<compile_context>
chip_gen: v7x
topology: tpu7x:2x2x1
jax: 0.10.0
libtpu: 0.0.40
codegen_flags: <defaults>
</compile_context>

<pallas_src>
import math
import jax
import jax.numpy as jnp
from jax.experimental import pallas as pl
from jax.experimental.pallas import tpu as pltpu

# ---- shapes consistent with the module's forward ----------------------------
B, S, H = 2, 8, 32                     # batch, seq_len, base_model hidden size
NUM_FILTERS = 100                      # module: self.num_filters
NF_PAD = 128                           # filters padded 100 -> 128 (lane dense)
FILTER_SIZES = (3, 4, 5)               # module: self.filter_sizes
LSTM_HID = 512                         # module: nn.LSTM(hidden_size=512)
FEAT = len(FILTER_SIZES) * NUM_FILTERS + LSTM_HID   # 812, matches nn.Linear(812, 128)
CNN_PAD = len(FILTER_SIZES) * NF_PAD                # 384
FEAT_PAD = CNN_PAD + LSTM_HID                       # 896 = 7 * 128, lane aligned
QKV_PAD = 3 * 128                                   # fused QKV output width (lane blocks)
NORM_FACT = 1.0 / math.sqrt(H)         # module: self._norm_fact


# -----------------------------------------------------------------------------
# Fused kernel: attention + CNN branches + LSTM + classifier head
# -----------------------------------------------------------------------------
def _fused_kernel(x_bm_ref, x_tm_ref,
                  wqkv_ref, bqkv_ref,
                  cw3_ref, cb3_ref, cw4_ref, cb4_ref, cw5_ref, cb5_ref,
                  wih_ref, whh_hbm_ref, lstm_b_ref,
                  w1_ref, b1_ref, w23_ref, b23_ref,
                  o_ref, whh_vmem, dma_sem):
    # ---- start the whh HBM->VMEM copy immediately; wait only before the LSTM ----
    whh_copy = pltpu.make_async_copy(whh_hbm_ref, whh_vmem, dma_sem)
    whh_copy.start()

    x_bm = x_bm_ref[...]                                         # (B*S, H) batch-major
    x_tm = x_tm_ref[...]                                         # (S*B, H) time-major

    # ---- fused Q/K/V projection: one MXU call, lane-aligned output slices ----
    qkv = jnp.dot(x_bm, wqkv_ref[...],
                  preferred_element_type=jnp.float32) + bqkv_ref[...]   # (B*S, 384)
    q = qkv[:, 0:H]
    k = qkv[:, 128:128 + H]
    v = qkv[:, 256:256 + H]

    # ---- LSTM input projection hoisted out of the recurrence (bf16 MXU, f32 acc) ----
    xproj = jnp.dot(x_tm.astype(jnp.bfloat16), wih_ref[...],
                    preferred_element_type=jnp.float32) + lstm_b_ref[...]  # (S*B, 4*HID)

    # ---- scaled-dot-product attention, per batch element (B = 2, static) ----
    ao_parts = []
    for b in range(B):
        qb = q[b * S:(b + 1) * S, :]
        kb = k[b * S:(b + 1) * S, :]
        vb = v[b * S:(b + 1) * S, :]
        s = jnp.dot(qb, kb.T, preferred_element_type=jnp.float32) * NORM_FACT
        s = s - jnp.max(s, axis=-1, keepdims=True)
        es = jnp.exp(s)
        attn = es / jnp.sum(es, axis=-1, keepdims=True)
        ao_parts.append(jnp.dot(attn, vb, preferred_element_type=jnp.float32))
    ao_all = jnp.concatenate(ao_parts, axis=0)                   # (B*S, H)
    ao_bf = ao_all.astype(jnp.bfloat16)

    # ---- Conv2d(kernel=(K, H)) + ReLU + global max-pool, batched over B ----
    # Conv is run over the full stacked (B*S) sequence (one matmul per kk-shift);
    # rows that straddle the batch boundary are excluded from the per-b max-pool.
    conv_refs = ((cw3_ref, cb3_ref, FILTER_SIZES[0]),
                 (cw4_ref, cb4_ref, FILTER_SIZES[1]),
                 (cw5_ref, cb5_ref, FILTER_SIZES[2]))
    feat_parts = []
    for w_ref, cb_ref, ksz in conv_refs:
        Lf = B * S - ksz + 1                                     # full stacked length
        L = S - ksz + 1                                          # valid per-batch length
        acc = jnp.zeros((Lf, NF_PAD), jnp.float32)
        for kk in range(ksz):                                    # tiny static loop
            acc = acc + jnp.dot(ao_bf[kk:kk + Lf, :], w_ref[kk],
                                preferred_element_type=jnp.float32)
        y = jnp.maximum(acc + cb_ref[...], 0.0)                  # ReLU
        p0 = jnp.max(y[0:L, :], axis=0, keepdims=True)           # batch 0 pool
        p1 = jnp.max(y[S:S + L, :], axis=0, keepdims=True)       # batch 1 pool
        feat_parts.append(jnp.concatenate([p0, p1], axis=0))     # (B, NF_PAD)

    # ---- single-layer LSTM, batched over B; PyTorch gate order [i, f, g, o] ----
    whh_copy.wait()                                              # whh now in VMEM
    whh = whh_vmem[...]                                          # (HID, 4*HID) bf16
    h = jnp.zeros((B, LSTM_HID), jnp.float32)
    c = jnp.zeros((B, LSTM_HID), jnp.float32)
    for t in range(S):                                           # S = 8, fully unrolled
        g_all = (xproj[t * B:(t + 1) * B, :]
                 + jnp.dot(h.astype(jnp.bfloat16), whh,
                           preferred_element_type=jnp.float32))  # (B, 4*HID)
        gi = jax.nn.sigmoid(g_all[:, 0 * LSTM_HID:1 * LSTM_HID])
        gf = jax.nn.sigmoid(g_all[:, 1 * LSTM_HID:2 * LSTM_HID])
        gg = jnp.tanh(g_all[:, 2 * LSTM_HID:3 * LSTM_HID])
        go = jax.nn.sigmoid(g_all[:, 3 * LSTM_HID:4 * LSTM_HID])
        c = gf * c + gi * gg
        h = go * jnp.tanh(c)

    # ---- feature slab [conv3|conv4|conv5|lstm], lane-dense (B, 896) ----
    feat = jnp.concatenate(feat_parts + [h], axis=1)

    # ---- head: Dropout -> Linear(812,128) -> Linear(128,32) -> Linear(32,2) -> Softmax
    # Last two Linears folded offline into w23/b23 (exact up to fp reassociation).
    # TODO(synk): nn.Dropout(0.5) is identity at inference (eval mode); no RNG here.
    h1 = jnp.dot(feat.astype(jnp.bfloat16), w1_ref[...],
                 preferred_element_type=jnp.float32) + b1_ref[...]
    logits = jnp.dot(h1, w23_ref[...], preferred_element_type=jnp.float32) + b23_ref[...]
    z = logits - jnp.max(logits, axis=1, keepdims=True)
    ez = jnp.exp(z)
    o_ref[...] = ez / jnp.sum(ez, axis=1, keepdims=True)


def forward(tokens, kp):
    x_bm = tokens.reshape(B * S, H)                              # batch-major, free
    x_tm = jnp.transpose(tokens, (1, 0, 2)).reshape(S * B, H)    # time-major (layout plumbing)
    args = (x_bm, x_tm,
            kp["wqkv"], kp["bqkv"],
            kp["cw3"], kp["cb3"], kp["cw4"], kp["cb4"], kp["cw5"], kp["cb5"],
            kp["wih"], kp["whh"], kp["lstm_b"],
            kp["w1"], kp["b1"], kp["w23"], kp["b23"])
    WHH_POS = 11                                                 # index of kp["whh"] in args
    in_specs = []
    for idx, a in enumerate(args):
        if idx == WHH_POS:
            # whh stays in HBM; the kernel overlaps its DMA with attention/conv work.
            in_specs.append(pl.BlockSpec(memory_space=pl.ANY))
        else:
            in_specs.append(pl.BlockSpec(a.shape, lambda i, nd=a.ndim: (0,) * nd))
    return pl.pallas_call(
        _fused_kernel,
        out_shape=jax.ShapeDtypeStruct((B, 2), jnp.float32),
        grid=(1,),
        in_specs=in_specs,
        out_specs=pl.BlockSpec((B, 2), lambda i: (0, 0)),
        scratch_shapes=[pltpu.VMEM((LSTM_HID, 4 * LSTM_HID), jnp.bfloat16),
                        pltpu.SemaphoreType.DMA(())],
        compiler_params=pltpu.CompilerParams(
            dimension_semantics=("arbitrary",),
            vmem_limit_bytes=32 * 1024 * 1024),
    )(*args)


# -----------------------------------------------------------------------------
# Parameter init (deterministic, synthetic, PyTorch-equivalent shapes) + prep
# -----------------------------------------------------------------------------
def init_params(key):
    ks = jax.random.split(key, 24)
    it = iter(range(24))
    rnd = lambda shape, scale=0.05: scale * jax.random.normal(ks[next(it)], shape, jnp.float32)
    p = {
        # attention projections (stored as (in, out) = W.T)
        "wq": rnd((H, H)), "bq": rnd((1, H)),
        "wk": rnd((H, H)), "bk": rnd((1, H)),
        "wv": rnd((H, H)), "bv": rnd((1, H)),
        # LSTM (stored transposed: W_ih.T, W_hh.T; bias = b_ih + b_hh combined)
        "wih": rnd((H, 4 * LSTM_HID)),
        "whh": rnd((LSTM_HID, 4 * LSTM_HID)),
        "lstm_b": rnd((1, 4 * LSTM_HID)),
        # classifier head (stored as W.T)
        "w1": rnd((FEAT, 128)), "b1": rnd((1, 128)),
        "w2": rnd((128, 32)), "b2": rnd((1, 32)),
        "w3": rnd((32, 2)), "b3": rnd((1, 2)),
    }
    # conv weights: PyTorch (F, 1, K, H) -> stored (K, H, F)
    for ksz in FILTER_SIZES:
        p[f"conv_w_{ksz}"] = rnd((ksz, H, NUM_FILTERS))
        p[f"conv_b_{ksz}"] = rnd((1, NUM_FILTERS))
    return p


def prepare_kernel_params(p):
    """PyTorch-shaped params -> fused / lane-padded / bf16 params for the kernel."""
    kp = {"lstm_b": p["lstm_b"], "b1": p["b1"]}

    # Fused Q/K/V weight: each projection padded to its own 128-lane block so the
    # q/k/v slices of the fused result are lane-aligned (query | key | value).
    wqkv = jnp.zeros((H, QKV_PAD), jnp.float32)
    wqkv = wqkv.at[:, 0:H].set(p["wq"])
    wqkv = wqkv.at[:, 128:128 + H].set(p["wk"])
    wqkv = wqkv.at[:, 256:256 + H].set(p["wv"])
    bqkv = jnp.zeros((1, QKV_PAD), jnp.float32)
    bqkv = bqkv.at[:, 0:H].set(p["bq"])
    bqkv = bqkv.at[:, 128:128 + H].set(p["bk"])
    bqkv = bqkv.at[:, 256:256 + H].set(p["bv"])
    kp["wqkv"] = wqkv
    kp["bqkv"] = bqkv

    # bf16 LSTM weights: MXU-native, halves the whh DMA; f32 accumulation and
    # f32 gate/state math stay inside the kernel.
    kp["wih"] = p["wih"].astype(jnp.bfloat16)
    kp["whh"] = p["whh"].astype(jnp.bfloat16)

    # conv filters padded 100 -> 128 with zero filters (ReLU+maxpool of zeros = 0),
    # transported as bf16 (f32 accumulation in-kernel).
    for ksz in FILTER_SIZES:
        w = jnp.zeros((ksz, H, NF_PAD), jnp.float32).at[:, :, :NUM_FILTERS].set(
            p[f"conv_w_{ksz}"])
        bias = jnp.zeros((1, NF_PAD), jnp.float32).at[:, :NUM_FILTERS].set(
            p[f"conv_b_{ksz}"])
        kp[f"cw{ksz}"] = w.astype(jnp.bfloat16)
        kp[f"cb{ksz}"] = bias

    # head w1 (812,128) -> (896,128): zero rows at the padded filter slots keep the
    # padded feature layout [128|128|128|512] equivalent to PyTorch's [100|100|100|512].
    w1 = p["w1"]
    w1p = jnp.zeros((FEAT_PAD, 128), jnp.float32)
    for idx in range(len(FILTER_SIZES)):
        w1p = w1p.at[idx * NF_PAD: idx * NF_PAD + NUM_FILTERS].set(
            w1[idx * NUM_FILTERS:(idx + 1) * NUM_FILTERS])
    w1p = w1p.at[CNN_PAD:].set(w1[len(FILTER_SIZES) * NUM_FILTERS:])
    kp["w1"] = w1p.astype(jnp.bfloat16)

    # Fold the last two Linears: logits = h1 @ (w2 @ w3) + (b2 @ w3 + b3).
    kp["w23"] = jnp.dot(p["w2"], p["w3"])
    kp["b23"] = jnp.dot(p["b2"], p["w3"]) + p["b3"]
    return kp


if __name__ == "__main__":
    key = jax.random.PRNGKey(0)
    k_tok, k_par = jax.random.split(key)
    tokens = jax.random.normal(k_tok, (B, S, H), jnp.float32)    # base_model last_hidden_state
    params = init_params(k_par)
    kparams = prepare_kernel_params(params)
    out = forward(tokens, kparams)
    out = jax.block_until_ready(out)
    assert out.shape == (B, 2)
    assert bool(jnp.all(jnp.isfinite(out)))
    print("KERNEL_OK")
</pallas_src>

<mosaic_0001>
module attributes {stable_mosaic.version = 11 : i64} {
  func.func @_fused_kernel(%arg0: i32, %arg1: memref<16x32xf32, #tpu.memory_space<vmem>>, %arg2: memref<16x32xf32, #tpu.memory_space<vmem>>, %arg3: memref<32x384xf32, #tpu.memory_space<vmem>>, %arg4: memref<1x384xf32, #tpu.memory_space<vmem>>, %arg5: memref<3x32x128xbf16, #tpu.memory_space<vmem>>, %arg6: memref<1x128xf32, #tpu.memory_space<vmem>>, %arg7: memref<4x32x128xbf16, #tpu.memory_space<vmem>>, %arg8: memref<1x128xf32, #tpu.memory_space<vmem>>, %arg9: memref<5x32x128xbf16, #tpu.memory_space<vmem>>, %arg10: memref<1x128xf32, #tpu.memory_space<vmem>>, %arg11: memref<32x2048xbf16, #tpu.memory_space<vmem>>, %arg12: memref<512x2048xbf16, #tpu.memory_space<any>>, %arg13: memref<1x2048xf32, #tpu.memory_space<vmem>>, %arg14: memref<896x128xbf16, #tpu.memory_space<vmem>>, %arg15: memref<1x128xf32, #tpu.memory_space<vmem>>, %arg16: memref<128x2xf32, #tpu.memory_space<vmem>>, %arg17: memref<1x2xf32, #tpu.memory_space<vmem>>, %arg18: memref<2x2xf32, #tpu.memory_space<vmem>>, %arg19: memref<512x2048xbf16, #tpu.memory_space<vmem>>, %arg20: memref<!tpu.dma_semaphore, #tpu.memory_space<semaphore_mem>>) attributes {dimension_semantics = [#tpu.dimension_semantics<arbitrary>], iteration_bounds = array<i64: 1>, scalar_prefetch = 0 : i64, scratch_operands = 2 : i64, tpu.core_type = #tpu.core_type<tc>, window_params = [{pipeline_mode = #tpu.pipeline_mode<synchronous>, transform_indices = @transform_0, window_bounds = array<i64: 16, 32>}, {pipeline_mode = #tpu.pipeline_mode<synchronous>, transform_indices = @transform_1, window_bounds = array<i64: 16, 32>}, {pipeline_mode = #tpu.pipeline_mode<synchronous>, transform_indices = @transform_2, window_bounds = array<i64: 32, 384>}, {pipeline_mode = #tpu.pipeline_mode<synchronous>, transform_indices = @transform_3, window_bounds = array<i64: 1, 384>}, {pipeline_mode = #tpu.pipeline_mode<synchronous>, transform_indices = @transform_4, window_bounds = array<i64: 3, 32, 128>}, {pipeline_mode = #tpu.pipeline_mode<synchronous>, transform_indices = @transform_5, window_bounds = array<i64: 1, 128>}, {pipeline_mode = #tpu.pipeline_mode<synchronous>, transform_indices = @transform_6, window_bounds = array<i64: 4, 32, 128>}, {pipeline_mode = #tpu.pipeline_mode<synchronous>, transform_indices = @transform_7, window_bounds = array<i64: 1, 128>}, {pipeline_mode = #tpu.pipeline_mode<synchronous>, transform_indices = @transform_8, window_bounds = array<i64: 5, 32, 128>}, {pipeline_mode = #tpu.pipeline_mode<synchronous>, transform_indices = @transform_9, window_bounds = array<i64: 1, 128>}, {pipeline_mode = #tpu.pipeline_mode<synchronous>, transform_indices = @transform_10, window_bounds = array<i64: 32, 2048>}, {}, {pipeline_mode = #tpu.pipeline_mode<synchronous>, transform_indices = @transform_12, window_bounds = array<i64: 1, 2048>}, {pipeline_mode = #tpu.pipeline_mode<synchronous>, transform_indices = @transform_13, window_bounds = array<i64: 896, 128>}, {pipeline_mode = #tpu.pipeline_mode<synchronous>, transform_indices = @transform_14, window_bounds = array<i64: 1, 128>}, {pipeline_mode = #tpu.pipeline_mode<synchronous>, transform_indices = @transform_15, window_bounds = array<i64: 128, 2>}, {pipeline_mode = #tpu.pipeline_mode<synchronous>, transform_indices = @transform_16, window_bounds = array<i64: 1, 2>}, {pipeline_mode = #tpu.pipeline_mode<synchronous>, transform_indices = @transform_17, window_bounds = array<i64: 2, 2>}]} {
    tpu.enqueue_dma source(%arg12 : memref<512x2048xbf16, #tpu.memory_space<any>>) target(%arg19 : memref<512x2048xbf16, #tpu.memory_space<vmem>>) target_semaphore(%arg20 : memref<!tpu.dma_semaphore, #tpu.memory_space<semaphore_mem>>)
    %c0 = arith.constant 0 : index
    %c0_0 = arith.constant 0 : index
    %0 = vector.load %arg1[%c0, %c0_0] : memref<16x32xf32, #tpu.memory_space<vmem>>, vector<16x32xf32>
    %c0_1 = arith.constant 0 : index
    %c0_2 = arith.constant 0 : index
    %1 = vector.load %arg2[%c0_1, %c0_2] : memref<16x32xf32, #tpu.memory_space<vmem>>, vector<16x32xf32>
    %c0_3 = arith.constant 0 : index
    %c0_4 = arith.constant 0 : index
    %2 = vector.load %arg3[%c0_3, %c0_4] : memref<32x384xf32, #tpu.memory_space<vmem>>, vector<32x384xf32>
    %cst = arith.constant dense<0.000000e+00> : vector<16x384xf32>
    %3 = tpu.matmul %0, %2, %cst {dimension_numbers = #tpu.dot_dimension_numbers<[1], [0], [0], [1], [0, 0, 1, 1], [], []>} : vector<16x32xf32>, vector<32x384xf32>, vector<16x384xf32> -> vector<16x384xf32>
    %c0_5 = arith.constant 0 : index
    %c0_6 = arith.constant 0 : index
    %4 = vector.load %arg4[%c0_5, %c0_6] : memref<1x384xf32, #tpu.memory_space<vmem>>, vector<1x384xf32>
    %5 = vector.broadcast %4 : vector<1x384xf32> to vector<16x384xf32>
    %6 = arith.addf %3, %5 : vector<16x384xf32>
    %7 = vector.extract_strided_slice %6 {offsets = [0, 0], sizes = [16, 32], strides = [1, 1]} : vector<16x384xf32> to vector<16x32xf32>
    %8 = vector.extract_strided_slice %6 {offsets = [0, 128], sizes = [16, 32], strides = [1, 1]} : vector<16x384xf32> to vector<16x32xf32>
    %9 = vector.extract_strided_slice %6 {offsets = [0, 256], sizes = [16, 32], strides = [1, 1]} : vector<16x384xf32> to vector<16x32xf32>
    %10 = arith.truncf %1 : vector<16x32xf32> to vector<16x32xbf16>
    %c0_7 = arith.constant 0 : index
    %c0_8 = arith.constant 0 : index
    %11 = vector.load %arg11[%c0_7, %c0_8] : memref<32x2048xbf16, #tpu.memory_space<vmem>>, vector<32x2048xbf16>
    %cst_9 = arith.constant dense<0.000000e+00> : vector<16x2048xf32>
    %12 = tpu.matmul %10, %11, %cst_9 {dimension_numbers = #tpu.dot_dimension_numbers<[1], [0], [0], [1], [0, 0, 1, 1], [], []>} : vector<16x32xbf16>, vector<32x2048xbf16>, vector<16x2048xf32> -> vector<16x2048xf32>
    %c0_10 = arith.constant 0 : index
    %c0_11 = arith.constant 0 : index
    %13 = vector.load %arg13[%c0_10, %c0_11] : memref<1x2048xf32, #tpu.memory_space<vmem>>, vector<1x2048xf32>
    %14 = vector.broadcast %13 : vector<1x2048xf32> to vector<16x2048xf32>
    %15 = arith.addf %12, %14 : vector<16x2048xf32>
    %16 = vector.extract_strided_slice %7 {offsets = [0, 0], sizes = [8, 32], strides = [1, 1]} : vector<16x32xf32> to vector<8x32xf32>
    %17 = vector.extract_strided_slice %8 {offsets = [0, 0], sizes = [8, 32], strides = [1, 1]} : vector<16x32xf32> to vector<8x32xf32>
    %18 = vector.extract_strided_slice %9 {offsets = [0, 0], sizes = [8, 32], strides = [1, 1]} : vector<16x32xf32> to vector<8x32xf32>
    %19 = tpu.transpose %17, [1, 0] : vector<8x32xf32> -> vector<32x8xf32>
    %cst_12 = arith.constant dense<0.000000e+00> : vector<8x8xf32>
    %20 = tpu.matmul %16, %19, %cst_12 {dimension_numbers = #tpu.dot_dimension_numbers<[1], [0], [0], [1], [0, 0, 1, 1], [], []>} : vector<8x32xf32>, vector<32x8xf32>, vector<8x8xf32> -> vector<8x8xf32>
    %cst_13 = arith.constant 0.176776692 : f32
    %21 = vector.broadcast %cst_13 : f32 to vector<8x8xf32>
    %22 = arith.mulf %20, %21 : vector<8x8xf32>
    %cst_14 = arith.constant dense<0xFF800000> : vector<8xf32>
    %23 = vector.multi_reduction <maximumf>, %22, %cst_14 [1] : vector<8x8xf32> to vector<8xf32>
    %24 = vector.shape_cast %23 : vector<8xf32> to vector<8x1xf32>
    %25 = vector.broadcast %24 : vector<8x1xf32> to vector<8x8xf32>
    %26 = arith.subf %22, %25 : vector<8x8xf32>
    %27 = math.exp %26 : vector<8x8xf32>
    %cst_15 = arith.constant dense<0.000000e+00> : vector<8xf32>
    %28 = vector.multi_reduction <add>, %27, %cst_15 [1] : vector<8x8xf32> to vector<8xf32>
    %29 = vector.shape_cast %28 : vector<8xf32> to vector<8x1xf32>
    %30 = vector.broadcast %29 : vector<8x1xf32> to vector<8x8xf32>
    %31 = arith.divf %27, %30 : vector<8x8xf32>
    %cst_16 = arith.constant dense<0.000000e+00> : vector<8x32xf32>
    %32 = tpu.matmul %31, %18, %cst_16 {dimension_numbers = #tpu.dot_dimension_numbers<[1], [0], [0], [1], [0, 0, 1, 1], [], []>} : vector<8x8xf32>, vector<8x32xf32>, vector<8x32xf32> -> vector<8x32xf32>
    %33 = vector.extract_strided_slice %7 {offsets = [8, 0], sizes = [8, 32], strides = [1, 1]} : vector<16x32xf32> to vector<8x32xf32>
    %34 = vector.extract_strided_slice %8 {offsets = [8, 0], sizes = [8, 32], strides = [1, 1]} : vector<16x32xf32> to vector<8x32xf32>
    %35 = vector.extract_strided_slice %9 {offsets = [8, 0], sizes = [8, 32], strides = [1, 1]} : vector<16x32xf32> to vector<8x32xf32>
    %36 = tpu.transpose %34, [1, 0] : vector<8x32xf32> -> vector<32x8xf32>
    %cst_17 = arith.constant dense<0.000000e+00> : vector<8x8xf32>
    %37 = tpu.matmul %33, %36, %cst_17 {dimension_numbers = #tpu.dot_dimension_numbers<[1], [0], [0], [1], [0, 0, 1, 1], [], []>} : vector<8x32xf32>, vector<32x8xf32>, vector<8x8xf32> -> vector<8x8xf32>
    %cst_18 = arith.constant 0.176776692 : f32
    %38 = vector.broadcast %cst_18 : f32 to vector<8x8xf32>
    %39 = arith.mulf %37, %38 : vector<8x8xf32>
    %cst_19 = arith.constant dense<0xFF800000> : vector<8xf32>
    %40 = vector.multi_reduction <maximumf>, %39, %cst_19 [1] : vector<8x8xf32> to vector<8xf32>
    %41 = vector.shape_cast %40 : vector<8xf32> to vector<8x1xf32>
    %42 = vector.broadcast %41 : vector<8x1xf32> to vector<8x8xf32>
    %43 = arith.subf %39, %42 : vector<8x8xf32>
    %44 = math.exp %43 : vector<8x8xf32>
    %cst_20 = arith.constant dense<0.000000e+00> : vector<8xf32>
    %45 = vector.multi_reduction <add>, %44, %cst_20 [1] : vector<8x8xf32> to vector<8xf32>
    %46 = vector.shape_cast %45 : vector<8xf32> to vector<8x1xf32>
    %47 = vector.broadcast %46 : vector<8x1xf32> to vector<8x8xf32>
    %48 = arith.divf %44, %47 : vector<8x8xf32>
    %cst_21 = arith.constant dense<0.000000e+00> : vector<8x32xf32>
    %49 = tpu.matmul %48, %35, %cst_21 {dimension_numbers = #tpu.dot_dimension_numbers<[1], [0], [0], [1], [0, 0, 1, 1], [], []>} : vector<8x8xf32>, vector<8x32xf32>, vector<8x32xf32> -> vector<8x32xf32>
    %50 = tpu.concatenate %32, %49 in 0 : vector<8x32xf32>, vector<8x32xf32> -> vector<16x32xf32>
    %51 = arith.truncf %50 : vector<16x32xf32> to vector<16x32xbf16>
    %cst_22 = arith.constant 0.000000e+00 : f32
    %52 = vector.broadcast %cst_22 : f32 to vector<14x128xf32>
    %53 = vector.extract_strided_slice %51 {offsets = [0, 0], sizes = [14, 32], strides = [1, 1]} : vector<16x32xbf16> to vector<14x32xbf16>
    %c0_23 = arith.constant 0 : index
    %c0_24 = arith.constant 0 : index
    %c0_25 = arith.constant 0 : index
    %54 = vector.load %arg5[%c0_23, %c0_24, %c0_25] : memref<3x32x128xbf16, #tpu.memory_space<vmem>>, vector<1x32x128xbf16>
    %55 = vector.shape_cast %54 : vector<1x32x128xbf16> to vector<32x128xbf16>
    %cst_26 = arith.constant dense<0.000000e+00> : vector<14x128xf32>
    %56 = tpu.matmul %53, %55, %cst_26 {dimension_numbers = #tpu.dot_dimension_numbers<[1], [0], [0], [1], [0, 0, 1, 1], [], []>} : vector<14x32xbf16>, vector<32x128xbf16>, vector<14x128xf32> -> vector<14x128xf32>
    %57 = arith.addf %52, %56 : vector<14x128xf32>
    %58 = vector.extract_strided_slice %51 {offsets = [1, 0], sizes = [14, 32], strides = [1, 1]} : vector<16x32xbf16> to vector<14x32xbf16>
    %c1 = arith.constant 1 : index
    %c0_27 = arith.constant 0 : index
    %c0_28 = arith.constant 0 : index
    %59 = vector.load %arg5[%c1, %c0_27, %c0_28] : memref<3x32x128xbf16, #tpu.memory_space<vmem>>, vector<1x32x128xbf16>
    %60 = vector.shape_cast %59 : vector<1x32x128xbf16> to vector<32x128xbf16>
    %cst_29 = arith.constant dense<0.000000e+00> : vector<14x128xf32>
    %61 = tpu.matmul %58, %60, %cst_29 {dimension_numbers = #tpu.dot_dimension_numbers<[1], [0], [0], [1], [0, 0, 1, 1], [], []>} : vector<14x32xbf16>, vector<32x128xbf16>, vector<14x128xf32> -> vector<14x128xf32>
    %62 = arith.addf %57, %61 : vector<14x128xf32>
    %63 = vector.extract_strided_slice %51 {offsets = [2, 0], sizes = [14, 32], strides = [1, 1]} : vector<16x32xbf16> to vector<14x32xbf16>
    %c2 = arith.constant 2 : index
    %c0_30 = arith.constant 0 : index
    %c0_31 = arith.constant 0 : index
    %64 = vector.load %arg5[%c2, %c0_30, %c0_31] : memref<3x32x128xbf16, #tpu.memory_space<vmem>>, vector<1x32x128xbf16>
    %65 = vector.shape_cast %64 : vector<1x32x128xbf16> to vector<32x128xbf16>
    %cst_32 = arith.constant dense<0.000000e+00> : vector<14x128xf32>
    %66 = tpu.matmul %63, %65, %cst_32 {dimension_numbers = #tpu.dot_dimension_numbers<[1], [0], [0], [1], [0, 0, 1, 1], [], []>} : vector<14x32xbf16>, vector<32x128xbf16>, vector<14x128xf32> -> vector<14x128xf32>
    %67 = arith.addf %62, %66 : vector<14x128xf32>
    %c0_33 = arith.constant 0 : index
    %c0_34 = arith.constant 0 : index
    %68 = vector.load %arg6[%c0_33, %c0_34] : memref<1x128xf32, #tpu.memory_space<vmem>>, vector<1x128xf32>
    %69 = vector.broadcast %68 : vector<1x128xf32> to vector<14x128xf32>
    %70 = arith.addf %67, %69 : vector<14x128xf32>
    %cst_35 = arith.constant 0.000000e+00 : f32
    %71 = vector.broadcast %cst_35 : f32 to vector<14x128xf32>
    %72 = arith.maximumf %70, %71 : vector<14x128xf32>
    %73 = vector.extract_strided_slice %72 {offsets = [0, 0], sizes = [6, 128], strides = [1, 1]} : vector<14x128xf32> to vector<6x128xf32>
    %cst_36 = arith.constant dense<0xFF800000> : vector<128xf32>
    %74 = vector.multi_reduction <maximumf>, %73, %cst_36 [0] : vector<6x128xf32> to vector<128xf32>
    %75 = vector.shape_cast %74 : vector<128xf32> to vector<1x128xf32>
    %76 = vector.extract_strided_slice %72 {offsets = [8, 0], sizes = [6, 128], strides = [1, 1]} : vector<14x128xf32> to vector<6x128xf32>
    %cst_37 = arith.constant dense<0xFF800000> : vector<128xf32>
    %77 = vector.multi_reduction <maximumf>, %76, %cst_37 [0] : vector<6x128xf32> to vector<128xf32>
    %78 = vector.shape_cast %77 : vector<128xf32> to vector<1x128xf32>
    %79 = tpu.concatenate %75, %78 in 0 : vector<1x128xf32>, vector<1x128xf32> -> vector<2x128xf32>
    %cst_38 = arith.constant 0.000000e+00 : f32
    %80 = vector.broadcast %cst_38 : f32 to vector<13x128xf32>
    %81 = vector.extract_strided_slice %51 {offsets = [0, 0], sizes = [13, 32], strides = [1, 1]} : vector<16x32xbf16> to vector<13x32xbf16>
    %c0_39 = arith.constant 0 : index
    %c0_40 = arith.constant 0 : index
    %c0_41 = arith.constant 0 : index
    %82 = vector.load %arg7[%c0_39, %c0_40, %c0_41] : memref<4x32x128xbf16, #tpu.memory_space<vmem>>, vector<1x32x128xbf16>
    %83 = vector.shape_cast %82 : vector<1x32x128xbf16> to vector<32x128xbf16>
    %cst_42 = arith.constant dense<0.000000e+00> : vector<13x128xf32>
    %84 = tpu.matmul %81, %83, %cst_42 {dimension_numbers = #tpu.dot_dimension_numbers<[1], [0], [0], [1], [0, 0, 1, 1], [], []>} : vector<13x32xbf16>, vector<32x128xbf16>, vector<13x128xf32> -> vector<13x128xf32>
    %85 = arith.addf %80, %84 : vector<13x128xf32>
    %86 = vector.extract_strided_slice %51 {offsets = [1, 0], sizes = [13, 32], strides = [1, 1]} : vector<16x32xbf16> to vector<13x32xbf16>
    %c1_43 = arith.constant 1 : index
    %c0_44 = arith.constant 0 : index
    %c0_45 = arith.constant 0 : index
    %87 = vector.load %arg7[%c1_43, %c0_44, %c0_45] : memref<4x32x128xbf16, #tpu.memory_space<vmem>>, vector<1x32x128xbf16>
    %88 = vector.shape_cast %87 : vector<1x32x128xbf16> to vector<32x128xbf16>
    %cst_46 = arith.constant dense<0.000000e+00> : vector<13x128xf32>
    %89 = tpu.matmul %86, %88, %cst_46 {dimension_numbers = #tpu.dot_dimension_numbers<[1], [0], [0], [1], [0, 0, 1, 1], [], []>} : vector<13x32xbf16>, vector<32x128xbf16>, vector<13x128xf32> -> vector<13x128xf32>
    %90 = arith.addf %85, %89 : vector<13x128xf32>
    %91 = vector.extract_strided_slice %51 {offsets = [2, 0], sizes = [13, 32], strides = [1, 1]} : vector<16x32xbf16> to vector<13x32xbf16>
    %c2_47 = arith.constant 2 : index
    %c0_48 = arith.constant 0 : index
    %c0_49 = arith.constant 0 : index
    %92 = vector.load %arg7[%c2_47, %c0_48, %c0_49] : memref<4x32x128xbf16, #tpu.memory_space<vmem>>, vector<1x32x128xbf16>
    %93 = vector.shape_cast %92 : vector<1x32x128xbf16> to vector<32x128xbf16>
    %cst_50 = arith.constant dense<0.000000e+00> : vector<13x128xf32>
    %94 = tpu.matmul %91, %93, %cst_50 {dimension_numbers = #tpu.dot_dimension_numbers<[1], [0], [0], [1], [0, 0, 1, 1], [], []>} : vector<13x32xbf16>, vector<32x128xbf16>, vector<13x128xf32> -> vector<13x128xf32>
    %95 = arith.addf %90, %94 : vector<13x128xf32>
    %96 = vector.extract_strided_slice %51 {offsets = [3, 0], sizes = [13, 32], strides = [1, 1]} : vector<16x32xbf16> to vector<13x32xbf16>
    %c3 = arith.constant 3 : index
    %c0_51 = arith.constant 0 : index
    %c0_52 = arith.constant 0 : index
    %97 = vector.load %arg7[%c3, %c0_51, %c0_52] : memref<4x32x128xbf16, #tpu.memory_space<vmem>>, vector<1x32x128xbf16>
    %98 = vector.shape_cast %97 : vector<1x32x128xbf16> to vector<32x128xbf16>
    %cst_53 = arith.constant dense<0.000000e+00> : vector<13x128xf32>
    %99 = tpu.matmul %96, %98, %cst_53 {dimension_numbers = #tpu.dot_dimension_numbers<[1], [0], [0], [1], [0, 0, 1, 1], [], []>} : vector<13x32xbf16>, vector<32x128xbf16>, vector<13x128xf32> -> vector<13x128xf32>
    %100 = arith.addf %95, %99 : vector<13x128xf32>
    %c0_54 = arith.constant 0 : index
    %c0_55 = arith.constant 0 : index
    %101 = vector.load %arg8[%c0_54, %c0_55] : memref<1x128xf32, #tpu.memory_space<vmem>>, vector<1x128xf32>
    %102 = vector.broadcast %101 : vector<1x128xf32> to vector<13x128xf32>
    %103 = arith.addf %100, %102 : vector<13x128xf32>
    %cst_56 = arith.constant 0.000000e+00 : f32
    %104 = vector.broadcast %cst_56 : f32 to vector<13x128xf32>
    %105 = arith.maximumf %103, %104 : vector<13x128xf32>
    %106 = vector.extract_strided_slice %105 {offsets = [0, 0], sizes = [5, 128], strides = [1, 1]} : vector<13x128xf32> to vector<5x128xf32>
    %cst_57 = arith.constant dense<0xFF800000> : vector<128xf32>
    %107 = vector.multi_reduction <maximumf>, %106, %cst_57 [0] : vector<5x128xf32> to vector<128xf32>
    %108 = vector.shape_cast %107 : vector<128xf32> to vector<1x128xf32>
    %109 = vector.extract_strided_slice %105 {offsets = [8, 0], sizes = [5, 128], strides = [1, 1]} : vector<13x128xf32> to vector<5x128xf32>
    %cst_58 = arith.constant dense<0xFF800000> : vector<128xf32>
    %110 = vector.multi_reduction <maximumf>, %109, %cst_58 [0] : vector<5x128xf32> to vector<128xf32>
    %111 = vector.shape_cast %110 : vector<128xf32> to vector<1x128xf32>
    %112 = tpu.concatenate %108, %111 in 0 : vector<1x128xf32>, vector<1x128xf32> -> vector<2x128xf32>
    %cst_59 = arith.constant 0.000000e+00 : f32
    %113 = vector.broadcast %cst_59 : f32 to vector<12x128xf32>
    %114 = vector.extract_strided_slice %51 {offsets = [0, 0], sizes = [12, 32], strides = [1, 1]} : vector<16x32xbf16> to vector<12x32xbf16>
    %c0_60 = arith.constant 0 : index
    %c0_61 = arith.constant 0 : index
    %c0_62 = arith.constant 0 : index
    %115 = vector.load %arg9[%c0_60, %c0_61, %c0_62] : memref<5x32x128xbf16, #tpu.memory_space<vmem>>, vector<1x32x128xbf16>
    %116 = vector.shape_cast %115 : vector<1x32x128xbf16> to vector<32x128xbf16>
    %cst_63 = arith.constant dense<0.000000e+00> : vector<12x128xf32>
    %117 = tpu.matmul %114, %116, %cst_63 {dimension_numbers = #tpu.dot_dimension_numbers<[1], [0], [0], [1], [0, 0, 1, 1], [], []>} : vector<12x32xbf16>, vector<32x128xbf16>, vector<12x128xf32> -> vector<12x128xf32>
    %118 = arith.addf %113, %117 : vector<12x128xf32>
    %119 = vector.extract_strided_slice %51 {offsets = [1, 0], sizes = [12, 32], strides = [1, 1]} : vector<16x32xbf16> to vector<12x32xbf16>
    %c1_64 = arith.constant 1 : index
    %c0_65 = arith.constant 0 : index
    %c0_66 = arith.constant 0 : index
    %120 = vector.load %arg9[%c1_64, %c0_65, %c0_66] : memref<5x32x128xbf16, #tpu.memory_space<vmem>>, vector<1x32x128xbf16>
    %121 = vector.shape_cast %120 : vector<1x32x128xbf16> to vector<32x128xbf16>
    %cst_67 = arith.constant dense<0.000000e+00> : vector<12x128xf32>
    %122 = tpu.matmul %119, %121, %cst_67 {dimension_numbers = #tpu.dot_dimension_numbers<[1], [0], [0], [1], [0, 0, 1, 1], [], []>} : vector<12x32xbf16>, vector<32x128xbf16>, vector<12x128xf32> -> vector<12x128xf32>
    %123 = arith.addf %118, %122 : vector<12x128xf32>
    %124 = vector.extract_strided_slice %51 {offsets = [2, 0], sizes = [12, 32], strides = [1, 1]} : vector<16x32xbf16> to vector<12x32xbf16>
    %c2_68 = arith.constant 2 : index
    %c0_69 = arith.constant 0 : index
    %c0_70 = arith.constant 0 : index
    %125 = vector.load %arg9[%c2_68, %c0_69, %c0_70] : memref<5x32x128xbf16, #tpu.memory_space<vmem>>, vector<1x32x128xbf16>
    %126 = vector.shape_cast %125 : vector<1x32x128xbf16> to vector<32x128xbf16>
    %cst_71 = arith.constant dense<0.000000e+00> : vector<12x128xf32>
    %127 = tpu.matmul %124, %126, %cst_71 {dimension_numbers = #tpu.dot_dimension_numbers<[1], [0], [0], [1], [0, 0, 1, 1], [], []>} : vector<12x32xbf16>, vector<32x128xbf16>, vector<12x128xf32> -> vector<12x128xf32>
    %128 = arith.addf %123, %127 : vector<12x128xf32>
    %129 = vector.extract_strided_slice %51 {offsets = [3, 0], sizes = [12, 32], strides = [1, 1]} : vector<16x32xbf16> to vector<12x32xbf16>
    %c3_72 = arith.constant 3 : index
    %c0_73 = arith.constant 0 : index
    %c0_74 = arith.constant 0 : index
    %130 = vector.load %arg9[%c3_72, %c0_73, %c0_74] : memref<5x32x128xbf16, #tpu.memory_space<vmem>>, vector<1x32x128xbf16>
    %131 = vector.shape_cast %130 : vector<1x32x128xbf16> to vector<32x128xbf16>
    %cst_75 = arith.constant dense<0.000000e+00> : vector<12x128xf32>
    %132 = tpu.matmul %129, %131, %cst_75 {dimension_numbers = #tpu.dot_dimension_numbers<[1], [0], [0], [1], [0, 0, 1, 1], [], []>} : vector<12x32xbf16>, vector<32x128xbf16>, vector<12x128xf32> -> vector<12x128xf32>
    %133 = arith.addf %128, %132 : vector<12x128xf32>
    %134 = vector.extract_strided_slice %51 {offsets = [4, 0], sizes = [12, 32], strides = [1, 1]} : vector<16x32xbf16> to vector<12x32xbf16>
    %c4 = arith.constant 4 : index
    %c0_76 = arith.constant 0 : index
    %c0_77 = arith.constant 0 : index
    %135 = vector.load %arg9[%c4, %c0_76, %c0_77] : memref<5x32x128xbf16, #tpu.memory_space<vmem>>, vector<1x32x128xbf16>
    %136 = vector.shape_cast %135 : vector<1x32x128xbf16> to vector<32x128xbf16>
    %cst_78 = arith.constant dense<0.000000e+00> : vector<12x128xf32>
    %137 = tpu.matmul %134, %136, %cst_78 {dimension_numbers = #tpu.dot_dimension_numbers<[1], [0], [0], [1], [0, 0, 1, 1], [], []>} : vector<12x32xbf16>, vector<32x128xbf16>, vector<12x128xf32> -> vector<12x128xf32>
    %138 = arith.addf %133, %137 : vector<12x128xf32>
    %c0_79 = arith.constant 0 : index
    %c0_80 = arith.constant 0 : index
    %139 = vector.load %arg10[%c0_79, %c0_80] : memref<1x128xf32, #tpu.memory_space<vmem>>, vector<1x128xf32>
    %140 = vector.broadcast %139 : vector<1x128xf32> to vector<12x128xf32>
    %141 = arith.addf %138, %140 : vector<12x128xf32>
    %cst_81 = arith.constant 0.000000e+00 : f32
    %142 = vector.broadcast %cst_81 : f32 to vector<12x128xf32>
    %143 = arith.maximumf %141, %142 : vector<12x128xf32>
    %144 = vector.extract_strided_slice %143 {offsets = [0, 0], sizes = [4, 128], strides = [1, 1]} : vector<12x128xf32> to vector<4x128xf32>
    %cst_82 = arith.constant dense<0xFF800000> : vector<128xf32>
    %145 = vector.multi_reduction <maximumf>, %144, %cst_82 [0] : vector<4x128xf32> to vector<128xf32>
    %146 = vector.shape_cast %145 : vector<128xf32> to vector<1x128xf32>
    %147 = vector.extract_strided_slice %143 {offsets = [8, 0], sizes = [4, 128], strides = [1, 1]} : vector<12x128xf32> to vector<4x128xf32>
    %cst_83 = arith.constant dense<0xFF800000> : vector<128xf32>
    %148 = vector.multi_reduction <maximumf>, %147, %cst_83 [0] : vector<4x128xf32> to vector<128xf32>
    %149 = vector.shape_cast %148 : vector<128xf32> to vector<1x128xf32>
    %150 = tpu.concatenate %146, %149 in 0 : vector<1x128xf32>, vector<1x128xf32> -> vector<2x128xf32>
    tpu.wait_dma2 semaphore(%arg20 : memref<!tpu.dma_semaphore, #tpu.memory_space<semaphore_mem>>) src(%arg12 : memref<512x2048xbf16, #tpu.memory_space<any>>) dst(%arg19 : memref<512x2048xbf16, #tpu.memory_space<vmem>>)
    %c0_84 = arith.constant 0 : index
    %c0_85 = arith.constant 0 : index
    %151 = vector.load %arg19[%c0_84, %c0_85] : memref<512x2048xbf16, #tpu.memory_space<vmem>>, vector<512x2048xbf16>
    %cst_86 = arith.constant 0.000000e+00 : f32
    %152 = vector.broadcast %cst_86 : f32 to vector<2x512xf32>
    %cst_87 = arith.constant 0.000000e+00 : f32
    %153 = vector.broadcast %cst_87 : f32 to vector<2x512xf32>
    %154 = vector.extract_strided_slice %15 {offsets = [0, 0], sizes = [2, 2048], strides = [1, 1]} : vector<16x2048xf32> to vector<2x2048xf32>
    %155 = arith.truncf %152 : vector<2x512xf32> to vector<2x512xbf16>
    %cst_88 = arith.constant dense<0.000000e+00> : vector<2x2048xf32>
    %156 = tpu.matmul %155, %151, %cst_88 {dimension_numbers = #tpu.dot_dimension_numbers<[1], [0], [0], [1], [0, 0, 1, 1], [], []>} : vector<2x512xbf16>, vector<512x2048xbf16>, vector<2x2048xf32> -> vector<2x2048xf32>
    %157 = arith.addf %154, %156 : vector<2x2048xf32>
    %158 = vector.extract_strided_slice %157 {offsets = [0, 0], sizes = [2, 512], strides = [1, 1]} : vector<2x2048xf32> to vector<2x512xf32>
    %159 = arith.negf %158 : vector<2x512xf32>
    %160 = math.exp %159 : vector<2x512xf32>
    %cst_89 = arith.constant 1.000000e+00 : f32
    %161 = vector.broadcast %cst_89 : f32 to vector<2x512xf32>
    %162 = arith.addf %161, %160 : vector<2x512xf32>
    %163 = arith.divf %161, %162 : vector<2x512xf32>
    %164 = vector.extract_strided_slice %157 {offsets = [0, 512], sizes = [2, 512], strides = [1, 1]} : vector<2x2048xf32> to vector<2x512xf32>
    %165 = arith.negf %164 : vector<2x512xf32>
    %166 = math.exp %165 : vector<2x512xf32>
    %cst_90 = arith.constant 1.000000e+00 : f32
    %167 = vector.broadcast %cst_90 : f32 to vector<2x512xf32>
    %168 = arith.addf %167, %166 : vector<2x512xf32>
    %169 = arith.divf %167, %168 : vector<2x512xf32>
    %170 = vector.extract_strided_slice %157 {offsets = [0, 1024], sizes = [2, 512], strides = [1, 1]} : vector<2x2048xf32> to vector<2x512xf32>
    %171 = math.tanh %170 : vector<2x512xf32>
    %172 = vector.extract_strided_slice %157 {offsets = [0, 1536], sizes = [2, 512], strides = [1, 1]} : vector<2x2048xf32> to vector<2x512xf32>
    %173 = arith.negf %172 : vector<2x512xf32>
    %174 = math.exp %173 : vector<2x512xf32>
    %cst_91 = arith.constant 1.000000e+00 : f32
    %175 = vector.broadcast %cst_91 : f32 to vector<2x512xf32>
    %176 = arith.addf %175, %174 : vector<2x512xf32>
    %177 = arith.divf %175, %176 : vector<2x512xf32>
    %178 = arith.mulf %169, %153 : vector<2x512xf32>
    %179 = arith.mulf %163, %171 : vector<2x512xf32>
    %180 = arith.addf %178, %179 : vector<2x512xf32>
    %181 = math.tanh %180 : vector<2x512xf32>
    %182 = arith.mulf %177, %181 : vector<2x512xf32>
    %183 = vector.extract_strided_slice %15 {offsets = [2, 0], sizes = [2, 2048], strides = [1, 1]} : vector<16x2048xf32> to vector<2x2048xf32>
    %184 = arith.truncf %182 : vector<2x512xf32> to vector<2x512xbf16>
    %cst_92 = arith.constant dense<0.000000e+00> : vector<2x2048xf32>
    %185 = tpu.matmul %184, %151, %cst_92 {dimension_numbers = #tpu.dot_dimension_numbers<[1], [0], [0], [1], [0, 0, 1, 1], [], []>} : vector<2x512xbf16>, vector<512x2048xbf16>, vector<2x2048xf32> -> vector<2x2048xf32>
    %186 = arith.addf %183, %185 : vector<2x2048xf32>
    %187 = vector.extract_strided_slice %186 {offsets = [0, 0], sizes = [2, 512], strides = [1, 1]} : vector<2x2048xf32> to vector<2x512xf32>
    %188 = arith.negf %187 : vector<2x512xf32>
    %189 = math.exp %188 : vector<2x512xf32>
    %cst_93 = arith.constant 1.000000e+00 : f32
    %190 = vector.broadcast %cst_93 : f32 to vector<2x512xf32>
    %191 = arith.addf %190, %189 : vector<2x512xf32>
    %192 = arith.divf %190, %191 : vector<2x512xf32>
    %193 = vector.extract_strided_slice %186 {offsets = [0, 512], sizes = [2, 512], strides = [1, 1]} : vector<2x2048xf32> to vector<2x512xf32>
    %194 = arith.negf %193 : vector<2x512xf32>
    %195 = math.exp %194 : vector<2x512xf32>
    %cst_94 = arith.constant 1.000000e+00 : f32
    %196 = vector.broadcast %cst_94 : f32 to vector<2x512xf32>
    %197 = arith.addf %196, %195 : vector<2x512xf32>
    %198 = arith.divf %196, %197 : vector<2x512xf32>
    %199 = vector.extract_strided_slice %186 {offsets = [0, 1024], sizes = [2, 512], strides = [1, 1]} : vector<2x2048xf32> to vector<2x512xf32>
    %200 = math.tanh %199 : vector<2x512xf32>
    %201 = vector.extract_strided_slice %186 {offsets = [0, 1536], sizes = [2, 512], strides = [1, 1]} : vector<2x2048xf32> to vector<2x512xf32>
    %202 = arith.negf %201 : vector<2x512xf32>
    %203 = math.exp %202 : vector<2x512xf32>
    %cst_95 = arith.constant 1.000000e+00 : f32
    %204 = vector.broadcast %cst_95 : f32 to vector<2x512xf32>
    %205 = arith.addf %204, %203 : vector<2x512xf32>
    %206 = arith.divf %204, %205 : vector<2x512xf32>
    %207 = arith.mulf %198, %180 : vector<2x512xf32>
    %208 = arith.mulf %192, %200 : vector<2x512xf32>
    %209 = arith.addf %207, %208 : vector<2x512xf32>
    %210 = math.tanh %209 : vector<2x512xf32>
    %211 = arith.mulf %206, %210 : vector<2x512xf32>
    %212 = vector.extract_strided_slice %15 {offsets = [4, 0], sizes = [2, 2048], strides = [1, 1]} : vector<16x2048xf32> to vector<2x2048xf32>
    %213 = arith.truncf %211 : vector<2x512xf32> to vector<2x512xbf16>
    %cst_96 = arith.constant dense<0.000000e+00> : vector<2x2048xf32>
    %214 = tpu.matmul %213, %151, %cst_96 {dimension_numbers = #tpu.dot_dimension_numbers<[1], [0], [0], [1], [0, 0, 1, 1], [], []>} : vector<2x512xbf16>, vector<512x2048xbf16>, vector<2x2048xf32> -> vector<2x2048xf32>
    %215 = arith.addf %212, %214 : vector<2x2048xf32>
    %216 = vector.extract_strided_slice %215 {offsets = [0, 0], sizes = [2, 512], strides = [1, 1]} : vector<2x2048xf32> to vector<2x512xf32>
    %217 = arith.negf %216 : vector<2x512xf32>
    %218 = math.exp %217 : vector<2x512xf32>
    %cst_97 = arith.constant 1.000000e+00 : f32
    %219 = vector.broadcast %cst_97 : f32 to vector<2x512xf32>
    %220 = arith.addf %219, %218 : vector<2x512xf32>
    %221 = arith.divf %219, %220 : vector<2x512xf32>
    %222 = vector.extract_strided_slice %215 {offsets = [0, 512], sizes = [2, 512], strides = [1, 1]} : vector<2x2048xf32> to vector<2x512xf32>
    %223 = arith.negf %222 : vector<2x512xf32>
    %224 = math.exp %223 : vector<2x512xf32>
    %cst_98 = arith.constant 1.000000e+00 : f32
    %225 = vector.broadcast %cst_98 : f32 to vector<2x512xf32>
    %226 = arith.addf %225, %224 : vector<2x512xf32>
    %227 = arith.divf %225, %226 : vector<2x512xf32>
    %228 = vector.extract_strided_slice %215 {offsets = [0, 1024], sizes = [2, 512], strides = [1, 1]} : vector<2x2048xf32> to vector<2x512xf32>
    %229 = math.tanh %228 : vector<2x512xf32>
    %230 = vector.extract_strided_slice %215 {offsets = [0, 1536], sizes = [2, 512], strides = [1, 1]} : vector<2x2048xf32> to vector<2x512xf32>
    %231 = arith.negf %230 : vector<2x512xf32>
    %232 = math.exp %231 : vector<2x512xf32>
    %cst_99 = arith.constant 1.000000e+00 : f32
    %233 = vector.broadcast %cst_99 : f32 to vector<2x512xf32>
    %234 = arith.addf %233, %232 : vector<2x512xf32>
    %235 = arith.divf %233, %234 : vector<2x512xf32>
    %236 = arith.mulf %227, %209 : vector<2x512xf32>
    %237 = arith.mulf %221, %229 : vector<2x512xf32>
    %238 = arith.addf %236, %237 : vector<2x512xf32>
    %239 = math.tanh %238 : vector<2x512xf32>
    %240 = arith.mulf %235, %239 : vector<2x512xf32>
    %241 = vector.extract_strided_slice %15 {offsets = [6, 0], sizes = [2, 2048], strides = [1, 1]} : vector<16x2048xf32> to vector<2x2048xf32>
    %242 = arith.truncf %240 : vector<2x512xf32> to vector<2x512xbf16>
    %cst_100 = arith.constant dense<0.000000e+00> : vector<2x2048xf32>
    %243 = tpu.matmul %242, %151, %cst_100 {dimension_numbers = #tpu.dot_dimension_numbers<[1], [0], [0], [1], [0, 0, 1, 1], [], []>} : vector<2x512xbf16>, vector<512x2048xbf16>, vector<2x2048xf32> -> vector<2x2048xf32>
    %244 = arith.addf %241, %243 : vector<2x2048xf32>
    %245 = vector.extract_strided_slice %244 {offsets = [0, 0], sizes = [2, 512], strides = [1, 1]} : vector<2x2048xf32> to vector<2x512xf32>
    %246 = arith.negf %245 : vector<2x512xf32>
    %247 = math.exp %246 : vector<2x512xf32>
    %cst_101 = arith.constant 1.000000e+00 : f32
    %248 = vector.broadcast %cst_101 : f32 to vector<2x512xf32>
    %249 = arith.addf %248, %247 : vector<2x512xf32>
    %250 = arith.divf %248, %249 : vector<2x512xf32>
    %251 = vector.extract_strided_slice %244 {offsets = [0, 512], sizes = [2, 512], strides = [1, 1]} : vector<2x2048xf32> to vector<2x512xf32>
    %252 = arith.negf %251 : vector<2x512xf32>
    %253 = math.exp %252 : vector<2x512xf32>
    %cst_102 = arith.constant 1.000000e+00 : f32
    %254 = vector.broadcast %cst_102 : f32 to vector<2x512xf32>
    %255 = arith.addf %254, %253 : vector<2x512xf32>
    %256 = arith.divf %254, %255 : vector<2x512xf32>
    %257 = vector.extract_strided_slice %244 {offsets = [0, 1024], sizes = [2, 512], strides = [1, 1]} : vector<2x2048xf32> to vector<2x512xf32>
    %258 = math.tanh %257 : vector<2x512xf32>
    %259 = vector.extract_strided_slice %244 {offsets = [0, 1536], sizes = [2, 512], strides = [1, 1]} : vector<2x2048xf32> to vector<2x512xf32>
    %260 = arith.negf %259 : vector<2x512xf32>
    %261 = math.exp %260 : vector<2x512xf32>
    %cst_103 = arith.constant 1.000000e+00 : f32
    %262 = vector.broadcast %cst_103 : f32 to vector<2x512xf32>
    %263 = arith.addf %262, %261 : vector<2x512xf32>
    %264 = arith.divf %262, %263 : vector<2x512xf32>
    %265 = arith.mulf %256, %238 : vector<2x512xf32>
    %266 = arith.mulf %250, %258 : vector<2x512xf32>
    %267 = arith.addf %265, %266 : vector<2x512xf32>
    %268 = math.tanh %267 : vector<2x512xf32>
    %269 = arith.mulf %264, %268 : vector<2x512xf32>
    %270 = vector.extract_strided_slice %15 {offsets = [8, 0], sizes = [2, 2048], strides = [1, 1]} : vector<16x2048xf32> to vector<2x2048xf32>
    %271 = arith.truncf %269 : vector<2x512xf32> to vector<2x512xbf16>
    %cst_104 = arith.constant dense<0.000000e+00> : vector<2x2048xf32>
    %272 = tpu.matmul %271, %151, %cst_104 {dimension_numbers = #tpu.dot_dimension_numbers<[1], [0], [0], [1], [0, 0, 1, 1], [], []>} : vector<2x512xbf16>, vector<512x2048xbf16>, vector<2x2048xf32> -> vector<2x2048xf32>
    %273 = arith.addf %270, %272 : vector<2x2048xf32>
    %274 = vector.extract_strided_slice %273 {offsets = [0, 0], sizes = [2, 512], strides = [1, 1]} : vector<2x2048xf32> to vector<2x512xf32>
    %275 = arith.negf %274 : vector<2x512xf32>
    %276 = math.exp %275 : vector<2x512xf32>
    %cst_105 = arith.constant 1.000000e+00 : f32
    %277 = vector.broadcast %cst_105 : f32 to vector<2x512xf32>
    %278 = arith.addf %277, %276 : vector<2x512xf32>
    %279 = arith.divf %277, %278 : vector<2x512xf32>
    %280 = vector.extract_strided_slice %273 {offsets = [0, 512], sizes = [2, 512], strides = [1, 1]} : vector<2x2048xf32> to vector<2x512xf32>
    %281 = arith.negf %280 : vector<2x512xf32>
    %282 = math.exp %281 : vector<2x512xf32>
    %cst_106 = arith.constant 1.000000e+00 : f32
    %283 = vector.broadcast %cst_106 : f32 to vector<2x512xf32>
    %284 = arith.addf %283, %282 : vector<2x512xf32>
    %285 = arith.divf %283, %284 : vector<2x512xf32>
    %286 = vector.extract_strided_slice %273 {offsets = [0, 1024], sizes = [2, 512], strides = [1, 1]} : vector<2x2048xf32> to vector<2x512xf32>
    %287 = math.tanh %286 : vector<2x512xf32>
    %288 = vector.extract_strided_slice %273 {offsets = [0, 1536], sizes = [2, 512], strides = [1, 1]} : vector<2x2048xf32> to vector<2x512xf32>
    %289 = arith.negf %288 : vector<2x512xf32>
    %290 = math.exp %289 : vector<2x512xf32>
    %cst_107 = arith.constant 1.000000e+00 : f32
    %291 = vector.broadcast %cst_107 : f32 to vector<2x512xf32>
    %292 = arith.addf %291, %290 : vector<2x512xf32>
    %293 = arith.divf %291, %292 : vector<2x512xf32>
    %294 = arith.mulf %285, %267 : vector<2x512xf32>
    %295 = arith.mulf %279, %287 : vector<2x512xf32>
    %296 = arith.addf %294, %295 : vector<2x512xf32>
    %297 = math.tanh %296 : vector<2x512xf32>
    %298 = arith.mulf %293, %297 : vector<2x512xf32>
    %299 = vector.extract_strided_slice %15 {offsets = [10, 0], sizes = [2, 2048], strides = [1, 1]} : vector<16x2048xf32> to vector<2x2048xf32>
    %300 = arith.truncf %298 : vector<2x512xf32> to vector<2x512xbf16>
    %cst_108 = arith.constant dense<0.000000e+00> : vector<2x2048xf32>
    %301 = tpu.matmul %300, %151, %cst_108 {dimension_numbers = #tpu.dot_dimension_numbers<[1], [0], [0], [1], [0, 0, 1, 1], [], []>} : vector<2x512xbf16>, vector<512x2048xbf16>, vector<2x2048xf32> -> vector<2x2048xf32>
    %302 = arith.addf %299, %301 : vector<2x2048xf32>
    %303 = vector.extract_strided_slice %302 {offsets = [0, 0], sizes = [2, 512], strides = [1, 1]} : vector<2x2048xf32> to vector<2x512xf32>
    %304 = arith.negf %303 : vector<2x512xf32>
    %305 = math.exp %304 : vector<2x512xf32>
    %cst_109 = arith.constant 1.000000e+00 : f32
    %306 = vector.broadcast %cst_109 : f32 to vector<2x512xf32>
    %307 = arith.addf %306, %305 : vector<2x512xf32>
    %308 = arith.divf %306, %307 : vector<2x512xf32>
    %309 = vector.extract_strided_slice %302 {offsets = [0, 512], sizes = [2, 512], strides = [1, 1]} : vector<2x2048xf32> to vector<2x512xf32>
    %310 = arith.negf %309 : vector<2x512xf32>
    %311 = math.exp %310 : vector<2x512xf32>
    %cst_110 = arith.constant 1.000000e+00 : f32
    %312 = vector.broadcast %cst_110 : f32 to vector<2x512xf32>
    %313 = arith.addf %312, %311 : vector<2x512xf32>
    %314 = arith.divf %312, %313 : vector<2x512xf32>
    %315 = vector.extract_strided_slice %302 {offsets = [0, 1024], sizes = [2, 512], strides = [1, 1]} : vector<2x2048xf32> to vector<2x512xf32>
    %316 = math.tanh %315 : vector<2x512xf32>
    %317 = vector.extract_strided_slice %302 {offsets = [0, 1536], sizes = [2, 512], strides = [1, 1]} : vector<2x2048xf32> to vector<2x512xf32>
    %318 = arith.negf %317 : vector<2x512xf32>
    %319 = math.exp %318 : vector<2x512xf32>
    %cst_111 = arith.constant 1.000000e+00 : f32
    %320 = vector.broadcast %cst_111 : f32 to vector<2x512xf32>
    %321 = arith.addf %320, %319 : vector<2x512xf32>
    %322 = arith.divf %320, %321 : vector<2x512xf32>
    %323 = arith.mulf %314, %296 : vector<2x512xf32>
    %324 = arith.mulf %308, %316 : vector<2x512xf32>
    %325 = arith.addf %323, %324 : vector<2x512xf32>
    %326 = math.tanh %325 : vector<2x512xf32>
    %327 = arith.mulf %322, %326 : vector<2x512xf32>
    %328 = vector.extract_strided_slice %15 {offsets = [12, 0], sizes = [2, 2048], strides = [1, 1]} : vector<16x2048xf32> to vector<2x2048xf32>
    %329 = arith.truncf %327 : vector<2x512xf32> to vector<2x512xbf16>
    %cst_112 = arith.constant dense<0.000000e+00> : vector<2x2048xf32>
    %330 = tpu.matmul %329, %151, %cst_112 {dimension_numbers = #tpu.dot_dimension_numbers<[1], [0], [0], [1], [0, 0, 1, 1], [], []>} : vector<2x512xbf16>, vector<512x2048xbf16>, vector<2x2048xf32> -> vector<2x2048xf32>
    %331 = arith.addf %328, %330 : vector<2x2048xf32>
    %332 = vector.extract_strided_slice %331 {offsets = [0, 0], sizes = [2, 512], strides = [1, 1]} : vector<2x2048xf32> to vector<2x512xf32>
    %333 = arith.negf %332 : vector<2x512xf32>
    %334 = math.exp %333 : vector<2x512xf32>
    %cst_113 = arith.constant 1.000000e+00 : f32
    %335 = vector.broadcast %cst_113 : f32 to vector<2x512xf32>
    %336 = arith.addf %335, %334 : vector<2x512xf32>
    %337 = arith.divf %335, %336 : vector<2x512xf32>
    %338 = vector.extract_strided_slice %331 {offsets = [0, 512], sizes = [2, 512], strides = [1, 1]} : vector<2x2048xf32> to vector<2x512xf32>
    %339 = arith.negf %338 : vector<2x512xf32>
    %340 = math.exp %339 : vector<2x512xf32>
    %cst_114 = arith.constant 1.000000e+00 : f32
    %341 = vector.broadcast %cst_114 : f32 to vector<2x512xf32>
    %342 = arith.addf %341, %340 : vector<2x512xf32>
    %343 = arith.divf %341, %342 : vector<2x512xf32>
    %344 = vector.extract_strided_slice %331 {offsets = [0, 1024], sizes = [2, 512], strides = [1, 1]} : vector<2x2048xf32> to vector<2x512xf32>
    %345 = math.tanh %344 : vector<2x512xf32>
    %346 = vector.extract_strided_slice %331 {offsets = [0, 1536], sizes = [2, 512], strides = [1, 1]} : vector<2x2048xf32> to vector<2x512xf32>
    %347 = arith.negf %346 : vector<2x512xf32>
    %348 = math.exp %347 : vector<2x512xf32>
    %cst_115 = arith.constant 1.000000e+00 : f32
    %349 = vector.broadcast %cst_115 : f32 to vector<2x512xf32>
    %350 = arith.addf %349, %348 : vector<2x512xf32>
    %351 = arith.divf %349, %350 : vector<2x512xf32>
    %352 = arith.mulf %343, %325 : vector<2x512xf32>
    %353 = arith.mulf %337, %345 : vector<2x512xf32>
    %354 = arith.addf %352, %353 : vector<2x512xf32>
    %355 = math.tanh %354 : vector<2x512xf32>
    %356 = arith.mulf %351, %355 : vector<2x512xf32>
    %357 = vector.extract_strided_slice %15 {offsets = [14, 0], sizes = [2, 2048], strides = [1, 1]} : vector<16x2048xf32> to vector<2x2048xf32>
    %358 = arith.truncf %356 : vector<2x512xf32> to vector<2x512xbf16>
    %cst_116 = arith.constant dense<0.000000e+00> : vector<2x2048xf32>
    %359 = tpu.matmul %358, %151, %cst_116 {dimension_numbers = #tpu.dot_dimension_numbers<[1], [0], [0], [1], [0, 0, 1, 1], [], []>} : vector<2x512xbf16>, vector<512x2048xbf16>, vector<2x2048xf32> -> vector<2x2048xf32>
    %360 = arith.addf %357, %359 : vector<2x2048xf32>
    %361 = vector.extract_strided_slice %360 {offsets = [0, 0], sizes = [2, 512], strides = [1, 1]} : vector<2x2048xf32> to vector<2x512xf32>
    %362 = arith.negf %361 : vector<2x512xf32>
    %363 = math.exp %362 : vector<2x512xf32>
    %cst_117 = arith.constant 1.000000e+00 : f32
    %364 = vector.broadcast %cst_117 : f32 to vector<2x512xf32>
    %365 = arith.addf %364, %363 : vector<2x512xf32>
    %366 = arith.divf %364, %365 : vector<2x512xf32>
    %367 = vector.extract_strided_slice %360 {offsets = [0, 512], sizes = [2, 512], strides = [1, 1]} : vector<2x2048xf32> to vector<2x512xf32>
    %368 = arith.negf %367 : vector<2x512xf32>
    %369 = math.exp %368 : vector<2x512xf32>
    %cst_118 = arith.constant 1.000000e+00 : f32
    %370 = vector.broadcast %cst_118 : f32 to vector<2x512xf32>
    %371 = arith.addf %370, %369 : vector<2x512xf32>
    %372 = arith.divf %370, %371 : vector<2x512xf32>
    %373 = vector.extract_strided_slice %360 {offsets = [0, 1024], sizes = [2, 512], strides = [1, 1]} : vector<2x2048xf32> to vector<2x512xf32>
    %374 = math.tanh %373 : vector<2x512xf32>
    %375 = vector.extract_strided_slice %360 {offsets = [0, 1536], sizes = [2, 512], strides = [1, 1]} : vector<2x2048xf32> to vector<2x512xf32>
    %376 = arith.negf %375 : vector<2x512xf32>
    %377 = math.exp %376 : vector<2x512xf32>
    %cst_119 = arith.constant 1.000000e+00 : f32
    %378 = vector.broadcast %cst_119 : f32 to vector<2x512xf32>
    %379 = arith.addf %378, %377 : vector<2x512xf32>
    %380 = arith.divf %378, %379 : vector<2x512xf32>
    %381 = arith.mulf %372, %354 : vector<2x512xf32>
    %382 = arith.mulf %366, %374 : vector<2x512xf32>
    %383 = arith.addf %381, %382 : vector<2x512xf32>
    %384 = math.tanh %383 : vector<2x512xf32>
    %385 = arith.mulf %380, %384 : vector<2x512xf32>
    %386 = tpu.concatenate %79, %112, %150, %385 in 1 : vector<2x128xf32>, vector<2x128xf32>, vector<2x128xf32>, vector<2x512xf32> -> vector<2x896xf32>
    %387 = arith.truncf %386 : vector<2x896xf32> to vector<2x896xbf16>
    %c0_120 = arith.constant 0 : index
    %c0_121 = arith.constant 0 : index
    %388 = vector.load %arg14[%c0_120, %c0_121] : memref<896x128xbf16, #tpu.memory_space<vmem>>, vector<896x128xbf16>
    %cst_122 = arith.constant dense<0.000000e+00> : vector<2x128xf32>
    %389 = tpu.matmul %387, %388, %cst_122 {dimension_numbers = #tpu.dot_dimension_numbers<[1], [0], [0], [1], [0, 0, 1, 1], [], []>} : vector<2x896xbf16>, vector<896x128xbf16>, vector<2x128xf32> -> vector<2x128xf32>
    %c0_123 = arith.constant 0 : index
    %c0_124 = arith.constant 0 : index
    %390 = vector.load %arg15[%c0_123, %c0_124] : memref<1x128xf32, #tpu.memory_space<vmem>>, vector<1x128xf32>
    %391 = vector.broadcast %390 : vector<1x128xf32> to vector<2x128xf32>
    %392 = arith.addf %389, %391 : vector<2x128xf32>
    %c0_125 = arith.constant 0 : index
    %c0_126 = arith.constant 0 : index
    %393 = vector.load %arg16[%c0_125, %c0_126] : memref<128x2xf32, #tpu.memory_space<vmem>>, vector<128x2xf32>
    %cst_127 = arith.constant dense<0.000000e+00> : vector<2x2xf32>
    %394 = tpu.matmul %392, %393, %cst_127 {dimension_numbers = #tpu.dot_dimension_numbers<[1], [0], [0], [1], [0, 0, 1, 1], [], []>} : vector<2x128xf32>, vector<128x2xf32>, vector<2x2xf32> -> vector<2x2xf32>
    %c0_128 = arith.constant 0 : index
    %c0_129 = arith.constant 0 : index
    %395 = vector.load %arg17[%c0_128, %c0_129] : memref<1x2xf32, #tpu.memory_space<vmem>>, vector<1x2xf32>
    %396 = vector.broadcast %395 : vector<1x2xf32> to vector<2x2xf32>
    %397 = arith.addf %394, %396 : vector<2x2xf32>
    %cst_130 = arith.constant dense<0xFF800000> : vector<2xf32>
    %398 = vector.multi_reduction <maximumf>, %397, %cst_130 [1] : vector<2x2xf32> to vector<2xf32>
    %399 = vector.shape_cast %398 : vector<2xf32> to vector<2x1xf32>
    %400 = vector.broadcast %399 : vector<2x1xf32> to vector<2x2xf32>
    %401 = arith.subf %397, %400 : vector<2x2xf32>
    %402 = math.exp %401 : vector<2x2xf32>
    %cst_131 = arith.constant dense<0.000000e+00> : vector<2xf32>
    %403 = vector.multi_reduction <add>, %402, %cst_131 [1] : vector<2x2xf32> to vector<2xf32>
    %404 = vector.shape_cast %403 : vector<2xf32> to vector<2x1xf32>
    %405 = vector.broadcast %404 : vector<2x1xf32> to vector<2x2xf32>
    %406 = arith.divf %402, %405 : vector<2x2xf32>
    %c0_132 = arith.constant 0 : index
    %c0_133 = arith.constant 0 : index
    %407 = vector.load %arg18[%c0_132, %c0_133] : memref<2x2xf32, #tpu.memory_space<vmem>>, vector<2x2xf32>
    tpu.vector_store %arg18[%c0_132, %c0_133], %406 {strides = array<i32>} : memref<2x2xf32, #tpu.memory_space<vmem>>, vector<2x2xf32>,
    return
  }
  func.func @transform_0(%arg0: i32) -> (i32, i32) {
    %c0_i32 = arith.constant 0 : i32
    %c0_i32_0 = arith.constant 0 : i32
    %c0_i32_1 = arith.constant 0 : i32
    return %c0_i32, %c0_i32_0 : i32, i32
  }
  func.func @transform_1(%arg0: i32) -> (i32, i32) {
    %c0_i32 = arith.constant 0 : i32
    %c0_i32_0 = arith.constant 0 : i32
    %c0_i32_1 = arith.constant 0 : i32
    return %c0_i32, %c0_i32_0 : i32, i32
  }
  func.func @transform_2(%arg0: i32) -> (i32, i32) {
    %c0_i32 = arith.constant 0 : i32
    %c0_i32_0 = arith.constant 0 : i32
    %c0_i32_1 = arith.constant 0 : i32
    return %c0_i32, %c0_i32_0 : i32, i32
  }
  func.func @transform_3(%arg0: i32) -> (i32, i32) {
    %c0_i32 = arith.constant 0 : i32
    %c0_i32_0 = arith.constant 0 : i32
    %c0_i32_1 = arith.constant 0 : i32
    return %c0_i32, %c0_i32_0 : i32, i32
  }
  func.func @transform_4(%arg0: i32) -> (i32, i32, i32) {
    %c0_i32 = arith.constant 0 : i32
    %c0_i32_0 = arith.constant 0 : i32
    %c0_i32_1 = arith.constant 0 : i32
    %c0_i32_2 = arith.constant 0 : i32
    return %c0_i32, %c0_i32_0, %c0_i32_1 : i32, i32, i32
  }
  func.func @transform_5(%arg0: i32) -> (i32, i32) {
    %c0_i32 = arith.constant 0 : i32
    %c0_i32_0 = arith.constant 0 : i32
    %c0_i32_1 = arith.constant 0 : i32
    return %c0_i32, %c0_i32_0 : i32, i32
  }
  func.func @transform_6(%arg0: i32) -> (i32, i32, i32) {
    %c0_i32 = arith.constant 0 : i32
    %c0_i32_0 = arith.constant 0 : i32
    %c0_i32_1 = arith.constant 0 : i32
    %c0_i32_2 = arith.constant 0 : i32
    return %c0_i32, %c0_i32_0, %c0_i32_1 : i32, i32, i32
  }
  func.func @transform_7(%arg0: i32) -> (i32, i32) {
    %c0_i32 = arith.constant 0 : i32
    %c0_i32_0 = arith.constant 0 : i32
    %c0_i32_1 = arith.constant 0 : i32
    return %c0_i32, %c0_i32_0 : i32, i32
  }
  func.func @transform_8(%arg0: i32) -> (i32, i32, i32) {
    %c0_i32 = arith.constant 0 : i32
    %c0_i32_0 = arith.constant 0 : i32
    %c0_i32_1 = arith.constant 0 : i32
    %c0_i32_2 = arith.constant 0 : i32
    return %c0_i32, %c0_i32_0, %c0_i32_1 : i32, i32, i32
  }
  func.func @transform_9(%arg0: i32) -> (i32, i32) {
    %c0_i32 = arith.constant 0 : i32
    %c0_i32_0 = arith.constant 0 : i32
    %c0_i32_1 = arith.constant 0 : i32
    return %c0_i32, %c0_i32_0 : i32, i32
  }
  func.func @transform_10(%arg0: i32) -> (i32, i32) {
    %c0_i32 = arith.constant 0 : i32
    %c0_i32_0 = arith.constant 0 : i32
    %c0_i32_1 = arith.constant 0 : i32
    return %c0_i32, %c0_i32_0 : i32, i32
  }
  func.func @transform_12(%arg0: i32) -> (i32, i32) {
    %c0_i32 = arith.constant 0 : i32
    %c0_i32_0 = arith.constant 0 : i32
    %c0_i32_1 = arith.constant 0 : i32
    return %c0_i32, %c0_i32_0 : i32, i32
  }
  func.func @transform_13(%arg0: i32) -> (i32, i32) {
    %c0_i32 = arith.constant 0 : i32
    %c0_i32_0 = arith.constant 0 : i32
    %c0_i32_1 = arith.constant 0 : i32
    return %c0_i32, %c0_i32_0 : i32, i32
  }
  func.func @transform_14(%arg0: i32) -> (i32, i32) {
    %c0_i32 = arith.constant 0 : i32
    %c0_i32_0 = arith.constant 0 : i32
    %c0_i32_1 = arith.constant 0 : i32
    return %c0_i32, %c0_i32_0 : i32, i32
  }
  func.func @transform_15(%arg0: i32) -> (i32, i32) {
    %c0_i32 = arith.constant 0 : i32
    %c0_i32_0 = arith.constant 0 : i32
    %c0_i32_1 = arith.constant 0 : i32
    return %c0_i32, %c0_i32_0 : i32, i32
  }
  func.func @transform_16(%arg0: i32) -> (i32, i32) {
    %c0_i32 = arith.constant 0 : i32
    %c0_i32_0 = arith.constant 0 : i32
    %c0_i32_1 = arith.constant 0 : i32
    return %c0_i32, %c0_i32_0 : i32, i32
  }
  func.func @transform_17(%arg0: i32) -> (i32, i32) {
    %c0_i32 = arith.constant 0 : i32
    %c0_i32_0 = arith.constant 0 : i32
    %c0_i32_1 = arith.constant 0 : i32
    return %c0_i32, %c0_i32_0 : i32, i32
  }
}

</mosaic_0001>

<llo_original>
// kernel: tpu_custom_call.1
$region0: #{tpu_custom_call.1}
  #allocation0 [shape = 'u32[]', space=smem, size = 0x4, offset = 0x4, fixed_abs, tag = 'smem constant byte address 0x4 - core index']
  #allocation1 [shape = 'u32[144,128]{1,0:T(1,128)}', space=vmem, size = 0x12000, scoped, tag = 'internal scratch']
  #allocation2 [shape = 'bf16[512,2048]{1,0:T(16,128)(2,1)}', space=vmem, size = 0x200000, scoped, tag = 'scratch operand']
  #allocation3 [shape = 's32[1]{0}', space=sflag, size = 0x4, scoped, tag = 'scratch operand']
  #allocation29 [shape = 's32[]', space=sflag, size = 0x4, offset = 0, fixed_abs, tag = 'sflag constant byte address 0x0 - dummy sync flag']
  %s0 = inlined_call_operand.hbm [shape: f32[16,32], index: 0, kind: input, shape index: {}]
  %s1 = inlined_call_operand.hbm [shape: f32[16,32], index: 1, kind: input, shape index: {}]
  %s2 = inlined_call_operand.hbm [shape: f32[32,384], index: 2, kind: input, shape index: {}]
  %s3 = inlined_call_operand.hbm [shape: f32[1,384], index: 3, kind: input, shape index: {}]
  %s4 = inlined_call_operand.hbm [shape: bf16[3,32,128], index: 4, kind: input, shape index: {}]
  %s5 = inlined_call_operand.hbm [shape: f32[1,128], index: 5, kind: input, shape index: {}]
  %s6 = inlined_call_operand.hbm [shape: bf16[4,32,128], index: 6, kind: input, shape index: {}]
  %s7 = inlined_call_operand.hbm [shape: f32[1,128], index: 7, kind: input, shape index: {}]
  %s8 = inlined_call_operand.hbm [shape: bf16[5,32,128], index: 8, kind: input, shape index: {}]
  %s9 = inlined_call_operand.hbm [shape: f32[1,128], index: 9, kind: input, shape index: {}]
  %s10 = inlined_call_operand.hbm [shape: bf16[32,2048], index: 10, kind: input, shape index: {}]
  %s11 = inlined_call_operand.hbm [shape: bf16[512,2048], index: 11, kind: input, shape index: {}]
  %s12 = inlined_call_operand.hbm [shape: f32[1,2048], index: 12, kind: input, shape index: {}]
  %s13 = inlined_call_operand.hbm [shape: bf16[896,128], index: 13, kind: input, shape index: {}]
  %s14 = inlined_call_operand.hbm [shape: f32[1,128], index: 14, kind: input, shape index: {}]
  %s15 = inlined_call_operand.vmem [shape: f32[128,2], index: 15, kind: input, shape index: {}]
  %s16 = inlined_call_operand.hbm [shape: f32[1,2], index: 16, kind: input, shape index: {}]
  %s17 = inlined_call_operand.hbm [shape: f32[2,2], index: 17, kind: output, shape index: {}]
  %s18 = sld [smem:[#allocation0]]
  $region134: #{tpu_custom_call.1} parent=0
    _
  %s20 = ssub.s32 1, %s18
  %s21 = scalar_select 0, %s20, %s18
  $region1: #{tpu_custom_call.1} parent=0
    #allocation4 [shape = 'u8[8192]{0}', space=vmem, size = 0x2000, scoped, tag = 'input window, operand 0, single buffered']
    #allocation5 [shape = 's32[1]{0}', space=sflag, size = 0x4, scoped, tag = 'scoped memory for tpu_custom_call.1']
    #allocation6 [shape = 's32[1]{0}', space=sflag, size = 0x4, scoped, tag = 'scoped memory for tpu_custom_call.1']
    #allocation7 [shape = 'u8[8192]{0}', space=vmem, size = 0x2000, scoped, tag = 'input window, operand 1, single buffered']
    #allocation8 [shape = 's32[1]{0}', space=sflag, size = 0x4, scoped, tag = 'scoped memory for tpu_custom_call.1']
    #allocation9 [shape = 'u8[49152]{0}', space=vmem, size = 0xc000, scoped, tag = 'input window, operand 2, single buffered']
    #allocation10 [shape = 'u8[1536]{0}', space=vmem, size = 0x800, scoped, tag = 'input window, operand 3, single buffered']
    #allocation11 [shape = 's32[1]{0}', space=sflag, size = 0x4, scoped, tag = 'scoped memory for tpu_custom_call.1']
    #allocation12 [shape = 'u8[24576]{0}', space=vmem, size = 0x6000, scoped, tag = 'input window, operand 4, single buffered']
    #allocation13 [shape = 'u8[512]{0}', space=vmem, size = 0x400, scoped, tag = 'input window, operand 5, single buffered']
    #allocation14 [shape = 's32[1]{0}', space=sflag, size = 0x4, scoped, tag = 'scoped memory for tpu_custom_call.1']
    #allocation15 [shape = 'u8[32768]{0}', space=vmem, size = 0x8000, scoped, tag = 'input window, operand 6, single buffered']
    #allocation16 [shape = 'u8[512]{0}', space=vmem, size = 0x400, scoped, tag = 'input window, operand 7, single buffered']
    #allocation17 [shape = 's32[1]{0}', space=sflag, size = 0x4, scoped, tag = 'scoped memory for tpu_custom_call.1']
    #allocation18 [shape = 'u8[40960]{0}', space=vmem, size = 0xa000, scoped, tag = 'input window, operand 8, single buffered']
    #allocation19 [shape = 'u8[512]{0}', space=vmem, size = 0x400, scoped, tag = 'input window, operand 9, single buffered']
    #allocation20 [shape = 's32[1]{0}', space=sflag, size = 0x4, scoped, tag = 'scoped memory for tpu_custom_call.1']
    #allocation21 [shape = 'u8[131072]{0}', space=vmem, size = 0x20000, scoped, tag = 'input window, operand 10, single buffered']
    #allocation22 [shape = 'u8[8192]{0}', space=vmem, size = 0x2000, scoped, tag = 'input window, operand 12, single buffered']
    #allocation23 [shape = 's32[1]{0}', space=sflag, size = 0x4, scoped, tag = 'scoped memory for tpu_custom_call.1']
    #allocation24 [shape = 'u8[229376]{0}', space=vmem, size = 0x38000, scoped, tag = 'input window, operand 13, single buffered']
    #allocation25 [shape = 'u8[512]{0}', space=vmem, size = 0x400, scoped, tag = 'input window, operand 14, single buffered']
    #allocation26 [shape = 's32[1]{0}', space=sflag, size = 0x4, scoped, tag = 'scoped memory for tpu_custom_call.1']
    #allocation27 [shape = 'u8[512]{0}', space=vmem, size = 0x400, scoped, tag = 'input window, operand 16, single buffered']
    #allocation28 [shape = 'u8[1024]{0}', space=vmem, size = 0x400, scoped, tag = 'output window, operand 0, single buffered']
    #allocation30 [shape = 'u32[9]{0}', space=smem, size = 0x24, scoped, tag = 'DMA stride descriptor']
    %22 = vsyncpa [#allocation5], 0
    %23 = vsyncpa [#allocation8], 0
    %24 = vsyncpa [#allocation11], 0
    %25 = vsyncpa [#allocation14], 0
    %26 = vsyncpa [#allocation17], 0
    %27 = vsyncpa [#allocation20], 0
    %28 = vsyncpa [#allocation23], 0
    %29 = vsyncpa [#allocation26], 0
    %30 = vsyncpa [#allocation6], 0
    // Predicated region
    $region2: #{tpu_custom_call.1} parent=1 // pred_check
      _
    $region3: #{tpu_custom_call.1} parent=1 // pred_check_branch
      %32 = sbr.rel (0) target = $region5
    $region4: #{tpu_custom_call.1} parent=1 // pred_region
      %s34 = ssub.s32 256, 256
      %35 = vsyncadd [#allocation5], %s34
      %s36 = sshll.u32 [#allocation4], 4
      %s37 = int_to_ptr.vmem [resolvable:$true] %s36
      %42 = dma.hbm_to_vmem [thread:$0]  %s0, 256, %s37, [#allocation5], 128, 128, 8
    $region5: #{tpu_custom_call.1} parent=1 // pred_fallthru
      _
    // Predicated region
    $region6: #{tpu_custom_call.1} parent=1 // pred_check
      _
    $region7: #{tpu_custom_call.1} parent=1 // pred_check_branch
      %44 = sbr.rel (0) target = $region9
    $region8: #{tpu_custom_call.1} parent=1 // pred_region
      %s46 = ssub.s32 256, 256
      %47 = vsyncadd [#allocation8], %s46
      %s48 = sshll.u32 [#allocation7], 4
      %s49 = int_to_ptr.vmem [resolvable:$true] %s48
      %54 = dma.hbm_to_vmem [thread:$0]  %s1, 256, %s49, [#allocation8], 128, 128, 8
    $region9: #{tpu_custom_call.1} parent=1 // pred_fallthru
      _
    // Predicated region
    $region10: #{tpu_custom_call.1} parent=1 // pred_check
      _
    $region11: #{tpu_custom_call.1} parent=1 // pred_check_branch
      %56 = sbr.rel (0) target = $region13
    $region12: #{tpu_custom_call.1} parent=1 // pred_region
      %s58 = ssub.s32 1536, 1536
      %59 = vsyncadd [#allocation8], %s58
      %s60 = sshll.u32 [#allocation9], 4
      %s61 = int_to_ptr.vmem [resolvable:$true] %s60
      %66 = dma.hbm_to_vmem [thread:$0]  %s2, 1536, %s61, [#allocation8], 384, 384, 24
    $region13: #{tpu_custom_call.1} parent=1 // pred_fallthru
      _
    // Predicated region
    $region14: #{tpu_custom_call.1} parent=1 // pred_check
      _
    $region15: #{tpu_custom_call.1} parent=1 // pred_check_branch
      %68 = sbr.rel (0) target = $region17
    $region16: #{tpu_custom_call.1} parent=1 // pred_region
      %s70 = ssub.s32 48, 48
      %71 = vsyncadd [#allocation11], %s70
      %s73 = sshll.u32 [#allocation10], 4
      %s74 = int_to_ptr.vmem [resolvable:$true] %s73
      %76 = dma.hbm_to_vmem [thread:$0]  %s3, 48, %s74, [#allocation11]
    $region17: #{tpu_custom_call.1} parent=1 // pred_fallthru
      _
    // Predicated region
    $region18: #{tpu_custom_call.1} parent=1 // pred_check
      _
    $region19: #{tpu_custom_call.1} parent=1 // pred_check_branch
      %78 = sbr.rel (0) target = $region21
    $region20: #{tpu_custom_call.1} parent=1 // pred_region
      %s80 = ssub.s32 768, 768
      %81 = vsyncadd [#allocation11], %s80
      %s82 = sshll.u32 [#allocation12], 4
      %s83 = int_to_ptr.vmem [resolvable:$true] %s82
      %88 = dma.hbm_to_vmem [thread:$0]  %s4, 768, %s83, [#allocation11], 64, 64, 4
    $region21: #{tpu_custom_call.1} parent=1 // pred_fallthru
      _
    // Predicated region
    $region22: #{tpu_custom_call.1} parent=1 // pred_check
      _
    $region23: #{tpu_custom_call.1} parent=1 // pred_check_branch
      %90 = sbr.rel (0) target = $region25
    $region24: #{tpu_custom_call.1} parent=1 // pred_region
      %s92 = ssub.s32 16, 16
      %93 = vsyncadd [#allocation14], %s92
      %s95 = sshll.u32 [#allocation13], 4
      %s96 = int_to_ptr.vmem [resolvable:$true] %s95
      %98 = dma.hbm_to_vmem [thread:$0]  %s5, 16, %s96, [#allocation14]
    $region25: #{tpu_custom_call.1} parent=1 // pred_fallthru
      _
    // Predicated region
    $region26: #{tpu_custom_call.1} parent=1 // pred_check
      _
    $region27: #{tpu_custom_call.1} parent=1 // pred_check_branch
      %100 = sbr.rel (0) target = $region29
    $region28: #{tpu_custom_call.1} parent=1 // pred_region
      %s102 = ssub.s32 1024, 1024
      %103 = vsyncadd [#allocation14], %s102
      %s104 = sshll.u32 [#allocation15], 4
      %s105 = int_to_ptr.vmem [resolvable:$true] %s104
      %110 = dma.hbm_to_vmem [thread:$0]  %s6, 1024, %s105, [#allocation14], 64, 64, 4
    $region29: #{tpu_custom_call.1} parent=1 // pred_fallthru
      _
    // Predicated region
    $region30: #{tpu_custom_call.1} parent=1 // pred_check
      _
    $region31: #{tpu_custom_call.1} parent=1 // pred_check_branch
      %112 = sbr.rel (0) target = $region33
    $region32: #{tpu_custom_call.1} parent=1 // pred_region
      %s114 = ssub.s32 16, 16
      %115 = vsyncadd [#allocation17], %s114
      %s117 = sshll.u32 [#allocation16], 4
      %s118 = int_to_ptr.vmem [resolvable:$true] %s117
      %120 = dma.hbm_to_vmem [thread:$0]  %s7, 16, %s118, [#allocation17]
    $region33: #{tpu_custom_call.1} parent=1 // pred_fallthru
      _
    // Predicated region
    $region34: #{tpu_custom_call.1} parent=1 // pred_check
      _
    $region35: #{tpu_custom_call.1} parent=1 // pred_check_branch
      %122 = sbr.rel (0) target = $region37
    $region36: #{tpu_custom_call.1} parent=1 // pred_region
      %s124 = ssub.s32 1280, 1280
      %125 = vsyncadd [#allocation17], %s124
      %s126 = sshll.u32 [#allocation18], 4
      %s127 = int_to_ptr.vmem [resolvable:$true] %s126
      %132 = dma.hbm_to_vmem [thread:$0]  %s8, 1280, %s127, [#allocation17], 64, 64, 4
    $region37: #{tpu_custom_call.1} parent=1 // pred_fallthru
      _
    // Predicated region
    $region38: #{tpu_custom_call.1} parent=1 // pred_check
      _
    $region39: #{tpu_custom_call.1} parent=1 // pred_check_branch
      %134 = sbr.rel (0) target = $region41
    $region40: #{tpu_custom_call.1} parent=1 // pred_region
      %s136 = ssub.s32 16, 16
      %137 = vsyncadd [#allocation20], %s136
      %s139 = sshll.u32 [#allocation19], 4
      %s140 = int_to_ptr.vmem [resolvable:$true] %s139
      %142 = dma.hbm_to_vmem [thread:$0]  %s9, 16, %s140, [#allocation20]
    $region41: #{tpu_custom_call.1} parent=1 // pred_fallthru
      _
    // Predicated region
    $region42: #{tpu_custom_call.1} parent=1 // pred_check
      _
    $region43: #{tpu_custom_call.1} parent=1 // pred_check_branch
      %144 = sbr.rel (0) target = $region45
    $region44: #{tpu_custom_call.1} parent=1 // pred_region
      %s146 = ssub.s32 4096, 4096
      %147 = vsyncadd [#allocation20], %s146
      %s148 = sshll.u32 [#allocation21], 4
      %s149 = int_to_ptr.vmem [resolvable:$true] %s148
      %154 = dma.hbm_to_vmem [thread:$0]  %s10, 4096, %s149, [#allocation20], 1024, 1024, 64
    $region45: #{tpu_custom_call.1} parent=1 // pred_fallthru
      _
    // Predicated region
    $region46: #{tpu_custom_call.1} parent=1 // pred_check
      _
    $region47: #{tpu_custom_call.1} parent=1 // pred_check_branch
      %156 = sbr.rel (0) target = $region49
    $region48: #{tpu_custom_call.1} parent=1 // pred_region
      %s158 = ssub.s32 256, 256
      %159 = vsyncadd [#allocation23], %s158
      %s161 = sshll.u32 [#allocation22], 4
      %s162 = int_to_ptr.vmem [resolvable:$true] %s161
      %164 = dma.hbm_to_vmem [thread:$0]  %s12, 256, %s162, [#allocation23]
    $region49: #{tpu_custom_call.1} parent=1 // pred_fallthru
      _
    // Predicated region
    $region50: #{tpu_custom_call.1} parent=1 // pred_check
      _
    $region51: #{tpu_custom_call.1} parent=1 // pred_check_branch
      %166 = sbr.rel (0) target = $region53
    $region52: #{tpu_custom_call.1} parent=1 // pred_region
      %s168 = ssub.s32 7168, 7168
      %169 = vsyncadd [#allocation23], %s168
      %s170 = sshll.u32 [#allocation24], 4
      %s171 = int_to_ptr.vmem [resolvable:$true] %s170
      %176 = dma.hbm_to_vmem [thread:$0]  %s13, 7168, %s171, [#allocation23], 64, 64, 4
    $region53: #{tpu_custom_call.1} parent=1 // pred_fallthru
      _
    // Predicated region
    $region54: #{tpu_custom_call.1} parent=1 // pred_check
      _
    $region55: #{tpu_custom_call.1} parent=1 // pred_check_branch
      %178 = sbr.rel (0) target = $region57
    $region56: #{tpu_custom_call.1} parent=1 // pred_region
      %s180 = ssub.s32 16, 16
      %181 = vsyncadd [#allocation26], %s180
      %s183 = sshll.u32 [#allocation25], 4
      %s184 = int_to_ptr.vmem [resolvable:$true] %s183
      %186 = dma.hbm_to_vmem [thread:$0]  %s14, 16, %s184, [#allocation26]
    $region57: #{tpu_custom_call.1} parent=1 // pred_fallthru
      _
    // Predicated region
    $region58: #{tpu_custom_call.1} parent=1 // pred_check
      _
    $region59: #{tpu_custom_call.1} parent=1 // pred_check_branch
      %188 = sbr.rel (0) target = $region61
    $region60: #{tpu_custom_call.1} parent=1 // pred_region
      _
    $region61: #{tpu_custom_call.1} parent=1 // pred_fallthru
      _
    // Predicated region
    $region62: #{tpu_custom_call.1} parent=1 // pred_check
      _
    $region63: #{tpu_custom_call.1} parent=1 // pred_check_branch
      %190 = sbr.rel (0) target = $region65
    $region64: #{tpu_custom_call.1} parent=1 // pred_region
      %s192 = ssub.s32 16, 16
      %193 = vsyncadd [#allocation26], %s192
      %s195 = sshll.u32 [#allocation27], 4
      %s196 = int_to_ptr.vmem [resolvable:$true] %s195
      %198 = dma.hbm_to_vmem [thread:$0]  %s16, 16, %s196, [#allocation26]
    $region65: #{tpu_custom_call.1} parent=1 // pred_fallthru
      _
    // Predicated region
    $region66: #{tpu_custom_call.1} parent=1 // pred_check
      _
    $region67: #{tpu_custom_call.1} parent=1 // pred_check_branch
      %200 = sbr.rel (0) target = $region69
    $region68: #{tpu_custom_call.1} parent=1 // pred_region
      %201 = dma.done [#allocation5], 256
    $region69: #{tpu_custom_call.1} parent=1 // pred_fallthru
      _
    // Predicated region
    $region70: #{tpu_custom_call.1} parent=1 // pred_check
      _
    $region71: #{tpu_custom_call.1} parent=1 // pred_check_branch
      %203 = sbr.rel (0) target = $region73
    $region72: #{tpu_custom_call.1} parent=1 // pred_region
      %204 = dma.done [#allocation8], 256
    $region73: #{tpu_custom_call.1} parent=1 // pred_fallthru
      _
    // Predicated region
    $region74: #{tpu_custom_call.1} parent=1 // pred_check
      _
    $region75: #{tpu_custom_call.1} parent=1 // pred_check_branch
      %206 = sbr.rel (0) target = $region77
    $region76: #{tpu_custom_call.1} parent=1 // pred_region
      %207 = dma.done [#allocation8], 1536
    $region77: #{tpu_custom_call.1} parent=1 // pred_fallthru
      _
    // Predicated region
    $region78: #{tpu_custom_call.1} parent=1 // pred_check
      _
    $region79: #{tpu_custom_call.1} parent=1 // pred_check_branch
      %209 = sbr.rel (0) target = $region81
    $region80: #{tpu_custom_call.1} parent=1 // pred_region
      %210 = dma.done [#allocation11], 48
    $region81: #{tpu_custom_call.1} parent=1 // pred_fallthru
      _
    // Predicated region
    $region82: #{tpu_custom_call.1} parent=1 // pred_check
      _
    $region83: #{tpu_custom_call.1} parent=1 // pred_check_branch
      %212 = sbr.rel (0) target = $region85
    $region84: #{tpu_custom_call.1} parent=1 // pred_region
      %213 = dma.done [#allocation11], 768
    $region85: #{tpu_custom_call.1} parent=1 // pred_fallthru
      _
    // Predicated region
    $region86: #{tpu_custom_call.1} parent=1 // pred_check
      _
    $region87: #{tpu_custom_call.1} parent=1 // pred_check_branch
      %215 = sbr.rel (0) target = $region89
    $region88: #{tpu_custom_call.1} parent=1 // pred_region
      %216 = dma.done [#allocation14], 16
    $region89: #{tpu_custom_call.1} parent=1 // pred_fallthru
      _
    // Predicated region
    $region90: #{tpu_custom_call.1} parent=1 // pred_check
      _
    $region91: #{tpu_custom_call.1} parent=1 // pred_check_branch
      %218 = sbr.rel (0) target = $region93
    $region92: #{tpu_custom_call.1} parent=1 // pred_region
      %219 = dma.done [#allocation14], 1024
    $region93: #{tpu_custom_call.1} parent=1 // pred_fallthru
      _
    // Predicated region
    $region94: #{tpu_custom_call.1} parent=1 // pred_check
      _
    $region95: #{tpu_custom_call.1} parent=1 // pred_check_branch
      %221 = sbr.rel (0) target = $region97
    $region96: #{tpu_custom_call.1} parent=1 // pred_region
      %222 = dma.done [#allocation17], 16
    $region97: #{tpu_custom_call.1} parent=1 // pred_fallthru
      _
    // Predicated region
    $region98: #{tpu_custom_call.1} parent=1 // pred_check
      _
    $region99: #{tpu_custom_call.1} parent=1 // pred_check_branch
      %224 = sbr.rel (0) target = $region101
    $region100: #{tpu_custom_call.1} parent=1 // pred_region
      %225 = dma.done [#allocation17], 1280
    $region101: #{tpu_custom_call.1} parent=1 // pred_fallthru
      _
    // Predicated region
    $region102: #{tpu_custom_call.1} parent=1 // pred_check
      _
    $region103: #{tpu_custom_call.1} parent=1 // pred_check_branch
      %227 = sbr.rel (0) target = $region105
    $region104: #{tpu_custom_call.1} parent=1 // pred_region
      %228 = dma.done [#allocation20], 16
    $region105: #{tpu_custom_call.1} parent=1 // pred_fallthru
      _
    // Predicated region
    $region106: #{tpu_custom_call.1} parent=1 // pred_check
      _
    $region107: #{tpu_custom_call.1} parent=1 // pred_check_branch
      %230 = sbr.rel (0) target = $region109
    $region108: #{tpu_custom_call.1} parent=1 // pred_region
      %231 = dma.done [#allocation20], 4096
    $region109: #{tpu_custom_call.1} parent=1 // pred_fallthru
      _
    // Predicated region
    $region110: #{tpu_custom_call.1} parent=1 // pred_check
      _
    $region111: #{tpu_custom_call.1} parent=1 // pred_check_branch
      %233 = sbr.rel (0) target = $region113
    $region112: #{tpu_custom_call.1} parent=1 // pred_region
      %234 = dma.done [#allocation23], 256
    $region113: #{tpu_custom_call.1} parent=1 // pred_fallthru
      _
    // Predicated region
    $region114: #{tpu_custom_call.1} parent=1 // pred_check
      _
    $region115: #{tpu_custom_call.1} parent=1 // pred_check_branch
      %236 = sbr.rel (0) target = $region117
    $region116: #{tpu_custom_call.1} parent=1 // pred_region
      %237 = dma.done [#allocation23], 7168
    $region117: #{tpu_custom_call.1} parent=1 // pred_fallthru
      _
    // Predicated region
    $region118: #{tpu_custom_call.1} parent=1 // pred_check
      _
    $region119: #{tpu_custom_call.1} parent=1 // pred_check_branch
      %239 = sbr.rel (0) target = $region121
    $region120: #{tpu_custom_call.1} parent=1 // pred_region
      %240 = dma.done [#allocation26], 16
    $region121: #{tpu_custom_call.1} parent=1 // pred_fallthru
      _
    // Predicated region
    $region122: #{tpu_custom_call.1} parent=1 // pred_check
      _
    $region123: #{tpu_custom_call.1} parent=1 // pred_check_branch
      %242 = sbr.rel (0) target = $region125
    $region124: #{tpu_custom_call.1} parent=1 // pred_region
      %243 = dma.done [#allocation26], 16
    $region125: #{tpu_custom_call.1} parent=1 // pred_fallthru
      _
    %s246 = sshll.u32 1, 14
    %s247 = sxor.u32 4294967295, %s246
    %s249 = sld [smem:[#allocation0]]
    %s250 = sadd.s32 2, %s249
    %s252 = sshll.u32 7, 26
    %s253 = sxor.u32 4294967295, %s252
    %s254 = sand.u32 0, %s253
    %s255 = sshll.u32 %s250, 26
    %s256 = sor.u32 %s254, %s255
    %s257 = sshll.u32 [#allocation2], 4
    %s258 = int_to_ptr.vmem [resolvable:$true] %s257
    %261 = sst [smem:[#allocation30]] 2048
    %s262 = scalar_lea.smem [#allocation30], 1
    %263 = sst [smem:[%s262]] 2048
    %s264 = scalar_lea.smem [#allocation30], 2
    %265 = sst [smem:[%s264]] 16
    %s266 = scalar_lea.smem [#allocation30], 3
    %267 = sst [smem:[%s266]] 64
    %s268 = scalar_lea.smem [#allocation30], 4
    %269 = sst [smem:[%s268]] 128
    %s270 = scalar_lea.smem [#allocation30], 5
    %271 = sst [smem:[%s270]] 2
    %s272 = scalar_lea.smem [#allocation30], 6
    %273 = sst [smem:[%s272]] 1024
    %s274 = scalar_lea.smem [#allocation30], 7
    %275 = sst [smem:[%s274]] 64
    %s276 = scalar_lea.smem [#allocation30], 8
    %277 = sst [smem:[%s276]] 4
    %279 = dma.general %s11, 65536, %s258, [#allocation3], [#allocation29], [#allocation30], %s256, 0
    %v280 = vld [vmem:[#allocation4] sm:$0xff]
    %v281 = vld [vmem:[#allocation4 + $0x8] sm:$0xff]
    %v282 = vld [vmem:[#allocation7] sm:$0xff]
    %v283 = vld [vmem:[#allocation7 + $0x8] sm:$0xff]
    %v284 = vld [vmem:[#allocation9] sm:$0xff]
    %v285 = vld [vmem:[#allocation9 + $0x8] sm:$0xff]
    %v286 = vld [vmem:[#allocation9 + $0x10] sm:$0xff]
    %v287 = vld [vmem:[#allocation9 + $0x18] sm:$0xff]
    %v288 = vld [vmem:[#allocation9 + $0x20] sm:$0xff]
    %v289 = vld [vmem:[#allocation9 + $0x28] sm:$0xff]
    %v290 = vld [vmem:[#allocation9 + $0x30] sm:$0xff]
    %v291 = vld [vmem:[#allocation9 + $0x38] sm:$0xff]
    %v292 = vld [vmem:[#allocation9 + $0x40] sm:$0xff]
    %v293 = vld [vmem:[#allocation9 + $0x48] sm:$0xff]
    %v294 = vld [vmem:[#allocation9 + $0x50] sm:$0xff]
    %v295 = vld [vmem:[#allocation9 + $0x58] sm:$0xff]
    %v296 = vld [vmem:[#allocation10] sm:$0x7]
    %v298 = vlaneseq
    %v299 = vshrl.u32 %v298, 7
    %v300 = vsub.s32 0, %v299
    %v301 = vrot.slane %v296, %v300
    %v302 = vlaneseq
    %v303 = vshrl.u32 %v302, 7
    %v304 = vsub.s32 1, %v303
    %v305 = vrot.slane %v296, %v304
    %v306 = vlaneseq
    %v307 = vshrl.u32 %v306, 7
    %v308 = vsub.s32 2, %v307
    %v309 = vrot.slane %v296, %v308
    %vm313 = vcmask 261120
    %v315 = vsel %vm313, %v280, 0
    %v318 = vsel %vm313, %v281, 0
    %320 = vmatprep.subr.mxu0 %v285
    %321 = vmatpush1.msra.mxu0 %v284
    %322 = vmatprep.subr.mxu0 %v288
    %323 = vmatpush1.msra.mxu0 %v287
    %324 = vmatprep.subr.mxu0 %v291
    %325 = vmatpush1.msra.mxu0 %v290
    %326 = vmatprep.subr.mxu0 %v294
    %327 = vmatpush1.msra.mxu0 %v293
    %328 = vmatprep.subr.mxu0 0.0
    %329 = vmatpush1.msra.mxu0 0.0
    %330 = vmatprep.subr.mxu0 0.0
    %331 = vmatpush1.msra.mxu0 0.0
    %332 = vmatprep.subr.mxu0 0.0
    %333 = vmatpush1.msra.mxu0 0.0
    %334 = vmatprep.subr.mxu0 0.0
    %335 = vmatpush1.msra.mxu0 0.0
    %336 = vmatprep.subr.mxu0 0.0
    %337 = vmatpush1.msra.mxu0 0.0
    %338 = vmatprep.subr.mxu0 0.0
    %339 = vmatpush1.msra.mxu0 0.0
    %340 = vmatprep.subr.mxu0 0.0
    %341 = vmatpush1.msra.mxu0 0.0
    %342 = vmatprep.subr.mxu0 0.0
    %343 = vmatpush1.msra.mxu0 0.0
    %344 = vmatprep.subr.mxu0 0.0
    %345 = vmatpush1.msra.mxu0 0.0
    %346 = vmatprep.subr.mxu0 0.0
    %347 = vmatpush1.msra.mxu0 0.0
    %348 = vmatprep.subr.mxu0 0.0
    %349 = vmatpush1.msra.mxu0 0.0
    %350 = vmatprep.subr.mxu0 0.0
    %351 = vmatpush1.msra.mxu0 0.0
    %352 = vmatprep.subr.mxu0 0.0
    %353 = vmatpush1.msra.mxu0 0.0
    %354 = vmatprep.subr.mxu0 0.0
    %355 = vmatpush1.msra.mxu0 0.0
    %356 = vmatprep.subr.mxu0 0.0
    %357 = vmatpush1.msra.mxu0 0.0
    %358 = vmatprep.subr.mxu0 0.0
    %359 = vmatpush1.msra.mxu0 0.0
    %360 = vmatprep.subr.mxu0 0.0
    %361 = vmatpush1.msra.mxu0 0.0
    %362 = vmatprep.subr.mxu0 0.0
    %363 = vmatpush1.msra.mxu0 0.0
    %364 = vmatprep.subr.mxu0 0.0
    %365 = vmatpush1.msra.mxu0 0.0
    %366 = vmatprep.subr.mxu0 0.0
    %367 = vmatpush1.msra.mxu0 0.0
    %368 = vmatprep.subr.mxu0 0.0
    %369 = vmatpush1.msra.mxu0 0.0
    %370 = vmatprep.subr.mxu0 0.0
    %371 = vmatpush1.msra.mxu0 0.0
    %372 = vmatprep.subr.mxu0 0.0
    %373 = vmatpush1.msra.mxu0 0.0
    %374 = vmatprep.subr.mxu0 0.0
    %375 = vmatpush1.msra.mxu0 0.0
    %376 = vmatprep.subr.mxu0 0.0
    %377 = vmatpush1.msra.mxu0 0.0
    %378 = vmatprep.subr.mxu0 0.0
    %379 = vmatpush1.msra.mxu0 0.0
    %380 = vmatprep.subr.mxu0 0.0
    %381 = vmatpush1.msra.mxu0 0.0
    %382 = vmatprep.subr.mxu0 0.0
    %383 = vmatpush1.msra.mxu0 0.0
    %384 = vmatprep.mubr.f32.mxu0 0.0
    %385 = vmatmul.mubr.f32.gmra.mrb[0].mxu0 %v315
    %v386 = vpop.f32.mrb[0].mxu0
    %v387 = vadd.f32 %v301, %v386
    %v388 = vpop.f32.mrb[0].mxu0
    %v389 = vadd.f32 %v305, %v388
    %390 = vmatprep.mubr.f32.mxu0 0.0
    %391 = vmatmul.mubr.f32.gmra.mrb[0].mxu0 %v318
    %v392 = vpop.f32.mrb[0].mxu0
    %v393 = vadd.f32 %v301, %v392
    %v394 = vpop.f32.mrb[0].mxu0
    %v395 = vadd.f32 %v305, %v394
    %396 = vdwg.mxu0
    %397 = vmatprep.subr.mxu0 0.0
    %398 = vmatpush1.msra.mxu0 %v286
    %399 = vmatprep.subr.mxu0 0.0
    %400 = vmatpush1.msra.mxu0 %v289
    %401 = vmatprep.subr.mxu0 0.0
    %402 = vmatpush1.msra.mxu0 %v292
    %403 = vmatprep.subr.mxu0 0.0
    %404 = vmatpush1.msra.mxu0 %v295
    %405 = vmatprep.subr.mxu0 0.0
    %406 = vmatpush1.msra.mxu0 0.0
    %407 = vmatprep.subr.mxu0 0.0
    %408 = vmatpush1.msra.mxu0 0.0
    %409 = vmatprep.subr.mxu0 0.0
    %410 = vmatpush1.msra.mxu0 0.0
    %411 = vmatprep.subr.mxu0 0.0
    %412 = vmatpush1.msra.mxu0 0.0
    %413 = vmatprep.subr.mxu0 0.0
    %414 = vmatpush1.msra.mxu0 0.0
    %415 = vmatprep.subr.mxu0 0.0
    %416 = vmatpush1.msra.mxu0 0.0
    %417 = vmatprep.subr.mxu0 0.0
    %418 = vmatpush1.msra.mxu0 0.0
    %419 = vmatprep.subr.mxu0 0.0
    %420 = vmatpush1.msra.mxu0 0.0
    %421 = vmatprep.subr.mxu0 0.0
    %422 = vmatpush1.msra.mxu0 0.0
    %423 = vmatprep.subr.mxu0 0.0
    %424 = vmatpush1.msra.mxu0 0.0
    %425 = vmatprep.subr.mxu0 0.0
    %426 = vmatpush1.msra.mxu0 0.0
    %427 = vmatprep.subr.mxu0 0.0
    %428 = vmatpush1.msra.mxu0 0.0
    %429 = vmatprep.subr.mxu0 0.0
    %430 = vmatpush1.msra.mxu0 0.0
    %431 = vmatprep.subr.mxu0 0.0
    %432 = vmatpush1.msra.mxu0 0.0
    %433 = vmatprep.subr.mxu0 0.0
    %434 = vmatpush1.msra.mxu0 0.0
    %435 = vmatprep.subr.mxu0 0.0
    %436 = vmatpush1.msra.mxu0 0.0
    %437 = vmatprep.subr.mxu0 0.0
    %438 = vmatpush1.msra.mxu0 0.0
    %439 = vmatprep.subr.mxu0 0.0
    %440 = vmatpush1.msra.mxu0 0.0
    %441 = vmatprep.subr.mxu0 0.0
    %442 = vmatpush1.msra.mxu0 0.0
    %443 = vmatprep.subr.mxu0 0.0
    %444 = vmatpush1.msra.mxu0 0.0
    %445 = vmatprep.subr.mxu0 0.0
    %446 = vmatpush1.msra.mxu0 0.0
    %447 = vmatprep.subr.mxu0 0.0
    %448 = vmatpush1.msra.mxu0 0.0
    %449 = vmatprep.subr.mxu0 0.0
    %450 = vmatpush1.msra.mxu0 0.0
    %451 = vmatprep.subr.mxu0 0.0
    %452 = vmatpush1.msra.mxu0 0.0
    %453 = vmatprep.subr.mxu0 0.0
    %454 = vmatpush1.msra.mxu0 0.0
    %455 = vmatprep.subr.mxu0 0.0
    %456 = vmatpush1.msra.mxu0 0.0
    %457 = vmatprep.subr.mxu0 0.0
    %458 = vmatpush1.msra.mxu0 0.0
    %459 = vmatprep.subr.mxu0 0.0
    %460 = vmatpush1.msra.mxu0 0.0
    %461 = vmatprep.mubr.f32.mxu0 0.0
    %462 = vmatmul.mubr.f32.gmra.mrb[0].mxu0 %v315
    %v463 = vpop.f32.mrb[0].mxu0
    %v464 = vadd.f32 %v309, %v463
    %v465 = vpop.f32.mrb[0].mxu0
    %466 = vmatprep.mubr.f32.mxu0 0.0
    %467 = vmatmul.mubr.f32.gmra.mrb[0].mxu0 %v318
    %v468 = vpop.f32.mrb[0].mxu0
    %v469 = vadd.f32 %v309, %v468
    %v470 = vpop.f32.mrb[0].mxu0
    %471 = vdwg.mxu0
    %v472 = vpack.c.bf16 %v283, %v282
    %v473 = vld [vmem:[#allocation21] sm:$0xff]
    %v474 = vld [vmem:[#allocation21 + $0x8] sm:$0xff]
    %v475 = vld [vmem:[#allocation21 + $0x10] sm:$0xff]
    %v476 = vld [vmem:[#allocation21 + $0x18] sm:$0xff]
    %v477 = vld [vmem:[#allocation21 + $0x20] sm:$0xff]
    %v478 = vld [vmem:[#allocation21 + $0x28] sm:$0xff]
    %v479 = vld [vmem:[#allocation21 + $0x30] sm:$0xff]
    %v480 = vld [vmem:[#allocation21 + $0x38] sm:$0xff]
    %v481 = vld [vmem:[#allocation21 + $0x40] sm:$0xff]
    %v482 = vld [vmem:[#allocation21 + $0x48] sm:$0xff]
    %v483 = vld [vmem:[#allocation21 + $0x50] sm:$0xff]
    %v484 = vld [vmem:[#allocation21 + $0x58] sm:$0xff]
    %v485 = vld [vmem:[#allocation21 + $0x60] sm:$0xff]
    %v486 = vld [vmem:[#allocation21 + $0x68] sm:$0xff]
    %v487 = vld [vmem:[#allocation21 + $0x70] sm:$0xff]
    %v488 = vld [vmem:[#allocation21 + $0x78] sm:$0xff]
    %v489 = vld [vmem:[#allocation21 + $0x80] sm:$0xff]
    %v490 = vld [vmem:[#allocation21 + $0x88] sm:$0xff]
    %v491 = vld [vmem:[#allocation21 + $0x90] sm:$0xff]
    %v492 = vld [vmem:[#allocation21 + $0x98] sm:$0xff]
    %v493 = vld [vmem:[#allocation21 + $0xa0] sm:$0xff]
    %v494 = vld [vmem:[#allocation21 + $0xa8] sm:$0xff]
    %v495 = vld [vmem:[#allocation21 + $0xb0] sm:$0xff]
    %v496 = vld [vmem:[#allocation21 + $0xb8] sm:$0xff]
    %v497 = vld [vmem:[#allocation21 + $0xc0] sm:$0xff]
    %v498 = vld [vmem:[#allocation21 + $0xc8] sm:$0xff]
    %v499 = vld [vmem:[#allocation21 + $0xd0] sm:$0xff]
    %v500 = vld [vmem:[#allocation21 + $0xd8] sm:$0xff]
    %v501 = vld [vmem:[#allocation21 + $0xe0] sm:$0xff]
    %v502 = vld [vmem:[#allocation21 + $0xe8] sm:$0xff]
    %v503 = vld [vmem:[#allocation21 + $0xf0] sm:$0xff]
    %v504 = vld [vmem:[#allocation21 + $0xf8] sm:$0xff]
    %v505 = vld [vmem:[#allocation22] sm:$0xff]
    %v506 = vld [vmem:[#allocation22 + $0x8] sm:$0xff]
    %v509 = vlaneseq
    %v510 = vshrl.u32 %v509, 7
    %v511 = vsub.s32 0, %v510
    %v512 = vrot.slane %v505, %v511
    %v513 = vlaneseq
    %v514 = vshrl.u32 %v513, 7
    %v515 = vsub.s32 1, %v514
    %v516 = vrot.slane %v505, %v515
    %v517 = vlaneseq
    %v518 = vshrl.u32 %v517, 7
    %v519 = vsub.s32 2, %v518
    %v520 = vrot.slane %v505, %v519
    %v521 = vlaneseq
    %v522 = vshrl.u32 %v521, 7
    %v523 = vsub.s32 3, %v522
    %v524 = vrot.slane %v505, %v523
    %v525 = vlaneseq
    %v526 = vshrl.u32 %v525, 7
    %v527 = vsub.s32 4, %v526
    %v528 = vrot.slane %v505, %v527
    %v529 = vlaneseq
    %v530 = vshrl.u32 %v529, 7
    %v531 = vsub.s32 5, %v530
    %v532 = vrot.slane %v505, %v531
    %v533 = vlaneseq
    %v534 = vshrl.u32 %v533, 7
    %v535 = vsub.s32 6, %v534
    %v536 = vrot.slane %v505, %v535
    %v537 = vlaneseq
    %v538 = vshrl.u32 %v537, 7
    %v539 = vsub.s32 7, %v538
    %v540 = vrot.slane %v505, %v539
    %v541 = vlaneseq
    %v542 = vshrl.u32 %v541, 7
    %v543 = vsub.s32 0, %v542
    %v544 = vrot.slane %v506, %v543
    %v545 = vlaneseq
    %v546 = vshrl.u32 %v545, 7
    %v547 = vsub.s32 1, %v546
    %v548 = vrot.slane %v506, %v547
    %v549 = vlaneseq
    %v550 = vshrl.u32 %v549, 7
    %v551 = vsub.s32 2, %v550
    %v552 = vrot.slane %v506, %v551
    %v553 = vlaneseq
    %v554 = vshrl.u32 %v553, 7
    %v555 = vsub.s32 3, %v554
    %v556 = vrot.slane %v506, %v555
    %v557 = vlaneseq
    %v558 = vshrl.u32 %v557, 7
    %v559 = vsub.s32 4, %v558
    %v560 = vrot.slane %v506, %v559
    %v561 = vlaneseq
    %v562 = vshrl.u32 %v561, 7
    %v563 = vsub.s32 5, %v562
    %v564 = vrot.slane %v506, %v563
    %v565 = vlaneseq
    %v566 = vshrl.u32 %v565, 7
    %v567 = vsub.s32 6, %v566
    %v568 = vrot.slane %v506, %v567
    %v569 = vlaneseq
    %v570 = vshrl.u32 %v569, 7
    %v571 = vsub.s32 7, %v570
    %v572 = vrot.slane %v506, %v571
    %v621 = vunpack.c.l.b16 %v473
    %v622 = vunpack.c.h.b16 %v473
    %v623 = vunpack.c.l.b16 %v474
    %v624 = vunpack.c.h.b16 %v474
    %v625 = vunpack.c.l.b16 %v475
    %v626 = vunpack.c.h.b16 %v475
    %v627 = vunpack.c.l.b16 %v476
    %v628 = vunpack.c.h.b16 %v476
    %v629 = vunpack.c.l.b16 %v477
    %v630 = vunpack.c.h.b16 %v477
    %v631 = vunpack.c.l.b16 %v478
    %v632 = vunpack.c.h.b16 %v478
    %v633 = vunpack.c.l.b16 %v479
    %v634 = vunpack.c.h.b16 %v479
    %v635 = vunpack.c.l.b16 %v480
    %v636 = vunpack.c.h.b16 %v480
    %v637 = vunpack.c.l.b16 %v481
    %v638 = vunpack.c.h.b16 %v481
    %v639 = vunpack.c.l.b16 %v482
    %v640 = vunpack.c.h.b16 %v482
    %v641 = vunpack.c.l.b16 %v483
    %v642 = vunpack.c.h.b16 %v483
    %v643 = vunpack.c.l.b16 %v484
    %v644 = vunpack.c.h.b16 %v484
    %v645 = vunpack.c.l.b16 %v485
    %v646 = vunpack.c.h.b16 %v485
    %v647 = vunpack.c.l.b16 %v486
    %v648 = vunpack.c.h.b16 %v486
    %v649 = vunpack.c.l.b16 %v487
    %v650 = vunpack.c.h.b16 %v487
    %v651 = vunpack.c.l.b16 %v488
    %v652 = vunpack.c.h.b16 %v488
    %v653 = vunpack.c.l.b16 %v489
    %v654 = vunpack.c.h.b16 %v489
    %v655 = vunpack.c.l.b16 %v490
    %v656 = vunpack.c.h.b16 %v490
    %v657 = vunpack.c.l.b16 %v491
    %v658 = vunpack.c.h.b16 %v491
    %v659 = vunpack.c.l.b16 %v492
    %v660 = vunpack.c.h.b16 %v492
    %v661 = vunpack.c.l.b16 %v493
    %v662 = vunpack.c.h.b16 %v493
    %v663 = vunpack.c.l.b16 %v494
    %v664 = vunpack.c.h.b16 %v494
    %v665 = vunpack.c.l.b16 %v495
    %v666 = vunpack.c.h.b16 %v495
    %v667 = vunpack.c.l.b16 %v496
    %v668 = vunpack.c.h.b16 %v496
    %v669 = vunpack.c.l.b16 %v497
    %v670 = vunpack.c.h.b16 %v497
    %v671 = vunpack.c.l.b16 %v498
    %v672 = vunpack.c.h.b16 %v498
    %v673 = vunpack.c.l.b16 %v499
    %v674 = vunpack.c.h.b16 %v499
    %v675 = vunpack.c.l.b16 %v500
    %v676 = vunpack.c.h.b16 %v500
    %v677 = vunpack.c.l.b16 %v501
    %v678 = vunpack.c.h.b16 %v501
    %v679 = vunpack.c.l.b16 %v502
    %v680 = vunpack.c.h.b16 %v502
    %v681 = vunpack.c.l.b16 %v503
    %v682 = vunpack.c.h.b16 %v503
    %v683 = vunpack.c.l.b16 %v504
    %v684 = vunpack.c.h.b16 %v504
    %v685 = vpack.c.b16 %v637, %v621
    %v686 = vpack.c.b16 %v638, %v622
    %v687 = vpack.c.b16 %v639, %v623
    %v688 = vpack.c.b16 %v640, %v624
    %v689 = vpack.c.b16 %v641, %v625
    %v690 = vpack.c.b16 %v642, %v626
    %v691 = vpack.c.b16 %v643, %v627
    %v692 = vpack.c.b16 %v644, %v628
    %v693 = vpack.c.b16 %v645, %v629
    %v694 = vpack.c.b16 %v646, %v630
    %v695 = vpack.c.b16 %v647, %v631
    %v696 = vpack.c.b16 %v648, %v632
    %v697 = vpack.c.b16 %v649, %v633
    %v698 = vpack.c.b16 %v650, %v634
    %v699 = vpack.c.b16 %v651, %v635
    %v700 = vpack.c.b16 %v652, %v636
    %v701 = vpack.c.b16 %v669, %v653
    %v702 = vpack.c.b16 %v670, %v654
    %v703 = vpack.c.b16 %v671, %v655
    %v704 = vpack.c.b16 %v672, %v656
    %v705 = vpack.c.b16 %v673, %v657
    %v706 = vpack.c.b16 %v674, %v658
    %v707 = vpack.c.b16 %v675, %v659
    %v708 = vpack.c.b16 %v676, %v660
    %v709 = vpack.c.b16 %v677, %v661
    %v710 = vpack.c.b16 %v678, %v662
    %v711 = vpack.c.b16 %v679, %v663
    %v712 = vpack.c.b16 %v680, %v664
    %v713 = vpack.c.b16 %v681, %v665
    %v714 = vpack.c.b16 %v682, %v666
    %v715 = vpack.c.b16 %v683, %v667
    %v716 = vpack.c.b16 %v684, %v668
    %v750 = vsel %vm313, %v472, 0
    %752 = vmatprep.subr.bf16.mxu0 %v686
    %753 = vmatpush1.bf16.msra.mxu0 %v685
    %754 = vmatprep.subr.bf16.mxu0 %v702
    %755 = vmatpush1.bf16.msra.mxu0 %v701
    %756 = vmatprep.subr.bf16.mxu0 0
    %757 = vmatpush1.bf16.msra.mxu0 0
    %758 = vmatprep.subr.bf16.mxu0 0
    %759 = vmatpush1.bf16.msra.mxu0 0
    %760 = vmatprep.subr.bf16.mxu0 0
    %761 = vmatpush1.bf16.msra.mxu0 0
    %762 = vmatprep.subr.bf16.mxu0 0
    %763 = vmatpush1.bf16.msra.mxu0 0
    %764 = vmatprep.subr.bf16.mxu0 0
    %765 = vmatpush1.bf16.msra.mxu0 0
    %766 = vmatprep.subr.bf16.mxu0 0
    %767 = vmatpush1.bf16.msra.mxu0 0
    %768 = vmatprep.subr.bf16.mxu0 0
    %769 = vmatpush1.bf16.msra.mxu0 0
    %770 = vmatprep.subr.bf16.mxu0 0
    %771 = vmatpush1.bf16.msra.mxu0 0
    %772 = vmatprep.subr.bf16.mxu0 0
    %773 = vmatpush1.bf16.msra.mxu0 0
    %774 = vmatprep.subr.bf16.mxu0 0
    %775 = vmatpush1.bf16.msra.mxu0 0
    %776 = vmatprep.subr.bf16.mxu0 0
    %777 = vmatpush1.bf16.msra.mxu0 0
    %778 = vmatprep.subr.bf16.mxu0 0
    %779 = vmatpush1.bf16.msra.mxu0 0
    %780 = vmatprep.subr.bf16.mxu0 0
    %781 = vmatpush1.bf16.msra.mxu0 0
    %782 = vmatprep.subr.bf16.mxu0 0
    %783 = vmatpush1.bf16.msra.mxu0 0
    %784 = vmatprep.mubr.bf16.mxu0 0
    %785 = vmatmul.mubr.bf16.gmra.mrb[0].mxu0 %v750
    %v786 = vpop.f32.mrb[0].mxu0
    %v787 = vadd.f32 %v512, %v786
    %v788 = vpop.f32.mrb[0].mxu0
    %v789 = vadd.f32 %v516, %v788
    %v790 = vpop.f32.mrb[0].mxu0
    %v791 = vadd.f32 %v512, %v790
    %v792 = vpop.f32.mrb[0].mxu0
    %v793 = vadd.f32 %v516, %v792
    %794 = vdwg.mxu0
    %795 = vmatprep.subr.bf16.mxu0 %v688
    %796 = vmatpush1.bf16.msra.mxu0 %v687
    %797 = vmatprep.subr.bf16.mxu0 %v704
    %798 = vmatpush1.bf16.msra.mxu0 %v703
    %799 = vmatprep.subr.bf16.mxu0 0
    %800 = vmatpush1.bf16.msra.mxu0 0
    %801 = vmatprep.subr.bf16.mxu0 0
    %802 = vmatpush1.bf16.msra.mxu0 0
    %803 = vmatprep.subr.bf16.mxu0 0
    %804 = vmatpush1.bf16.msra.mxu0 0
    %805 = vmatprep.subr.bf16.mxu0 0
    %806 = vmatpush1.bf16.msra.mxu0 0
    %807 = vmatprep.subr.bf16.mxu0 0
    %808 = vmatpush1.bf16.msra.mxu0 0
    %809 = vmatprep.subr.bf16.mxu0 0
    %810 = vmatpush1.bf16.msra.mxu0 0
    %811 = vmatprep.subr.bf16.mxu0 0
    %812 = vmatpush1.bf16.msra.mxu0 0
    %813 = vmatprep.subr.bf16.mxu0 0
    %814 = vmatpush1.bf16.msra.mxu0 0
    %815 = vmatprep.subr.bf16.mxu0 0
    %816 = vmatpush1.bf16.msra.mxu0 0
    %817 = vmatprep.subr.bf16.mxu0 0
    %818 = vmatpush1.bf16.msra.mxu0 0
    %819 = vmatprep.subr.bf16.mxu0 0
    %820 = vmatpush1.bf16.msra.mxu0 0
    %821 = vmatprep.subr.bf16.mxu0 0
    %822 = vmatpush1.bf16.msra.mxu0 0
    %823 = vmatprep.subr.bf16.mxu0 0
    %824 = vmatpush1.bf16.msra.mxu0 0
    %825 = vmatprep.subr.bf16.mxu0 0
    %826 = vmatpush1.bf16.msra.mxu0 0
    %827 = vmatprep.mubr.bf16.mxu0 0
    %828 = vmatmul.mubr.bf16.gmra.mrb[0].mxu0 %v750
    %v829 = vpop.f32.mrb[0].mxu0
    %v830 = vadd.f32 %v520, %v829
    %v831 = vpop.f32.mrb[0].mxu0
    %v832 = vadd.f32 %v524, %v831
    %v833 = vpop.f32.mrb[0].mxu0
    %v834 = vadd.f32 %v520, %v833
    %v835 = vpop.f32.mrb[0].mxu0
    %v836 = vadd.f32 %v524, %v835
    %837 = vdwg.mxu0
    %838 = vmatprep.subr.bf16.mxu0 %v690
    %839 = vmatpush1.bf16.msra.mxu0 %v689
    %840 = vmatprep.subr.bf16.mxu0 %v706
    %841 = vmatpush1.bf16.msra.mxu0 %v705
    %842 = vmatprep.subr.bf16.mxu0 0
    %843 = vmatpush1.bf16.msra.mxu0 0
    %844 = vmatprep.subr.bf16.mxu0 0
    %845 = vmatpush1.bf16.msra.mxu0 0
    %846 = vmatprep.subr.bf16.mxu0 0
    %847 = vmatpush1.bf16.msra.mxu0 0
    %848 = vmatprep.subr.bf16.mxu0 0
    %849 = vmatpush1.bf16.msra.mxu0 0
    %850 = vmatprep.subr.bf16.mxu0 0
    %851 = vmatpush1.bf16.msra.mxu0 0
    %852 = vmatprep.subr.bf16.mxu0 0
    %853 = vmatpush1.bf16.msra.mxu0 0
    %854 = vmatprep.subr.bf16.mxu0 0
    %855 = vmatpush1.bf16.msra.mxu0 0
    %856 = vmatprep.subr.bf16.mxu0 0
    %857 = vmatpush1.bf16.msra.mxu0 0
    %858 = vmatprep.subr.bf16.mxu0 0
    %859 = vmatpush1.bf16.msra.mxu0 0
    %860 = vmatprep.subr.bf16.mxu0 0
    %861 = vmatpush1.bf16.msra.mxu0 0
    %862 = vmatprep.subr.bf16.mxu0 0
    %863 = vmatpush1.bf16.msra.mxu0 0
    %864 = vmatprep.subr.bf16.mxu0 0
    %865 = vmatpush1.bf16.msra.mxu0 0
    %866 = vmatprep.subr.bf16.mxu0 0
    %867 = vmatpush1.bf16.msra.mxu0 0
    %868 = vmatprep.subr.bf16.mxu0 0
    %869 = vmatpush1.bf16.msra.mxu0 0
    %870 = vmatprep.mubr.bf16.mxu0 0
    %871 = vmatmul.mubr.bf16.gmra.mrb[0].mxu0 %v750
    %v872 = vpop.f32.mrb[0].mxu0
    %v873 = vadd.f32 %v528, %v872
    %v874 = vpop.f32.mrb[0].mxu0
    %v875 = vadd.f32 %v532, %v874
    %v876 = vpop.f32.mrb[0].mxu0
    %v877 = vadd.f32 %v528, %v876
    %v878 = vpop.f32.mrb[0].mxu0
    %v879 = vadd.f32 %v532, %v878
    %880 = vdwg.mxu0
    %881 = vmatprep.subr.bf16.mxu0 %v692
    %882 = vmatpush1.bf16.msra.mxu0 %v691
    %883 = vmatprep.subr.bf16.mxu0 %v708
    %884 = vmatpush1.bf16.msra.mxu0 %v707
    %885 = vmatprep.subr.bf16.mxu0 0
    %886 = vmatpush1.bf16.msra.mxu0 0
    %887 = vmatprep.subr.bf16.mxu0 0
    %888 = vmatpush1.bf16.msra.mxu0 0
    %889 = vmatprep.subr.bf16.mxu0 0
    %890 = vmatpush1.bf16.msra.mxu0 0
    %891 = vmatprep.subr.bf16.mxu0 0
    %892 = vmatpush1.bf16.msra.mxu0 0
    %893 = vmatprep.subr.bf16.mxu0 0
    %894 = vmatpush1.bf16.msra.mxu0 0
    %895 = vmatprep.subr.bf16.mxu0 0
    %896 = vmatpush1.bf16.msra.mxu0 0
    %897 = vmatprep.subr.bf16.mxu0 0
    %898 = vmatpush1.bf16.msra.mxu0 0
    %899 = vmatprep.subr.bf16.mxu0 0
    %900 = vmatpush1.bf16.msra.mxu0 0
    %901 = vmatprep.subr.bf16.mxu0 0
    %902 = vmatpush1.bf16.msra.mxu0 0
    %903 = vmatprep.subr.bf16.mxu0 0
    %904 = vmatpush1.bf16.msra.mxu0 0
    %905 = vmatprep.subr.bf16.mxu0 0
    %906 = vmatpush1.bf16.msra.mxu0 0
    %907 = vmatprep.subr.bf16.mxu0 0
    %908 = vmatpush1.bf16.msra.mxu0 0
    %909 = vmatprep.subr.bf16.mxu0 0
    %910 = vmatpush1.bf16.msra.mxu0 0
    %911 = vmatprep.subr.bf16.mxu0 0
    %912 = vmatpush1.bf16.msra.mxu0 0
    %913 = vmatprep.mubr.bf16.mxu0 0
    %914 = vmatmul.mubr.bf16.gmra.mrb[0].mxu0 %v750
    %v915 = vpop.f32.mrb[0].mxu0
    %v916 = vadd.f32 %v536, %v915
    %v917 = vpop.f32.mrb[0].mxu0
    %v918 = vadd.f32 %v540, %v917
    %v919 = vpop.f32.mrb[0].mxu0
    %v920 = vadd.f32 %v536, %v919
    %v921 = vpop.f32.mrb[0].mxu0
    %v922 = vadd.f32 %v540, %v921
    %923 = vdwg.mxu0
    %924 = vmatprep.subr.bf16.mxu0 %v694
    %925 = vmatpush1.bf16.msra.mxu0 %v693
    %926 = vmatprep.subr.bf16.mxu0 %v710
    %927 = vmatpush1.bf16.msra.mxu0 %v709
    %928 = vmatprep.subr.bf16.mxu0 0
    %929 = vmatpush1.bf16.msra.mxu0 0
    %930 = vmatprep.subr.bf16.mxu0 0
    %931 = vmatpush1.bf16.msra.mxu0 0
    %932 = vmatprep.subr.bf16.mxu0 0
    %933 = vmatpush1.bf16.msra.mxu0 0
    %934 = vmatprep.subr.bf16.mxu0 0
    %935 = vmatpush1.bf16.msra.mxu0 0
    %936 = vmatprep.subr.bf16.mxu0 0
    %937 = vmatpush1.bf16.msra.mxu0 0
    %938 = vmatprep.subr.bf16.mxu0 0
    %939 = vmatpush1.bf16.msra.mxu0 0
    %940 = vmatprep.subr.bf16.mxu0 0
    %941 = vmatpush1.bf16.msra.mxu0 0
    %942 = vmatprep.subr.bf16.mxu0 0
    %943 = vmatpush1.bf16.msra.mxu0 0
    %944 = vmatprep.subr.bf16.mxu0 0
    %945 = vmatpush1.bf16.msra.mxu0 0
    %946 = vmatprep.subr.bf16.mxu0 0
    %947 = vmatpush1.bf16.msra.mxu0 0
    %948 = vmatprep.subr.bf16.mxu0 0
    %949 = vmatpush1.bf16.msra.mxu0 0
    %950 = vmatprep.subr.bf16.mxu0 0
    %951 = vmatpush1.bf16.msra.mxu0 0
    %952 = vmatprep.subr.bf16.mxu0 0
    %953 = vmatpush1.bf16.msra.mxu0 0
    %954 = vmatprep.subr.bf16.mxu0 0
    %955 = vmatpush1.bf16.msra.mxu0 0
    %956 = vmatprep.mubr.bf16.mxu0 0
    %957 = vmatmul.mubr.bf16.gmra.mrb[0].mxu0 %v750
    %v958 = vpop.f32.mrb[0].mxu0
    %v959 = vadd.f32 %v544, %v958
    %v960 = vpop.f32.mrb[0].mxu0
    %v961 = vadd.f32 %v548, %v960
    %v962 = vpop.f32.mrb[0].mxu0
    %v963 = vadd.f32 %v544, %v962
    %v964 = vpop.f32.mrb[0].mxu0
    %v965 = vadd.f32 %v548, %v964
    %966 = vdwg.mxu0
    %967 = vmatprep.subr.bf16.mxu0 %v696
    %968 = vmatpush1.bf16.msra.mxu0 %v695
    %969 = vmatprep.subr.bf16.mxu0 %v712
    %970 = vmatpush1.bf16.msra.mxu0 %v711
    %971 = vmatprep.subr.bf16.mxu0 0
    %972 = vmatpush1.bf16.msra.mxu0 0
    %973 = vmatprep.subr.bf16.mxu0 0
    %974 = vmatpush1.bf16.msra.mxu0 0
    %975 = vmatprep.subr.bf16.mxu0 0
    %976 = vmatpush1.bf16.msra.mxu0 0
    %977 = vmatprep.subr.bf16.mxu0 0
    %978 = vmatpush1.bf16.msra.mxu0 0
    %979 = vmatprep.subr.bf16.mxu0 0
    %980 = vmatpush1.bf16.msra.mxu0 0
    %981 = vmatprep.subr.bf16.mxu0 0
    %982 = vmatpush1.bf16.msra.mxu0 0
    %983 = vmatprep.subr.bf16.mxu0 0
    %984 = vmatpush1.bf16.msra.mxu0 0
    %985 = vmatprep.subr.bf16.mxu0 0
    %986 = vmatpush1.bf16.msra.mxu0 0
    %987 = vmatprep.subr.bf16.mxu0 0
    %988 = vmatpush1.bf16.msra.mxu0 0
    %989 = vmatprep.subr.bf16.mxu0 0
    %990 = vmatpush1.bf16.msra.mxu0 0
    %991 = vmatprep.subr.bf16.mxu0 0
    %992 = vmatpush1.bf16.msra.mxu0 0
    %993 = vmatprep.subr.bf16.mxu0 0
    %994 = vmatpush1.bf16.msra.mxu0 0
    %995 = vmatprep.subr.bf16.mxu0 0
    %996 = vmatpush1.bf16.msra.mxu0 0
    %997 = vmatprep.subr.bf16.mxu0 0
    %998 = vmatpush1.bf16.msra.mxu0 0
    %999 = vmatprep.mubr.bf16.mxu0 0
    %1000 = vmatmul.mubr.bf16.gmra.mrb[0].mxu0 %v750
    %v1001 = vpop.f32.mrb[0].mxu0
    %v1002 = vadd.f32 %v552, %v1001
    %v1003 = vpop.f32.mrb[0].mxu0
    %v1004 = vadd.f32 %v556, %v1003
    %v1005 = vpop.f32.mrb[0].mxu0
    %v1006 = vadd.f32 %v552, %v1005
    %v1007 = vpop.f32.mrb[0].mxu0
    %v1008 = vadd.f32 %v556, %v1007
    %1009 = vdwg.mxu0
    %1010 = vmatprep.subr.bf16.mxu0 %v698
    %1011 = vmatpush1.bf16.msra.mxu0 %v697
    %1012 = vmatprep.subr.bf16.mxu0 %v714
    %1013 = vmatpush1.bf16.msra.mxu0 %v713
    %1014 = vmatprep.subr.bf16.mxu0 0
    %1015 = vmatpush1.bf16.msra.mxu0 0
    %1016 = vmatprep.subr.bf16.mxu0 0
    %1017 = vmatpush1.bf16.msra.mxu0 0
    %1018 = vmatprep.subr.bf16.mxu0 0
    %1019 = vmatpush1.bf16.msra.mxu0 0
    %1020 = vmatprep.subr.bf16.mxu0 0
    %1021 = vmatpush1.bf16.msra.mxu0 0
    %1022 = vmatprep.subr.bf16.mxu0 0
    %1023 = vmatpush1.bf16.msra.mxu0 0
    %1024 = vmatprep.subr.bf16.mxu0 0
    %1025 = vmatpush1.bf16.msra.mxu0 0
    %1026 = vmatprep.subr.bf16.mxu0 0
    %1027 = vmatpush1.bf16.msra.mxu0 0
    %1028 = vmatprep.subr.bf16.mxu0 0
    %1029 = vmatpush1.bf16.msra.mxu0 0
    %1030 = vmatprep.subr.bf16.mxu0 0
    %1031 = vmatpush1.bf16.msra.mxu0 0
    %1032 = vmatprep.subr.bf16.mxu0 0
    %1033 = vmatpush1.bf16.msra.mxu0 0
    %1034 = vmatprep.subr.bf16.mxu0 0
    %1035 = vmatpush1.bf16.msra.mxu0 0
    %1036 = vmatprep.subr.bf16.mxu0 0
    %1037 = vmatpush1.bf16.msra.mxu0 0
    %1038 = vmatprep.subr.bf16.mxu0 0
    %1039 = vmatpush1.bf16.msra.mxu0 0
    %1040 = vmatprep.subr.bf16.mxu0 0
    %1041 = vmatpush1.bf16.msra.mxu0 0
    %1042 = vmatprep.mubr.bf16.mxu0 0
    %1043 = vmatmul.mubr.bf16.gmra.mrb[0].mxu0 %v750
    %v1044 = vpop.f32.mrb[0].mxu0
    %v1045 = vadd.f32 %v560, %v1044
    %v1046 = vpop.f32.mrb[0].mxu0
    %v1047 = vadd.f32 %v564, %v1046
    %v1048 = vpop.f32.mrb[0].mxu0
    %v1049 = vadd.f32 %v560, %v1048
    %v1050 = vpop.f32.mrb[0].mxu0
    %v1051 = vadd.f32 %v564, %v1050
    %1052 = vdwg.mxu0
    %1053 = vmatprep.subr.bf16.mxu0 %v700
    %1054 = vmatpush1.bf16.msra.mxu0 %v699
    %1055 = vmatprep.subr.bf16.mxu0 %v716
    %1056 = vmatpush1.bf16.msra.mxu0 %v715
    %1057 = vmatprep.subr.bf16.mxu0 0
    %1058 = vmatpush1.bf16.msra.mxu0 0
    %1059 = vmatprep.subr.bf16.mxu0 0
    %1060 = vmatpush1.bf16.msra.mxu0 0
    %1061 = vmatprep.subr.bf16.mxu0 0
    %1062 = vmatpush1.bf16.msra.mxu0 0
    %1063 = vmatprep.subr.bf16.mxu0 0
    %1064 = vmatpush1.bf16.msra.mxu0 0
    %1065 = vmatprep.subr.bf16.mxu0 0
    %1066 = vmatpush1.bf16.msra.mxu0 0
    %1067 = vmatprep.subr.bf16.mxu0 0
    %1068 = vmatpush1.bf16.msra.mxu0 0
    %1069 = vmatprep.subr.bf16.mxu0 0
    %1070 = vmatpush1.bf16.msra.mxu0 0
    %1071 = vmatprep.subr.bf16.mxu0 0
    %1072 = vmatpush1.bf16.msra.mxu0 0
    %1073 = vmatprep.subr.bf16.mxu0 0
    %1074 = vmatpush1.bf16.msra.mxu0 0
    %1075 = vmatprep.subr.bf16.mxu0 0
    %1076 = vmatpush1.bf16.msra.mxu0 0
    %1077 = vmatprep.subr.bf16.mxu0 0
    %1078 = vmatpush1.bf16.msra.mxu0 0
    %1079 = vmatprep.subr.bf16.mxu0 0
    %1080 = vmatpush1.bf16.msra.mxu0 0
    %1081 = vmatprep.subr.bf16.mxu0 0
    %1082 = vmatpush1.bf16.msra.mxu0 0
    %1083 = vmatprep.subr.bf16.mxu0 0
    %1084 = vmatpush1.bf16.msra.mxu0 0
    %1085 = vmatprep.mubr.bf16.mxu0 0
    %1086 = vmatmul.mubr.bf16.gmra.mrb[0].mxu0 %v750
    %v1087 = vpop.f32.mrb[0].mxu0
    %v1088 = vadd.f32 %v568, %v1087
    %v1089 = vpop.f32.mrb[0].mxu0
    %v1090 = vadd.f32 %v572, %v1089
    %v1091 = vpop.f32.mrb[0].mxu0
    %v1092 = vadd.f32 %v568, %v1091
    %v1093 = vpop.f32.mrb[0].mxu0
    %v1094 = vadd.f32 %v572, %v1093
    %1095 = vdwg.mxu0
    %v1097 = vsel %vm313, %v387, 0
    %v1100 = vsel %vm313, %v389, 0
    %1102 = vmatprep.subr.mxu0 0.0
    %1103 = vmatpush1.xpose.msra.mxu0 %v1100
    %1104 = vmatprep.subr.mxu0 0.0
    %1105 = vmatpush1.xpose.msra.mxu0 0.0
    %1106 = vmatprep.subr.mxu0 0.0
    %1107 = vmatpush1.xpose.msra.mxu0 0.0
    %1108 = vmatprep.subr.mxu0 0.0
    %1109 = vmatpush1.xpose.msra.mxu0 0.0
    %1110 = vmatprep.subr.mxu0 0.0
    %1111 = vmatpush1.xpose.msra.mxu0 0.0
    %1112 = vmatprep.subr.mxu0 0.0
    %1113 = vmatpush1.xpose.msra.mxu0 0.0
    %1114 = vmatprep.subr.mxu0 0.0
    %1115 = vmatpush1.xpose.msra.mxu0 0.0
    %1116 = vmatprep.subr.mxu0 0.0
    %1117 = vmatpush1.xpose.msra.mxu0 0.0
    %1118 = vmatprep.subr.mxu0 0.0
    %1119 = vmatpush1.xpose.msra.mxu0 0.0
    %1120 = vmatprep.subr.mxu0 0.0
    %1121 = vmatpush1.xpose.msra.mxu0 0.0
    %1122 = vmatprep.subr.mxu0 0.0
    %1123 = vmatpush1.xpose.msra.mxu0 0.0
    %1124 = vmatprep.subr.mxu0 0.0
    %1125 = vmatpush1.xpose.msra.mxu0 0.0
    %1126 = vmatprep.subr.mxu0 0.0
    %1127 = vmatpush1.xpose.msra.mxu0 0.0
    %1128 = vmatprep.subr.mxu0 0.0
    %1129 = vmatpush1.xpose.msra.mxu0 0.0
    %1130 = vmatprep.subr.mxu0 0.0
    %1131 = vmatpush1.xpose.msra.mxu0 0.0
    %1132 = vmatprep.subr.mxu0 0.0
    %1133 = vmatpush1.xpose.msra.mxu0 0.0
    %1134 = vmatprep.subr.mxu0 0.0
    %1135 = vmatpush1.xpose.msra.mxu0 0.0
    %1136 = vmatprep.subr.mxu0 0.0
    %1137 = vmatpush1.xpose.msra.mxu0 0.0
    %1138 = vmatprep.subr.mxu0 0.0
    %1139 = vmatpush1.xpose.msra.mxu0 0.0
    %1140 = vmatprep.subr.mxu0 0.0
    %1141 = vmatpush1.xpose.msra.mxu0 0.0
    %1142 = vmatprep.subr.mxu0 0.0
    %1143 = vmatpush1.xpose.msra.mxu0 0.0
    %1144 = vmatprep.subr.mxu0 0.0
    %1145 = vmatpush1.xpose.msra.mxu0 0.0
    %1146 = vmatprep.subr.mxu0 0.0
    %1147 = vmatpush1.xpose.msra.mxu0 0.0
    %1148 = vmatprep.subr.mxu0 0.0
    %1149 = vmatpush1.xpose.msra.mxu0 0.0
    %1150 = vmatprep.subr.mxu0 0.0
    %1151 = vmatpush1.xpose.msra.mxu0 0.0
    %1152 = vmatprep.subr.mxu0 0.0
    %1153 = vmatpush1.xpose.msra.mxu0 0.0
    %1154 = vmatprep.subr.mxu0 0.0
    %1155 = vmatpush1.xpose.msra.mxu0 0.0
    %1156 = vmatprep.subr.mxu0 0.0
    %1157 = vmatpush1.xpose.msra.mxu0 0.0
    %1158 = vmatprep.subr.mxu0 0.0
    %1159 = vmatpush1.xpose.msra.mxu0 0.0
    %1160 = vmatprep.subr.mxu0 0.0
    %1161 = vmatpush1.xpose.msra.mxu0 0.0
    %1162 = vmatprep.subr.mxu0 0.0
    %1163 = vmatpush1.xpose.msra.mxu0 0.0
    %1164 = vmatprep.subr.mxu0 0.0
    %1165 = vmatpush1.xpose.msra.mxu0 0.0
    %1166 = vmatprep.mubr.f32.mxu0 0.0
    %1167 = vmatmul.mubr.f32.gmra.mrb[0].mxu0 %v1097
    %v1168 = vpop.f32.mrb[0].mxu0
    %v1169 = vadd.f32 0.0, %v1168
    %v1170 = vpop.f32.mrb[0].mxu0
    %1171 = vdwg.mxu0
    %v1172 = vmul.f32 %v1169, 0.17677669
    %vm1173 = vcmask 64512
    %v1174 = vsel %vm1173, %v1172, -inf
    %1175 = vmax.xlane.f32.xlu0 %v1174
    %v1176 = vpop.xlane.xlu0 %1175
    %v1177 = vsub.f32 %v1172, %v1176
    %v1178 = vmul.f32 %v1177, 1.442695
    %v1179 = vpow.pop %v1178
    %v1180 = vsel %vm1173, %v1179, 0.0
    %1181 = vadd.xlane.f32.xlu0 %v1180
    %v1182 = vpop.xlane.xlu0 %1181
    %v1183 = vrcp.pop %v1182
    %v1184 = vmul.f32 %v1179, %v1183
    %v1186 = vsel %vm1173, %v1184, 0
    %1188 = vmatprep.subr.mxu0 0.0
    %1189 = vmatpush1.msra.mxu0 %v464
    %1190 = vmatprep.subr.mxu0 0.0
    %1191 = vmatpush1.msra.mxu0 0.0
    %1192 = vmatprep.subr.mxu0 0.0
    %1193 = vmatpush1.msra.mxu0 0.0
    %1194 = vmatprep.subr.mxu0 0.0
    %1195 = vmatpush1.msra.mxu0 0.0
    %1196 = vmatprep.subr.mxu0 0.0
    %1197 = vmatpush1.msra.mxu0 0.0
    %1198 = vmatprep.subr.mxu0 0.0
    %1199 = vmatpush1.msra.mxu0 0.0
    %1200 = vmatprep.subr.mxu0 0.0
    %1201 = vmatpush1.msra.mxu0 0.0
    %1202 = vmatprep.subr.mxu0 0.0
    %1203 = vmatpush1.msra.mxu0 0.0
    %1204 = vmatprep.subr.mxu0 0.0
    %1205 = vmatpush1.msra.mxu0 0.0
    %1206 = vmatprep.subr.mxu0 0.0
    %1207 = vmatpush1.msra.mxu0 0.0
    %1208 = vmatprep.subr.mxu0 0.0
    %1209 = vmatpush1.msra.mxu0 0.0
    %1210 = vmatprep.subr.mxu0 0.0
    %1211 = vmatpush1.msra.mxu0 0.0
    %1212 = vmatprep.subr.mxu0 0.0
    %1213 = vmatpush1.msra.mxu0 0.0
    %1214 = vmatprep.subr.mxu0 0.0
    %1215 = vmatpush1.msra.mxu0 0.0
    %1216 = vmatprep.subr.mxu0 0.0
    %1217 = vmatpush1.msra.mxu0 0.0
    %1218 = vmatprep.subr.mxu0 0.0
    %1219 = vmatpush1.msra.mxu0 0.0
    %1220 = vmatprep.subr.mxu0 0.0
    %1221 = vmatpush1.msra.mxu0 0.0
    %1222 = vmatprep.subr.mxu0 0.0
    %1223 = vmatpush1.msra.mxu0 0.0
    %1224 = vmatprep.subr.mxu0 0.0
    %1225 = vmatpush1.msra.mxu0 0.0
    %1226 = vmatprep.subr.mxu0 0.0
    %1227 = vmatpush1.msra.mxu0 0.0
    %1228 = vmatprep.subr.mxu0 0.0
    %1229 = vmatpush1.msra.mxu0 0.0
    %1230 = vmatprep.subr.mxu0 0.0
    %1231 = vmatpush1.msra.mxu0 0.0
    %1232 = vmatprep.subr.mxu0 0.0
    %1233 = vmatpush1.msra.mxu0 0.0
    %1234 = vmatprep.subr.mxu0 0.0
    %1235 = vmatpush1.msra.mxu0 0.0
    %1236 = vmatprep.subr.mxu0 0.0
    %1237 = vmatpush1.msra.mxu0 0.0
    %1238 = vmatprep.subr.mxu0 0.0
    %1239 = vmatpush1.msra.mxu0 0.0
    %1240 = vmatprep.subr.mxu0 0.0
    %1241 = vmatpush1.msra.mxu0 0.0
    %1242 = vmatprep.subr.mxu0 0.0
    %1243 = vmatpush1.msra.mxu0 0.0
    %1244 = vmatprep.subr.mxu0 0.0
    %1245 = vmatpush1.msra.mxu0 0.0
    %1246 = vmatprep.subr.mxu0 0.0
    %1247 = vmatpush1.msra.mxu0 0.0
    %1248 = vmatprep.subr.mxu0 0.0
    %1249 = vmatpush1.msra.mxu0 0.0
    %1250 = vmatprep.subr.mxu0 0.0
    %1251 = vmatpush1.msra.mxu0 0.0
    %1252 = vmatprep.mubr.f32.mxu0 0.0
    %1253 = vmatmul.mubr.f32.gmra.mrb[0].mxu0 %v1186
    %v1254 = vpop.f32.mrb[0].mxu0
    %v1255 = vadd.f32 0.0, %v1254
    %v1256 = vpop.f32.mrb[0].mxu0
    %1257 = vdwg.mxu0
    %v1259 = vsel %vm313, %v393, 0
    %v1262 = vsel %vm313, %v395, 0
    %1264 = vmatprep.subr.mxu0 0.0
    %1265 = vmatpush1.xpose.msra.mxu0 %v1262
    %1266 = vmatprep.subr.mxu0 0.0
    %1267 = vmatpush1.xpose.msra.mxu0 0.0
    %1268 = vmatprep.subr.mxu0 0.0
    %1269 = vmatpush1.xpose.msra.mxu0 0.0
    %1270 = vmatprep.subr.mxu0 0.0
    %1271 = vmatpush1.xpose.msra.mxu0 0.0
    %1272 = vmatprep.subr.mxu0 0.0
    %1273 = vmatpush1.xpose.msra.mxu0 0.0
    %1274 = vmatprep.subr.mxu0 0.0
    %1275 = vmatpush1.xpose.msra.mxu0 0.0
    %1276 = vmatprep.subr.mxu0 0.0
    %1277 = vmatpush1.xpose.msra.mxu0 0.0
    %1278 = vmatprep.subr.mxu0 0.0
    %1279 = vmatpush1.xpose.msra.mxu0 0.0
    %1280 = vmatprep.subr.mxu0 0.0
    %1281 = vmatpush1.xpose.msra.mxu0 0.0
    %1282 = vmatprep.subr.mxu0 0.0
    %1283 = vmatpush1.xpose.msra.mxu0 0.0
    %1284 = vmatprep.subr.mxu0 0.0
    %1285 = vmatpush1.xpose.msra.mxu0 0.0
    %1286 = vmatprep.subr.mxu0 0.0
    %1287 = vmatpush1.xpose.msra.mxu0 0.0
    %1288 = vmatprep.subr.mxu0 0.0
    %1289 = vmatpush1.xpose.msra.mxu0 0.0
    %1290 = vmatprep.subr.mxu0 0.0
    %1291 = vmatpush1.xpose.msra.mxu0 0.0
    %1292 = vmatprep.subr.mxu0 0.0
    %1293 = vmatpush1.xpose.msra.mxu0 0.0
    %1294 = vmatprep.subr.mxu0 0.0
    %1295 = vmatpush1.xpose.msra.mxu0 0.0
    %1296 = vmatprep.subr.mxu0 0.0
    %1297 = vmatpush1.xpose.msra.mxu0 0.0
    %1298 = vmatprep.subr.mxu0 0.0
    %1299 = vmatpush1.xpose.msra.mxu0 0.0
    %1300 = vmatprep.subr.mxu0 0.0
    %1301 = vmatpush1.xpose.msra.mxu0 0.0
    %1302 = vmatprep.subr.mxu0 0.0
    %1303 = vmatpush1.xpose.msra.mxu0 0.0
    %1304 = vmatprep.subr.mxu0 0.0
    %1305 = vmatpush1.xpose.msra.mxu0 0.0
    %1306 = vmatprep.subr.mxu0 0.0
    %1307 = vmatpush1.xpose.msra.mxu0 0.0
    %1308 = vmatprep.subr.mxu0 0.0
    %1309 = vmatpush1.xpose.msra.mxu0 0.0
    %1310 = vmatprep.subr.mxu0 0.0
    %1311 = vmatpush1.xpose.msra.mxu0 0.0
    %1312 = vmatprep.subr.mxu0 0.0
    %1313 = vmatpush1.xpose.msra.mxu0 0.0
    %1314 = vmatprep.subr.mxu0 0.0
    %1315 = vmatpush1.xpose.msra.mxu0 0.0
    %1316 = vmatprep.subr.mxu0 0.0
    %1317 = vmatpush1.xpose.msra.mxu0 0.0
    %1318 = vmatprep.subr.mxu0 0.0
    %1319 = vmatpush1.xpose.msra.mxu0 0.0
    %1320 = vmatprep.subr.mxu0 0.0
    %1321 = vmatpush1.xpose.msra.mxu0 0.0
    %1322 = vmatprep.subr.mxu0 0.0
    %1323 = vmatpush1.xpose.msra.mxu0 0.0
    %1324 = vmatprep.subr.mxu0 0.0
    %1325 = vmatpush1.xpose.msra.mxu0 0.0
    %1326 = vmatprep.subr.mxu0 0.0
    %1327 = vmatpush1.xpose.msra.mxu0 0.0
    %1328 = vmatprep.mubr.f32.mxu0 0.0
    %1329 = vmatmul.mubr.f32.gmra.mrb[0].mxu0 %v1259
    %v1330 = vpop.f32.mrb[0].mxu0
    %v1331 = vadd.f32 0.0, %v1330
    %v1332 = vpop.f32.mrb[0].mxu0
    %1333 = vdwg.mxu0
    %v1334 = vmul.f32 %v1331, 0.17677669
    %v1335 = vsel %vm1173, %v1334, -inf
    %1336 = vmax.xlane.f32.xlu0 %v1335
    %v1337 = vpop.xlane.xlu0 %1336
    %v1338 = vsub.f32 %v1334, %v1337
    %v1339 = vmul.f32 %v1338, 1.442695
    %v1340 = vpow.pop %v1339
    %v1341 = vsel %vm1173, %v1340, 0.0
    %1342 = vadd.xlane.f32.xlu0 %v1341
    %v1343 = vpop.xlane.xlu0 %1342
    %v1344 = vrcp.pop %v1343
    %v1345 = vmul.f32 %v1340, %v1344
    %v1347 = vsel %vm1173, %v1345, 0
    %1349 = vmatprep.subr.mxu0 0.0
    %1350 = vmatpush1.msra.mxu0 %v469
    %1351 = vmatprep.subr.mxu0 0.0
    %1352 = vmatpush1.msra.mxu0 0.0
    %1353 = vmatprep.subr.mxu0 0.0
    %1354 = vmatpush1.msra.mxu0 0.0
    %1355 = vmatprep.subr.mxu0 0.0
    %1356 = vmatpush1.msra.mxu0 0.0
    %1357 = vmatprep.subr.mxu0 0.0
    %1358 = vmatpush1.msra.mxu0 0.0
    %1359 = vmatprep.subr.mxu0 0.0
    %1360 = vmatpush1.msra.mxu0 0.0
    %1361 = vmatprep.subr.mxu0 0.0
    %1362 = vmatpush1.msra.mxu0 0.0
    %1363 = vmatprep.subr.mxu0 0.0
    %1364 = vmatpush1.msra.mxu0 0.0
    %1365 = vmatprep.subr.mxu0 0.0
    %1366 = vmatpush1.msra.mxu0 0.0
    %1367 = vmatprep.subr.mxu0 0.0
    %1368 = vmatpush1.msra.mxu0 0.0
    %1369 = vmatprep.subr.mxu0 0.0
    %1370 = vmatpush1.msra.mxu0 0.0
    %1371 = vmatprep.subr.mxu0 0.0
    %1372 = vmatpush1.msra.mxu0 0.0
    %1373 = vmatprep.subr.mxu0 0.0
    %1374 = vmatpush1.msra.mxu0 0.0
    %1375 = vmatprep.subr.mxu0 0.0
    %1376 = vmatpush1.msra.mxu0 0.0
    %1377 = vmatprep.subr.mxu0 0.0
    %1378 = vmatpush1.msra.mxu0 0.0
    %1379 = vmatprep.subr.mxu0 0.0
    %1380 = vmatpush1.msra.mxu0 0.0
    %1381 = vmatprep.subr.mxu0 0.0
    %1382 = vmatpush1.msra.mxu0 0.0
    %1383 = vmatprep.subr.mxu0 0.0
    %1384 = vmatpush1.msra.mxu0 0.0
    %1385 = vmatprep.subr.mxu0 0.0
    %1386 = vmatpush1.msra.mxu0 0.0
    %1387 = vmatprep.subr.mxu0 0.0
    %1388 = vmatpush1.msra.mxu0 0.0
    %1389 = vmatprep.subr.mxu0 0.0
    %1390 = vmatpush1.msra.mxu0 0.0
    %1391 = vmatprep.subr.mxu0 0.0
    %1392 = vmatpush1.msra.mxu0 0.0
    %1393 = vmatprep.subr.mxu0 0.0
    %1394 = vmatpush1.msra.mxu0 0.0
    %1395 = vmatprep.subr.mxu0 0.0
    %1396 = vmatpush1.msra.mxu0 0.0
    %1397 = vmatprep.subr.mxu0 0.0
    %1398 = vmatpush1.msra.mxu0 0.0
    %1399 = vmatprep.subr.mxu0 0.0
    %1400 = vmatpush1.msra.mxu0 0.0
    %1401 = vmatprep.subr.mxu0 0.0
    %1402 = vmatpush1.msra.mxu0 0.0
    %1403 = vmatprep.subr.mxu0 0.0
    %1404 = vmatpush1.msra.mxu0 0.0
    %1405 = vmatprep.subr.mxu0 0.0
    %1406 = vmatpush1.msra.mxu0 0.0
    %1407 = vmatprep.subr.mxu0 0.0
    %1408 = vmatpush1.msra.mxu0 0.0
    %1409 = vmatprep.subr.mxu0 0.0
    %1410 = vmatpush1.msra.mxu0 0.0
    %1411 = vmatprep.subr.mxu0 0.0
    %1412 = vmatpush1.msra.mxu0 0.0
    %1413 = vmatprep.mubr.f32.mxu0 0.0
    %1414 = vmatmul.mubr.f32.gmra.mrb[0].mxu0 %v1347
    %v1415 = vpop.f32.mrb[0].mxu0
    %v1416 = vadd.f32 0.0, %v1415
    %v1417 = vpop.f32.mrb[0].mxu0
    %1418 = vdwg.mxu0
    %v1419 = vpack.c.bf16 %v1416, %v1255
    %v1420 = vld [vmem:[#allocation12] sm:$0xf]
    %v1421 = vld [vmem:[#allocation12 + $0x4] sm:$0xf]
    %v1422 = vld [vmem:[#allocation12 + $0x8] sm:$0xf]
    %v1423 = vld [vmem:[#allocation12 + $0xc] sm:$0xf]
    %s1424 = scalar_lea.vmem [#allocation12], 16
    %v1425 = vld [vmem:[%s1424] sm:$0xf]
    %v1426 = vld [vmem:[%s1424 + $0x4] sm:$0xf]
    %v1427 = vld [vmem:[%s1424 + $0x8] sm:$0xf]
    %v1428 = vld [vmem:[%s1424 + $0xc] sm:$0xf]
    %v1430 = vshrl.u32 %v1419, 16
    %v1432 = vshll.u32 %v1419, 16
    %v1434 = vrot.slane %v1432, 1
    %v1435 = vor.u32 %v1430, %v1434
    %v1440 = vunpack.c.l.b16 %v1425
    %v1441 = vunpack.c.l.b16 %v1426
    %v1442 = vunpack.c.l.b16 %v1427
    %v1443 = vunpack.c.l.b16 %v1428
    %v1444 = vpack.c.b16 %v1441, %v1440
    %v1445 = vpack.c.b16 %v1443, %v1442
    %v1449 = vsel %vm313, %v1435, 0
    %1451 = vmatprep.subr.bf16.mxu0 0
    %1452 = vmatpush1.bf16.msra.mxu0 %v1444
    %1453 = vmatprep.subr.bf16.mxu0 0
    %1454 = vmatpush1.bf16.msra.mxu0 %v1445
    %1455 = vmatprep.subr.bf16.mxu0 0
    %1456 = vmatpush1.bf16.msra.mxu0 0
    %1457 = vmatprep.subr.bf16.mxu0 0
    %1458 = vmatpush1.bf16.msra.mxu0 0
    %1459 = vmatprep.subr.bf16.mxu0 0
    %1460 = vmatpush1.bf16.msra.mxu0 0
    %1461 = vmatprep.subr.bf16.mxu0 0
    %1462 = vmatpush1.bf16.msra.mxu0 0
    %1463 = vmatprep.subr.bf16.mxu0 0
    %1464 = vmatpush1.bf16.msra.mxu0 0
    %1465 = vmatprep.subr.bf16.mxu0 0
    %1466 = vmatpush1.bf16.msra.mxu0 0
    %1467 = vmatprep.subr.bf16.mxu0 0
    %1468 = vmatpush1.bf16.msra.mxu0 0
    %1469 = vmatprep.subr.bf16.mxu0 0
    %1470 = vmatpush1.bf16.msra.mxu0 0
    %1471 = vmatprep.subr.bf16.mxu0 0
    %1472 = vmatpush1.bf16.msra.mxu0 0
    %1473 = vmatprep.subr.bf16.mxu0 0
    %1474 = vmatpush1.bf16.msra.mxu0 0
    %1475 = vmatprep.subr.bf16.mxu0 0
    %1476 = vmatpush1.bf16.msra.mxu0 0
    %1477 = vmatprep.subr.bf16.mxu0 0
    %1478 = vmatpush1.bf16.msra.mxu0 0
    %1479 = vmatprep.subr.bf16.mxu0 0
    %1480 = vmatpush1.bf16.msra.mxu0 0
    %1481 = vmatprep.subr.bf16.mxu0 0
    %1482 = vmatpush1.bf16.msra.mxu0 0
    %1483 = vmatprep.mubr.bf16.mxu0 0
    %1484 = vmatmul.mubr.bf16.gmra.mrb[0].mxu0 %v1449
    %v1485 = vpop.f32.mrb[0].mxu0
    %v1486 = vadd.f32 0.0, %v1485
    %v1487 = vpop.f32.mrb[0].mxu0
    %v1488 = vpop.f32.mrb[0].mxu0
    %v1489 = vadd.f32 0.0, %v1488
    %v1490 = vpop.f32.mrb[0].mxu0
    %1491 = vdwg.mxu0
    %v1496 = vunpack.c.l.b16 %v1420
    %v1497 = vunpack.c.l.b16 %v1421
    %v1498 = vunpack.c.l.b16 %v1422
    %v1499 = vunpack.c.l.b16 %v1423
    %v1500 = vpack.c.b16 %v1497, %v1496
    %v1501 = vpack.c.b16 %v1499, %v1498
    %v1504 = vsel %vm313, %v1419, 0
    %1506 = vmatprep.subr.bf16.mxu0 0
    %1507 = vmatpush1.bf16.msra.mxu0 %v1500
    %1508 = vmatprep.subr.bf16.mxu0 0
    %1509 = vmatpush1.bf16.msra.mxu0 %v1501
    %1510 = vmatprep.subr.bf16.mxu0 0
    %1511 = vmatpush1.bf16.msra.mxu0 0
    %1512 = vmatprep.subr.bf16.mxu0 0
    %1513 = vmatpush1.bf16.msra.mxu0 0
    %1514 = vmatprep.subr.bf16.mxu0 0
    %1515 = vmatpush1.bf16.msra.mxu0 0
    %1516 = vmatprep.subr.bf16.mxu0 0
    %1517 = vmatpush1.bf16.msra.mxu0 0
    %1518 = vmatprep.subr.bf16.mxu0 0
    %1519 = vmatpush1.bf16.msra.mxu0 0
    %1520 = vmatprep.subr.bf16.mxu0 0
    %1521 = vmatpush1.bf16.msra.mxu0 0
    %1522 = vmatprep.subr.bf16.mxu0 0
    %1523 = vmatpush1.bf16.msra.mxu0 0
    %1524 = vmatprep.subr.bf16.mxu0 0
    %1525 = vmatpush1.bf16.msra.mxu0 0
    %1526 = vmatprep.subr.bf16.mxu0 0
    %1527 = vmatpush1.bf16.msra.mxu0 0
    %1528 = vmatprep.subr.bf16.mxu0 0
    %1529 = vmatpush1.bf16.msra.mxu0 0
    %1530 = vmatprep.subr.bf16.mxu0 0
    %1531 = vmatpush1.bf16.msra.mxu0 0
    %1532 = vmatprep.subr.bf16.mxu0 0
    %1533 = vmatpush1.bf16.msra.mxu0 0
    %1534 = vmatprep.subr.bf16.mxu0 0
    %1535 = vmatpush1.bf16.msra.mxu0 0
    %1536 = vmatprep.subr.bf16.mxu0 0
    %1537 = vmatpush1.bf16.msra.mxu0 0
    %1538 = vmatprep.mubr.bf16.mxu0 0
    %1539 = vmatmul.mubr.bf16.gmra.mrb[0].mxu0 %v1504
    %v1540 = vpop.f32.mrb[0].mxu0
    %v1541 = vadd.f32 %v1486, %v1540
    %v1542 = vpop.f32.mrb[0].mxu0
    %v1543 = vpop.f32.mrb[0].mxu0
    %v1544 = vadd.f32 %v1489, %v1543
    %v1545 = vpop.f32.mrb[0].mxu0
    %1546 = vdwg.mxu0
    %s1547 = scalar_lea.vmem [#allocation12], 32
    %v1548 = vld [vmem:[%s1547] sm:$0xf]
    %v1549 = vld [vmem:[%s1547 + $0x4] sm:$0xf]
    %v1550 = vld [vmem:[%s1547 + $0x8] sm:$0xf]
    %v1551 = vld [vmem:[%s1547 + $0xc] sm:$0xf]
    %v1553 = vrot.slane %v1419, 1
    %v1558 = vunpack.c.l.b16 %v1548
    %v1559 = vunpack.c.l.b16 %v1549
    %v1560 = vunpack.c.l.b16 %v1550
    %v1561 = vunpack.c.l.b16 %v1551
    %v1562 = vpack.c.b16 %v1559, %v1558
    %v1563 = vpack.c.b16 %v1561, %v1560
    %v1567 = vsel %vm313, %v1553, 0
    %1569 = vmatprep.subr.bf16.mxu0 0
    %1570 = vmatpush1.bf16.msra.mxu0 %v1562
    %1571 = vmatprep.subr.bf16.mxu0 0
    %1572 = vmatpush1.bf16.msra.mxu0 %v1563
    %1573 = vmatprep.subr.bf16.mxu0 0
    %1574 = vmatpush1.bf16.msra.mxu0 0
    %1575 = vmatprep.subr.bf16.mxu0 0
    %1576 = vmatpush1.bf16.msra.mxu0 0
    %1577 = vmatprep.subr.bf16.mxu0 0
    %1578 = vmatpush1.bf16.msra.mxu0 0
    %1579 = vmatprep.subr.bf16.mxu0 0
    %1580 = vmatpush1.bf16.msra.mxu0 0
    %1581 = vmatprep.subr.bf16.mxu0 0
    %1582 = vmatpush1.bf16.msra.mxu0 0
    %1583 = vmatprep.subr.bf16.mxu0 0
    %1584 = vmatpush1.bf16.msra.mxu0 0
    %1585 = vmatprep.subr.bf16.mxu0 0
    %1586 = vmatpush1.bf16.msra.mxu0 0
    %1587 = vmatprep.subr.bf16.mxu0 0
    %1588 = vmatpush1.bf16.msra.mxu0 0
    %1589 = vmatprep.subr.bf16.mxu0 0
    %1590 = vmatpush1.bf16.msra.mxu0 0
    %1591 = vmatprep.subr.bf16.mxu0 0
    %1592 = vmatpush1.bf16.msra.mxu0 0
    %1593 = vmatprep.subr.bf16.mxu0 0
    %1594 = vmatpush1.bf16.msra.mxu0 0
    %1595 = vmatprep.subr.bf16.mxu0 0
    %1596 = vmatpush1.bf16.msra.mxu0 0
    %1597 = vmatprep.subr.bf16.mxu0 0
    %1598 = vmatpush1.bf16.msra.mxu0 0
    %1599 = vmatprep.subr.bf16.mxu0 0
    %1600 = vmatpush1.bf16.msra.mxu0 0
    %1601 = vmatprep.mubr.bf16.mxu0 0
    %1602 = vmatmul.mubr.bf16.gmra.mrb[0].mxu0 %v1567
    %v1603 = vpop.f32.mrb[0].mxu0
    %v1604 = vadd.f32 0.0, %v1603
    %v1605 = vpop.f32.mrb[0].mxu0
    %v1606 = vpop.f32.mrb[0].mxu0
    %v1607 = vadd.f32 0.0, %v1606
    %v1608 = vpop.f32.mrb[0].mxu0
    %1609 = vdwg.mxu0
    %v1610 = vadd.f32 %v1541, %v1604
    %v1611 = vadd.f32 %v1544, %v1607
    %v1612 = vld [vmem:[#allocation13] sm:$0x1]
    %v1614 = vlaneseq
    %v1615 = vshrl.u32 %v1614, 7
    %v1616 = vsub.s32 0, %v1615
    %v1617 = vrot.slane %v1612, %v1616
    %v1619 = vadd.f32 %v1610, %v1617
    %v1620 = vadd.f32 %v1611, %v1617
    %v1621 = vmax.f32 %v1619, 0.0
    %v1622 = vmax.f32 %v1620, 0.0
    %vm1623 = vcmask 1045504
    %v1624 = vsel %vm1623, %v1621, -inf
    %v1625 = vrot.slane %v1624, 4
    %v1626 = vmax.f32 %v1624, %v1625
    %v1627 = vrot.slane %v1626, 2
    %v1628 = vmax.f32 %v1626, %v1627
    %v1629 = vrot.slane %v1628, 1
    %v1630 = vmax.f32 %v1628, %v1629
    %v1631 = vsel %vm1623, %v1622, -inf
    %v1632 = vrot.slane %v1631, 4
    %v1633 = vmax.f32 %v1631, %v1632
    %v1634 = vrot.slane %v1633, 2
    %v1635 = vmax.f32 %v1633, %v1634
    %v1636 = vrot.slane %v1635, 1
    %v1637 = vmax.f32 %v1635, %v1636
    %vm1638 = vcmask 1040384
    %v1639 = vsel %vm1638, %v1630, %v1637
    %v1640 = vld [vmem:[#allocation15] sm:$0xf]
    %v1641 = vld [vmem:[#allocation15 + $0x4] sm:$0xf]
    %v1642 = vld [vmem:[#allocation15 + $0x8] sm:$0xf]
    %v1643 = vld [vmem:[#allocation15 + $0xc] sm:$0xf]
    %s1644 = scalar_lea.vmem [#allocation15], 16
    %v1645 = vld [vmem:[%s1644] sm:$0xf]
    %v1646 = vld [vmem:[%s1644 + $0x4] sm:$0xf]
    %v1647 = vld [vmem:[%s1644 + $0x8] sm:$0xf]
    %v1648 = vld [vmem:[%s1644 + $0xc] sm:$0xf]
    %v1653 = vunpack.c.l.b16 %v1645
    %v1654 = vunpack.c.l.b16 %v1646
    %v1655 = vunpack.c.l.b16 %v1647
    %v1656 = vunpack.c.l.b16 %v1648
    %v1657 = vpack.c.b16 %v1654, %v1653
    %v1658 = vpack.c.b16 %v1656, %v1655
    %1661 = vmatprep.subr.bf16.mxu0 0
    %1662 = vmatpush1.bf16.msra.mxu0 %v1657
    %1663 = vmatprep.subr.bf16.mxu0 0
    %1664 = vmatpush1.bf16.msra.mxu0 %v1658
    %1665 = vmatprep.subr.bf16.mxu0 0
    %1666 = vmatpush1.bf16.msra.mxu0 0
    %1667 = vmatprep.subr.bf16.mxu0 0
    %1668 = vmatpush1.bf16.msra.mxu0 0
    %1669 = vmatprep.subr.bf16.mxu0 0
    %1670 = vmatpush1.bf16.msra.mxu0 0
    %1671 = vmatprep.subr.bf16.mxu0 0
    %1672 = vmatpush1.bf16.msra.mxu0 0
    %1673 = vmatprep.subr.bf16.mxu0 0
    %1674 = vmatpush1.bf16.msra.mxu0 0
    %1675 = vmatprep.subr.bf16.mxu0 0
    %1676 = vmatpush1.bf16.msra.mxu0 0
    %1677 = vmatprep.subr.bf16.mxu0 0
    %1678 = vmatpush1.bf16.msra.mxu0 0
    %1679 = vmatprep.subr.bf16.mxu0 0
    %1680 = vmatpush1.bf16.msra.mxu0 0
    %1681 = vmatprep.subr.bf16.mxu0 0
    %1682 = vmatpush1.bf16.msra.mxu0 0
    %1683 = vmatprep.subr.bf16.mxu0 0
    %1684 = vmatpush1.bf16.msra.mxu0 0
    %1685 = vmatprep.subr.bf16.mxu0 0
    %1686 = vmatpush1.bf16.msra.mxu0 0
    %1687 = vmatprep.subr.bf16.mxu0 0
    %1688 = vmatpush1.bf16.msra.mxu0 0
    %1689 = vmatprep.subr.bf16.mxu0 0
    %1690 = vmatpush1.bf16.msra.mxu0 0
    %1691 = vmatprep.subr.bf16.mxu0 0
    %1692 = vmatpush1.bf16.msra.mxu0 0
    %1693 = vmatprep.mubr.bf16.mxu0 0
    %1694 = vmatmul.mubr.bf16.gmra.mrb[0].mxu0 %v1449
    %v1695 = vpop.f32.mrb[0].mxu0
    %v1696 = vadd.f32 0.0, %v1695
    %v1697 = vpop.f32.mrb[0].mxu0
    %v1698 = vpop.f32.mrb[0].mxu0
    %v1699 = vadd.f32 0.0, %v1698
    %v1700 = vpop.f32.mrb[0].mxu0
    %1701 = vdwg.mxu0
    %v1706 = vunpack.c.l.b16 %v1640
    %v1707 = vunpack.c.l.b16 %v1641
    %v1708 = vunpack.c.l.b16 %v1642
    %v1709 = vunpack.c.l.b16 %v1643
    %v1710 = vpack.c.b16 %v1707, %v1706
    %v1711 = vpack.c.b16 %v1709, %v1708
    %1714 = vmatprep.subr.bf16.mxu0 0
    %1715 = vmatpush1.bf16.msra.mxu0 %v1710
    %1716 = vmatprep.subr.bf16.mxu0 0
    %1717 = vmatpush1.bf16.msra.mxu0 %v1711
    %1718 = vmatprep.subr.bf16.mxu0 0
    %1719 = vmatpush1.bf16.msra.mxu0 0
    %1720 = vmatprep.subr.bf16.mxu0 0
    %1721 = vmatpush1.bf16.msra.mxu0 0
    %1722 = vmatprep.subr.bf16.mxu0 0
    %1723 = vmatpush1.bf16.msra.mxu0 0
    %1724 = vmatprep.subr.bf16.mxu0 0
    %1725 = vmatpush1.bf16.msra.mxu0 0
    %1726 = vmatprep.subr.bf16.mxu0 0
    %1727 = vmatpush1.bf16.msra.mxu0 0
    %1728 = vmatprep.subr.bf16.mxu0 0
    %1729 = vmatpush1.bf16.msra.mxu0 0
    %1730 = vmatprep.subr.bf16.mxu0 0
    %1731 = vmatpush1.bf16.msra.mxu0 0
    %1732 = vmatprep.subr.bf16.mxu0 0
    %1733 = vmatpush1.bf16.msra.mxu0 0
    %1734 = vmatprep.subr.bf16.mxu0 0
    %1735 = vmatpush1.bf16.msra.mxu0 0
    %1736 = vmatprep.subr.bf16.mxu0 0
    %1737 = vmatpush1.bf16.msra.mxu0 0
    %1738 = vmatprep.subr.bf16.mxu0 0
    %1739 = vmatpush1.bf16.msra.mxu0 0
    %1740 = vmatprep.subr.bf16.mxu0 0
    %1741 = vmatpush1.bf16.msra.mxu0 0
    %1742 = vmatprep.subr.bf16.mxu0 0
    %1743 = vmatpush1.bf16.msra.mxu0 0
    %1744 = vmatprep.subr.bf16.mxu0 0
    %1745 = vmatpush1.bf16.msra.mxu0 0
    %1746 = vmatprep.mubr.bf16.mxu0 0
    %1747 = vmatmul.mubr.bf16.gmra.mrb[0].mxu0 %v1504
    %v1748 = vpop.f32.mrb[0].mxu0
    %v1749 = vadd.f32 %v1696, %v1748
    %v1750 = vpop.f32.mrb[0].mxu0
    %v1751 = vpop.f32.mrb[0].mxu0
    %v1752 = vadd.f32 %v1699, %v1751
    %v1753 = vpop.f32.mrb[0].mxu0
    %1754 = vdwg.mxu0
    %s1755 = scalar_lea.vmem [#allocation15], 32
    %v1756 = vld [vmem:[%s1755] sm:$0xf]
    %v1757 = vld [vmem:[%s1755 + $0x4] sm:$0xf]
    %v1758 = vld [vmem:[%s1755 + $0x8] sm:$0xf]
    %v1759 = vld [vmem:[%s1755 + $0xc] sm:$0xf]
    %v1764 = vunpack.c.l.b16 %v1756
    %v1765 = vunpack.c.l.b16 %v1757
    %v1766 = vunpack.c.l.b16 %v1758
    %v1767 = vunpack.c.l.b16 %v1759
    %v1768 = vpack.c.b16 %v1765, %v1764
    %v1769 = vpack.c.b16 %v1767, %v1766
    %1772 = vmatprep.subr.bf16.mxu0 0
    %1773 = vmatpush1.bf16.msra.mxu0 %v1768
    %1774 = vmatprep.subr.bf16.mxu0 0
    %1775 = vmatpush1.bf16.msra.mxu0 %v1769
    %1776 = vmatprep.subr.bf16.mxu0 0
    %1777 = vmatpush1.bf16.msra.mxu0 0
    %1778 = vmatprep.subr.bf16.mxu0 0
    %1779 = vmatpush1.bf16.msra.mxu0 0
    %1780 = vmatprep.subr.bf16.mxu0 0
    %1781 = vmatpush1.bf16.msra.mxu0 0
    %1782 = vmatprep.subr.bf16.mxu0 0
    %1783 = vmatpush1.bf16.msra.mxu0 0
    %1784 = vmatprep.subr.bf16.mxu0 0
    %1785 = vmatpush1.bf16.msra.mxu0 0
    %1786 = vmatprep.subr.bf16.mxu0 0
    %1787 = vmatpush1.bf16.msra.mxu0 0
    %1788 = vmatprep.subr.bf16.mxu0 0
    %1789 = vmatpush1.bf16.msra.mxu0 0
    %1790 = vmatprep.subr.bf16.mxu0 0
    %1791 = vmatpush1.bf16.msra.mxu0 0
    %1792 = vmatprep.subr.bf16.mxu0 0
    %1793 = vmatpush1.bf16.msra.mxu0 0
    %1794 = vmatprep.subr.bf16.mxu0 0
    %1795 = vmatpush1.bf16.msra.mxu0 0
    %1796 = vmatprep.subr.bf16.mxu0 0
    %1797 = vmatpush1.bf16.msra.mxu0 0
    %1798 = vmatprep.subr.bf16.mxu0 0
    %1799 = vmatpush1.bf16.msra.mxu0 0
    %1800 = vmatprep.subr.bf16.mxu0 0
    %1801 = vmatpush1.bf16.msra.mxu0 0
    %1802 = vmatprep.subr.bf16.mxu0 0
    %1803 = vmatpush1.bf16.msra.mxu0 0
    %1804 = vmatprep.mubr.bf16.mxu0 0
    %1805 = vmatmul.mubr.bf16.gmra.mrb[0].mxu0 %v1567
    %v1806 = vpop.f32.mrb[0].mxu0
    %v1807 = vadd.f32 0.0, %v1806
    %v1808 = vpop.f32.mrb[0].mxu0
    %v1809 = vpop.f32.mrb[0].mxu0
    %v1810 = vadd.f32 0.0, %v1809
    %v1811 = vpop.f32.mrb[0].mxu0
    %1812 = vdwg.mxu0
    %v1813 = vadd.f32 %v1749, %v1807
    %v1814 = vadd.f32 %v1752, %v1810
    %s1815 = scalar_lea.vmem [#allocation15], 48
    %v1816 = vld [vmem:[%s1815] sm:$0xf]
    %v1817 = vld [vmem:[%s1815 + $0x4] sm:$0xf]
    %v1818 = vld [vmem:[%s1815 + $0x8] sm:$0xf]
    %v1819 = vld [vmem:[%s1815 + $0xc] sm:$0xf]
    %v1820 = vrot.slane %v1430, 1
    %v1821 = vrot.slane %v1432, 2
    %v1822 = vor.u32 %v1820, %v1821
    %v1827 = vunpack.c.l.b16 %v1816
    %v1828 = vunpack.c.l.b16 %v1817
    %v1829 = vunpack.c.l.b16 %v1818
    %v1830 = vunpack.c.l.b16 %v1819
    %v1831 = vpack.c.b16 %v1828, %v1827
    %v1832 = vpack.c.b16 %v1830, %v1829
    %v1836 = vsel %vm313, %v1822, 0
    %1838 = vmatprep.subr.bf16.mxu0 0
    %1839 = vmatpush1.bf16.msra.mxu0 %v1831
    %1840 = vmatprep.subr.bf16.mxu0 0
    %1841 = vmatpush1.bf16.msra.mxu0 %v1832
    %1842 = vmatprep.subr.bf16.mxu0 0
    %1843 = vmatpush1.bf16.msra.mxu0 0
    %1844 = vmatprep.subr.bf16.mxu0 0
    %1845 = vmatpush1.bf16.msra.mxu0 0
    %1846 = vmatprep.subr.bf16.mxu0 0
    %1847 = vmatpush1.bf16.msra.mxu0 0
    %1848 = vmatprep.subr.bf16.mxu0 0
    %1849 = vmatpush1.bf16.msra.mxu0 0
    %1850 = vmatprep.subr.bf16.mxu0 0
    %1851 = vmatpush1.bf16.msra.mxu0 0
    %1852 = vmatprep.subr.bf16.mxu0 0
    %1853 = vmatpush1.bf16.msra.mxu0 0
    %1854 = vmatprep.subr.bf16.mxu0 0
    %1855 = vmatpush1.bf16.msra.mxu0 0
    %1856 = vmatprep.subr.bf16.mxu0 0
    %1857 = vmatpush1.bf16.msra.mxu0 0
    %1858 = vmatprep.subr.bf16.mxu0 0
    %1859 = vmatpush1.bf16.msra.mxu0 0
    %1860 = vmatprep.subr.bf16.mxu0 0
    %1861 = vmatpush1.bf16.msra.mxu0 0
    %1862 = vmatprep.subr.bf16.mxu0 0
    %1863 = vmatpush1.bf16.msra.mxu0 0
    %1864 = vmatprep.subr.bf16.mxu0 0
    %1865 = vmatpush1.bf16.msra.mxu0 0
    %1866 = vmatprep.subr.bf16.mxu0 0
    %1867 = vmatpush1.bf16.msra.mxu0 0
    %1868 = vmatprep.subr.bf16.mxu0 0
    %1869 = vmatpush1.bf16.msra.mxu0 0
    %1870 = vmatprep.mubr.bf16.mxu0 0
    %1871 = vmatmul.mubr.bf16.gmra.mrb[0].mxu0 %v1836
    %v1872 = vpop.f32.mrb[0].mxu0
    %v1873 = vadd.f32 0.0, %v1872
    %v1874 = vpop.f32.mrb[0].mxu0
    %v1875 = vpop.f32.mrb[0].mxu0
    %v1876 = vadd.f32 0.0, %v1875
    %v1877 = vpop.f32.mrb[0].mxu0
    %1878 = vdwg.mxu0
    %v1879 = vadd.f32 %v1813, %v1873
    %v1880 = vadd.f32 %v1814, %v1876
    %v1881 = vld [vmem:[#allocation16] sm:$0x1]
    %v1883 = vlaneseq
    %v1884 = vshrl.u32 %v1883, 7
    %v1885 = vsub.s32 0, %v1884
    %v1886 = vrot.slane %v1881, %v1885
    %v1888 = vadd.f32 %v1879, %v1886
    %v1889 = vadd.f32 %v1880, %v1886
    %v1890 = vmax.f32 %v1888, 0.0
    %v1891 = vmax.f32 %v1889, 0.0
    %vm1892 = vcmask 1044480
    %v1893 = vsel %vm1892, %v1890, -inf
    %v1894 = vrot.slane %v1893, 4
    %v1895 = vmax.f32 %v1893, %v1894
    %v1896 = vrot.slane %v1895, 2
    %v1897 = vmax.f32 %v1895, %v1896
    %v1898 = vrot.slane %v1897, 1
    %v1899 = vmax.f32 %v1897, %v1898
    %v1900 = vsel %vm1892, %v1891, -inf
    %v1901 = vrot.slane %v1900, 4
    %v1902 = vmax.f32 %v1900, %v1901
    %v1903 = vrot.slane %v1902, 2
    %v1904 = vmax.f32 %v1902, %v1903
    %v1905 = vrot.slane %v1904, 1
    %v1906 = vmax.f32 %v1904, %v1905
    %v1907 = vsel %vm1638, %v1899, %v1906
    %v1908 = vld [vmem:[#allocation18] sm:$0xf]
    %v1909 = vld [vmem:[#allocation18 + $0x4] sm:$0xf]
    %v1910 = vld [vmem:[#allocation18 + $0x8] sm:$0xf]
    %v1911 = vld [vmem:[#allocation18 + $0xc] sm:$0xf]
    %s1912 = scalar_lea.vmem [#allocation18], 16
    %v1913 = vld [vmem:[%s1912] sm:$0xf]
    %v1914 = vld [vmem:[%s1912 + $0x4] sm:$0xf]
    %v1915 = vld [vmem:[%s1912 + $0x8] sm:$0xf]
    %v1916 = vld [vmem:[%s1912 + $0xc] sm:$0xf]
    %v1921 = vunpack.c.l.b16 %v1913
    %v1922 = vunpack.c.l.b16 %v1914
    %v1923 = vunpack.c.l.b16 %v1915
    %v1924 = vunpack.c.l.b16 %v1916
    %v1925 = vpack.c.b16 %v1922, %v1921
    %v1926 = vpack.c.b16 %v1924, %v1923
    %1929 = vmatprep.subr.bf16.mxu0 0
    %1930 = vmatpush1.bf16.msra.mxu0 %v1925
    %1931 = vmatprep.subr.bf16.mxu0 0
    %1932 = vmatpush1.bf16.msra.mxu0 %v1926
    %1933 = vmatprep.subr.bf16.mxu0 0
    %1934 = vmatpush1.bf16.msra.mxu0 0
    %1935 = vmatprep.subr.bf16.mxu0 0
    %1936 = vmatpush1.bf16.msra.mxu0 0
    %1937 = vmatprep.subr.bf16.mxu0 0
    %1938 = vmatpush1.bf16.msra.mxu0 0
    %1939 = vmatprep.subr.bf16.mxu0 0
    %1940 = vmatpush1.bf16.msra.mxu0 0
    %1941 = vmatprep.subr.bf16.mxu0 0
    %1942 = vmatpush1.bf16.msra.mxu0 0
    %1943 = vmatprep.subr.bf16.mxu0 0
    %1944 = vmatpush1.bf16.msra.mxu0 0
    %1945 = vmatprep.subr.bf16.mxu0 0
    %1946 = vmatpush1.bf16.msra.mxu0 0
    %1947 = vmatprep.subr.bf16.mxu0 0
    %1948 = vmatpush1.bf16.msra.mxu0 0
    %1949 = vmatprep.subr.bf16.mxu0 0
    %1950 = vmatpush1.bf16.msra.mxu0 0
    %1951 = vmatprep.subr.bf16.mxu0 0
    %1952 = vmatpush1.bf16.msra.mxu0 0
    %1953 = vmatprep.subr.bf16.mxu0 0
    %1954 = vmatpush1.bf16.msra.mxu0 0
    %1955 = vmatprep.subr.bf16.mxu0 0
    %1956 = vmatpush1.bf16.msra.mxu0 0
    %1957 = vmatprep.subr.bf16.mxu0 0
    %1958 = vmatpush1.bf16.msra.mxu0 0
    %1959 = vmatprep.subr.bf16.mxu0 0
    %1960 = vmatpush1.bf16.msra.mxu0 0
    %1961 = vmatprep.mubr.bf16.mxu0 0
    %1962 = vmatmul.mubr.bf16.gmra.mrb[0].mxu0 %v1449
    %v1963 = vpop.f32.mrb[0].mxu0
    %v1964 = vadd.f32 0.0, %v1963
    %v1965 = vpop.f32.mrb[0].mxu0
    %v1966 = vpop.f32.mrb[0].mxu0
    %v1967 = vadd.f32 0.0, %v1966
    %v1968 = vpop.f32.mrb[0].mxu0
    %1969 = vdwg.mxu0
    %v1974 = vunpack.c.l.b16 %v1908
    %v1975 = vunpack.c.l.b16 %v1909
    %v1976 = vunpack.c.l.b16 %v1910
    %v1977 = vunpack.c.l.b16 %v1911
    %v1978 = vpack.c.b16 %v1975, %v1974
    %v1979 = vpack.c.b16 %v1977, %v1976
    %1982 = vmatprep.subr.bf16.mxu0 0
    %1983 = vmatpush1.bf16.msra.mxu0 %v1978
    %1984 = vmatprep.subr.bf16.mxu0 0
    %1985 = vmatpush1.bf16.msra.mxu0 %v1979
    %1986 = vmatprep.subr.bf16.mxu0 0
    %1987 = vmatpush1.bf16.msra.mxu0 0
    %1988 = vmatprep.subr.bf16.mxu0 0
    %1989 = vmatpush1.bf16.msra.mxu0 0
    %1990 = vmatprep.subr.bf16.mxu0 0
    %1991 = vmatpush1.bf16.msra.mxu0 0
    %1992 = vmatprep.subr.bf16.mxu0 0
    %1993 = vmatpush1.bf16.msra.mxu0 0
    %1994 = vmatprep.subr.bf16.mxu0 0
    %1995 = vmatpush1.bf16.msra.mxu0 0
    %1996 = vmatprep.subr.bf16.mxu0 0
    %1997 = vmatpush1.bf16.msra.mxu0 0
    %1998 = vmatprep.subr.bf16.mxu0 0
    %1999 = vmatpush1.bf16.msra.mxu0 0
    %2000 = vmatprep.subr.bf16.mxu0 0
    %2001 = vmatpush1.bf16.msra.mxu0 0
    %2002 = vmatprep.subr.bf16.mxu0 0
    %2003 = vmatpush1.bf16.msra.mxu0 0
    %2004 = vmatprep.subr.bf16.mxu0 0
    %2005 = vmatpush1.bf16.msra.mxu0 0
    %2006 = vmatprep.subr.bf16.mxu0 0
    %2007 = vmatpush1.bf16.msra.mxu0 0
    %2008 = vmatprep.subr.bf16.mxu0 0
    %2009 = vmatpush1.bf16.msra.mxu0 0
    %2010 = vmatprep.subr.bf16.mxu0 0
    %2011 = vmatpush1.bf16.msra.mxu0 0
    %2012 = vmatprep.subr.bf16.mxu0 0
    %2013 = vmatpush1.bf16.msra.mxu0 0
    %2014 = vmatprep.mubr.bf16.mxu0 0
    %2015 = vmatmul.mubr.bf16.gmra.mrb[0].mxu0 %v1504
    %v2016 = vpop.f32.mrb[0].mxu0
    %v2017 = vadd.f32 %v1964, %v2016
    %v2018 = vpop.f32.mrb[0].mxu0
    %v2019 = vpop.f32.mrb[0].mxu0
    %v2020 = vadd.f32 %v1967, %v2019
    %v2021 = vpop.f32.mrb[0].mxu0
    %2022 = vdwg.mxu0
    %s2023 = scalar_lea.vmem [#allocation18], 32
    %v2024 = vld [vmem:[%s2023] sm:$0xf]
    %v2025 = vld [vmem:[%s2023 + $0x4] sm:$0xf]
    %v2026 = vld [vmem:[%s2023 + $0x8] sm:$0xf]
    %v2027 = vld [vmem:[%s2023 + $0xc] sm:$0xf]
    %v2032 = vunpack.c.l.b16 %v2024
    %v2033 = vunpack.c.l.b16 %v2025
    %v2034 = vunpack.c.l.b16 %v2026
    %v2035 = vunpack.c.l.b16 %v2027
    %v2036 = vpack.c.b16 %v2033, %v2032
    %v2037 = vpack.c.b16 %v2035, %v2034
    %2040 = vmatprep.subr.bf16.mxu0 0
    %2041 = vmatpush1.bf16.msra.mxu0 %v2036
    %2042 = vmatprep.subr.bf16.mxu0 0
    %2043 = vmatpush1.bf16.msra.mxu0 %v2037
    %2044 = vmatprep.subr.bf16.mxu0 0
    %2045 = vmatpush1.bf16.msra.mxu0 0
    %2046 = vmatprep.subr.bf16.mxu0 0
    %2047 = vmatpush1.bf16.msra.mxu0 0
    %2048 = vmatprep.subr.bf16.mxu0 0
    %2049 = vmatpush1.bf16.msra.mxu0 0
    %2050 = vmatprep.subr.bf16.mxu0 0
    %2051 = vmatpush1.bf16.msra.mxu0 0
    %2052 = vmatprep.subr.bf16.mxu0 0
    %2053 = vmatpush1.bf16.msra.mxu0 0
    %2054 = vmatprep.subr.bf16.mxu0 0
    %2055 = vmatpush1.bf16.msra.mxu0 0
    %2056 = vmatprep.subr.bf16.mxu0 0
    %2057 = vmatpush1.bf16.msra.mxu0 0
    %2058 = vmatprep.subr.bf16.mxu0 0
    %2059 = vmatpush1.bf16.msra.mxu0 0
    %2060 = vmatprep.subr.bf16.mxu0 0
    %2061 = vmatpush1.bf16.msra.mxu0 0
    %2062 = vmatprep.subr.bf16.mxu0 0
    %2063 = vmatpush1.bf16.msra.mxu0 0
    %2064 = vmatprep.subr.bf16.mxu0 0
    %2065 = vmatpush1.bf16.msra.mxu0 0
    %2066 = vmatprep.subr.bf16.mxu0 0
    %2067 = vmatpush1.bf16.msra.mxu0 0
    %2068 = vmatprep.subr.bf16.mxu0 0
    %2069 = vmatpush1.bf16.msra.mxu0 0
    %2070 = vmatprep.subr.bf16.mxu0 0
    %2071 = vmatpush1.bf16.msra.mxu0 0
    %2072 = vmatprep.mubr.bf16.mxu0 0
    %2073 = vmatmul.mubr.bf16.gmra.mrb[0].mxu0 %v1567
    %v2074 = vpop.f32.mrb[0].mxu0
    %v2075 = vadd.f32 0.0, %v2074
    %v2076 = vpop.f32.mrb[0].mxu0
    %v2077 = vpop.f32.mrb[0].mxu0
    %v2078 = vadd.f32 0.0, %v2077
    %v2079 = vpop.f32.mrb[0].mxu0
    %2080 = vdwg.mxu0
    %v2081 = vadd.f32 %v2017, %v2075
    %v2082 = vadd.f32 %v2020, %v2078
    %s2083 = scalar_lea.vmem [#allocation18], 48
    %v2084 = vld [vmem:[%s2083] sm:$0xf]
    %v2085 = vld [vmem:[%s2083 + $0x4] sm:$0xf]
    %v2086 = vld [vmem:[%s2083 + $0x8] sm:$0xf]
    %v2087 = vld [vmem:[%s2083 + $0xc] sm:$0xf]
    %v2092 = vunpack.c.l.b16 %v2084
    %v2093 = vunpack.c.l.b16 %v2085
    %v2094 = vunpack.c.l.b16 %v2086
    %v2095 = vunpack.c.l.b16 %v2087
    %v2096 = vpack.c.b16 %v2093, %v2092
    %v2097 = vpack.c.b16 %v2095, %v2094
    %2100 = vmatprep.subr.bf16.mxu0 0
    %2101 = vmatpush1.bf16.msra.mxu0 %v2096
    %2102 = vmatprep.subr.bf16.mxu0 0
    %2103 = vmatpush1.bf16.msra.mxu0 %v2097
    %2104 = vmatprep.subr.bf16.mxu0 0
    %2105 = vmatpush1.bf16.msra.mxu0 0
    %2106 = vmatprep.subr.bf16.mxu0 0
    %2107 = vmatpush1.bf16.msra.mxu0 0
    %2108 = vmatprep.subr.bf16.mxu0 0
    %2109 = vmatpush1.bf16.msra.mxu0 0
    %2110 = vmatprep.subr.bf16.mxu0 0
    %2111 = vmatpush1.bf16.msra.mxu0 0
    %2112 = vmatprep.subr.bf16.mxu0 0
    %2113 = vmatpush1.bf16.msra.mxu0 0
    %2114 = vmatprep.subr.bf16.mxu0 0
    %2115 = vmatpush1.bf16.msra.mxu0 0
    %2116 = vmatprep.subr.bf16.mxu0 0
    %2117 = vmatpush1.bf16.msra.mxu0 0
    %2118 = vmatprep.subr.bf16.mxu0 0
    %2119 = vmatpush1.bf16.msra.mxu0 0
    %2120 = vmatprep.subr.bf16.mxu0 0
    %2121 = vmatpush1.bf16.msra.mxu0 0
    %2122 = vmatprep.subr.bf16.mxu0 0
    %2123 = vmatpush1.bf16.msra.mxu0 0
    %2124 = vmatprep.subr.bf16.mxu0 0
    %2125 = vmatpush1.bf16.msra.mxu0 0
    %2126 = vmatprep.subr.bf16.mxu0 0
    %2127 = vmatpush1.bf16.msra.mxu0 0
    %2128 = vmatprep.subr.bf16.mxu0 0
    %2129 = vmatpush1.bf16.msra.mxu0 0
    %2130 = vmatprep.subr.bf16.mxu0 0
    %2131 = vmatpush1.bf16.msra.mxu0 0
    %2132 = vmatprep.mubr.bf16.mxu0 0
    %2133 = vmatmul.mubr.bf16.gmra.mrb[0].mxu0 %v1836
    %v2134 = vpop.f32.mrb[0].mxu0
    %v2135 = vadd.f32 0.0, %v2134
    %v2136 = vpop.f32.mrb[0].mxu0
    %v2137 = vpop.f32.mrb[0].mxu0
    %v2138 = vadd.f32 0.0, %v2137
    %v2139 = vpop.f32.mrb[0].mxu0
    %2140 = vdwg.mxu0
    %v2141 = vadd.f32 %v2081, %v2135
    %v2142 = vadd.f32 %v2082, %v2138
    %s2143 = scalar_lea.vmem [#allocation18], 64
    %v2144 = vld [vmem:[%s2143] sm:$0xf]
    %v2145 = vld [vmem:[%s2143 + $0x4] sm:$0xf]
    %v2146 = vld [vmem:[%s2143 + $0x8] sm:$0xf]
    %v2147 = vld [vmem:[%s2143 + $0xc] sm:$0xf]
    %v2148 = vrot.slane %v1419, 2
    %v2153 = vunpack.c.l.b16 %v2144
    %v2154 = vunpack.c.l.b16 %v2145
    %v2155 = vunpack.c.l.b16 %v2146
    %v2156 = vunpack.c.l.b16 %v2147
    %v2157 = vpack.c.b16 %v2154, %v2153
    %v2158 = vpack.c.b16 %v2156, %v2155
    %v2162 = vsel %vm313, %v2148, 0
    %2164 = vmatprep.subr.bf16.mxu0 0
    %2165 = vmatpush1.bf16.msra.mxu0 %v2157
    %2166 = vmatprep.subr.bf16.mxu0 0
    %2167 = vmatpush1.bf16.msra.mxu0 %v2158
    %2168 = vmatprep.subr.bf16.mxu0 0
    %2169 = vmatpush1.bf16.msra.mxu0 0
    %2170 = vmatprep.subr.bf16.mxu0 0
    %2171 = vmatpush1.bf16.msra.mxu0 0
    %2172 = vmatprep.subr.bf16.mxu0 0
    %2173 = vmatpush1.bf16.msra.mxu0 0
    %2174 = vmatprep.subr.bf16.mxu0 0
    %2175 = vmatpush1.bf16.msra.mxu0 0
    %2176 = vmatprep.subr.bf16.mxu0 0
    %2177 = vmatpush1.bf16.msra.mxu0 0
    %2178 = vmatprep.subr.bf16.mxu0 0
    %2179 = vmatpush1.bf16.msra.mxu0 0
    %2180 = vmatprep.subr.bf16.mxu0 0
    %2181 = vmatpush1.bf16.msra.mxu0 0
    %2182 = vmatprep.subr.bf16.mxu0 0
    %2183 = vmatpush1.bf16.msra.mxu0 0
    %2184 = vmatprep.subr.bf16.mxu0 0
    %2185 = vmatpush1.bf16.msra.mxu0 0
    %2186 = vmatprep.subr.bf16.mxu0 0
    %2187 = vmatpush1.bf16.msra.mxu0 0
    %2188 = vmatprep.subr.bf16.mxu0 0
    %2189 = vmatpush1.bf16.msra.mxu0 0
    %2190 = vmatprep.subr.bf16.mxu0 0
    %2191 = vmatpush1.bf16.msra.mxu0 0
    %2192 = vmatprep.subr.bf16.mxu0 0
    %2193 = vmatpush1.bf16.msra.mxu0 0
    %2194 = vmatprep.subr.bf16.mxu0 0
    %2195 = vmatpush1.bf16.msra.mxu0 0
    %2196 = vmatprep.mubr.bf16.mxu0 0
    %2197 = vmatmul.mubr.bf16.gmra.mrb[0].mxu0 %v2162
    %v2198 = vpop.f32.mrb[0].mxu0
    %v2199 = vadd.f32 0.0, %v2198
    %v2200 = vpop.f32.mrb[0].mxu0
    %v2201 = vpop.f32.mrb[0].mxu0
    %v2202 = vadd.f32 0.0, %v2201
    %v2203 = vpop.f32.mrb[0].mxu0
    %2204 = vdwg.mxu0
    %v2205 = vadd.f32 %v2141, %v2199
    %v2206 = vadd.f32 %v2142, %v2202
    %v2207 = vld [vmem:[#allocation19] sm:$0x1]
    %v2209 = vlaneseq
    %v2210 = vshrl.u32 %v2209, 7
    %v2211 = vsub.s32 0, %v2210
    %v2212 = vrot.slane %v2207, %v2211
    %v2214 = vadd.f32 %v2205, %v2212
    %v2215 = vadd.f32 %v2206, %v2212
    %v2216 = vmax.f32 %v2214, 0.0
    %v2217 = vmax.f32 %v2215, 0.0
    %vm2218 = vcmask 1043456
    %v2219 = vsel %vm2218, %v2216, -inf
    %v2220 = vrot.slane %v2219, 4
    %v2221 = vmax.f32 %v2219, %v2220
    %v2222 = vrot.slane %v2221, 2
    %v2223 = vmax.f32 %v2221, %v2222
    %v2224 = vrot.slane %v2223, 1
    %v2225 = vmax.f32 %v2223, %v2224
    %v2226 = vsel %vm2218, %v2217, -inf
    %v2227 = vrot.slane %v2226, 4
    %v2228 = vmax.f32 %v2226, %v2227
    %v2229 = vrot.slane %v2228, 2
    %v2230 = vmax.f32 %v2228, %v2229
    %v2231 = vrot.slane %v2230, 1
    %v2232 = vmax.f32 %v2230, %v2231
    %v2233 = vsel %vm1638, %v2225, %v2232
    %s2234 = smul.u32 4, 64
    %s2235 = smul.u32 %s2234, 16
    %s2236 = sshll.u32 %s2235, 4
    %2237 = dma.done [#allocation3], %s2236
    %v2238 = vld [vmem:[#allocation2] sm:$0xff]
    %v2239 = vld [vmem:[#allocation2 + $0x8] sm:$0xff]
    %v2240 = vld [vmem:[#allocation2 + $0x10] sm:$0xff]
    %v2241 = vld [vmem:[#allocation2 + $0x18] sm:$0xff]
    %v2242 = vld [vmem:[#allocation2 + $0x20] sm:$0xff]
    %v2243 = vld [vmem:[#allocation2 + $0x28] sm:$0xff]
    %v2244 = vld [vmem:[#allocation2 + $0x30] sm:$0xff]
    %v2245 = vld [vmem:[#allocation2 + $0x38] sm:$0xff]
    %v2246 = vld [vmem:[#allocation2 + $0x40] sm:$0xff]
    %v2247 = vld [vmem:[#allocation2 + $0x48] sm:$0xff]
    %v2248 = vld [vmem:[#allocation2 + $0x50] sm:$0xff]
    %v2249 = vld [vmem:[#allocation2 + $0x58] sm:$0xff]
    %v2250 = vld [vmem:[#allocation2 + $0x60] sm:$0xff]
    %v2251 = vld [vmem:[#allocation2 + $0x68] sm:$0xff]
    %v2252 = vld [vmem:[#allocation2 + $0x70] sm:$0xff]
    %v2253 = vld [vmem:[#allocation2 + $0x78] sm:$0xff]
    %v2254 = vld [vmem:[#allocation2 + $0x80] sm:$0xff]
    %v2255 = vld [vmem:[#allocation2 + $0x88] sm:$0xff]
    %v2256 = vld [vmem:[#allocation2 + $0x90] sm:$0xff]
    %v2257 = vld [vmem:[#allocation2 + $0x98] sm:$0xff]
    %v2258 = vld [vmem:[#allocation2 + $0xa0] sm:$0xff]
    %v2259 = vld [vmem:[#allocation2 + $0xa8] sm:$0xff]
    %v2260 = vld [vmem:[#allocation2 + $0xb0] sm:$0xff]
    %v2261 = vld [vmem:[#allocation2 + $0xb8] sm:$0xff]
    %v2262 = vld [vmem:[#allocation2 + $0xc0] sm:$0xff]
    %v2263 = vld [vmem:[#allocation2 + $0xc8] sm:$0xff]
    %v2264 = vld [vmem:[#allocation2 + $0xd0] sm:$0xff]
    %v2265 = vld [vmem:[#allocation2 + $0xd8] sm:$0xff]
    %v2266 = vld [vmem:[#allocation2 + $0xe0] sm:$0xff]
    %v2267 = vld [vmem:[#allocation2 + $0xe8] sm:$0xff]
    %v2268 = vld [vmem:[#allocation2 + $0xf0] sm:$0xff]
    %v2269 = vld [vmem:[#allocation2 + $0xf8] sm:$0xff]
    %v2270 = vld [vmem:[#allocation2 + $0x100] sm:$0xff]
    %v2271 = vld [vmem:[#allocation2 + $0x108] sm:$0xff]
    %v2272 = vld [vmem:[#allocation2 + $0x110] sm:$0xff]
    %v2273 = vld [vmem:[#allocation2 + $0x118] sm:$0xff]
    %v2274 = vld [vmem:[#allocation2 + $0x120] sm:$0xff]
    %v2275 = vld [vmem:[#allocation2 + $0x128] sm:$0xff]
    %v2276 = vld [vmem:[#allocation2 + $0x130] sm:$0xff]
    %v2277 = vld [vmem:[#allocation2 + $0x138] sm:$0xff]
    %v2278 = vld [vmem:[#allocation2 + $0x140] sm:$0xff]
    %v2279 = vld [vmem:[#allocation2 + $0x148] sm:$0xff]
    %v2280 = vld [vmem:[#allocation2 + $0x150] sm:$0xff]
    %v2281 = vld [vmem:[#allocation2 + $0x158] sm:$0xff]
    %v2282 = vld [vmem:[#allocation2 + $0x160] sm:$0xff]
    %v2283 = vld [vmem:[#allocation2 + $0x168] sm:$0xff]
    %v2284 = vld [vmem:[#allocation2 + $0x170] sm:$0xff]
    %v2285 = vld [vmem:[#allocation2 + $0x178] sm:$0xff]
    %v2286 = vld [vmem:[#allocation2 + $0x180] sm:$0xff]
    %v2287 = vld [vmem:[#allocation2 + $0x188] sm:$0xff]
    %v2288 = vld [vmem:[#allocation2 + $0x190] sm:$0xff]
    %v2289 = vld [vmem:[#allocation2 + $0x198] sm:$0xff]
    %v2290 = vld [vmem:[#allocation2 + $0x1a0] sm:$0xff]
    %v2291 = vld [vmem:[#allocation2 + $0x1a8] sm:$0xff]
    %v2292 = vld [vmem:[#allocation2 + $0x1b0] sm:$0xff]
    %v2293 = vld [vmem:[#allocation2 + $0x1b8] sm:$0xff]
    %v2294 = vld [vmem:[#allocation2 + $0x1c0] sm:$0xff]
    %v2295 = vld [vmem:[#allocation2 + $0x1c8] sm:$0xff]
    %v2296 = vld [vmem:[#allocation2 + $0x1d0] sm:$0xff]
    %v2297 = vld [vmem:[#allocation2 + $0x1d8] sm:$0xff]
    %v2298 = vld [vmem:[#allocation2 + $0x1e0] sm:$0xff]
    %v2299 = vld [vmem:[#allocation2 + $0x1e8] sm:$0xff]
    %v2300 = vld [vmem:[#allocation2 + $0x1f0] sm:$0xff]
    %v2301 = vld [vmem:[#allocation2 + $0x1f8] sm:$0xff]
    %v2302 = vld [vmem:[#allocation2 + $0x200] sm:$0xff]
    %v2303 = vld [vmem:[#allocation2 + $0x208] sm:$0xff]
    %v2304 = vld [vmem:[#allocation2 + $0x210] sm:$0xff]
    %v2305 = vld [vmem:[#allocation2 + $0x218] sm:$0xff]
    %v2306 = vld [vmem:[#allocation2 + $0x220] sm:$0xff]
    %v2307 = vld [vmem:[#allocation2 + $0x228] sm:$0xff]
    %v2308 = vld [vmem:[#allocation2 + $0x230] sm:$0xff]
    %v2309 = vld [vmem:[#allocation2 + $0x238] sm:$0xff]
    %v2310 = vld [vmem:[#allocation2 + $0x240] sm:$0xff]
    %v2311 = vld [vmem:[#allocation2 + $0x248] sm:$0xff]
    %v2312 = vld [vmem:[#allocation2 + $0x250] sm:$0xff]
    %v2313 = vld [vmem:[#allocation2 + $0x258] sm:$0xff]
    %v2314 = vld [vmem:[#allocation2 + $0x260] sm:$0xff]
    %v2315 = vld [vmem:[#allocation2 + $0x268] sm:$0xff]
    %v2316 = vld [vmem:[#allocation2 + $0x270] sm:$0xff]
    %v2317 = vld [vmem:[#allocation2 + $0x278] sm:$0xff]
    %v2318 = vld [vmem:[#allocation2 + $0x280] sm:$0xff]
    %v2319 = vld [vmem:[#allocation2 + $0x288] sm:$0xff]
    %v2320 = vld [vmem:[#allocation2 + $0x290] sm:$0xff]
    %v2321 = vld [vmem:[#allocation2 + $0x298] sm:$0xff]
    %v2322 = vld [vmem:[#allocation2 + $0x2a0] sm:$0xff]
    %v2323 = vld [vmem:[#allocation2 + $0x2a8] sm:$0xff]
    %v2324 = vld [vmem:[#allocation2 + $0x2b0] sm:$0xff]
    %v2325 = vld [vmem:[#allocation2 + $0x2b8] sm:$0xff]
    %v2326 = vld [vmem:[#allocation2 + $0x2c0] sm:$0xff]
    %v2327 = vld [vmem:[#allocation2 + $0x2c8] sm:$0xff]
    %v2328 = vld [vmem:[#allocation2 + $0x2d0] sm:$0xff]
    %v2329 = vld [vmem:[#allocation2 + $0x2d8] sm:$0xff]
    %v2330 = vld [vmem:[#allocation2 + $0x2e0] sm:$0xff]
    %v2331 = vld [vmem:[#allocation2 + $0x2e8] sm:$0xff]
    %v2332 = vld [vmem:[#allocation2 + $0x2f0] sm:$0xff]
    %v2333 = vld [vmem:[#allocation2 + $0x2f8] sm:$0xff]
    %v2334 = vld [vmem:[#allocation2 + $0x300] sm:$0xff]
    %v2335 = vld [vmem:[#allocation2 + $0x308] sm:$0xff]
    %v2336 = vld [vmem:[#allocation2 + $0x310] sm:$0xff]
    %v2337 = vld [vmem:[#allocation2 + $0x318] sm:$0xff]
    %v2338 = vld [vmem:[#allocation2 + $0x320] sm:$0xff]
    %v2339 = vld [vmem:[#allocation2 + $0x328] sm:$0xff]
    %v2340 = vld [vmem:[#allocation2 + $0x330] sm:$0xff]
    %v2341 = vld [vmem:[#allocation2 + $0x338] sm:$0xff]
    %v2342 = vld [vmem:[#allocation2 + $0x340] sm:$0xff]
    %v2343 = vld [vmem:[#allocation2 + $0x348] sm:$0xff]
    %v2344 = vld [vmem:[#allocation2 + $0x350] sm:$0xff]
    %v2345 = vld [vmem:[#allocation2 + $0x358] sm:$0xff]
    %v2346 = vld [vmem:[#allocation2 + $0x360] sm:$0xff]
    %v2347 = vld [vmem:[#allocation2 + $0x368] sm:$0xff]
    %v2348 = vld [vmem:[#allocation2 + $0x370] sm:$0xff]
    %v2349 = vld [vmem:[#allocation2 + $0x378] sm:$0xff]
    %v2350 = vld [vmem:[#allocation2 + $0x380] sm:$0xff]
    %v2351 = vld [vmem:[#allocation2 + $0x388] sm:$0xff]
    %v2352 = vld [vmem:[#allocation2 + $0x390] sm:$0xff]
    %v2353 = vld [vmem:[#allocation2 + $0x398] sm:$0xff]
    %v2354 = vld [vmem:[#allocation2 + $0x3a0] sm:$0xff]
    %v2355 = vld [vmem:[#allocation2 + $0x3a8] sm:$0xff]
    %v2356 = vld [vmem:[#allocation2 + $0x3b0] sm:$0xff]
    %v2357 = vld [vmem:[#allocation2 + $0x3b8] sm:$0xff]
    %v2358 = vld [vmem:[#allocation2 + $0x3c0] sm:$0xff]
    %v2359 = vld [vmem:[#allocation2 + $0x3c8] sm:$0xff]
    %v2360 = vld [vmem:[#allocation2 + $0x3d0] sm:$0xff]
    %v2361 = vld [vmem:[#allocation2 + $0x3d8] sm:$0xff]
    %v2362 = vld [vmem:[#allocation2 + $0x3e0] sm:$0xff]
    %v2363 = vld [vmem:[#allocation2 + $0x3e8] sm:$0xff]
    %v2364 = vld [vmem:[#allocation2 + $0x3f0] sm:$0xff]
    %v2365 = vld [vmem:[#allocation2 + $0x3f8] sm:$0xff]
    %v2366 = vld [vmem:[#allocation2 + $0x400] sm:$0xff]
    %v2367 = vld [vmem:[#allocation2 + $0x408] sm:$0xff]
    %v2368 = vld [vmem:[#allocation2 + $0x410] sm:$0xff]
    %v2369 = vld [vmem:[#allocation2 + $0x418] sm:$0xff]
    %v2370 = vld [vmem:[#allocation2 + $0x420] sm:$0xff]
    %v2371 = vld [vmem:[#allocation2 + $0x428] sm:$0xff]
    %v2372 = vld [vmem:[#allocation2 + $0x430] sm:$0xff]
    %v2373 = vld [vmem:[#allocation2 + $0x438] sm:$0xff]
    %v2374 = vld [vmem:[#allocation2 + $0x440] sm:$0xff]
    %v2375 = vld [vmem:[#allocation2 + $0x448] sm:$0xff]
    %v2376 = vld [vmem:[#allocation2 + $0x450] sm:$0xff]
    %v2377 = vld [vmem:[#allocation2 + $0x458] sm:$0xff]
    %v2378 = vld [vmem:[#allocation2 + $0x460] sm:$0xff]
    %v2379 = vld [vmem:[#allocation2 + $0x468] sm:$0xff]
    %v2380 = vld [vmem:[#allocation2 + $0x470] sm:$0xff]
    %v2381 = vld [vmem:[#allocation2 + $0x478] sm:$0xff]
    %v2382 = vld [vmem:[#allocation2 + $0x480] sm:$0xff]
    %v2383 = vld [vmem:[#allocation2 + $0x488] sm:$0xff]
    %v2384 = vld [vmem:[#allocation2 + $0x490] sm:$0xff]
    %v2385 = vld [vmem:[#allocation2 + $0x498] sm:$0xff]
    %v2386 = vld [vmem:[#allocation2 + $0x4a0] sm:$0xff]
    %v2387 = vld [vmem:[#allocation2 + $0x4a8] sm:$0xff]
    %v2388 = vld [vmem:[#allocation2 + $0x4b0] sm:$0xff]
    %v2389 = vld [vmem:[#allocation2 + $0x4b8] sm:$0xff]
    %v2390 = vld [vmem:[#allocation2 + $0x4c0] sm:$0xff]
    %v2391 = vld [vmem:[#allocation2 + $0x4c8] sm:$0xff]
    %v2392 = vld [vmem:[#allocation2 + $0x4d0] sm:$0xff]
    %v2393 = vld [vmem:[#allocation2 + $0x4d8] sm:$0xff]
    %v2394 = vld [vmem:[#allocation2 + $0x4e0] sm:$0xff]
    %v2395 = vld [vmem:[#allocation2 + $0x4e8] sm:$0xff]
    %v2396 = vld [vmem:[#allocation2 + $0x4f0] sm:$0xff]
    %v2397 = vld [vmem:[#allocation2 + $0x4f8] sm:$0xff]
    %v2398 = vld [vmem:[#allocation2 + $0x500] sm:$0xff]
    %v2399 = vld [vmem:[#allocation2 + $0x508] sm:$0xff]
    %v2400 = vld [vmem:[#allocation2 + $0x510] sm:$0xff]
    %v2401 = vld [vmem:[#allocation2 + $0x518] sm:$0xff]
    %v2402 = vld [vmem:[#allocation2 + $0x520] sm:$0xff]
    %v2403 = vld [vmem:[#allocation2 + $0x528] sm:$0xff]
    %v2404 = vld [vmem:[#allocation2 + $0x530] sm:$0xff]
    %v2405 = vld [vmem:[#allocation2 + $0x538] sm:$0xff]
    %v2406 = vld [vmem:[#allocation2 + $0x540] sm:$0xff]
    %v2407 = vld [vmem:[#allocation2 + $0x548] sm:$0xff]
    %v2408 = vld [vmem:[#allocation2 + $0x550] sm:$0xff]
    %v2409 = vld [vmem:[#allocation2 + $0x558] sm:$0xff]
    %v2410 = vld [vmem:[#allocation2 + $0x560] sm:$0xff]
    %v2411 = vld [vmem:[#allocation2 + $0x568] sm:$0xff]
    %v2412 = vld [vmem:[#allocation2 + $0x570] sm:$0xff]
    %v2413 = vld [vmem:[#allocation2 + $0x578] sm:$0xff]
    %v2414 = vld [vmem:[#allocation2 + $0x580] sm:$0xff]
    %v2415 = vld [vmem:[#allocation2 + $0x588] sm:$0xff]
    %v2416 = vld [vmem:[#allocation2 + $0x590] sm:$0xff]
    %v2417 = vld [vmem:[#allocation2 + $0x598] sm:$0xff]
    %v2418 = vld [vmem:[#allocation2 + $0x5a0] sm:$0xff]
    %v2419 = vld [vmem:[#allocation2 + $0x5a8] sm:$0xff]
    %v2420 = vld [vmem:[#allocation2 + $0x5b0] sm:$0xff]
    %v2421 = vld [vmem:[#allocation2 + $0x5b8] sm:$0xff]
    %v2422 = vld [vmem:[#allocation2 + $0x5c0] sm:$0xff]
    %v2423 = vld [vmem:[#allocation2 + $0x5c8] sm:$0xff]
    %v2424 = vld [vmem:[#allocation2 + $0x5d0] sm:$0xff]
    %v2425 = vld [vmem:[#allocation2 + $0x5d8] sm:$0xff]
    %v2426 = vld [vmem:[#allocation2 + $0x5e0] sm:$0xff]
    %v2427 = vld [vmem:[#allocation2 + $0x5e8] sm:$0xff]
    %v2428 = vld [vmem:[#allocation2 + $0x5f0] sm:$0xff]
    %v2429 = vld [vmem:[#allocation2 + $0x5f8] sm:$0xff]
    %v2430 = vld [vmem:[#allocation2 + $0x600] sm:$0xff]
    %v2431 = vld [vmem:[#allocation2 + $0x608] sm:$0xff]
    %v2432 = vld [vmem:[#allocation2 + $0x610] sm:$0xff]
    %v2433 = vld [vmem:[#allocation2 + $0x618] sm:$0xff]
    %v2434 = vld [vmem:[#allocation2 + $0x620] sm:$0xff]
    %v2435 = vld [vmem:[#allocation2 + $0x628] sm:$0xff]
    %v2436 = vld [vmem:[#allocation2 + $0x630] sm:$0xff]
    %v2437 = vld [vmem:[#allocation2 + $0x638] sm:$0xff]
    %v2438 = vld [vmem:[#allocation2 + $0x640] sm:$0xff]
    %v2439 = vld [vmem:[#allocation2 + $0x648] sm:$0xff]
    %v2440 = vld [vmem:[#allocation2 + $0x650] sm:$0xff]
    %v2441 = vld [vmem:[#allocation2 + $0x658] sm:$0xff]
    %v2442 = vld [vmem:[#allocation2 + $0x660] sm:$0xff]
    %v2443 = vld [vmem:[#allocation2 + $0x668] sm:$0xff]
    %v2444 = vld [vmem:[#allocation2 + $0x670] sm:$0xff]
    %v2445 = vld [vmem:[#allocation2 + $0x678] sm:$0xff]
    %v2446 = vld [vmem:[#allocation2 + $0x680] sm:$0xff]
    %v2447 = vld [vmem:[#allocation2 + $0x688] sm:$0xff]
    %v2448 = vld [vmem:[#allocation2 + $0x690] sm:$0xff]
    %v2449 = vld [vmem:[#allocation2 + $0x698] sm:$0xff]
    %v2450 = vld [vmem:[#allocation2 + $0x6a0] sm:$0xff]
    %v2451 = vld [vmem:[#allocation2 + $0x6a8] sm:$0xff]
    %v2452 = vld [vmem:[#allocation2 + $0x6b0] sm:$0xff]
    %v2453 = vld [vmem:[#allocation2 + $0x6b8] sm:$0xff]
    %v2454 = vld [vmem:[#allocation2 + $0x6c0] sm:$0xff]
    %v2455 = vld [vmem:[#allocation2 + $0x6c8] sm:$0xff]
    %v2456 = vld [vmem:[#allocation2 + $0x6d0] sm:$0xff]
    %v2457 = vld [vmem:[#allocation2 + $0x6d8] sm:$0xff]
    %v2458 = vld [vmem:[#allocation2 + $0x6e0] sm:$0xff]
    %v2459 = vld [vmem:[#allocation2 + $0x6e8] sm:$0xff]
    %v2460 = vld [vmem:[#allocation2 + $0x6f0] sm:$0xff]
    %v2461 = vld [vmem:[#allocation2 + $0x6f8] sm:$0xff]
    %v2462 = vld [vmem:[#allocation2 + $0x700] sm:$0xff]
    %v2463 = vld [vmem:[#allocation2 + $0x708] sm:$0xff]
    %v2464 = vld [vmem:[#allocation2 + $0x710] sm:$0xff]
    %v2465 = vld [vmem:[#allocation2 + $0x718] sm:$0xff]
    %v2466 = vld [vmem:[#allocation2 + $0x720] sm:$0xff]
    %v2467 = vld [vmem:[#allocation2 + $0x728] sm:$0xff]
    %v2468 = vld [vmem:[#allocation2 + $0x730] sm:$0xff]
    %v2469 = vld [vmem:[#allocation2 + $0x738] sm:$0xff]
    %v2470 = vld [vmem:[#allocation2 + $0x740] sm:$0xff]
    %v2471 = vld [vmem:[#allocation2 + $0x748] sm:$0xff]
    %v2472 = vld [vmem:[#allocation2 + $0x750] sm:$0xff]
    %v2473 = vld [vmem:[#allocation2 + $0x758] sm:$0xff]
    %v2474 = vld [vmem:[#allocation2 + $0x760] sm:$0xff]
    %v2475 = vld [vmem:[#allocation2 + $0x768] sm:$0xff]
    %v2476 = vld [vmem:[#allocation2 + $0x770] sm:$0xff]
    %v2477 = vld [vmem:[#allocation2 + $0x778] sm:$0xff]
    %v2478 = vld [vmem:[#allocation2 + $0x780] sm:$0xff]
    %v2479 = vld [vmem:[#allocation2 + $0x788] sm:$0xff]
    %v2480 = vld [vmem:[#allocation2 + $0x790] sm:$0xff]
    %v2481 = vld [vmem:[#allocation2 + $0x798] sm:$0xff]
    %v2482 = vld [vmem:[#allocation2 + $0x7a0] sm:$0xff]
    %v2483 = vld [vmem:[#allocation2 + $0x7a8] sm:$0xff]
    %v2484 = vld [vmem:[#allocation2 + $0x7b0] sm:$0xff]
    %v2485 = vld [vmem:[#allocation2 + $0x7b8] sm:$0xff]
    %v2486 = vld [vmem:[#allocation2 + $0x7c0] sm:$0xff]
    %v2487 = vld [vmem:[#allocation2 + $0x7c8] sm:$0xff]
    %v2488 = vld [vmem:[#allocation2 + $0x7d0] sm:$0xff]
    %v2489 = vld [vmem:[#allocation2 + $0x7d8] sm:$0xff]
    %v2490 = vld [vmem:[#allocation2 + $0x7e0] sm:$0xff]
    %v2491 = vld [vmem:[#allocation2 + $0x7e8] sm:$0xff]
    %v2492 = vld [vmem:[#allocation2 + $0x7f0] sm:$0xff]
    %v2493 = vld [vmem:[#allocation2 + $0x7f8] sm:$0xff]
    %v2494 = vld [vmem:[#allocation2 + $0x800] sm:$0xff]
    %v2495 = vld [vmem:[#allocation2 + $0x808] sm:$0xff]
    %v2496 = vld [vmem:[#allocation2 + $0x810] sm:$0xff]
    %v2497 = vld [vmem:[#allocation2 + $0x818] sm:$0xff]
    %v2498 = vld [vmem:[#allocation2 + $0x820] sm:$0xff]
    %v2499 = vld [vmem:[#allocation2 + $0x828] sm:$0xff]
    %v2500 = vld [vmem:[#allocation2 + $0x830] sm:$0xff]
    %v2501 = vld [vmem:[#allocation2 + $0x838] sm:$0xff]
    %v2502 = vld [vmem:[#allocation2 + $0x840] sm:$0xff]
    %v2503 = vld [vmem:[#allocation2 + $0x848] sm:$0xff]
    %v2504 = vld [vmem:[#allocation2 + $0x850] sm:$0xff]
    %v2505 = vld [vmem:[#allocation2 + $0x858] sm:$0xff]
    %v2506 = vld [vmem:[#allocation2 + $0x860] sm:$0xff]
    %v2507 = vld [vmem:[#allocation2 + $0x868] sm:$0xff]
    %v2508 = vld [vmem:[#allocation2 + $0x870] sm:$0xff]
    %v2509 = vld [vmem:[#allocation2 + $0x878] sm:$0xff]
    %v2510 = vld [vmem:[#allocation2 + $0x880] sm:$0xff]
    %v2511 = vld [vmem:[#allocation2 + $0x888] sm:$0xff]
    %v2512 = vld [vmem:[#allocation2 + $0x890] sm:$0xff]
    %v2513 = vld [vmem:[#allocation2 + $0x898] sm:$0xff]
    %v2514 = vld [vmem:[#allocation2 + $0x8a0] sm:$0xff]
    %v2515 = vld [vmem:[#allocation2 + $0x8a8] sm:$0xff]
    %v2516 = vld [vmem:[#allocation2 + $0x8b0] sm:$0xff]
    %v2517 = vld [vmem:[#allocation2 + $0x8b8] sm:$0xff]
    %v2518 = vld [vmem:[#allocation2 + $0x8c0] sm:$0xff]
    %v2519 = vld [vmem:[#allocation2 + $0x8c8] sm:$0xff]
    %v2520 = vld [vmem:[#allocation2 + $0x8d0] sm:$0xff]
    %v2521 = vld [vmem:[#allocation2 + $0x8d8] sm:$0xff]
    %v2522 = vld [vmem:[#allocation2 + $0x8e0] sm:$0xff]
    %v2523 = vld [vmem:[#allocation2 + $0x8e8] sm:$0xff]
    %v2524 = vld [vmem:[#allocation2 + $0x8f0] sm:$0xff]
    %v2525 = vld [vmem:[#allocation2 + $0x8f8] sm:$0xff]
    %v2526 = vld [vmem:[#allocation2 + $0x900] sm:$0xff]
    %v2527 = vld [vmem:[#allocation2 + $0x908] sm:$0xff]
    %v2528 = vld [vmem:[#allocation2 + $0x910] sm:$0xff]
    %v2529 = vld [vmem:[#allocation2 + $0x918] sm:$0xff]
    %v2530 = vld [vmem:[#allocation2 + $0x920] sm:$0xff]
    %v2531 = vld [vmem:[#allocation2 + $0x928] sm:$0xff]
    %v2532 = vld [vmem:[#allocation2 + $0x930] sm:$0xff]
    %v2533 = vld [vmem:[#allocation2 + $0x938] sm:$0xff]
    %v2534 = vld [vmem:[#allocation2 + $0x940] sm:$0xff]
    %v2535 = vld [vmem:[#allocation2 + $0x948] sm:$0xff]
    %v2536 = vld [vmem:[#allocation2 + $0x950] sm:$0xff]
    %v2537 = vld [vmem:[#allocation2 + $0x958] sm:$0xff]
    %v2538 = vld [vmem:[#allocation2 + $0x960] sm:$0xff]
    %v2539 = vld [vmem:[#allocation2 + $0x968] sm:$0xff]
    %v2540 = vld [vmem:[#allocation2 + $0x970] sm:$0xff]
    %v2541 = vld [vmem:[#allocation2 + $0x978] sm:$0xff]
    %v2542 = vld [vmem:[#allocation2 + $0x980] sm:$0xff]
    %v2543 = vld [vmem:[#allocation2 + $0x988] sm:$0xff]
    %v2544 = vld [vmem:[#allocation2 + $0x990] sm:$0xff]
    %v2545 = vld [vmem:[#allocation2 + $0x998] sm:$0xff]
    %v2546 = vld [vmem:[#allocation2 + $0x9a0] sm:$0xff]
    %v2547 = vld [vmem:[#allocation2 + $0x9a8] sm:$0xff]
    %v2548 = vld [vmem:[#allocation2 + $0x9b0] sm:$0xff]
    %v2549 = vld [vmem:[#allocation2 + $0x9b8] sm:$0xff]
    %v2550 = vld [vmem:[#allocation2 + $0x9c0] sm:$0xff]
    %v2551 = vld [vmem:[#allocation2 + $0x9c8] sm:$0xff]
    %v2552 = vld [vmem:[#allocation2 + $0x9d0] sm:$0xff]
    %v2553 = vld [vmem:[#allocation2 + $0x9d8] sm:$0xff]
    %v2554 = vld [vmem:[#allocation2 + $0x9e0] sm:$0xff]
    %v2555 = vld [vmem:[#allocation2 + $0x9e8] sm:$0xff]
    %v2556 = vld [vmem:[#allocation2 + $0x9f0] sm:$0xff]
    %v2557 = vld [vmem:[#allocation2 + $0x9f8] sm:$0xff]
    %v2558 = vld [vmem:[#allocation2 + $0xa00] sm:$0xff]
    %v2559 = vld [vmem:[#allocation2 + $0xa08] sm:$0xff]
    %v2560 = vld [vmem:[#allocation2 + $0xa10] sm:$0xff]
    %v2561 = vld [vmem:[#allocation2 + $0xa18] sm:$0xff]
    %v2562 = vld [vmem:[#allocation2 + $0xa20] sm:$0xff]
    %v2563 = vld [vmem:[#allocation2 + $0xa28] sm:$0xff]
    %v2564 = vld [vmem:[#allocation2 + $0xa30] sm:$0xff]
    %v2565 = vld [vmem:[#allocation2 + $0xa38] sm:$0xff]
    %v2566 = vld [vmem:[#allocation2 + $0xa40] sm:$0xff]
    %v2567 = vld [vmem:[#allocation2 + $0xa48] sm:$0xff]
    %v2568 = vld [vmem:[#allocation2 + $0xa50] sm:$0xff]
    %v2569 = vld [vmem:[#allocation2 + $0xa58] sm:$0xff]
    %v2570 = vld [vmem:[#allocation2 + $0xa60] sm:$0xff]
    %v2571 = vld [vmem:[#allocation2 + $0xa68] sm:$0xff]
    %v2572 = vld [vmem:[#allocation2 + $0xa70] sm:$0xff]
    %v2573 = vld [vmem:[#allocation2 + $0xa78] sm:$0xff]
    %v2574 = vld [vmem:[#allocation2 + $0xa80] sm:$0xff]
    %v2575 = vld [vmem:[#allocation2 + $0xa88] sm:$0xff]
    %v2576 = vld [vmem:[#allocation2 + $0xa90] sm:$0xff]
    %v2577 = vld [vmem:[#allocation2 + $0xa98] sm:$0xff]
    %v2578 = vld [vmem:[#allocation2 + $0xaa0] sm:$0xff]
    %v2579 = vld [vmem:[#allocation2 + $0xaa8] sm:$0xff]
    %v2580 = vld [vmem:[#allocation2 + $0xab0] sm:$0xff]
    %v2581 = vld [vmem:[#allocation2 + $0xab8] sm:$0xff]
    %v2582 = vld [vmem:[#allocation2 + $0xac0] sm:$0xff]
    %v2583 = vld [vmem:[#allocation2 + $0xac8] sm:$0xff]
    %v2584 = vld [vmem:[#allocation2 + $0xad0] sm:$0xff]
    %v2585 = vld [vmem:[#allocation2 + $0xad8] sm:$0xff]
    %v2586 = vld [vmem:[#allocation2 + $0xae0] sm:$0xff]
    %v2587 = vld [vmem:[#allocation2 + $0xae8] sm:$0xff]
    %v2588 = vld [vmem:[#allocation2 + $0xaf0] sm:$0xff]
    %v2589 = vld [vmem:[#allocation2 + $0xaf8] sm:$0xff]
    %v2590 = vld [vmem:[#allocation2 + $0xb00] sm:$0xff]
    %v2591 = vld [vmem:[#allocation2 + $0xb08] sm:$0xff]
    %v2592 = vld [vmem:[#allocation2 + $0xb10] sm:$0xff]
    %v2593 = vld [vmem:[#allocation2 + $0xb18] sm:$0xff]
    %v2594 = vld [vmem:[#allocation2 + $0xb20] sm:$0xff]
    %v2595 = vld [vmem:[#allocation2 + $0xb28] sm:$0xff]
    %v2596 = vld [vmem:[#allocation2 + $0xb30] sm:$0xff]
    %v2597 = vld [vmem:[#allocation2 + $0xb38] sm:$0xff]
    %v2598 = vld [vmem:[#allocation2 + $0xb40] sm:$0xff]
    %v2599 = vld [vmem:[#allocation2 + $0xb48] sm:$0xff]
    %v2600 = vld [vmem:[#allocation2 + $0xb50] sm:$0xff]
    %v2601 = vld [vmem:[#allocation2 + $0xb58] sm:$0xff]
    %v2602 = vld [vmem:[#allocation2 + $0xb60] sm:$0xff]
    %v2603 = vld [vmem:[#allocation2 + $0xb68] sm:$0xff]
    %v2604 = vld [vmem:[#allocation2 + $0xb70] sm:$0xff]
    %v2605 = vld [vmem:[#allocation2 + $0xb78] sm:$0xff]
    %v2606 = vld [vmem:[#allocation2 + $0xb80] sm:$0xff]
    %v2607 = vld [vmem:[#allocation2 + $0xb88] sm:$0xff]
    %v2608 = vld [vmem:[#allocation2 + $0xb90] sm:$0xff]
    %v2609 = vld [vmem:[#allocation2 + $0xb98] sm:$0xff]
    %v2610 = vld [vmem:[#allocation2 + $0xba0] sm:$0xff]
    %v2611 = vld [vmem:[#allocation2 + $0xba8] sm:$0xff]
    %v2612 = vld [vmem:[#allocation2 + $0xbb0] sm:$0xff]
    %v2613 = vld [vmem:[#allocation2 + $0xbb8] sm:$0xff]
    %v2614 = vld [vmem:[#allocation2 + $0xbc0] sm:$0xff]
    %v2615 = vld [vmem:[#allocation2 + $0xbc8] sm:$0xff]
    %v2616 = vld [vmem:[#allocation2 + $0xbd0] sm:$0xff]
    %v2617 = vld [vmem:[#allocation2 + $0xbd8] sm:$0xff]
    %v2618 = vld [vmem:[#allocation2 + $0xbe0] sm:$0xff]
    %v2619 = vld [vmem:[#allocation2 + $0xbe8] sm:$0xff]
    %v2620 = vld [vmem:[#allocation2 + $0xbf0] sm:$0xff]
    %v2621 = vld [vmem:[#allocation2 + $0xbf8] sm:$0xff]
    %v2622 = vld [vmem:[#allocation2 + $0xc00] sm:$0xff]
    %v2623 = vld [vmem:[#allocation2 + $0xc08] sm:$0xff]
    %v2624 = vld [vmem:[#allocation2 + $0xc10] sm:$0xff]
    %v2625 = vld [vmem:[#allocation2 + $0xc18] sm:$0xff]
    %v2626 = vld [vmem:[#allocation2 + $0xc20] sm:$0xff]
    %v2627 = vld [vmem:[#allocation2 + $0xc28] sm:$0xff]
    %v2628 = vld [vmem:[#allocation2 + $0xc30] sm:$0xff]
    %v2629 = vld [vmem:[#allocation2 + $0xc38] sm:$0xff]
    %v2630 = vld [vmem:[#allocation2 + $0xc40] sm:$0xff]
    %v2631 = vld [vmem:[#allocation2 + $0xc48] sm:$0xff]
    %v2632 = vld [vmem:[#allocation2 + $0xc50] sm:$0xff]
    %v2633 = vld [vmem:[#allocation2 + $0xc58] sm:$0xff]
    %v2634 = vld [vmem:[#allocation2 + $0xc60] sm:$0xff]
    %v2635 = vld [vmem:[#allocation2 + $0xc68] sm:$0xff]
    %v2636 = vld [vmem:[#allocation2 + $0xc70] sm:$0xff]
    %v2637 = vld [vmem:[#allocation2 + $0xc78] sm:$0xff]
    %v2638 = vld [vmem:[#allocation2 + $0xc80] sm:$0xff]
    %v2639 = vld [vmem:[#allocation2 + $0xc88] sm:$0xff]
    %v2640 = vld [vmem:[#allocation2 + $0xc90] sm:$0xff]
    %v2641 = vld [vmem:[#allocation2 + $0xc98] sm:$0xff]
    %v2642 = vld [vmem:[#allocation2 + $0xca0] sm:$0xff]
    %v2643 = vld [vmem:[#allocation2 + $0xca8] sm:$0xff]
    %v2644 = vld [vmem:[#allocation2 + $0xcb0] sm:$0xff]
    %v2645 = vld [vmem:[#allocation2 + $0xcb8] sm:$0xff]
    %v2646 = vld [vmem:[#allocation2 + $0xcc0] sm:$0xff]
    %v2647 = vld [vmem:[#allocation2 + $0xcc8] sm:$0xff]
    %v2648 = vld [vmem:[#allocation2 + $0xcd0] sm:$0xff]
    %v2649 = vld [vmem:[#allocation2 + $0xcd8] sm:$0xff]
    %v2650 = vld [vmem:[#allocation2 + $0xce0] sm:$0xff]
    %v2651 = vld [vmem:[#allocation2 + $0xce8] sm:$0xff]
    %v2652 = vld [vmem:[#allocation2 + $0xcf0] sm:$0xff]
    %v2653 = vld [vmem:[#allocation2 + $0xcf8] sm:$0xff]
    %v2654 = vld [vmem:[#allocation2 + $0xd00] sm:$0xff]
    %v2655 = vld [vmem:[#allocation2 + $0xd08] sm:$0xff]
    %v2656 = vld [vmem:[#allocation2 + $0xd10] sm:$0xff]
    %v2657 = vld [vmem:[#allocation2 + $0xd18] sm:$0xff]
    %v2658 = vld [vmem:[#allocation2 + $0xd20] sm:$0xff]
    %v2659 = vld [vmem:[#allocation2 + $0xd28] sm:$0xff]
    %v2660 = vld [vmem:[#allocation2 + $0xd30] sm:$0xff]
    %v2661 = vld [vmem:[#allocation2 + $0xd38] sm:$0xff]
    %v2662 = vld [vmem:[#allocation2 + $0xd40] sm:$0xff]
    %v2663 = vld [vmem:[#allocation2 + $0xd48] sm:$0xff]
    %v2664 = vld [vmem:[#allocation2 + $0xd50] sm:$0xff]
    %v2665 = vld [vmem:[#allocation2 + $0xd58] sm:$0xff]
    %v2666 = vld [vmem:[#allocation2 + $0xd60] sm:$0xff]
    %v2667 = vld [vmem:[#allocation2 + $0xd68] sm:$0xff]
    %v2668 = vld [vmem:[#allocation2 + $0xd70] sm:$0xff]
    %v2669 = vld [vmem:[#allocation2 + $0xd78] sm:$0xff]
    %v2670 = vld [vmem:[#allocation2 + $0xd80] sm:$0xff]
    %v2671 = vld [vmem:[#allocation2 + $0xd88] sm:$0xff]
    %v2672 = vld [vmem:[#allocation2 + $0xd90] sm:$0xff]
    %v2673 = vld [vmem:[#allocation2 + $0xd98] sm:$0xff]
    %v2674 = vld [vmem:[#allocation2 + $0xda0] sm:$0xff]
    %v2675 = vld [vmem:[#allocation2 + $0xda8] sm:$0xff]
    %v2676 = vld [vmem:[#allocation2 + $0xdb0] sm:$0xff]
    %v2677 = vld [vmem:[#allocation2 + $0xdb8] sm:$0xff]
    %v2678 = vld [vmem:[#allocation2 + $0xdc0] sm:$0xff]
    %v2679 = vld [vmem:[#allocation2 + $0xdc8] sm:$0xff]
    %v2680 = vld [vmem:[#allocation2 + $0xdd0] sm:$0xff]
    %v2681 = vld [vmem:[#allocation2 + $0xdd8] sm:$0xff]
    %v2682 = vld [vmem:[#allocation2 + $0xde0] sm:$0xff]
    %v2683 = vld [vmem:[#allocation2 + $0xde8] sm:$0xff]
    %v2684 = vld [vmem:[#allocation2 + $0xdf0] sm:$0xff]
    %v2685 = vld [vmem:[#allocation2 + $0xdf8] sm:$0xff]
    %v2686 = vld [vmem:[#allocation2 + $0xe00] sm:$0xff]
    %v2687 = vld [vmem:[#allocation2 + $0xe08] sm:$0xff]
    %v2688 = vld [vmem:[#allocation2 + $0xe10] sm:$0xff]
    %v2689 = vld [vmem:[#allocation2 + $0xe18] sm:$0xff]
    %v2690 = vld [vmem:[#allocation2 + $0xe20] sm:$0xff]
    %v2691 = vld [vmem:[#allocation2 + $0xe28] sm:$0xff]
    %v2692 = vld [vmem:[#allocation2 + $0xe30] sm:$0xff]
    %v2693 = vld [vmem:[#allocation2 + $0xe38] sm:$0xff]
    %v2694 = vld [vmem:[#allocation2 + $0xe40] sm:$0xff]
    %v2695 = vld [vmem:[#allocation2 + $0xe48] sm:$0xff]
    %v2696 = vld [vmem:[#allocation2 + $0xe50] sm:$0xff]
    %v2697 = vld [vmem:[#allocation2 + $0xe58] sm:$0xff]
    %v2698 = vld [vmem:[#allocation2 + $0xe60] sm:$0xff]
    %v2699 = vld [vmem:[#allocation2 + $0xe68] sm:$0xff]
    %v2700 = vld [vmem:[#allocation2 + $0xe70] sm:$0xff]
    %v2701 = vld [vmem:[#allocation2 + $0xe78] sm:$0xff]
    %v2702 = vld [vmem:[#allocation2 + $0xe80] sm:$0xff]
    %v2703 = vld [vmem:[#allocation2 + $0xe88] sm:$0xff]
    %v2704 = vld [vmem:[#allocation2 + $0xe90] sm:$0xff]
    %v2705 = vld [vmem:[#allocation2 + $0xe98] sm:$0xff]
    %v2706 = vld [vmem:[#allocation2 + $0xea0] sm:$0xff]
    %v2707 = vld [vmem:[#allocation2 + $0xea8] sm:$0xff]
    %v2708 = vld [vmem:[#allocation2 + $0xeb0] sm:$0xff]
    %v2709 = vld [vmem:[#allocation2 + $0xeb8] sm:$0xff]
    %v2710 = vld [vmem:[#allocation2 + $0xec0] sm:$0xff]
    %v2711 = vld [vmem:[#allocation2 + $0xec8] sm:$0xff]
    %v2712 = vld [vmem:[#allocation2 + $0xed0] sm:$0xff]
    %v2713 = vld [vmem:[#allocation2 + $0xed8] sm:$0xff]
    %v2714 = vld [vmem:[#allocation2 + $0xee0] sm:$0xff]
    %v2715 = vld [vmem:[#allocation2 + $0xee8] sm:$0xff]
    %v2716 = vld [vmem:[#allocation2 + $0xef0] sm:$0xff]
    %v2717 = vld [vmem:[#allocation2 + $0xef8] sm:$0xff]
    %v2718 = vld [vmem:[#allocation2 + $0xf00] sm:$0xff]
    %v2719 = vld [vmem:[#allocation2 + $0xf08] sm:$0xff]
    %v2720 = vld [vmem:[#allocation2 + $0xf10] sm:$0xff]
    %v2721 = vld [vmem:[#allocation2 + $0xf18] sm:$0xff]
    %v2722 = vld [vmem:[#allocation2 + $0xf20] sm:$0xff]
    %v2723 = vld [vmem:[#allocation2 + $0xf28] sm:$0xff]
    %v2724 = vld [vmem:[#allocation2 + $0xf30] sm:$0xff]
    %v2725 = vld [vmem:[#allocation2 + $0xf38] sm:$0xff]
    %v2726 = vld [vmem:[#allocation2 + $0xf40] sm:$0xff]
    %v2727 = vld [vmem:[#allocation2 + $0xf48] sm:$0xff]
    %v2728 = vld [vmem:[#allocation2 + $0xf50] sm:$0xff]
    %v2729 = vld [vmem:[#allocation2 + $0xf58] sm:$0xff]
    %v2730 = vld [vmem:[#allocation2 + $0xf60] sm:$0xff]
    %v2731 = vld [vmem:[#allocation2 + $0xf68] sm:$0xff]
    %v2732 = vld [vmem:[#allocation2 + $0xf70] sm:$0xff]
    %v2733 = vld [vmem:[#allocation2 + $0xf78] sm:$0xff]
    %v2734 = vld [vmem:[#allocation2 + $0xf80] sm:$0xff]
    %v2735 = vld [vmem:[#allocation2 + $0xf88] sm:$0xff]
    %v2736 = vld [vmem:[#allocation2 + $0xf90] sm:$0xff]
    %v2737 = vld [vmem:[#allocation2 + $0xf98] sm:$0xff]
    %v2738 = vld [vmem:[#allocation2 + $0xfa0] sm:$0xff]
    %v2739 = vld [vmem:[#allocation2 + $0xfa8] sm:$0xff]
    %v2740 = vld [vmem:[#allocation2 + $0xfb0] sm:$0xff]
    %v2741 = vld [vmem:[#allocation2 + $0xfb8] sm:$0xff]
    %v2742 = vld [vmem:[#allocation2 + $0xfc0] sm:$0xff]
    %v2743 = vld [vmem:[#allocation2 + $0xfc8] sm:$0xff]
    %v2744 = vld [vmem:[#allocation2 + $0xfd0] sm:$0xff]
    %v2745 = vld [vmem:[#allocation2 + $0xfd8] sm:$0xff]
    %v2746 = vld [vmem:[#allocation2 + $0xfe0] sm:$0xff]
    %v2747 = vld [vmem:[#allocation2 + $0xfe8] sm:$0xff]
    %v2748 = vld [vmem:[#allocation2 + $0xff0] sm:$0xff]
    %v2749 = vld [vmem:[#allocation2 + $0xff8] sm:$0xff]
    %2750 = vmatprep.subr.bf16.mxu0 %v2239
    %2751 = vmatpush1.bf16.msra.mxu0 %v2238
    %2752 = vmatprep.subr.bf16.mxu0 %v2255
    %2753 = vmatpush1.bf16.msra.mxu0 %v2254
    %2754 = vmatprep.subr.bf16.mxu0 %v2271
    %2755 = vmatpush1.bf16.msra.mxu0 %v2270
    %2756 = vmatprep.subr.bf16.mxu0 %v2287
    %2757 = vmatpush1.bf16.msra.mxu0 %v2286
    %2758 = vmatprep.subr.bf16.mxu0 %v2303
    %2759 = vmatpush1.bf16.msra.mxu0 %v2302
    %2760 = vmatprep.subr.bf16.mxu0 %v2319
    %2761 = vmatpush1.bf16.msra.mxu0 %v2318
    %2762 = vmatprep.subr.bf16.mxu0 %v2335
    %2763 = vmatpush1.bf16.msra.mxu0 %v2334
    %2764 = vmatprep.subr.bf16.mxu0 %v2351
    %2765 = vmatpush1.bf16.msra.mxu0 %v2350
    %2766 = vmatprep.subr.bf16.mxu0 %v2367
    %2767 = vmatpush1.bf16.msra.mxu0 %v2366
    %2768 = vmatprep.subr.bf16.mxu0 %v2383
    %2769 = vmatpush1.bf16.msra.mxu0 %v2382
    %2770 = vmatprep.subr.bf16.mxu0 %v2399
    %2771 = vmatpush1.bf16.msra.mxu0 %v2398
    %2772 = vmatprep.subr.bf16.mxu0 %v2415
    %2773 = vmatpush1.bf16.msra.mxu0 %v2414
    %2774 = vmatprep.subr.bf16.mxu0 %v2431
    %2775 = vmatpush1.bf16.msra.mxu0 %v2430
    %2776 = vmatprep.subr.bf16.mxu0 %v2447
    %2777 = vmatpush1.bf16.msra.mxu0 %v2446
    %2778 = vmatprep.subr.bf16.mxu0 %v2463
    %2779 = vmatpush1.bf16.msra.mxu0 %v2462
    %2780 = vmatprep.subr.bf16.mxu0 %v2479
    %2781 = vmatpush1.bf16.msra.mxu0 %v2478
    %2782 = vmatprep.mubr.bf16.mxu0 0
    %2783 = vmatmul.mubr.bf16.gmra.mrb[0].mxu0 0
    %v2784 = vpop.f32.mrb[0].mxu0
    %v2785 = vadd.f32 0.0, %v2784
    %v2786 = vpop.f32.mrb[0].mxu0
    %v2787 = vadd.f32 0.0, %v2786
    %v2788 = vpop.f32.mrb[0].mxu0
    %v2789 = vpop.f32.mrb[0].mxu0
    %2790 = vdwg.mxu0
    %2791 = vmatprep.subr.bf16.mxu0 %v2495
    %2792 = vmatpush1.bf16.msra.mxu0 %v2494
    %2793 = vmatprep.subr.bf16.mxu0 %v2511
    %2794 = vmatpush1.bf16.msra.mxu0 %v2510
    %2795 = vmatprep.subr.bf16.mxu0 %v2527
    %2796 = vmatpush1.bf16.msra.mxu0 %v2526
    %2797 = vmatprep.subr.bf16.mxu0 %v2543
    %2798 = vmatpush1.bf16.msra.mxu0 %v2542
    %2799 = vmatprep.subr.bf16.mxu0 %v2559
    %2800 = vmatpush1.bf16.msra.mxu0 %v2558
    %2801 = vmatprep.subr.bf16.mxu0 %v2575
    %2802 = vmatpush1.bf16.msra.mxu0 %v2574
    %2803 = vmatprep.subr.bf16.mxu0 %v2591
    %2804 = vmatpush1.bf16.msra.mxu0 %v2590
    %2805 = vmatprep.subr.bf16.mxu0 %v2607
    %2806 = vmatpush1.bf16.msra.mxu0 %v2606
    %2807 = vmatprep.subr.bf16.mxu0 %v2623
    %2808 = vmatpush1.bf16.msra.mxu0 %v2622
    %2809 = vmatprep.subr.bf16.mxu0 %v2639
    %2810 = vmatpush1.bf16.msra.mxu0 %v2638
    %2811 = vmatprep.subr.bf16.mxu0 %v2655
    %2812 = vmatpush1.bf16.msra.mxu0 %v2654
    %2813 = vmatprep.subr.bf16.mxu0 %v2671
    %2814 = vmatpush1.bf16.msra.mxu0 %v2670
    %2815 = vmatprep.subr.bf16.mxu0 %v2687
    %2816 = vmatpush1.bf16.msra.mxu0 %v2686
    %2817 = vmatprep.subr.bf16.mxu0 %v2703
    %2818 = vmatpush1.bf16.msra.mxu0 %v2702
    %2819 = vmatprep.subr.bf16.mxu0 %v2719
    %2820 = vmatpush1.bf16.msra.mxu0 %v2718
    %2821 = vmatprep.subr.bf16.mxu0 %v2735
    %2822 = vmatpush1.bf16.msra.mxu0 %v2734
    %2823 = vmatprep.mubr.bf16.mxu0 0
    %2824 = vmatmul.mubr.bf16.gmra.mrb[0].mxu0 0
    %v2825 = vpop.f32.mrb[0].mxu0
    %v2826 = vadd.f32 %v2785, %v2825
    %v2827 = vpop.f32.mrb[0].mxu0
    %v2828 = vadd.f32 %v2787, %v2827
    %v2829 = vpop.f32.mrb[0].mxu0
    %v2830 = vpop.f32.mrb[0].mxu0
    %2831 = vdwg.mxu0
    %2832 = vmatprep.subr.bf16.mxu0 %v2241
    %2833 = vmatpush1.bf16.msra.mxu0 %v2240
    %2834 = vmatprep.subr.bf16.mxu0 %v2257
    %2835 = vmatpush1.bf16.msra.mxu0 %v2256
    %2836 = vmatprep.subr.bf16.mxu0 %v2273
    %2837 = vmatpush1.bf16.msra.mxu0 %v2272
    %2838 = vmatprep.subr.bf16.mxu0 %v2289
    %2839 = vmatpush1.bf16.msra.mxu0 %v2288
    %2840 = vmatprep.subr.bf16.mxu0 %v2305
    %2841 = vmatpush1.bf16.msra.mxu0 %v2304
    %2842 = vmatprep.subr.bf16.mxu0 %v2321
    %2843 = vmatpush1.bf16.msra.mxu0 %v2320
    %2844 = vmatprep.subr.bf16.mxu0 %v2337
    %2845 = vmatpush1.bf16.msra.mxu0 %v2336
    %2846 = vmatprep.subr.bf16.mxu0 %v2353
    %2847 = vmatpush1.bf16.msra.mxu0 %v2352
    %2848 = vmatprep.subr.bf16.mxu0 %v2369
    %2849 = vmatpush1.bf16.msra.mxu0 %v2368
    %2850 = vmatprep.subr.bf16.mxu0 %v2385
    %2851 = vmatpush1.bf16.msra.mxu0 %v2384
    %2852 = vmatprep.subr.bf16.mxu0 %v2401
    %2853 = vmatpush1.bf16.msra.mxu0 %v2400
    %2854 = vmatprep.subr.bf16.mxu0 %v2417
    %2855 = vmatpush1.bf16.msra.mxu0 %v2416
    %2856 = vmatprep.subr.bf16.mxu0 %v2433
    %2857 = vmatpush1.bf16.msra.mxu0 %v2432
    %2858 = vmatprep.subr.bf16.mxu0 %v2449
    %2859 = vmatpush1.bf16.msra.mxu0 %v2448
    %2860 = vmatprep.subr.bf16.mxu0 %v2465
    %2861 = vmatpush1.bf16.msra.mxu0 %v2464
    %2862 = vmatprep.subr.bf16.mxu0 %v2481
    %2863 = vmatpush1.bf16.msra.mxu0 %v2480
    %2864 = vmatprep.mubr.bf16.mxu0 0
    %2865 = vmatmul.mubr.bf16.gmra.mrb[0].mxu0 0
    %v2866 = vpop.f32.mrb[0].mxu0
    %v2867 = vadd.f32 0.0, %v2866
    %v2868 = vpop.f32.mrb[0].mxu0
    %v2869 = vadd.f32 0.0, %v2868
    %v2870 = vpop.f32.mrb[0].mxu0
    %v2871 = vpop.f32.mrb[0].mxu0
    %2872 = vdwg.mxu0
    %2873 = vmatprep.subr.bf16.mxu0 %v2497
    %2874 = vmatpush1.bf16.msra.mxu0 %v2496
    %2875 = vmatprep.subr.bf16.mxu0 %v2513
    %2876 = vmatpush1.bf16.msra.mxu0 %v2512
    %2877 = vmatprep.subr.bf16.mxu0 %v2529
    %2878 = vmatpush1.bf16.msra.mxu0 %v2528
    %2879 = vmatprep.subr.bf16.mxu0 %v2545
    %2880 = vmatpush1.bf16.msra.mxu0 %v2544
    %2881 = vmatprep.subr.bf16.mxu0 %v2561
    %2882 = vmatpush1.bf16.msra.mxu0 %v2560
    %2883 = vmatprep.subr.bf16.mxu0 %v2577
    %2884 = vmatpush1.bf16.msra.mxu0 %v2576
    %2885 = vmatprep.subr.bf16.mxu0 %v2593
    %2886 = vmatpush1.bf16.msra.mxu0 %v2592
    %2887 = vmatprep.subr.bf16.mxu0 %v2609
    %2888 = vmatpush1.bf16.msra.mxu0 %v2608
    %2889 = vmatprep.subr.bf16.mxu0 %v2625
    %2890 = vmatpush1.bf16.msra.mxu0 %v2624
    %2891 = vmatprep.subr.bf16.mxu0 %v2641
    %2892 = vmatpush1.bf16.msra.mxu0 %v2640
    %2893 = vmatprep.subr.bf16.mxu0 %v2657
    %2894 = vmatpush1.bf16.msra.mxu0 %v2656
    %2895 = vmatprep.subr.bf16.mxu0 %v2673
    %2896 = vmatpush1.bf16.msra.mxu0 %v2672
    %2897 = vmatprep.subr.bf16.mxu0 %v2689
    %2898 = vmatpush1.bf16.msra.mxu0 %v2688
    %2899 = vmatprep.subr.bf16.mxu0 %v2705
    %2900 = vmatpush1.bf16.msra.mxu0 %v2704
    %2901 = vmatprep.subr.bf16.mxu0 %v2721
    %2902 = vmatpush1.bf16.msra.mxu0 %v2720
    %2903 = vmatprep.subr.bf16.mxu0 %v2737
    %2904 = vmatpush1.bf16.msra.mxu0 %v2736
    %2905 = vmatprep.mubr.bf16.mxu0 0
    %2906 = vmatmul.mubr.bf16.gmra.mrb[0].mxu0 0
    %v2907 = vpop.f32.mrb[0].mxu0
    %v2908 = vadd.f32 %v2867, %v2907
    %v2909 = vpop.f32.mrb[0].mxu0
    %v2910 = vadd.f32 %v2869, %v2909
    %v2911 = vpop.f32.mrb[0].mxu0
    %v2912 = vpop.f32.mrb[0].mxu0
    %2913 = vdwg.mxu0
    %2914 = vmatprep.subr.bf16.mxu0 %v2243
    %2915 = vmatpush1.bf16.msra.mxu0 %v2242
    %2916 = vmatprep.subr.bf16.mxu0 %v2259
    %2917 = vmatpush1.bf16.msra.mxu0 %v2258
    %2918 = vmatprep.subr.bf16.mxu0 %v2275
    %2919 = vmatpush1.bf16.msra.mxu0 %v2274
    %2920 = vmatprep.subr.bf16.mxu0 %v2291
    %2921 = vmatpush1.bf16.msra.mxu0 %v2290
    %2922 = vmatprep.subr.bf16.mxu0 %v2307
    %2923 = vmatpush1.bf16.msra.mxu0 %v2306
    %2924 = vmatprep.subr.bf16.mxu0 %v2323
    %2925 = vmatpush1.bf16.msra.mxu0 %v2322
    %2926 = vmatprep.subr.bf16.mxu0 %v2339
    %2927 = vmatpush1.bf16.msra.mxu0 %v2338
    %2928 = vmatprep.subr.bf16.mxu0 %v2355
    %2929 = vmatpush1.bf16.msra.mxu0 %v2354
    %2930 = vmatprep.subr.bf16.mxu0 %v2371
    %2931 = vmatpush1.bf16.msra.mxu0 %v2370
    %2932 = vmatprep.subr.bf16.mxu0 %v2387
    %2933 = vmatpush1.bf16.msra.mxu0 %v2386
    %2934 = vmatprep.subr.bf16.mxu0 %v2403
    %2935 = vmatpush1.bf16.msra.mxu0 %v2402
    %2936 = vmatprep.subr.bf16.mxu0 %v2419
    %2937 = vmatpush1.bf16.msra.mxu0 %v2418
    %2938 = vmatprep.subr.bf16.mxu0 %v2435
    %2939 = vmatpush1.bf16.msra.mxu0 %v2434
    %2940 = vmatprep.subr.bf16.mxu0 %v2451
    %2941 = vmatpush1.bf16.msra.mxu0 %v2450
    %2942 = vmatprep.subr.bf16.mxu0 %v2467
    %2943 = vmatpush1.bf16.msra.mxu0 %v2466
    %2944 = vmatprep.subr.bf16.mxu0 %v2483
    %2945 = vmatpush1.bf16.msra.mxu0 %v2482
    %2946 = vmatprep.mubr.bf16.mxu0 0
    %2947 = vmatmul.mubr.bf16.gmra.mrb[0].mxu0 0
    %v2948 = vpop.f32.mrb[0].mxu0
    %v2949 = vadd.f32 0.0, %v2948
    %v2950 = vpop.f32.mrb[0].mxu0
    %v2951 = vadd.f32 0.0, %v2950
    %v2952 = vpop.f32.mrb[0].mxu0
    %v2953 = vpop.f32.mrb[0].mxu0
    %2954 = vdwg.mxu0
    %2955 = vmatprep.subr.bf16.mxu0 %v2499
    %2956 = vmatpush1.bf16.msra.mxu0 %v2498
    %2957 = vmatprep.subr.bf16.mxu0 %v2515
    %2958 = vmatpush1.bf16.msra.mxu0 %v2514
    %2959 = vmatprep.subr.bf16.mxu0 %v2531
    %2960 = vmatpush1.bf16.msra.mxu0 %v2530
    %2961 = vmatprep.subr.bf16.mxu0 %v2547
    %2962 = vmatpush1.bf16.msra.mxu0 %v2546
    %2963 = vmatprep.subr.bf16.mxu0 %v2563
    %2964 = vmatpush1.bf16.msra.mxu0 %v2562
    %2965 = vmatprep.subr.bf16.mxu0 %v2579
    %2966 = vmatpush1.bf16.msra.mxu0 %v2578
    %2967 = vmatprep.subr.bf16.mxu0 %v2595
    %2968 = vmatpush1.bf16.msra.mxu0 %v2594
    %2969 = vmatprep.subr.bf16.mxu0 %v2611
    %2970 = vmatpush1.bf16.msra.mxu0 %v2610
    %2971 = vmatprep.subr.bf16.mxu0 %v2627
    %2972 = vmatpush1.bf16.msra.mxu0 %v2626
    %2973 = vmatprep.subr.bf16.mxu0 %v2643
    %2974 = vmatpush1.bf16.msra.mxu0 %v2642
    %2975 = vmatprep.subr.bf16.mxu0 %v2659
    %2976 = vmatpush1.bf16.msra.mxu0 %v2658
    %2977 = vmatprep.subr.bf16.mxu0 %v2675
    %2978 = vmatpush1.bf16.msra.mxu0 %v2674
    %2979 = vmatprep.subr.bf16.mxu0 %v2691
    %2980 = vmatpush1.bf16.msra.mxu0 %v2690
    %2981 = vmatprep.subr.bf16.mxu0 %v2707
    %2982 = vmatpush1.bf16.msra.mxu0 %v2706
    %2983 = vmatprep.subr.bf16.mxu0 %v2723
    %2984 = vmatpush1.bf16.msra.mxu0 %v2722
    %2985 = vmatprep.subr.bf16.mxu0 %v2739
    %2986 = vmatpush1.bf16.msra.mxu0 %v2738
    %2987 = vmatprep.mubr.bf16.mxu0 0
    %2988 = vmatmul.mubr.bf16.gmra.mrb[0].mxu0 0
    %v2989 = vpop.f32.mrb[0].mxu0
    %v2990 = vadd.f32 %v2949, %v2989
    %v2991 = vpop.f32.mrb[0].mxu0
    %v2992 = vadd.f32 %v2951, %v2991
    %v2993 = vpop.f32.mrb[0].mxu0
    %v2994 = vpop.f32.mrb[0].mxu0
    %2995 = vdwg.mxu0
    %2996 = vmatprep.subr.bf16.mxu0 %v2245
    %2997 = vmatpush1.bf16.msra.mxu0 %v2244
    %2998 = vmatprep.subr.bf16.mxu0 %v2261
    %2999 = vmatpush1.bf16.msra.mxu0 %v2260
    %3000 = vmatprep.subr.bf16.mxu0 %v2277
    %3001 = vmatpush1.bf16.msra.mxu0 %v2276
    %3002 = vmatprep.subr.bf16.mxu0 %v2293
    %3003 = vmatpush1.bf16.msra.mxu0 %v2292
    %3004 = vmatprep.subr.bf16.mxu0 %v2309
    %3005 = vmatpush1.bf16.msra.mxu0 %v2308
    %3006 = vmatprep.subr.bf16.mxu0 %v2325
    %3007 = vmatpush1.bf16.msra.mxu0 %v2324
    %3008 = vmatprep.subr.bf16.mxu0 %v2341
    %3009 = vmatpush1.bf16.msra.mxu0 %v2340
    %3010 = vmatprep.subr.bf16.mxu0 %v2357
    %3011 = vmatpush1.bf16.msra.mxu0 %v2356
    %3012 = vmatprep.subr.bf16.mxu0 %v2373
    %3013 = vmatpush1.bf16.msra.mxu0 %v2372
    %3014 = vmatprep.subr.bf16.mxu0 %v2389
    %3015 = vmatpush1.bf16.msra.mxu0 %v2388
    %3016 = vmatprep.subr.bf16.mxu0 %v2405
    %3017 = vmatpush1.bf16.msra.mxu0 %v2404
    %3018 = vmatprep.subr.bf16.mxu0 %v2421
    %3019 = vmatpush1.bf16.msra.mxu0 %v2420
    %3020 = vmatprep.subr.bf16.mxu0 %v2437
    %3021 = vmatpush1.bf16.msra.mxu0 %v2436
    %3022 = vmatprep.subr.bf16.mxu0 %v2453
    %3023 = vmatpush1.bf16.msra.mxu0 %v2452
    %3024 = vmatprep.subr.bf16.mxu0 %v2469
    %3025 = vmatpush1.bf16.msra.mxu0 %v2468
    %3026 = vmatprep.subr.bf16.mxu0 %v2485
    %3027 = vmatpush1.bf16.msra.mxu0 %v2484
    %3028 = vmatprep.mubr.bf16.mxu0 0
    %3029 = vmatmul.mubr.bf16.gmra.mrb[0].mxu0 0
    %v3030 = vpop.f32.mrb[0].mxu0
    %v3031 = vadd.f32 0.0, %v3030
    %v3032 = vpop.f32.mrb[0].mxu0
    %v3033 = vadd.f32 0.0, %v3032
    %v3034 = vpop.f32.mrb[0].mxu0
    %v3035 = vpop.f32.mrb[0].mxu0
    %3036 = vdwg.mxu0
    %3037 = vmatprep.subr.bf16.mxu0 %v2501
    %3038 = vmatpush1.bf16.msra.mxu0 %v2500
    %3039 = vmatprep.subr.bf16.mxu0 %v2517
    %3040 = vmatpush1.bf16.msra.mxu0 %v2516
    %3041 = vmatprep.subr.bf16.mxu0 %v2533
    %3042 = vmatpush1.bf16.msra.mxu0 %v2532
    %3043 = vmatprep.subr.bf16.mxu0 %v2549
    %3044 = vmatpush1.bf16.msra.mxu0 %v2548
    %3045 = vmatprep.subr.bf16.mxu0 %v2565
    %3046 = vmatpush1.bf16.msra.mxu0 %v2564
    %3047 = vmatprep.subr.bf16.mxu0 %v2581
    %3048 = vmatpush1.bf16.msra.mxu0 %v2580
    %3049 = vmatprep.subr.bf16.mxu0 %v2597
    %3050 = vmatpush1.bf16.msra.mxu0 %v2596
    %3051 = vmatprep.subr.bf16.mxu0 %v2613
    %3052 = vmatpush1.bf16.msra.mxu0 %v2612
    %3053 = vmatprep.subr.bf16.mxu0 %v2629
    %3054 = vmatpush1.bf16.msra.mxu0 %v2628
    %3055 = vmatprep.subr.bf16.mxu0 %v2645
    %3056 = vmatpush1.bf16.msra.mxu0 %v2644
    %3057 = vmatprep.subr.bf16.mxu0 %v2661
    %3058 = vmatpush1.bf16.msra.mxu0 %v2660
    %3059 = vmatprep.subr.bf16.mxu0 %v2677
    %3060 = vmatpush1.bf16.msra.mxu0 %v2676
    %3061 = vmatprep.subr.bf16.mxu0 %v2693
    %3062 = vmatpush1.bf16.msra.mxu0 %v2692
    %3063 = vmatprep.subr.bf16.mxu0 %v2709
    %3064 = vmatpush1.bf16.msra.mxu0 %v2708
    %3065 = vmatprep.subr.bf16.mxu0 %v2725
    %3066 = vmatpush1.bf16.msra.mxu0 %v2724
    %3067 = vmatprep.subr.bf16.mxu0 %v2741
    %3068 = vmatpush1.bf16.msra.mxu0 %v2740
    %3069 = vmatprep.mubr.bf16.mxu0 0
    %3070 = vmatmul.mubr.bf16.gmra.mrb[0].mxu0 0
    %v3071 = vpop.f32.mrb[0].mxu0
    %v3072 = vadd.f32 %v3031, %v3071
    %v3073 = vpop.f32.mrb[0].mxu0
    %v3074 = vadd.f32 %v3033, %v3073
    %v3075 = vpop.f32.mrb[0].mxu0
    %v3076 = vpop.f32.mrb[0].mxu0
    %3077 = vdwg.mxu0
    %3078 = vmatprep.subr.bf16.mxu0 %v2247
    %3079 = vmatpush1.bf16.msra.mxu0 %v2246
    %3080 = vmatprep.subr.bf16.mxu0 %v2263
    %3081 = vmatpush1.bf16.msra.mxu0 %v2262
    %3082 = vmatprep.subr.bf16.mxu0 %v2279
    %3083 = vmatpush1.bf16.msra.mxu0 %v2278
    %3084 = vmatprep.subr.bf16.mxu0 %v2295
    %3085 = vmatpush1.bf16.msra.mxu0 %v2294
    %3086 = vmatprep.subr.bf16.mxu0 %v2311
    %3087 = vmatpush1.bf16.msra.mxu0 %v2310
    %3088 = vmatprep.subr.bf16.mxu0 %v2327
    %3089 = vmatpush1.bf16.msra.mxu0 %v2326
    %3090 = vmatprep.subr.bf16.mxu0 %v2343
    %3091 = vmatpush1.bf16.msra.mxu0 %v2342
    %3092 = vmatprep.subr.bf16.mxu0 %v2359
    %3093 = vmatpush1.bf16.msra.mxu0 %v2358
    %3094 = vmatprep.subr.bf16.mxu0 %v2375
    %3095 = vmatpush1.bf16.msra.mxu0 %v2374
    %3096 = vmatprep.subr.bf16.mxu0 %v2391
    %3097 = vmatpush1.bf16.msra.mxu0 %v2390
    %3098 = vmatprep.subr.bf16.mxu0 %v2407
    %3099 = vmatpush1.bf16.msra.mxu0 %v2406
    %3100 = vmatprep.subr.bf16.mxu0 %v2423
    %3101 = vmatpush1.bf16.msra.mxu0 %v2422
    %3102 = vmatprep.subr.bf16.mxu0 %v2439
    %3103 = vmatpush1.bf16.msra.mxu0 %v2438
    %3104 = vmatprep.subr.bf16.mxu0 %v2455
    %3105 = vmatpush1.bf16.msra.mxu0 %v2454
    %3106 = vmatprep.subr.bf16.mxu0 %v2471
    %3107 = vmatpush1.bf16.msra.mxu0 %v2470
    %3108 = vmatprep.subr.bf16.mxu0 %v2487
    %3109 = vmatpush1.bf16.msra.mxu0 %v2486
    %3110 = vmatprep.mubr.bf16.mxu0 0
    %3111 = vmatmul.mubr.bf16.gmra.mrb[0].mxu0 0
    %v3112 = vpop.f32.mrb[0].mxu0
    %v3113 = vadd.f32 0.0, %v3112
    %v3114 = vpop.f32.mrb[0].mxu0
    %v3115 = vadd.f32 0.0, %v3114
    %v3116 = vpop.f32.mrb[0].mxu0
    %v3117 = vpop.f32.mrb[0].mxu0
    %3118 = vdwg.mxu0
    %3119 = vmatprep.subr.bf16.mxu0 %v2503
    %3120 = vmatpush1.bf16.msra.mxu0 %v2502
    %3121 = vmatprep.subr.bf16.mxu0 %v2519
    %3122 = vmatpush1.bf16.msra.mxu0 %v2518
    %3123 = vmatprep.subr.bf16.mxu0 %v2535
    %3124 = vmatpush1.bf16.msra.mxu0 %v2534
    %3125 = vmatprep.subr.bf16.mxu0 %v2551
    %3126 = vmatpush1.bf16.msra.mxu0 %v2550
    %3127 = vmatprep.subr.bf16.mxu0 %v2567
    %3128 = vmatpush1.bf16.msra.mxu0 %v2566
    %3129 = vmatprep.subr.bf16.mxu0 %v2583
    %3130 = vmatpush1.bf16.msra.mxu0 %v2582
    %3131 = vmatprep.subr.bf16.mxu0 %v2599
    %3132 = vmatpush1.bf16.msra.mxu0 %v2598
    %3133 = vmatprep.subr.bf16.mxu0 %v2615
    %3134 = vmatpush1.bf16.msra.mxu0 %v2614
    %3135 = vmatprep.subr.bf16.mxu0 %v2631
    %3136 = vmatpush1.bf16.msra.mxu0 %v2630
    %3137 = vmatprep.subr.bf16.mxu0 %v2647
    %3138 = vmatpush1.bf16.msra.mxu0 %v2646
    %3139 = vmatprep.subr.bf16.mxu0 %v2663
    %3140 = vmatpush1.bf16.msra.mxu0 %v2662
    %3141 = vmatprep.subr.bf16.mxu0 %v2679
    %3142 = vmatpush1.bf16.msra.mxu0 %v2678
    %3143 = vmatprep.subr.bf16.mxu0 %v2695
    %3144 = vmatpush1.bf16.msra.mxu0 %v2694
    %3145 = vmatprep.subr.bf16.mxu0 %v2711
    %3146 = vmatpush1.bf16.msra.mxu0 %v2710
    %3147 = vmatprep.subr.bf16.mxu0 %v2727
    %3148 = vmatpush1.bf16.msra.mxu0 %v2726
    %3149 = vmatprep.subr.bf16.mxu0 %v2743
    %3150 = vmatpush1.bf16.msra.mxu0 %v2742
    %3151 = vmatprep.mubr.bf16.mxu0 0
    %3152 = vmatmul.mubr.bf16.gmra.mrb[0].mxu0 0
    %v3153 = vpop.f32.mrb[0].mxu0
    %v3154 = vadd.f32 %v3113, %v3153
    %v3155 = vpop.f32.mrb[0].mxu0
    %v3156 = vadd.f32 %v3115, %v3155
    %v3157 = vpop.f32.mrb[0].mxu0
    %v3158 = vpop.f32.mrb[0].mxu0
    %3159 = vdwg.mxu0
    %3160 = vmatprep.subr.bf16.mxu0 %v2249
    %3161 = vmatpush1.bf16.msra.mxu0 %v2248
    %3162 = vmatprep.subr.bf16.mxu0 %v2265
    %3163 = vmatpush1.bf16.msra.mxu0 %v2264
    %3164 = vmatprep.subr.bf16.mxu0 %v2281
    %3165 = vmatpush1.bf16.msra.mxu0 %v2280
    %3166 = vmatprep.subr.bf16.mxu0 %v2297
    %3167 = vmatpush1.bf16.msra.mxu0 %v2296
    %3168 = vmatprep.subr.bf16.mxu0 %v2313
    %3169 = vmatpush1.bf16.msra.mxu0 %v2312
    %3170 = vmatprep.subr.bf16.mxu0 %v2329
    %3171 = vmatpush1.bf16.msra.mxu0 %v2328
    %3172 = vmatprep.subr.bf16.mxu0 %v2345
    %3173 = vmatpush1.bf16.msra.mxu0 %v2344
    %3174 = vmatprep.subr.bf16.mxu0 %v2361
    %3175 = vmatpush1.bf16.msra.mxu0 %v2360
    %3176 = vmatprep.subr.bf16.mxu0 %v2377
    %3177 = vmatpush1.bf16.msra.mxu0 %v2376
    %3178 = vmatprep.subr.bf16.mxu0 %v2393
    %3179 = vmatpush1.bf16.msra.mxu0 %v2392
    %3180 = vmatprep.subr.bf16.mxu0 %v2409
    %3181 = vmatpush1.bf16.msra.mxu0 %v2408
    %3182 = vmatprep.subr.bf16.mxu0 %v2425
    %3183 = vmatpush1.bf16.msra.mxu0 %v2424
    %3184 = vmatprep.subr.bf16.mxu0 %v2441
    %3185 = vmatpush1.bf16.msra.mxu0 %v2440
    %3186 = vmatprep.subr.bf16.mxu0 %v2457
    %3187 = vmatpush1.bf16.msra.mxu0 %v2456
    %3188 = vmatprep.subr.bf16.mxu0 %v2473
    %3189 = vmatpush1.bf16.msra.mxu0 %v2472
    %3190 = vmatprep.subr.bf16.mxu0 %v2489
    %3191 = vmatpush1.bf16.msra.mxu0 %v2488
    %3192 = vmatprep.mubr.bf16.mxu0 0
    %3193 = vmatmul.mubr.bf16.gmra.mrb[0].mxu0 0
    %v3194 = vpop.f32.mrb[0].mxu0
    %v3195 = vadd.f32 0.0, %v3194
    %v3196 = vpop.f32.mrb[0].mxu0
    %v3197 = vadd.f32 0.0, %v3196
    %v3198 = vpop.f32.mrb[0].mxu0
    %v3199 = vpop.f32.mrb[0].mxu0
    %3200 = vdwg.mxu0
    %3201 = vmatprep.subr.bf16.mxu0 %v2505
    %3202 = vmatpush1.bf16.msra.mxu0 %v2504
    %3203 = vmatprep.subr.bf16.mxu0 %v2521
    %3204 = vmatpush1.bf16.msra.mxu0 %v2520
    %3205 = vmatprep.subr.bf16.mxu0 %v2537
    %3206 = vmatpush1.bf16.msra.mxu0 %v2536
    %3207 = vmatprep.subr.bf16.mxu0 %v2553
    %3208 = vmatpush1.bf16.msra.mxu0 %v2552
    %3209 = vmatprep.subr.bf16.mxu0 %v2569
    %3210 = vmatpush1.bf16.msra.mxu0 %v2568
    %3211 = vmatprep.subr.bf16.mxu0 %v2585
    %3212 = vmatpush1.bf16.msra.mxu0 %v2584
    %3213 = vmatprep.subr.bf16.mxu0 %v2601
    %3214 = vmatpush1.bf16.msra.mxu0 %v2600
    %3215 = vmatprep.subr.bf16.mxu0 %v2617
    %3216 = vmatpush1.bf16.msra.mxu0 %v2616
    %3217 = vmatprep.subr.bf16.mxu0 %v2633
    %3218 = vmatpush1.bf16.msra.mxu0 %v2632
    %3219 = vmatprep.subr.bf16.mxu0 %v2649
    %3220 = vmatpush1.bf16.msra.mxu0 %v2648
    %3221 = vmatprep.subr.bf16.mxu0 %v2665
    %3222 = vmatpush1.bf16.msra.mxu0 %v2664
    %3223 = vmatprep.subr.bf16.mxu0 %v2681
    %3224 = vmatpush1.bf16.msra.mxu0 %v2680
    %3225 = vmatprep.subr.bf16.mxu0 %v2697
    %3226 = vmatpush1.bf16.msra.mxu0 %v2696
    %3227 = vmatprep.subr.bf16.mxu0 %v2713
    %3228 = vmatpush1.bf16.msra.mxu0 %v2712
    %3229 = vmatprep.subr.bf16.mxu0 %v2729
    %3230 = vmatpush1.bf16.msra.mxu0 %v2728
    %3231 = vmatprep.subr.bf16.mxu0 %v2745
    %3232 = vmatpush1.bf16.msra.mxu0 %v2744
    %3233 = vmatprep.mubr.bf16.mxu0 0
    %3234 = vmatmul.mubr.bf16.gmra.mrb[0].mxu0 0
    %v3235 = vpop.f32.mrb[0].mxu0
    %v3236 = vadd.f32 %v3195, %v3235
    %v3237 = vpop.f32.mrb[0].mxu0
    %v3238 = vadd.f32 %v3197, %v3237
    %v3239 = vpop.f32.mrb[0].mxu0
    %v3240 = vpop.f32.mrb[0].mxu0
    %3241 = vdwg.mxu0
    %3242 = vmatprep.subr.bf16.mxu0 %v2251
    %3243 = vmatpush1.bf16.msra.mxu0 %v2250
    %3244 = vmatprep.subr.bf16.mxu0 %v2267
    %3245 = vmatpush1.bf16.msra.mxu0 %v2266
    %3246 = vmatprep.subr.bf16.mxu0 %v2283
    %3247 = vmatpush1.bf16.msra.mxu0 %v2282
    %3248 = vmatprep.subr.bf16.mxu0 %v2299
    %3249 = vmatpush1.bf16.msra.mxu0 %v2298
    %3250 = vmatprep.subr.bf16.mxu0 %v2315
    %3251 = vmatpush1.bf16.msra.mxu0 %v2314
    %3252 = vmatprep.subr.bf16.mxu0 %v2331
    %3253 = vmatpush1.bf16.msra.mxu0 %v2330
    %3254 = vmatprep.subr.bf16.mxu0 %v2347
    %3255 = vmatpush1.bf16.msra.mxu0 %v2346
    %3256 = vmatprep.subr.bf16.mxu0 %v2363
    %3257 = vmatpush1.bf16.msra.mxu0 %v2362
    %3258 = vmatprep.subr.bf16.mxu0 %v2379
    %3259 = vmatpush1.bf16.msra.mxu0 %v2378
    %3260 = vmatprep.subr.bf16.mxu0 %v2395
    %3261 = vmatpush1.bf16.msra.mxu0 %v2394
    %3262 = vmatprep.subr.bf16.mxu0 %v2411
    %3263 = vmatpush1.bf16.msra.mxu0 %v2410
    %3264 = vmatprep.subr.bf16.mxu0 %v2427
    %3265 = vmatpush1.bf16.msra.mxu0 %v2426
    %3266 = vmatprep.subr.bf16.mxu0 %v2443
    %3267 = vmatpush1.bf16.msra.mxu0 %v2442
    %3268 = vmatprep.subr.bf16.mxu0 %v2459
    %3269 = vmatpush1.bf16.msra.mxu0 %v2458
    %3270 = vmatprep.subr.bf16.mxu0 %v2475
    %3271 = vmatpush1.bf16.msra.mxu0 %v2474
    %3272 = vmatprep.subr.bf16.mxu0 %v2491
    %3273 = vmatpush1.bf16.msra.mxu0 %v2490
    %3274 = vmatprep.mubr.bf16.mxu0 0
    %3275 = vmatmul.mubr.bf16.gmra.mrb[0].mxu0 0
    %v3276 = vpop.f32.mrb[0].mxu0
    %v3277 = vadd.f32 0.0, %v3276
    %v3278 = vpop.f32.mrb[0].mxu0
    %v3279 = vadd.f32 0.0, %v3278
    %v3280 = vpop.f32.mrb[0].mxu0
    %v3281 = vpop.f32.mrb[0].mxu0
    %3282 = vdwg.mxu0
    %3283 = vmatprep.subr.bf16.mxu0 %v2507
    %3284 = vmatpush1.bf16.msra.mxu0 %v2506
    %3285 = vmatprep.subr.bf16.mxu0 %v2523
    %3286 = vmatpush1.bf16.msra.mxu0 %v2522
    %3287 = vmatprep.subr.bf16.mxu0 %v2539
    %3288 = vmatpush1.bf16.msra.mxu0 %v2538
    %3289 = vmatprep.subr.bf16.mxu0 %v2555
    %3290 = vmatpush1.bf16.msra.mxu0 %v2554
    %3291 = vmatprep.subr.bf16.mxu0 %v2571
    %3292 = vmatpush1.bf16.msra.mxu0 %v2570
    %3293 = vmatprep.subr.bf16.mxu0 %v2587
    %3294 = vmatpush1.bf16.msra.mxu0 %v2586
    %3295 = vmatprep.subr.bf16.mxu0 %v2603
    %3296 = vmatpush1.bf16.msra.mxu0 %v2602
    %3297 = vmatprep.subr.bf16.mxu0 %v2619
    %3298 = vmatpush1.bf16.msra.mxu0 %v2618
    %3299 = vmatprep.subr.bf16.mxu0 %v2635
    %3300 = vmatpush1.bf16.msra.mxu0 %v2634
    %3301 = vmatprep.subr.bf16.mxu0 %v2651
    %3302 = vmatpush1.bf16.msra.mxu0 %v2650
    %3303 = vmatprep.subr.bf16.mxu0 %v2667
    %3304 = vmatpush1.bf16.msra.mxu0 %v2666
    %3305 = vmatprep.subr.bf16.mxu0 %v2683
    %3306 = vmatpush1.bf16.msra.mxu0 %v2682
    %3307 = vmatprep.subr.bf16.mxu0 %v2699
    %3308 = vmatpush1.bf16.msra.mxu0 %v2698
    %3309 = vmatprep.subr.bf16.mxu0 %v2715
    %3310 = vmatpush1.bf16.msra.mxu0 %v2714
    %3311 = vmatprep.subr.bf16.mxu0 %v2731
    %3312 = vmatpush1.bf16.msra.mxu0 %v2730
    %3313 = vmatprep.subr.bf16.mxu0 %v2747
    %3314 = vmatpush1.bf16.msra.mxu0 %v2746
    %3315 = vmatprep.mubr.bf16.mxu0 0
    %3316 = vmatmul.mubr.bf16.gmra.mrb[0].mxu0 0
    %v3317 = vpop.f32.mrb[0].mxu0
    %v3318 = vadd.f32 %v3277, %v3317
    %v3319 = vpop.f32.mrb[0].mxu0
    %v3320 = vadd.f32 %v3279, %v3319
    %v3321 = vpop.f32.mrb[0].mxu0
    %v3322 = vpop.f32.mrb[0].mxu0
    %3323 = vdwg.mxu0
    %3324 = vmatprep.subr.bf16.mxu0 %v2253
    %3325 = vmatpush1.bf16.msra.mxu0 %v2252
    %3326 = vmatprep.subr.bf16.mxu0 %v2269
    %3327 = vmatpush1.bf16.msra.mxu0 %v2268
    %3328 = vmatprep.subr.bf16.mxu0 %v2285
    %3329 = vmatpush1.bf16.msra.mxu0 %v2284
    %3330 = vmatprep.subr.bf16.mxu0 %v2301
    %3331 = vmatpush1.bf16.msra.mxu0 %v2300
    %3332 = vmatprep.subr.bf16.mxu0 %v2317
    %3333 = vmatpush1.bf16.msra.mxu0 %v2316
    %3334 = vmatprep.subr.bf16.mxu0 %v2333
    %3335 = vmatpush1.bf16.msra.mxu0 %v2332
    %3336 = vmatprep.subr.bf16.mxu0 %v2349
    %3337 = vmatpush1.bf16.msra.mxu0 %v2348
    %3338 = vmatprep.subr.bf16.mxu0 %v2365
    %3339 = vmatpush1.bf16.msra.mxu0 %v2364
    %3340 = vmatprep.subr.bf16.mxu0 %v2381
    %3341 = vmatpush1.bf16.msra.mxu0 %v2380
    %3342 = vmatprep.subr.bf16.mxu0 %v2397
    %3343 = vmatpush1.bf16.msra.mxu0 %v2396
    %3344 = vmatprep.subr.bf16.mxu0 %v2413
    %3345 = vmatpush1.bf16.msra.mxu0 %v2412
    %3346 = vmatprep.subr.bf16.mxu0 %v2429
    %3347 = vmatpush1.bf16.msra.mxu0 %v2428
    %3348 = vmatprep.subr.bf16.mxu0 %v2445
    %3349 = vmatpush1.bf16.msra.mxu0 %v2444
    %3350 = vmatprep.subr.bf16.mxu0 %v2461
    %3351 = vmatpush1.bf16.msra.mxu0 %v2460
    %3352 = vmatprep.subr.bf16.mxu0 %v2477
    %3353 = vmatpush1.bf16.msra.mxu0 %v2476
    %3354 = vmatprep.subr.bf16.mxu0 %v2493
    %3355 = vmatpush1.bf16.msra.mxu0 %v2492
    %3356 = vmatprep.mubr.bf16.mxu0 0
    %3357 = vmatmul.mubr.bf16.gmra.mrb[0].mxu0 0
    %v3358 = vpop.f32.mrb[0].mxu0
    %v3359 = vadd.f32 0.0, %v3358
    %v3360 = vpop.f32.mrb[0].mxu0
    %v3361 = vadd.f32 0.0, %v3360
    %v3362 = vpop.f32.mrb[0].mxu0
    %v3363 = vpop.f32.mrb[0].mxu0
    %3364 = vdwg.mxu0
    %3365 = vmatprep.subr.bf16.mxu0 %v2509
    %3366 = vmatpush1.bf16.msra.mxu0 %v2508
    %3367 = vmatprep.subr.bf16.mxu0 %v2525
    %3368 = vmatpush1.bf16.msra.mxu0 %v2524
    %3369 = vmatprep.subr.bf16.mxu0 %v2541
    %3370 = vmatpush1.bf16.msra.mxu0 %v2540
    %3371 = vmatprep.subr.bf16.mxu0 %v2557
    %3372 = vmatpush1.bf16.msra.mxu0 %v2556
    %3373 = vmatprep.subr.bf16.mxu0 %v2573
    %3374 = vmatpush1.bf16.msra.mxu0 %v2572
    %3375 = vmatprep.subr.bf16.mxu0 %v2589
    %3376 = vmatpush1.bf16.msra.mxu0 %v2588
    %3377 = vmatprep.subr.bf16.mxu0 %v2605
    %3378 = vmatpush1.bf16.msra.mxu0 %v2604
    %3379 = vmatprep.subr.bf16.mxu0 %v2621
    %3380 = vmatpush1.bf16.msra.mxu0 %v2620
    %3381 = vmatprep.subr.bf16.mxu0 %v2637
    %3382 = vmatpush1.bf16.msra.mxu0 %v2636
    %3383 = vmatprep.subr.bf16.mxu0 %v2653
    %3384 = vmatpush1.bf16.msra.mxu0 %v2652
    %3385 = vmatprep.subr.bf16.mxu0 %v2669
    %3386 = vmatpush1.bf16.msra.mxu0 %v2668
    %3387 = vmatprep.subr.bf16.mxu0 %v2685
    %3388 = vmatpush1.bf16.msra.mxu0 %v2684
    %3389 = vmatprep.subr.bf16.mxu0 %v2701
    %3390 = vmatpush1.bf16.msra.mxu0 %v2700
    %3391 = vmatprep.subr.bf16.mxu0 %v2717
    %3392 = vmatpush1.bf16.msra.mxu0 %v2716
    %3393 = vmatprep.subr.bf16.mxu0 %v2733
    %3394 = vmatpush1.bf16.msra.mxu0 %v2732
    %3395 = vmatprep.subr.bf16.mxu0 %v2749
    %3396 = vmatpush1.bf16.msra.mxu0 %v2748
    %3397 = vmatprep.mubr.bf16.mxu0 0
    %3398 = vmatmul.mubr.bf16.gmra.mrb[0].mxu0 0
    %v3399 = vpop.f32.mrb[0].mxu0
    %v3400 = vadd.f32 %v3359, %v3399
    %v3401 = vpop.f32.mrb[0].mxu0
    %v3402 = vadd.f32 %v3361, %v3401
    %v3403 = vpop.f32.mrb[0].mxu0
    %v3404 = vpop.f32.mrb[0].mxu0
    %3405 = vdwg.mxu0
    %v3406 = vadd.f32 %v787, %v2826
    %v3407 = vadd.f32 %v789, %v2828
    %v3408 = vadd.f32 %v830, %v2908
    %v3409 = vadd.f32 %v832, %v2910
    %v3410 = vadd.f32 %v873, %v2990
    %v3411 = vadd.f32 %v875, %v2992
    %v3412 = vadd.f32 %v916, %v3072
    %v3413 = vadd.f32 %v918, %v3074
    %v3414 = vadd.f32 %v959, %v3154
    %v3415 = vadd.f32 %v961, %v3156
    %v3416 = vadd.f32 %v1002, %v3236
    %v3417 = vadd.f32 %v1004, %v3238
    %v3418 = vadd.f32 %v1045, %v3318
    %v3419 = vadd.f32 %v1047, %v3320
    %v3420 = vadd.f32 %v1088, %v3400
    %v3421 = vadd.f32 %v1090, %v3402
    %v3422 = vxor.u32 %v3406, 2147483648
    %v3423 = vxor.u32 %v3407, 2147483648
    %v3424 = vxor.u32 %v3408, 2147483648
    %v3425 = vxor.u32 %v3409, 2147483648
    %v3426 = vmul.f32 %v3422, 1.442695
    %v3427 = vpow.pop %v3426
    %v3428 = vmul.f32 %v3423, 1.442695
    %v3429 = vpow.pop %v3428
    %v3430 = vmul.f32 %v3424, 1.442695
    %v3431 = vpow.pop %v3430
    %v3432 = vmul.f32 %v3425, 1.442695
    %v3433 = vpow.pop %v3432
    %v3434 = vadd.f32 %v3427, 1.0
    %v3435 = vadd.f32 %v3429, 1.0
    %v3436 = vadd.f32 %v3431, 1.0
    %v3437 = vadd.f32 %v3433, 1.0
    %v3438 = vrcp.pop %v3434
    %v3439 = vmul.f32 1.0, %v3438
    %v3440 = vrcp.pop %v3435
    %v3441 = vmul.f32 1.0, %v3440
    %v3442 = vrcp.pop %v3436
    %v3443 = vmul.f32 1.0, %v3442
    %v3444 = vrcp.pop %v3437
    %v3445 = vmul.f32 1.0, %v3444
    %v3446 = vxor.u32 %v3410, 2147483648
    %v3447 = vxor.u32 %v3411, 2147483648
    %v3448 = vxor.u32 %v3412, 2147483648
    %v3449 = vxor.u32 %v3413, 2147483648
    %v3450 = vmul.f32 %v3446, 1.442695
    %v3451 = vpow.pop %v3450
    %v3452 = vmul.f32 %v3447, 1.442695
    %v3453 = vpow.pop %v3452
    %v3454 = vmul.f32 %v3448, 1.442695
    %v3455 = vpow.pop %v3454
    %v3456 = vmul.f32 %v3449, 1.442695
    %v3457 = vpow.pop %v3456
    %v3458 = vadd.f32 %v3451, 1.0
    %v3459 = vadd.f32 %v3453, 1.0
    %v3460 = vadd.f32 %v3455, 1.0
    %v3461 = vadd.f32 %v3457, 1.0
    %v3462 = vrcp.pop %v3458
    %v3463 = vmul.f32 1.0, %v3462
    %v3464 = vrcp.pop %v3459
    %v3465 = vmul.f32 1.0, %v3464
    %v3466 = vrcp.pop %v3460
    %v3467 = vmul.f32 1.0, %v3466
    %v3468 = vrcp.pop %v3461
    %v3469 = vmul.f32 1.0, %v3468
    %v3470 = vtanh.pop %v3414
    %v3471 = vtanh.pop %v3415
    %v3472 = vtanh.pop %v3416
    %v3473 = vtanh.pop %v3417
    %v3474 = vxor.u32 %v3418, 2147483648
    %v3475 = vxor.u32 %v3419, 2147483648
    %v3476 = vxor.u32 %v3420, 2147483648
    %v3477 = vxor.u32 %v3421, 2147483648
    %v3478 = vmul.f32 %v3474, 1.442695
    %v3479 = vpow.pop %v3478
    %v3480 = vmul.f32 %v3475, 1.442695
    %v3481 = vpow.pop %v3480
    %v3482 = vmul.f32 %v3476, 1.442695
    %v3483 = vpow.pop %v3482
    %v3484 = vmul.f32 %v3477, 1.442695
    %v3485 = vpow.pop %v3484
    %v3486 = vadd.f32 %v3479, 1.0
    %v3487 = vadd.f32 %v3481, 1.0
    %v3488 = vadd.f32 %v3483, 1.0
    %v3489 = vadd.f32 %v3485, 1.0
    %v3490 = vrcp.pop %v3486
    %v3491 = vmul.f32 1.0, %v3490
    %v3492 = vrcp.pop %v3487
    %v3493 = vmul.f32 1.0, %v3492
    %v3494 = vrcp.pop %v3488
    %v3495 = vmul.f32 1.0, %v3494
    %v3496 = vrcp.pop %v3489
    %v3497 = vmul.f32 1.0, %v3496
    %v3498 = vmul.f32 %v3463, 0.0
    %v3499 = vmul.f32 %v3465, 0.0
    %v3500 = vmul.f32 %v3467, 0.0
    %v3501 = vmul.f32 %v3469, 0.0
    %v3502 = vmul.f32 %v3439, %v3470
    %v3503 = vmul.f32 %v3441, %v3471
    %v3504 = vmul.f32 %v3443, %v3472
    %v3505 = vmul.f32 %v3445, %v3473
    %v3506 = vadd.f32 %v3498, %v3502
    %v3507 = vadd.f32 %v3499, %v3503
    %v3508 = vadd.f32 %v3500, %v3504
    %v3509 = vadd.f32 %v3501, %v3505
    %v3510 = vtanh.pop %v3506
    %v3511 = vtanh.pop %v3507
    %v3512 = vtanh.pop %v3508
    %v3513 = vtanh.pop %v3509
    %v3514 = vmul.f32 %v3491, %v3510
    %v3515 = vmul.f32 %v3493, %v3511
    %v3516 = vmul.f32 %v3495, %v3512
    %v3517 = vmul.f32 %v3497, %v3513
    %v3518 = vpack.c.bf16 %v3514, %v3514
    %v3519 = vpack.c.bf16 %v3515, %v3515
    %v3520 = vpack.c.bf16 %v3516, %v3516
    %v3521 = vpack.c.bf16 %v3517, %v3517
    %3522 = vmatprep.subr.bf16.mxu0 %v2239
    %3523 = vmatpush1.bf16.msra.mxu0 %v2238
    %3524 = vmatprep.subr.bf16.mxu0 %v2255
    %3525 = vmatpush1.bf16.msra.mxu0 %v2254
    %3526 = vmatprep.subr.bf16.mxu0 %v2271
    %3527 = vmatpush1.bf16.msra.mxu0 %v2270
    %3528 = vmatprep.subr.bf16.mxu0 %v2287
    %3529 = vmatpush1.bf16.msra.mxu0 %v2286
    %3530 = vmatprep.subr.bf16.mxu0 %v2303
    %3531 = vmatpush1.bf16.msra.mxu0 %v2302
    %3532 = vmatprep.subr.bf16.mxu0 %v2319
    %3533 = vmatpush1.bf16.msra.mxu0 %v2318
    %3534 = vmatprep.subr.bf16.mxu0 %v2335
    %3535 = vmatpush1.bf16.msra.mxu0 %v2334
    %3536 = vmatprep.subr.bf16.mxu0 %v2351
    %3537 = vmatpush1.bf16.msra.mxu0 %v2350
    %3538 = vmatprep.subr.bf16.mxu0 %v2367
    %3539 = vmatpush1.bf16.msra.mxu0 %v2366
    %3540 = vmatprep.subr.bf16.mxu0 %v2383
    %3541 = vmatpush1.bf16.msra.mxu0 %v2382
    %3542 = vmatprep.subr.bf16.mxu0 %v2399
    %3543 = vmatpush1.bf16.msra.mxu0 %v2398
    %3544 = vmatprep.subr.bf16.mxu0 %v2415
    %3545 = vmatpush1.bf16.msra.mxu0 %v2414
    %3546 = vmatprep.subr.bf16.mxu0 %v2431
    %3547 = vmatpush1.bf16.msra.mxu0 %v2430
    %3548 = vmatprep.subr.bf16.mxu0 %v2447
    %3549 = vmatpush1.bf16.msra.mxu0 %v2446
    %3550 = vmatprep.subr.bf16.mxu0 %v2463
    %3551 = vmatpush1.bf16.msra.mxu0 %v2462
    %3552 = vmatprep.subr.bf16.mxu0 %v2479
    %3553 = vmatpush1.bf16.msra.mxu0 %v2478
    %3554 = vmatprep.mubr.bf16.mxu0 %v3519
    %3555 = vmatmul.mubr.bf16.gmra.mrb[0].mxu0 %v3518
    %v3556 = vpop.f32.mrb[0].mxu0
    %v3557 = vadd.f32 0.0, %v3556
    %v3558 = vpop.f32.mrb[0].mxu0
    %v3559 = vadd.f32 0.0, %v3558
    %v3560 = vpop.f32.mrb[0].mxu0
    %v3561 = vpop.f32.mrb[0].mxu0
    %3562 = vdwg.mxu0
    %3563 = vmatprep.subr.bf16.mxu0 %v2495
    %3564 = vmatpush1.bf16.msra.mxu0 %v2494
    %3565 = vmatprep.subr.bf16.mxu0 %v2511
    %3566 = vmatpush1.bf16.msra.mxu0 %v2510
    %3567 = vmatprep.subr.bf16.mxu0 %v2527
    %3568 = vmatpush1.bf16.msra.mxu0 %v2526
    %3569 = vmatprep.subr.bf16.mxu0 %v2543
    %3570 = vmatpush1.bf16.msra.mxu0 %v2542
    %3571 = vmatprep.subr.bf16.mxu0 %v2559
    %3572 = vmatpush1.bf16.msra.mxu0 %v2558
    %3573 = vmatprep.subr.bf16.mxu0 %v2575
    %3574 = vmatpush1.bf16.msra.mxu0 %v2574
    %3575 = vmatprep.subr.bf16.mxu0 %v2591
    %3576 = vmatpush1.bf16.msra.mxu0 %v2590
    %3577 = vmatprep.subr.bf16.mxu0 %v2607
    %3578 = vmatpush1.bf16.msra.mxu0 %v2606
    %3579 = vmatprep.subr.bf16.mxu0 %v2623
    %3580 = vmatpush1.bf16.msra.mxu0 %v2622
    %3581 = vmatprep.subr.bf16.mxu0 %v2639
    %3582 = vmatpush1.bf16.msra.mxu0 %v2638
    %3583 = vmatprep.subr.bf16.mxu0 %v2655
    %3584 = vmatpush1.bf16.msra.mxu0 %v2654
    %3585 = vmatprep.subr.bf16.mxu0 %v2671
    %3586 = vmatpush1.bf16.msra.mxu0 %v2670
    %3587 = vmatprep.subr.bf16.mxu0 %v2687
    %3588 = vmatpush1.bf16.msra.mxu0 %v2686
    %3589 = vmatprep.subr.bf16.mxu0 %v2703
    %3590 = vmatpush1.bf16.msra.mxu0 %v2702
    %3591 = vmatprep.subr.bf16.mxu0 %v2719
    %3592 = vmatpush1.bf16.msra.mxu0 %v2718
    %3593 = vmatprep.subr.bf16.mxu0 %v2735
    %3594 = vmatpush1.bf16.msra.mxu0 %v2734
    %3595 = vmatprep.mubr.bf16.mxu0 %v3521
    %3596 = vmatmul.mubr.bf16.gmra.mrb[0].mxu0 %v3520
    %v3597 = vpop.f32.mrb[0].mxu0
    %v3598 = vadd.f32 %v3557, %v3597
    %v3599 = vpop.f32.mrb[0].mxu0
    %v3600 = vadd.f32 %v3559, %v3599
    %v3601 = vpop.f32.mrb[0].mxu0
    %v3602 = vpop.f32.mrb[0].mxu0
    %3603 = vdwg.mxu0
    %3604 = vmatprep.subr.bf16.mxu0 %v2241
    %3605 = vmatpush1.bf16.msra.mxu0 %v2240
    %3606 = vmatprep.subr.bf16.mxu0 %v2257
    %3607 = vmatpush1.bf16.msra.mxu0 %v2256
    %3608 = vmatprep.subr.bf16.mxu0 %v2273
    %3609 = vmatpush1.bf16.msra.mxu0 %v2272
    %3610 = vmatprep.subr.bf16.mxu0 %v2289
    %3611 = vmatpush1.bf16.msra.mxu0 %v2288
    %3612 = vmatprep.subr.bf16.mxu0 %v2305
    %3613 = vmatpush1.bf16.msra.mxu0 %v2304
    %3614 = vmatprep.subr.bf16.mxu0 %v2321
    %3615 = vmatpush1.bf16.msra.mxu0 %v2320
    %3616 = vmatprep.subr.bf16.mxu0 %v2337
    %3617 = vmatpush1.bf16.msra.mxu0 %v2336
    %3618 = vmatprep.subr.bf16.mxu0 %v2353
    %3619 = vmatpush1.bf16.msra.mxu0 %v2352
    %3620 = vmatprep.subr.bf16.mxu0 %v2369
    %3621 = vmatpush1.bf16.msra.mxu0 %v2368
    %3622 = vmatprep.subr.bf16.mxu0 %v2385
    %3623 = vmatpush1.bf16.msra.mxu0 %v2384
    %3624 = vmatprep.subr.bf16.mxu0 %v2401
    %3625 = vmatpush1.bf16.msra.mxu0 %v2400
    %3626 = vmatprep.subr.bf16.mxu0 %v2417
    %3627 = vmatpush1.bf16.msra.mxu0 %v2416
    %3628 = vmatprep.subr.bf16.mxu0 %v2433
    %3629 = vmatpush1.bf16.msra.mxu0 %v2432
    %3630 = vmatprep.subr.bf16.mxu0 %v2449
    %3631 = vmatpush1.bf16.msra.mxu0 %v2448
    %3632 = vmatprep.subr.bf16.mxu0 %v2465
    %3633 = vmatpush1.bf16.msra.mxu0 %v2464
    %3634 = vmatprep.subr.bf16.mxu0 %v2481
    %3635 = vmatpush1.bf16.msra.mxu0 %v2480
    %3636 = vmatprep.mubr.bf16.mxu0 %v3519
    %3637 = vmatmul.mubr.bf16.gmra.mrb[0].mxu0 %v3518
    %v3638 = vpop.f32.mrb[0].mxu0
    %v3639 = vadd.f32 0.0, %v3638
    %v3640 = vpop.f32.mrb[0].mxu0
    %v3641 = vadd.f32 0.0, %v3640
    %v3642 = vpop.f32.mrb[0].mxu0
    %v3643 = vpop.f32.mrb[0].mxu0
    %3644 = vdwg.mxu0
    %3645 = vmatprep.subr.bf16.mxu0 %v2497
    %3646 = vmatpush1.bf16.msra.mxu0 %v2496
    %3647 = vmatprep.subr.bf16.mxu0 %v2513
    %3648 = vmatpush1.bf16.msra.mxu0 %v2512
    %3649 = vmatprep.subr.bf16.mxu0 %v2529
    %3650 = vmatpush1.bf16.msra.mxu0 %v2528
    %3651 = vmatprep.subr.bf16.mxu0 %v2545
    %3652 = vmatpush1.bf16.msra.mxu0 %v2544
    %3653 = vmatprep.subr.bf16.mxu0 %v2561
    %3654 = vmatpush1.bf16.msra.mxu0 %v2560
    %3655 = vmatprep.subr.bf16.mxu0 %v2577
    %3656 = vmatpush1.bf16.msra.mxu0 %v2576
    %3657 = vmatprep.subr.bf16.mxu0 %v2593
    %3658 = vmatpush1.bf16.msra.mxu0 %v2592
    %3659 = vmatprep.subr.bf16.mxu0 %v2609
    %3660 = vmatpush1.bf16.msra.mxu0 %v2608
    %3661 = vmatprep.subr.bf16.mxu0 %v2625
    %3662 = vmatpush1.bf16.msra.mxu0 %v2624
    %3663 = vmatprep.subr.bf16.mxu0 %v2641
    %3664 = vmatpush1.bf16.msra.mxu0 %v2640
    %3665 = vmatprep.subr.bf16.mxu0 %v2657
    %3666 = vmatpush1.bf16.msra.mxu0 %v2656
    %3667 = vmatprep.subr.bf16.mxu0 %v2673
    %3668 = vmatpush1.bf16.msra.mxu0 %v2672
    %3669 = vmatprep.subr.bf16.mxu0 %v2689
    %3670 = vmatpush1.bf16.msra.mxu0 %v2688
    %3671 = vmatprep.subr.bf16.mxu0 %v2705
    %3672 = vmatpush1.bf16.msra.mxu0 %v2704
    %3673 = vmatprep.subr.bf16.mxu0 %v2721
    %3674 = vmatpush1.bf16.msra.mxu0 %v2720
    %3675 = vmatprep.subr.bf16.mxu0 %v2737
    %3676 = vmatpush1.bf16.msra.mxu0 %v2736
    %3677 = vmatprep.mubr.bf16.mxu0 %v3521
    %3678 = vmatmul.mubr.bf16.gmra.mrb[0].mxu0 %v3520
    %v3679 = vpop.f32.mrb[0].mxu0
    %v3680 = vadd.f32 %v3639, %v3679
    %v3681 = vpop.f32.mrb[0].mxu0
    %v3682 = vadd.f32 %v3641, %v3681
    %v3683 = vpop.f32.mrb[0].mxu0
    %v3684 = vpop.f32.mrb[0].mxu0
    %3685 = vdwg.mxu0
    %3686 = vmatprep.subr.bf16.mxu0 %v2243
    %3687 = vmatpush1.bf16.msra.mxu0 %v2242
    %3688 = vmatprep.subr.bf16.mxu0 %v2259
    %3689 = vmatpush1.bf16.msra.mxu0 %v2258
    %3690 = vmatprep.subr.bf16.mxu0 %v2275
    %3691 = vmatpush1.bf16.msra.mxu0 %v2274
    %3692 = vmatprep.subr.bf16.mxu0 %v2291
    %3693 = vmatpush1.bf16.msra.mxu0 %v2290
    %3694 = vmatprep.subr.bf16.mxu0 %v2307
    %3695 = vmatpush1.bf16.msra.mxu0 %v2306
    %3696 = vmatprep.subr.bf16.mxu0 %v2323
    %3697 = vmatpush1.bf16.msra.mxu0 %v2322
    %3698 = vmatprep.subr.bf16.mxu0 %v2339
    %3699 = vmatpush1.bf16.msra.mxu0 %v2338
    %3700 = vmatprep.subr.bf16.mxu0 %v2355
    %3701 = vmatpush1.bf16.msra.mxu0 %v2354
    %3702 = vmatprep.subr.bf16.mxu0 %v2371
    %3703 = vmatpush1.bf16.msra.mxu0 %v2370
    %3704 = vmatprep.subr.bf16.mxu0 %v2387
    %3705 = vmatpush1.bf16.msra.mxu0 %v2386
    %3706 = vmatprep.subr.bf16.mxu0 %v2403
    %3707 = vmatpush1.bf16.msra.mxu0 %v2402
    %3708 = vmatprep.subr.bf16.mxu0 %v2419
    %3709 = vmatpush1.bf16.msra.mxu0 %v2418
    %3710 = vmatprep.subr.bf16.mxu0 %v2435
    %3711 = vmatpush1.bf16.msra.mxu0 %v2434
    %3712 = vmatprep.subr.bf16.mxu0 %v2451
    %3713 = vmatpush1.bf16.msra.mxu0 %v2450
    %3714 = vmatprep.subr.bf16.mxu0 %v2467
    %3715 = vmatpush1.bf16.msra.mxu0 %v2466
    %3716 = vmatprep.subr.bf16.mxu0 %v2483
    %3717 = vmatpush1.bf16.msra.mxu0 %v2482
    %3718 = vmatprep.mubr.bf16.mxu0 %v3519
    %3719 = vmatmul.mubr.bf16.gmra.mrb[0].mxu0 %v3518
    %v3720 = vpop.f32.mrb[0].mxu0
    %v3721 = vadd.f32 0.0, %v3720
    %v3722 = vpop.f32.mrb[0].mxu0
    %v3723 = vadd.f32 0.0, %v3722
    %v3724 = vpop.f32.mrb[0].mxu0
    %v3725 = vpop.f32.mrb[0].mxu0
    %3726 = vdwg.mxu0
    %3727 = vmatprep.subr.bf16.mxu0 %v2499
    %3728 = vmatpush1.bf16.msra.mxu0 %v2498
    %3729 = vmatprep.subr.bf16.mxu0 %v2515
    %3730 = vmatpush1.bf16.msra.mxu0 %v2514
    %3731 = vmatprep.subr.bf16.mxu0 %v2531
    %3732 = vmatpush1.bf16.msra.mxu0 %v2530
    %3733 = vmatprep.subr.bf16.mxu0 %v2547
    %3734 = vmatpush1.bf16.msra.mxu0 %v2546
    %3735 = vmatprep.subr.bf16.mxu0 %v2563
    %3736 = vmatpush1.bf16.msra.mxu0 %v2562
    %3737 = vmatprep.subr.bf16.mxu0 %v2579
    %3738 = vmatpush1.bf16.msra.mxu0 %v2578
    %3739 = vmatprep.subr.bf16.mxu0 %v2595
    %3740 = vmatpush1.bf16.msra.mxu0 %v2594
    %3741 = vmatprep.subr.bf16.mxu0 %v2611
    %3742 = vmatpush1.bf16.msra.mxu0 %v2610
    %3743 = vmatprep.subr.bf16.mxu0 %v2627
    %3744 = vmatpush1.bf16.msra.mxu0 %v2626
    %3745 = vmatprep.subr.bf16.mxu0 %v2643
    %3746 = vmatpush1.bf16.msra.mxu0 %v2642
    %3747 = vmatprep.subr.bf16.mxu0 %v2659
    %3748 = vmatpush1.bf16.msra.mxu0 %v2658
    %3749 = vmatprep.subr.bf16.mxu0 %v2675
    %3750 = vmatpush1.bf16.msra.mxu0 %v2674
    %3751 = vmatprep.subr.bf16.mxu0 %v2691
    %3752 = vmatpush1.bf16.msra.mxu0 %v2690
    %3753 = vmatprep.subr.bf16.mxu0 %v2707
    %3754 = vmatpush1.bf16.msra.mxu0 %v2706
    %3755 = vmatprep.subr.bf16.mxu0 %v2723
    %3756 = vmatpush1.bf16.msra.mxu0 %v2722
    %3757 = vmatprep.subr.bf16.mxu0 %v2739
    %3758 = vmatpush1.bf16.msra.mxu0 %v2738
    %3759 = vmatprep.mubr.bf16.mxu0 %v3521
    %3760 = vmatmul.mubr.bf16.gmra.mrb[0].mxu0 %v3520
    %v3761 = vpop.f32.mrb[0].mxu0
    %v3762 = vadd.f32 %v3721, %v3761
    %v3763 = vpop.f32.mrb[0].mxu0
    %v3764 = vadd.f32 %v3723, %v3763
    %v3765 = vpop.f32.mrb[0].mxu0
    %v3766 = vpop.f32.mrb[0].mxu0
    %3767 = vdwg.mxu0
    %3768 = vmatprep.subr.bf16.mxu0 %v2245
    %3769 = vmatpush1.bf16.msra.mxu0 %v2244
    %3770 = vmatprep.subr.bf16.mxu0 %v2261
    %3771 = vmatpush1.bf16.msra.mxu0 %v2260
    %3772 = vmatprep.subr.bf16.mxu0 %v2277
    %3773 = vmatpush1.bf16.msra.mxu0 %v2276
    %3774 = vmatprep.subr.bf16.mxu0 %v2293
    %3775 = vmatpush1.bf16.msra.mxu0 %v2292
    %3776 = vmatprep.subr.bf16.mxu0 %v2309
    %3777 = vmatpush1.bf16.msra.mxu0 %v2308
    %3778 = vmatprep.subr.bf16.mxu0 %v2325
    %3779 = vmatpush1.bf16.msra.mxu0 %v2324
    %3780 = vmatprep.subr.bf16.mxu0 %v2341
    %3781 = vmatpush1.bf16.msra.mxu0 %v2340
    %3782 = vmatprep.subr.bf16.mxu0 %v2357
    %3783 = vmatpush1.bf16.msra.mxu0 %v2356
    %3784 = vmatprep.subr.bf16.mxu0 %v2373
    %3785 = vmatpush1.bf16.msra.mxu0 %v2372
    %3786 = vmatprep.subr.bf16.mxu0 %v2389
    %3787 = vmatpush1.bf16.msra.mxu0 %v2388
    %3788 = vmatprep.subr.bf16.mxu0 %v2405
    %3789 = vmatpush1.bf16.msra.mxu0 %v2404
    %3790 = vmatprep.subr.bf16.mxu0 %v2421
    %3791 = vmatpush1.bf16.msra.mxu0 %v2420
    %3792 = vmatprep.subr.bf16.mxu0 %v2437
    %3793 = vmatpush1.bf16.msra.mxu0 %v2436
    %3794 = vmatprep.subr.bf16.mxu0 %v2453
    %3795 = vmatpush1.bf16.msra.mxu0 %v2452
    %3796 = vmatprep.subr.bf16.mxu0 %v2469
    %3797 = vmatpush1.bf16.msra.mxu0 %v2468
    %3798 = vmatprep.subr.bf16.mxu0 %v2485
    %3799 = vmatpush1.bf16.msra.mxu0 %v2484
    %3800 = vmatprep.mubr.bf16.mxu0 %v3519
    %3801 = vmatmul.mubr.bf16.gmra.mrb[0].mxu0 %v3518
    %v3802 = vpop.f32.mrb[0].mxu0
    %v3803 = vadd.f32 0.0, %v3802
    %v3804 = vpop.f32.mrb[0].mxu0
    %v3805 = vadd.f32 0.0, %v3804
    %v3806 = vpop.f32.mrb[0].mxu0
    %v3807 = vpop.f32.mrb[0].mxu0
    %3808 = vdwg.mxu0
    %3809 = vmatprep.subr.bf16.mxu0 %v2501
    %3810 = vmatpush1.bf16.msra.mxu0 %v2500
    %3811 = vmatprep.subr.bf16.mxu0 %v2517
    %3812 = vmatpush1.bf16.msra.mxu0 %v2516
    %3813 = vmatprep.subr.bf16.mxu0 %v2533
    %3814 = vmatpush1.bf16.msra.mxu0 %v2532
    %3815 = vmatprep.subr.bf16.mxu0 %v2549
    %3816 = vmatpush1.bf16.msra.mxu0 %v2548
    %3817 = vmatprep.subr.bf16.mxu0 %v2565
    %3818 = vmatpush1.bf16.msra.mxu0 %v2564
    %3819 = vmatprep.subr.bf16.mxu0 %v2581
    %3820 = vmatpush1.bf16.msra.mxu0 %v2580
    %3821 = vmatprep.subr.bf16.mxu0 %v2597
    %3822 = vmatpush1.bf16.msra.mxu0 %v2596
    %3823 = vmatprep.subr.bf16.mxu0 %v2613
    %3824 = vmatpush1.bf16.msra.mxu0 %v2612
    %3825 = vmatprep.subr.bf16.mxu0 %v2629
    %3826 = vmatpush1.bf16.msra.mxu0 %v2628
    %3827 = vmatprep.subr.bf16.mxu0 %v2645
    %3828 = vmatpush1.bf16.msra.mxu0 %v2644
    %3829 = vmatprep.subr.bf16.mxu0 %v2661
    %3830 = vmatpush1.bf16.msra.mxu0 %v2660
    %3831 = vmatprep.subr.bf16.mxu0 %v2677
    %3832 = vmatpush1.bf16.msra.mxu0 %v2676
    %3833 = vmatprep.subr.bf16.mxu0 %v2693
    %3834 = vmatpush1.bf16.msra.mxu0 %v2692
    %3835 = vmatprep.subr.bf16.mxu0 %v2709
    %3836 = vmatpush1.bf16.msra.mxu0 %v2708
    %3837 = vmatprep.subr.bf16.mxu0 %v2725
    %3838 = vmatpush1.bf16.msra.mxu0 %v2724
    %3839 = vmatprep.subr.bf16.mxu0 %v2741
    %3840 = vmatpush1.bf16.msra.mxu0 %v2740
    %3841 = vmatprep.mubr.bf16.mxu0 %v3521
    %3842 = vmatmul.mubr.bf16.gmra.mrb[0].mxu0 %v3520
    %v3843 = vpop.f32.mrb[0].mxu0
    %v3844 = vadd.f32 %v3803, %v3843
    %v3845 = vpop.f32.mrb[0].mxu0
    %v3846 = vadd.f32 %v3805, %v3845
    %v3847 = vpop.f32.mrb[0].mxu0
    %v3848 = vpop.f32.mrb[0].mxu0
    %3849 = vdwg.mxu0
    %3850 = vmatprep.subr.bf16.mxu0 %v2247
    %3851 = vmatpush1.bf16.msra.mxu0 %v2246
    %3852 = vmatprep.subr.bf16.mxu0 %v2263
    %3853 = vmatpush1.bf16.msra.mxu0 %v2262
    %3854 = vmatprep.subr.bf16.mxu0 %v2279
    %3855 = vmatpush1.bf16.msra.mxu0 %v2278
    %3856 = vmatprep.subr.bf16.mxu0 %v2295
    %3857 = vmatpush1.bf16.msra.mxu0 %v2294
    %3858 = vmatprep.subr.bf16.mxu0 %v2311
    %3859 = vmatpush1.bf16.msra.mxu0 %v2310
    %3860 = vmatprep.subr.bf16.mxu0 %v2327
    %3861 = vmatpush1.bf16.msra.mxu0 %v2326
    %3862 = vmatprep.subr.bf16.mxu0 %v2343
    %3863 = vmatpush1.bf16.msra.mxu0 %v2342
    %3864 = vmatprep.subr.bf16.mxu0 %v2359
    %3865 = vmatpush1.bf16.msra.mxu0 %v2358
    %3866 = vmatprep.subr.bf16.mxu0 %v2375
    %3867 = vmatpush1.bf16.msra.mxu0 %v2374
    %3868 = vmatprep.subr.bf16.mxu0 %v2391
    %3869 = vmatpush1.bf16.msra.mxu0 %v2390
    %3870 = vmatprep.subr.bf16.mxu0 %v2407
    %3871 = vmatpush1.bf16.msra.mxu0 %v2406
    %3872 = vmatprep.subr.bf16.mxu0 %v2423
    %3873 = vmatpush1.bf16.msra.mxu0 %v2422
    %3874 = vmatprep.subr.bf16.mxu0 %v2439
    %3875 = vmatpush1.bf16.msra.mxu0 %v2438
    %3876 = vmatprep.subr.bf16.mxu0 %v2455
    %3877 = vmatpush1.bf16.msra.mxu0 %v2454
    %3878 = vmatprep.subr.bf16.mxu0 %v2471
    %3879 = vmatpush1.bf16.msra.mxu0 %v2470
    %3880 = vmatprep.subr.bf16.mxu0 %v2487
    %3881 = vmatpush1.bf16.msra.mxu0 %v2486
    %3882 = vmatprep.mubr.bf16.mxu0 %v3519
    %3883 = vmatmul.mubr.bf16.gmra.mrb[0].mxu0 %v3518
    %v3884 = vpop.f32.mrb[0].mxu0
    %v3885 = vadd.f32 0.0, %v3884
    %v3886 = vpop.f32.mrb[0].mxu0
    %v3887 = vadd.f32 0.0, %v3886
    %v3888 = vpop.f32.mrb[0].mxu0
    %v3889 = vpop.f32.mrb[0].mxu0
    %3890 = vdwg.mxu0
    %3891 = vmatprep.subr.bf16.mxu0 %v2503
    %3892 = vmatpush1.bf16.msra.mxu0 %v2502
    %3893 = vmatprep.subr.bf16.mxu0 %v2519
    %3894 = vmatpush1.bf16.msra.mxu0 %v2518
    %3895 = vmatprep.subr.bf16.mxu0 %v2535
    %3896 = vmatpush1.bf16.msra.mxu0 %v2534
    %3897 = vmatprep.subr.bf16.mxu0 %v2551
    %3898 = vmatpush1.bf16.msra.mxu0 %v2550
    %3899 = vmatprep.subr.bf16.mxu0 %v2567
    %3900 = vmatpush1.bf16.msra.mxu0 %v2566
    %3901 = vmatprep.subr.bf16.mxu0 %v2583
    %3902 = vmatpush1.bf16.msra.mxu0 %v2582
    %3903 = vmatprep.subr.bf16.mxu0 %v2599
    %3904 = vmatpush1.bf16.msra.mxu0 %v2598
    %3905 = vmatprep.subr.bf16.mxu0 %v2615
    %3906 = vmatpush1.bf16.msra.mxu0 %v2614
    %3907 = vmatprep.subr.bf16.mxu0 %v2631
    %3908 = vmatpush1.bf16.msra.mxu0 %v2630
    %3909 = vmatprep.subr.bf16.mxu0 %v2647
    %3910 = vmatpush1.bf16.msra.mxu0 %v2646
    %3911 = vmatprep.subr.bf16.mxu0 %v2663
    %3912 = vmatpush1.bf16.msra.mxu0 %v2662
    %3913 = vmatprep.subr.bf16.mxu0 %v2679
    %3914 = vmatpush1.bf16.msra.mxu0 %v2678
    %3915 = vmatprep.subr.bf16.mxu0 %v2695
    %3916 = vmatpush1.bf16.msra.mxu0 %v2694
    %3917 = vmatprep.subr.bf16.mxu0 %v2711
    %3918 = vmatpush1.bf16.msra.mxu0 %v2710
    %3919 = vmatprep.subr.bf16.mxu0 %v2727
    %3920 = vmatpush1.bf16.msra.mxu0 %v2726
    %3921 = vmatprep.subr.bf16.mxu0 %v2743
    %3922 = vmatpush1.bf16.msra.mxu0 %v2742
    %3923 = vmatprep.mubr.bf16.mxu0 %v3521
    %3924 = vmatmul.mubr.bf16.gmra.mrb[0].mxu0 %v3520
    %v3925 = vpop.f32.mrb[0].mxu0
    %v3926 = vadd.f32 %v3885, %v3925
    %v3927 = vpop.f32.mrb[0].mxu0
    %v3928 = vadd.f32 %v3887, %v3927
    %v3929 = vpop.f32.mrb[0].mxu0
    %v3930 = vpop.f32.mrb[0].mxu0
    %3931 = vdwg.mxu0
    %3932 = vmatprep.subr.bf16.mxu0 %v2249
    %3933 = vmatpush1.bf16.msra.mxu0 %v2248
    %3934 = vmatprep.subr.bf16.mxu0 %v2265
    %3935 = vmatpush1.bf16.msra.mxu0 %v2264
    %3936 = vmatprep.subr.bf16.mxu0 %v2281
    %3937 = vmatpush1.bf16.msra.mxu0 %v2280
    %3938 = vmatprep.subr.bf16.mxu0 %v2297
    %3939 = vmatpush1.bf16.msra.mxu0 %v2296
    %3940 = vmatprep.subr.bf16.mxu0 %v2313
    %3941 = vmatpush1.bf16.msra.mxu0 %v2312
    %3942 = vmatprep.subr.bf16.mxu0 %v2329
    %3943 = vmatpush1.bf16.msra.mxu0 %v2328
    %3944 = vmatprep.subr.bf16.mxu0 %v2345
    %3945 = vmatpush1.bf16.msra.mxu0 %v2344
    %3946 = vmatprep.subr.bf16.mxu0 %v2361
    %3947 = vmatpush1.bf16.msra.mxu0 %v2360
    %3948 = vmatprep.subr.bf16.mxu0 %v2377
    %3949 = vmatpush1.bf16.msra.mxu0 %v2376
    %3950 = vmatprep.subr.bf16.mxu0 %v2393
    %3951 = vmatpush1.bf16.msra.mxu0 %v2392
    %3952 = vmatprep.subr.bf16.mxu0 %v2409
    %3953 = vmatpush1.bf16.msra.mxu0 %v2408
    %3954 = vmatprep.subr.bf16.mxu0 %v2425
    %3955 = vmatpush1.bf16.msra.mxu0 %v2424
    %3956 = vmatprep.subr.bf16.mxu0 %v2441
    %3957 = vmatpush1.bf16.msra.mxu0 %v2440
    %3958 = vmatprep.subr.bf16.mxu0 %v2457
    %3959 = vmatpush1.bf16.msra.mxu0 %v2456
    %3960 = vmatprep.subr.bf16.mxu0 %v2473
    %3961 = vmatpush1.bf16.msra.mxu0 %v2472
    %3962 = vmatprep.subr.bf16.mxu0 %v2489
    %3963 = vmatpush1.bf16.msra.mxu0 %v2488
    %3964 = vmatprep.mubr.bf16.mxu0 %v3519
    %3965 = vmatmul.mubr.bf16.gmra.mrb[0].mxu0 %v3518
    %v3966 = vpop.f32.mrb[0].mxu0
    %v3967 = vadd.f32 0.0, %v3966
    %v3968 = vpop.f32.mrb[0].mxu0
    %v3969 = vadd.f32 0.0, %v3968
    %v3970 = vpop.f32.mrb[0].mxu0
    %v3971 = vpop.f32.mrb[0].mxu0
    %3972 = vdwg.mxu0
    %3973 = vmatprep.subr.bf16.mxu0 %v2505
    %3974 = vmatpush1.bf16.msra.mxu0 %v2504
    %3975 = vmatprep.subr.bf16.mxu0 %v2521
    %3976 = vmatpush1.bf16.msra.mxu0 %v2520
    %3977 = vmatprep.subr.bf16.mxu0 %v2537
    %3978 = vmatpush1.bf16.msra.mxu0 %v2536
    %3979 = vmatprep.subr.bf16.mxu0 %v2553
    %3980 = vmatpush1.bf16.msra.mxu0 %v2552
    %3981 = vmatprep.subr.bf16.mxu0 %v2569
    %3982 = vmatpush1.bf16.msra.mxu0 %v2568
    %3983 = vmatprep.subr.bf16.mxu0 %v2585
    %3984 = vmatpush1.bf16.msra.mxu0 %v2584
    %3985 = vmatprep.subr.bf16.mxu0 %v2601
    %3986 = vmatpush1.bf16.msra.mxu0 %v2600
    %3987 = vmatprep.subr.bf16.mxu0 %v2617
    %3988 = vmatpush1.bf16.msra.mxu0 %v2616
    %3989 = vmatprep.subr.bf16.mxu0 %v2633
    %3990 = vmatpush1.bf16.msra.mxu0 %v2632
    %3991 = vmatprep.subr.bf16.mxu0 %v2649
    %3992 = vmatpush1.bf16.msra.mxu0 %v2648
    %3993 = vmatprep.subr.bf16.mxu0 %v2665
    %3994 = vmatpush1.bf16.msra.mxu0 %v2664
    %3995 = vmatprep.subr.bf16.mxu0 %v2681
    %3996 = vmatpush1.bf16.msra.mxu0 %v2680
    %3997 = vmatprep.subr.bf16.mxu0 %v2697
    %3998 = vmatpush1.bf16.msra.mxu0 %v2696
    %3999 = vmatprep.subr.bf16.mxu0 %v2713
    %4000 = vmatpush1.bf16.msra.mxu0 %v2712
    %4001 = vmatprep.subr.bf16.mxu0 %v2729
    %4002 = vmatpush1.bf16.msra.mxu0 %v2728
    %4003 = vmatprep.subr.bf16.mxu0 %v2745
    %4004 = vmatpush1.bf16.msra.mxu0 %v2744
    %4005 = vmatprep.mubr.bf16.mxu0 %v3521
    %4006 = vmatmul.mubr.bf16.gmra.mrb[0].mxu0 %v3520
    %v4007 = vpop.f32.mrb[0].mxu0
    %v4008 = vadd.f32 %v3967, %v4007
    %v4009 = vpop.f32.mrb[0].mxu0
    %v4010 = vadd.f32 %v3969, %v4009
    %v4011 = vpop.f32.mrb[0].mxu0
    %v4012 = vpop.f32.mrb[0].mxu0
    %4013 = vdwg.mxu0
    %4014 = vmatprep.subr.bf16.mxu0 %v2251
    %4015 = vmatpush1.bf16.msra.mxu0 %v2250
    %4016 = vmatprep.subr.bf16.mxu0 %v2267
    %4017 = vmatpush1.bf16.msra.mxu0 %v2266
    %4018 = vmatprep.subr.bf16.mxu0 %v2283
    %4019 = vmatpush1.bf16.msra.mxu0 %v2282
    %4020 = vmatprep.subr.bf16.mxu0 %v2299
    %4021 = vmatpush1.bf16.msra.mxu0 %v2298
    %4022 = vmatprep.subr.bf16.mxu0 %v2315
    %4023 = vmatpush1.bf16.msra.mxu0 %v2314
    %4024 = vmatprep.subr.bf16.mxu0 %v2331
    %4025 = vmatpush1.bf16.msra.mxu0 %v2330
    %4026 = vmatprep.subr.bf16.mxu0 %v2347
    %4027 = vmatpush1.bf16.msra.mxu0 %v2346
    %4028 = vmatprep.subr.bf16.mxu0 %v2363
    %4029 = vmatpush1.bf16.msra.mxu0 %v2362
    %4030 = vmatprep.subr.bf16.mxu0 %v2379
    %4031 = vmatpush1.bf16.msra.mxu0 %v2378
    %4032 = vmatprep.subr.bf16.mxu0 %v2395
    %4033 = vmatpush1.bf16.msra.mxu0 %v2394
    %4034 = vmatprep.subr.bf16.mxu0 %v2411
    %4035 = vmatpush1.bf16.msra.mxu0 %v2410
    %4036 = vmatprep.subr.bf16.mxu0 %v2427
    %4037 = vmatpush1.bf16.msra.mxu0 %v2426
    %4038 = vmatprep.subr.bf16.mxu0 %v2443
    %4039 = vmatpush1.bf16.msra.mxu0 %v2442
    %4040 = vmatprep.subr.bf16.mxu0 %v2459
    %4041 = vmatpush1.bf16.msra.mxu0 %v2458
    %4042 = vmatprep.subr.bf16.mxu0 %v2475
    %4043 = vmatpush1.bf16.msra.mxu0 %v2474
    %4044 = vmatprep.subr.bf16.mxu0 %v2491
    %4045 = vmatpush1.bf16.msra.mxu0 %v2490
    %4046 = vmatprep.mubr.bf16.mxu0 %v3519
    %4047 = vmatmul.mubr.bf16.gmra.mrb[0].mxu0 %v3518
    %v4048 = vpop.f32.mrb[0].mxu0
    %v4049 = vadd.f32 0.0, %v4048
    %v4050 = vpop.f32.mrb[0].mxu0
    %v4051 = vadd.f32 0.0, %v4050
    %v4052 = vpop.f32.mrb[0].mxu0
    %v4053 = vpop.f32.mrb[0].mxu0
    %4054 = vdwg.mxu0
    %4055 = vmatprep.subr.bf16.mxu0 %v2507
    %4056 = vmatpush1.bf16.msra.mxu0 %v2506
    %4057 = vmatprep.subr.bf16.mxu0 %v2523
    %4058 = vmatpush1.bf16.msra.mxu0 %v2522
    %4059 = vmatprep.subr.bf16.mxu0 %v2539
    %4060 = vmatpush1.bf16.msra.mxu0 %v2538
    %4061 = vmatprep.subr.bf16.mxu0 %v2555
    %4062 = vmatpush1.bf16.msra.mxu0 %v2554
    %4063 = vmatprep.subr.bf16.mxu0 %v2571
    %4064 = vmatpush1.bf16.msra.mxu0 %v2570
    %4065 = vmatprep.subr.bf16.mxu0 %v2587
    %4066 = vmatpush1.bf16.msra.mxu0 %v2586
    %4067 = vmatprep.subr.bf16.mxu0 %v2603
    %4068 = vmatpush1.bf16.msra.mxu0 %v2602
    %4069 = vmatprep.subr.bf16.mxu0 %v2619
    %4070 = vmatpush1.bf16.msra.mxu0 %v2618
    %4071 = vmatprep.subr.bf16.mxu0 %v2635
    %4072 = vmatpush1.bf16.msra.mxu0 %v2634
    %4073 = vmatprep.subr.bf16.mxu0 %v2651
    %4074 = vmatpush1.bf16.msra.mxu0 %v2650
    %4075 = vmatprep.subr.bf16.mxu0 %v2667
    %4076 = vmatpush1.bf16.msra.mxu0 %v2666
    %4077 = vmatprep.subr.bf16.mxu0 %v2683
    %4078 = vmatpush1.bf16.msra.mxu0 %v2682
    %4079 = vmatprep.subr.bf16.mxu0 %v2699
    %4080 = vmatpush1.bf16.msra.mxu0 %v2698
    %4081 = vmatprep.subr.bf16.mxu0 %v2715
    %4082 = vmatpush1.bf16.msra.mxu0 %v2714
    %4083 = vmatprep.subr.bf16.mxu0 %v2731
    %4084 = vmatpush1.bf16.msra.mxu0 %v2730
    %4085 = vmatprep.subr.bf16.mxu0 %v2747
    %4086 = vmatpush1.bf16.msra.mxu0 %v2746
    %4087 = vmatprep.mubr.bf16.mxu0 %v3521
    %4088 = vmatmul.mubr.bf16.gmra.mrb[0].mxu0 %v3520
    %v4089 = vpop.f32.mrb[0].mxu0
    %v4090 = vadd.f32 %v4049, %v4089
    %v4091 = vpop.f32.mrb[0].mxu0
    %v4092 = vadd.f32 %v4051, %v4091
    %v4093 = vpop.f32.mrb[0].mxu0
    %v4094 = vpop.f32.mrb[0].mxu0
    %4095 = vdwg.mxu0
    %4096 = vmatprep.subr.bf16.mxu0 %v2253
    %4097 = vmatpush1.bf16.msra.mxu0 %v2252
    %4098 = vmatprep.subr.bf16.mxu0 %v2269
    %4099 = vmatpush1.bf16.msra.mxu0 %v2268
    %4100 = vmatprep.subr.bf16.mxu0 %v2285
    %4101 = vmatpush1.bf16.msra.mxu0 %v2284
    %4102 = vmatprep.subr.bf16.mxu0 %v2301
    %4103 = vmatpush1.bf16.msra.mxu0 %v2300
    %4104 = vmatprep.subr.bf16.mxu0 %v2317
    %4105 = vmatpush1.bf16.msra.mxu0 %v2316
    %4106 = vmatprep.subr.bf16.mxu0 %v2333
    %4107 = vmatpush1.bf16.msra.mxu0 %v2332
    %4108 = vmatprep.subr.bf16.mxu0 %v2349
    %4109 = vmatpush1.bf16.msra.mxu0 %v2348
    %4110 = vmatprep.subr.bf16.mxu0 %v2365
    %4111 = vmatpush1.bf16.msra.mxu0 %v2364
    %4112 = vmatprep.subr.bf16.mxu0 %v2381
    %4113 = vmatpush1.bf16.msra.mxu0 %v2380
    %4114 = vmatprep.subr.bf16.mxu0 %v2397
    %4115 = vmatpush1.bf16.msra.mxu0 %v2396
    %4116 = vmatprep.subr.bf16.mxu0 %v2413
    %4117 = vmatpush1.bf16.msra.mxu0 %v2412
    %4118 = vmatprep.subr.bf16.mxu0 %v2429
    %4119 = vmatpush1.bf16.msra.mxu0 %v2428
    %4120 = vmatprep.subr.bf16.mxu0 %v2445
    %4121 = vmatpush1.bf16.msra.mxu0 %v2444
    %4122 = vmatprep.subr.bf16.mxu0 %v2461
    %4123 = vmatpush1.bf16.msra.mxu0 %v2460
    %4124 = vmatprep.subr.bf16.mxu0 %v2477
    %4125 = vmatpush1.bf16.msra.mxu0 %v2476
    %4126 = vmatprep.subr.bf16.mxu0 %v2493
    %4127 = vmatpush1.bf16.msra.mxu0 %v2492
    %4128 = vmatprep.mubr.bf16.mxu0 %v3519
    %4129 = vmatmul.mubr.bf16.gmra.mrb[0].mxu0 %v3518
    %v4130 = vpop.f32.mrb[0].mxu0
    %v4131 = vadd.f32 0.0, %v4130
    %v4132 = vpop.f32.mrb[0].mxu0
    %v4133 = vadd.f32 0.0, %v4132
    %v4134 = vpop.f32.mrb[0].mxu0
    %v4135 = vpop.f32.mrb[0].mxu0
    %4136 = vdwg.mxu0
    %4137 = vmatprep.subr.bf16.mxu0 %v2509
    %4138 = vmatpush1.bf16.msra.mxu0 %v2508
    %4139 = vmatprep.subr.bf16.mxu0 %v2525
    %4140 = vmatpush1.bf16.msra.mxu0 %v2524
    %4141 = vmatprep.subr.bf16.mxu0 %v2541
    %4142 = vmatpush1.bf16.msra.mxu0 %v2540
    %4143 = vmatprep.subr.bf16.mxu0 %v2557
    %4144 = vmatpush1.bf16.msra.mxu0 %v2556
    %4145 = vmatprep.subr.bf16.mxu0 %v2573
    %4146 = vmatpush1.bf16.msra.mxu0 %v2572
    %4147 = vmatprep.subr.bf16.mxu0 %v2589
    %4148 = vmatpush1.bf16.msra.mxu0 %v2588
    %4149 = vmatprep.subr.bf16.mxu0 %v2605
    %4150 = vmatpush1.bf16.msra.mxu0 %v2604
    %4151 = vmatprep.subr.bf16.mxu0 %v2621
    %4152 = vmatpush1.bf16.msra.mxu0 %v2620
    %4153 = vmatprep.subr.bf16.mxu0 %v2637
    %4154 = vmatpush1.bf16.msra.mxu0 %v2636
    %4155 = vmatprep.subr.bf16.mxu0 %v2653
    %4156 = vmatpush1.bf16.msra.mxu0 %v2652
    %4157 = vmatprep.subr.bf16.mxu0 %v2669
    %4158 = vmatpush1.bf16.msra.mxu0 %v2668
    %4159 = vmatprep.subr.bf16.mxu0 %v2685
    %4160 = vmatpush1.bf16.msra.mxu0 %v2684
    %4161 = vmatprep.subr.bf16.mxu0 %v2701
    %4162 = vmatpush1.bf16.msra.mxu0 %v2700
    %4163 = vmatprep.subr.bf16.mxu0 %v2717
    %4164 = vmatpush1.bf16.msra.mxu0 %v2716
    %4165 = vmatprep.subr.bf16.mxu0 %v2733
    %4166 = vmatpush1.bf16.msra.mxu0 %v2732
    %4167 = vmatprep.subr.bf16.mxu0 %v2749
    %4168 = vmatpush1.bf16.msra.mxu0 %v2748
    %4169 = vmatprep.mubr.bf16.mxu0 %v3521
    %4170 = vmatmul.mubr.bf16.gmra.mrb[0].mxu0 %v3520
    %v4171 = vpop.f32.mrb[0].mxu0
    %v4172 = vadd.f32 %v4131, %v4171
    %v4173 = vpop.f32.mrb[0].mxu0
    %v4174 = vadd.f32 %v4133, %v4173
    %v4175 = vpop.f32.mrb[0].mxu0
    %v4176 = vpop.f32.mrb[0].mxu0
    %4177 = vdwg.mxu0
    %v4194 = vrot.slane %v3598, 6
    %v4195 = vrot.slane %v3600, 6
    %v4196 = vrot.slane %v3680, 6
    %v4197 = vrot.slane %v3682, 6
    %v4198 = vrot.slane %v3762, 6
    %v4199 = vrot.slane %v3764, 6
    %v4200 = vrot.slane %v3844, 6
    %v4201 = vrot.slane %v3846, 6
    %v4202 = vrot.slane %v3926, 6
    %v4203 = vrot.slane %v3928, 6
    %v4204 = vrot.slane %v4008, 6
    %v4205 = vrot.slane %v4010, 6
    %v4206 = vrot.slane %v4090, 6
    %v4207 = vrot.slane %v4092, 6
    %v4208 = vrot.slane %v4172, 6
    %v4209 = vrot.slane %v4174, 6
    %v4226 = vadd.f32 %v787, %v4194
    %v4227 = vadd.f32 %v789, %v4195
    %v4228 = vadd.f32 %v830, %v4196
    %v4229 = vadd.f32 %v832, %v4197
    %v4230 = vadd.f32 %v873, %v4198
    %v4231 = vadd.f32 %v875, %v4199
    %v4232 = vadd.f32 %v916, %v4200
    %v4233 = vadd.f32 %v918, %v4201
    %v4234 = vadd.f32 %v959, %v4202
    %v4235 = vadd.f32 %v961, %v4203
    %v4236 = vadd.f32 %v1002, %v4204
    %v4237 = vadd.f32 %v1004, %v4205
    %v4238 = vadd.f32 %v1045, %v4206
    %v4239 = vadd.f32 %v1047, %v4207
    %v4240 = vadd.f32 %v1088, %v4208
    %v4241 = vadd.f32 %v1090, %v4209
    %v4242 = vxor.u32 %v4226, 2147483648
    %v4243 = vxor.u32 %v4227, 2147483648
    %v4244 = vxor.u32 %v4228, 2147483648
    %v4245 = vxor.u32 %v4229, 2147483648
    %v4246 = vmul.f32 %v4242, 1.442695
    %v4247 = vpow.pop %v4246
    %v4248 = vmul.f32 %v4243, 1.442695
    %v4249 = vpow.pop %v4248
    %v4250 = vmul.f32 %v4244, 1.442695
    %v4251 = vpow.pop %v4250
    %v4252 = vmul.f32 %v4245, 1.442695
    %v4253 = vpow.pop %v4252
    %v4254 = vadd.f32 %v4247, 1.0
    %v4255 = vadd.f32 %v4249, 1.0
    %v4256 = vadd.f32 %v4251, 1.0
    %v4257 = vadd.f32 %v4253, 1.0
    %v4258 = vrcp.pop %v4254
    %v4259 = vmul.f32 1.0, %v4258
    %v4260 = vrcp.pop %v4255
    %v4261 = vmul.f32 1.0, %v4260
    %v4262 = vrcp.pop %v4256
    %v4263 = vmul.f32 1.0, %v4262
    %v4264 = vrcp.pop %v4257
    %v4265 = vmul.f32 1.0, %v4264
    %v4266 = vxor.u32 %v4230, 2147483648
    %v4267 = vxor.u32 %v4231, 2147483648
    %v4268 = vxor.u32 %v4232, 2147483648
    %v4269 = vxor.u32 %v4233, 2147483648
    %v4270 = vmul.f32 %v4266, 1.442695
    %v4271 = vpow.pop %v4270
    %v4272 = vmul.f32 %v4267, 1.442695
    %v4273 = vpow.pop %v4272
    %v4274 = vmul.f32 %v4268, 1.442695
    %v4275 = vpow.pop %v4274
    %v4276 = vmul.f32 %v4269, 1.442695
    %v4277 = vpow.pop %v4276
    %v4278 = vadd.f32 %v4271, 1.0
    %v4279 = vadd.f32 %v4273, 1.0
    %v4280 = vadd.f32 %v4275, 1.0
    %v4281 = vadd.f32 %v4277, 1.0
    %v4282 = vrcp.pop %v4278
    %v4283 = vmul.f32 1.0, %v4282
    %v4284 = vrcp.pop %v4279
    %v4285 = vmul.f32 1.0, %v4284
    %v4286 = vrcp.pop %v4280
    %v4287 = vmul.f32 1.0, %v4286
    %v4288 = vrcp.pop %v4281
    %v4289 = vmul.f32 1.0, %v4288
    %v4290 = vtanh.pop %v4234
    %v4291 = vtanh.pop %v4235
    %v4292 = vtanh.pop %v4236
    %v4293 = vtanh.pop %v4237
    %v4294 = vxor.u32 %v4238, 2147483648
    %v4295 = vxor.u32 %v4239, 2147483648
    %v4296 = vxor.u32 %v4240, 2147483648
    %v4297 = vxor.u32 %v4241, 2147483648
    %v4298 = vmul.f32 %v4294, 1.442695
    %v4299 = vpow.pop %v4298
    %v4300 = vmul.f32 %v4295, 1.442695
    %v4301 = vpow.pop %v4300
    %v4302 = vmul.f32 %v4296, 1.442695
    %v4303 = vpow.pop %v4302
    %v4304 = vmul.f32 %v4297, 1.442695
    %v4305 = vpow.pop %v4304
    %v4306 = vadd.f32 %v4299, 1.0
    %v4307 = vadd.f32 %v4301, 1.0
    %v4308 = vadd.f32 %v4303, 1.0
    %v4309 = vadd.f32 %v4305, 1.0
    %v4310 = vrcp.pop %v4306
    %v4311 = vmul.f32 1.0, %v4310
    %v4312 = vrcp.pop %v4307
    %v4313 = vmul.f32 1.0, %v4312
    %v4314 = vrcp.pop %v4308
    %v4315 = vmul.f32 1.0, %v4314
    %v4316 = vrcp.pop %v4309
    %v4317 = vmul.f32 1.0, %v4316
    %v4322 = vrot.slane %v3506, 6
    %v4323 = vrot.slane %v3507, 6
    %v4324 = vrot.slane %v3508, 6
    %v4325 = vrot.slane %v3509, 6
    %v4330 = vmul.f32 %v4283, %v4322
    %v4331 = vmul.f32 %v4285, %v4323
    %v4332 = vmul.f32 %v4287, %v4324
    %v4333 = vmul.f32 %v4289, %v4325
    %v4334 = vmul.f32 %v4259, %v4290
    %v4335 = vmul.f32 %v4261, %v4291
    %v4336 = vmul.f32 %v4263, %v4292
    %v4337 = vmul.f32 %v4265, %v4293
    %v4338 = vadd.f32 %v4330, %v4334
    %v4339 = vadd.f32 %v4331, %v4335
    %v4340 = vadd.f32 %v4332, %v4336
    %v4341 = vadd.f32 %v4333, %v4337
    %v4342 = vtanh.pop %v4338
    %v4343 = vtanh.pop %v4339
    %v4344 = vtanh.pop %v4340
    %v4345 = vtanh.pop %v4341
    %v4346 = vmul.f32 %v4311, %v4342
    %v4347 = vmul.f32 %v4313, %v4343
    %v4348 = vmul.f32 %v4315, %v4344
    %v4349 = vmul.f32 %v4317, %v4345
    %v4350 = vpack.c.bf16 %v4346, %v4346
    %v4351 = vpack.c.bf16 %v4347, %v4347
    %v4352 = vpack.c.bf16 %v4348, %v4348
    %v4353 = vpack.c.bf16 %v4349, %v4349
    %v4358 = vrot.slane %v4350, 1
    %v4359 = vrot.slane %v4351, 1
    %v4360 = vrot.slane %v4352, 1
    %v4361 = vrot.slane %v4353, 1
    %4366 = vmatprep.subr.bf16.mxu0 %v2239
    %4367 = vmatpush1.bf16.msra.mxu0 %v2238
    %4368 = vmatprep.subr.bf16.mxu0 %v2255
    %4369 = vmatpush1.bf16.msra.mxu0 %v2254
    %4370 = vmatprep.subr.bf16.mxu0 %v2271
    %4371 = vmatpush1.bf16.msra.mxu0 %v2270
    %4372 = vmatprep.subr.bf16.mxu0 %v2287
    %4373 = vmatpush1.bf16.msra.mxu0 %v2286
    %4374 = vmatprep.subr.bf16.mxu0 %v2303
    %4375 = vmatpush1.bf16.msra.mxu0 %v2302
    %4376 = vmatprep.subr.bf16.mxu0 %v2319
    %4377 = vmatpush1.bf16.msra.mxu0 %v2318
    %4378 = vmatprep.subr.bf16.mxu0 %v2335
    %4379 = vmatpush1.bf16.msra.mxu0 %v2334
    %4380 = vmatprep.subr.bf16.mxu0 %v2351
    %4381 = vmatpush1.bf16.msra.mxu0 %v2350
    %4382 = vmatprep.subr.bf16.mxu0 %v2367
    %4383 = vmatpush1.bf16.msra.mxu0 %v2366
    %4384 = vmatprep.subr.bf16.mxu0 %v2383
    %4385 = vmatpush1.bf16.msra.mxu0 %v2382
    %4386 = vmatprep.subr.bf16.mxu0 %v2399
    %4387 = vmatpush1.bf16.msra.mxu0 %v2398
    %4388 = vmatprep.subr.bf16.mxu0 %v2415
    %4389 = vmatpush1.bf16.msra.mxu0 %v2414
    %4390 = vmatprep.subr.bf16.mxu0 %v2431
    %4391 = vmatpush1.bf16.msra.mxu0 %v2430
    %4392 = vmatprep.subr.bf16.mxu0 %v2447
    %4393 = vmatpush1.bf16.msra.mxu0 %v2446
    %4394 = vmatprep.subr.bf16.mxu0 %v2463
    %4395 = vmatpush1.bf16.msra.mxu0 %v2462
    %4396 = vmatprep.subr.bf16.mxu0 %v2479
    %4397 = vmatpush1.bf16.msra.mxu0 %v2478
    %4398 = vmatprep.mubr.bf16.mxu0 %v4359
    %4399 = vmatmul.mubr.bf16.gmra.mrb[0].mxu0 %v4358
    %v4400 = vpop.f32.mrb[0].mxu0
    %v4401 = vadd.f32 0.0, %v4400
    %v4402 = vpop.f32.mrb[0].mxu0
    %v4403 = vadd.f32 0.0, %v4402
    %v4404 = vpop.f32.mrb[0].mxu0
    %v4405 = vpop.f32.mrb[0].mxu0
    %4406 = vdwg.mxu0
    %4407 = vmatprep.subr.bf16.mxu0 %v2495
    %4408 = vmatpush1.bf16.msra.mxu0 %v2494
    %4409 = vmatprep.subr.bf16.mxu0 %v2511
    %4410 = vmatpush1.bf16.msra.mxu0 %v2510
    %4411 = vmatprep.subr.bf16.mxu0 %v2527
    %4412 = vmatpush1.bf16.msra.mxu0 %v2526
    %4413 = vmatprep.subr.bf16.mxu0 %v2543
    %4414 = vmatpush1.bf16.msra.mxu0 %v2542
    %4415 = vmatprep.subr.bf16.mxu0 %v2559
    %4416 = vmatpush1.bf16.msra.mxu0 %v2558
    %4417 = vmatprep.subr.bf16.mxu0 %v2575
    %4418 = vmatpush1.bf16.msra.mxu0 %v2574
    %4419 = vmatprep.subr.bf16.mxu0 %v2591
    %4420 = vmatpush1.bf16.msra.mxu0 %v2590
    %4421 = vmatprep.subr.bf16.mxu0 %v2607
    %4422 = vmatpush1.bf16.msra.mxu0 %v2606
    %4423 = vmatprep.subr.bf16.mxu0 %v2623
    %4424 = vmatpush1.bf16.msra.mxu0 %v2622
    %4425 = vmatprep.subr.bf16.mxu0 %v2639
    %4426 = vmatpush1.bf16.msra.mxu0 %v2638
    %4427 = vmatprep.subr.bf16.mxu0 %v2655
    %4428 = vmatpush1.bf16.msra.mxu0 %v2654
    %4429 = vmatprep.subr.bf16.mxu0 %v2671
    %4430 = vmatpush1.bf16.msra.mxu0 %v2670
    %4431 = vmatprep.subr.bf16.mxu0 %v2687
    %4432 = vmatpush1.bf16.msra.mxu0 %v2686
    %4433 = vmatprep.subr.bf16.mxu0 %v2703
    %4434 = vmatpush1.bf16.msra.mxu0 %v2702
    %4435 = vmatprep.subr.bf16.mxu0 %v2719
    %4436 = vmatpush1.bf16.msra.mxu0 %v2718
    %4437 = vmatprep.subr.bf16.mxu0 %v2735
    %4438 = vmatpush1.bf16.msra.mxu0 %v2734
    %4439 = vmatprep.mubr.bf16.mxu0 %v4361
    %4440 = vmatmul.mubr.bf16.gmra.mrb[0].mxu0 %v4360
    %v4441 = vpop.f32.mrb[0].mxu0
    %v4442 = vadd.f32 %v4401, %v4441
    %v4443 = vpop.f32.mrb[0].mxu0
    %v4444 = vadd.f32 %v4403, %v4443
    %v4445 = vpop.f32.mrb[0].mxu0
    %v4446 = vpop.f32.mrb[0].mxu0
    %4447 = vdwg.mxu0
    %4448 = vmatprep.subr.bf16.mxu0 %v2241
    %4449 = vmatpush1.bf16.msra.mxu0 %v2240
    %4450 = vmatprep.subr.bf16.mxu0 %v2257
    %4451 = vmatpush1.bf16.msra.mxu0 %v2256
    %4452 = vmatprep.subr.bf16.mxu0 %v2273
    %4453 = vmatpush1.bf16.msra.mxu0 %v2272
    %4454 = vmatprep.subr.bf16.mxu0 %v2289
    %4455 = vmatpush1.bf16.msra.mxu0 %v2288
    %4456 = vmatprep.subr.bf16.mxu0 %v2305
    %4457 = vmatpush1.bf16.msra.mxu0 %v2304
    %4458 = vmatprep.subr.bf16.mxu0 %v2321
    %4459 = vmatpush1.bf16.msra.mxu0 %v2320
    %4460 = vmatprep.subr.bf16.mxu0 %v2337
    %4461 = vmatpush1.bf16.msra.mxu0 %v2336
    %4462 = vmatprep.subr.bf16.mxu0 %v2353
    %4463 = vmatpush1.bf16.msra.mxu0 %v2352
    %4464 = vmatprep.subr.bf16.mxu0 %v2369
    %4465 = vmatpush1.bf16.msra.mxu0 %v2368
    %4466 = vmatprep.subr.bf16.mxu0 %v2385
    %4467 = vmatpush1.bf16.msra.mxu0 %v2384
    %4468 = vmatprep.subr.bf16.mxu0 %v2401
    %4469 = vmatpush1.bf16.msra.mxu0 %v2400
    %4470 = vmatprep.subr.bf16.mxu0 %v2417
    %4471 = vmatpush1.bf16.msra.mxu0 %v2416
    %4472 = vmatprep.subr.bf16.mxu0 %v2433
    %4473 = vmatpush1.bf16.msra.mxu0 %v2432
    %4474 = vmatprep.subr.bf16.mxu0 %v2449
    %4475 = vmatpush1.bf16.msra.mxu0 %v2448
    %4476 = vmatprep.subr.bf16.mxu0 %v2465
    %4477 = vmatpush1.bf16.msra.mxu0 %v2464
    %4478 = vmatprep.subr.bf16.mxu0 %v2481
    %4479 = vmatpush1.bf16.msra.mxu0 %v2480
    %4480 = vmatprep.mubr.bf16.mxu0 %v4359
    %4481 = vmatmul.mubr.bf16.gmra.mrb[0].mxu0 %v4358
    %v4482 = vpop.f32.mrb[0].mxu0
    %v4483 = vadd.f32 0.0, %v4482
    %v4484 = vpop.f32.mrb[0].mxu0
    %v4485 = vadd.f32 0.0, %v4484
    %v4486 = vpop.f32.mrb[0].mxu0
    %v4487 = vpop.f32.mrb[0].mxu0
    %4488 = vdwg.mxu0
    %4489 = vmatprep.subr.bf16.mxu0 %v2497
    %4490 = vmatpush1.bf16.msra.mxu0 %v2496
    %4491 = vmatprep.subr.bf16.mxu0 %v2513
    %4492 = vmatpush1.bf16.msra.mxu0 %v2512
    %4493 = vmatprep.subr.bf16.mxu0 %v2529
    %4494 = vmatpush1.bf16.msra.mxu0 %v2528
    %4495 = vmatprep.subr.bf16.mxu0 %v2545
    %4496 = vmatpush1.bf16.msra.mxu0 %v2544
    %4497 = vmatprep.subr.bf16.mxu0 %v2561
    %4498 = vmatpush1.bf16.msra.mxu0 %v2560
    %4499 = vmatprep.subr.bf16.mxu0 %v2577
    %4500 = vmatpush1.bf16.msra.mxu0 %v2576
    %4501 = vmatprep.subr.bf16.mxu0 %v2593
    %4502 = vmatpush1.bf16.msra.mxu0 %v2592
    %4503 = vmatprep.subr.bf16.mxu0 %v2609
    %4504 = vmatpush1.bf16.msra.mxu0 %v2608
    %4505 = vmatprep.subr.bf16.mxu0 %v2625
    %4506 = vmatpush1.bf16.msra.mxu0 %v2624
    %4507 = vmatprep.subr.bf16.mxu0 %v2641
    %4508 = vmatpush1.bf16.msra.mxu0 %v2640
    %4509 = vmatprep.subr.bf16.mxu0 %v2657
    %4510 = vmatpush1.bf16.msra.mxu0 %v2656
    %4511 = vmatprep.subr.bf16.mxu0 %v2673
    %4512 = vmatpush1.bf16.msra.mxu0 %v2672
    %4513 = vmatprep.subr.bf16.mxu0 %v2689
    %4514 = vmatpush1.bf16.msra.mxu0 %v2688
    %4515 = vmatprep.subr.bf16.mxu0 %v2705
    %4516 = vmatpush1.bf16.msra.mxu0 %v2704
    %4517 = vmatprep.subr.bf16.mxu0 %v2721
    %4518 = vmatpush1.bf16.msra.mxu0 %v2720
    %4519 = vmatprep.subr.bf16.mxu0 %v2737
    %4520 = vmatpush1.bf16.msra.mxu0 %v2736
    %4521 = vmatprep.mubr.bf16.mxu0 %v4361
    %4522 = vmatmul.mubr.bf16.gmra.mrb[0].mxu0 %v4360
    %v4523 = vpop.f32.mrb[0].mxu0
    %v4524 = vadd.f32 %v4483, %v4523
    %v4525 = vpop.f32.mrb[0].mxu0
    %v4526 = vadd.f32 %v4485, %v4525
    %v4527 = vpop.f32.mrb[0].mxu0
    %v4528 = vpop.f32.mrb[0].mxu0
    %4529 = vdwg.mxu0
    %4530 = vmatprep.subr.bf16.mxu0 %v2243
    %4531 = vmatpush1.bf16.msra.mxu0 %v2242
    %4532 = vmatprep.subr.bf16.mxu0 %v2259
    %4533 = vmatpush1.bf16.msra.mxu0 %v2258
    %4534 = vmatprep.subr.bf16.mxu0 %v2275
    %4535 = vmatpush1.bf16.msra.mxu0 %v2274
    %4536 = vmatprep.subr.bf16.mxu0 %v2291
    %4537 = vmatpush1.bf16.msra.mxu0 %v2290
    %4538 = vmatprep.subr.bf16.mxu0 %v2307
    %4539 = vmatpush1.bf16.msra.mxu0 %v2306
    %4540 = vmatprep.subr.bf16.mxu0 %v2323
    %4541 = vmatpush1.bf16.msra.mxu0 %v2322
    %4542 = vmatprep.subr.bf16.mxu0 %v2339
    %4543 = vmatpush1.bf16.msra.mxu0 %v2338
    %4544 = vmatprep.subr.bf16.mxu0 %v2355
    %4545 = vmatpush1.bf16.msra.mxu0 %v2354
    %4546 = vmatprep.subr.bf16.mxu0 %v2371
    %4547 = vmatpush1.bf16.msra.mxu0 %v2370
    %4548 = vmatprep.subr.bf16.mxu0 %v2387
    %4549 = vmatpush1.bf16.msra.mxu0 %v2386
    %4550 = vmatprep.subr.bf16.mxu0 %v2403
    %4551 = vmatpush1.bf16.msra.mxu0 %v2402
    %4552 = vmatprep.subr.bf16.mxu0 %v2419
    %4553 = vmatpush1.bf16.msra.mxu0 %v2418
    %4554 = vmatprep.subr.bf16.mxu0 %v2435
    %4555 = vmatpush1.bf16.msra.mxu0 %v2434
    %4556 = vmatprep.subr.bf16.mxu0 %v2451
    %4557 = vmatpush1.bf16.msra.mxu0 %v2450
    %4558 = vmatprep.subr.bf16.mxu0 %v2467
    %4559 = vmatpush1.bf16.msra.mxu0 %v2466
    %4560 = vmatprep.subr.bf16.mxu0 %v2483
    %4561 = vmatpush1.bf16.msra.mxu0 %v2482
    %4562 = vmatprep.mubr.bf16.mxu0 %v4359
    %4563 = vmatmul.mubr.bf16.gmra.mrb[0].mxu0 %v4358
    %v4564 = vpop.f32.mrb[0].mxu0
    %v4565 = vadd.f32 0.0, %v4564
    %v4566 = vpop.f32.mrb[0].mxu0
    %v4567 = vadd.f32 0.0, %v4566
    %v4568 = vpop.f32.mrb[0].mxu0
    %v4569 = vpop.f32.mrb[0].mxu0
    %4570 = vdwg.mxu0
    %4571 = vmatprep.subr.bf16.mxu0 %v2499
    %4572 = vmatpush1.bf16.msra.mxu0 %v2498
    %4573 = vmatprep.subr.bf16.mxu0 %v2515
    %4574 = vmatpush1.bf16.msra.mxu0 %v2514
    %4575 = vmatprep.subr.bf16.mxu0 %v2531
    %4576 = vmatpush1.bf16.msra.mxu0 %v2530
    %4577 = vmatprep.subr.bf16.mxu0 %v2547
    %4578 = vmatpush1.bf16.msra.mxu0 %v2546
    %4579 = vmatprep.subr.bf16.mxu0 %v2563
    %4580 = vmatpush1.bf16.msra.mxu0 %v2562
    %4581 = vmatprep.subr.bf16.mxu0 %v2579
    %4582 = vmatpush1.bf16.msra.mxu0 %v2578
    %4583 = vmatprep.subr.bf16.mxu0 %v2595
    %4584 = vmatpush1.bf16.msra.mxu0 %v2594
    %4585 = vmatprep.subr.bf16.mxu0 %v2611
    %4586 = vmatpush1.bf16.msra.mxu0 %v2610
    %4587 = vmatprep.subr.bf16.mxu0 %v2627
    %4588 = vmatpush1.bf16.msra.mxu0 %v2626
    %4589 = vmatprep.subr.bf16.mxu0 %v2643
    %4590 = vmatpush1.bf16.msra.mxu0 %v2642
    %4591 = vmatprep.subr.bf16.mxu0 %v2659
    %4592 = vmatpush1.bf16.msra.mxu0 %v2658
    %4593 = vmatprep.subr.bf16.mxu0 %v2675
    %4594 = vmatpush1.bf16.msra.mxu0 %v2674
    %4595 = vmatprep.subr.bf16.mxu0 %v2691
    %4596 = vmatpush1.bf16.msra.mxu0 %v2690
    %4597 = vmatprep.subr.bf16.mxu0 %v2707
    %4598 = vmatpush1.bf16.msra.mxu0 %v2706
    %4599 = vmatprep.subr.bf16.mxu0 %v2723
    %4600 = vmatpush1.bf16.msra.mxu0 %v2722
    %4601 = vmatprep.subr.bf16.mxu0 %v2739
    %4602 = vmatpush1.bf16.msra.mxu0 %v2738
    %4603 = vmatprep.mubr.bf16.mxu0 %v4361
    %4604 = vmatmul.mubr.bf16.gmra.mrb[0].mxu0 %v4360
    %v4605 = vpop.f32.mrb[0].mxu0
    %v4606 = vadd.f32 %v4565, %v4605
    %v4607 = vpop.f32.mrb[0].mxu0
    %v4608 = vadd.f32 %v4567, %v4607
    %v4609 = vpop.f32.mrb[0].mxu0
    %v4610 = vpop.f32.mrb[0].mxu0
    %4611 = vdwg.mxu0
    %4612 = vmatprep.subr.bf16.mxu0 %v2245
    %4613 = vmatpush1.bf16.msra.mxu0 %v2244
    %4614 = vmatprep.subr.bf16.mxu0 %v2261
    %4615 = vmatpush1.bf16.msra.mxu0 %v2260
    %4616 = vmatprep.subr.bf16.mxu0 %v2277
    %4617 = vmatpush1.bf16.msra.mxu0 %v2276
    %4618 = vmatprep.subr.bf16.mxu0 %v2293
    %4619 = vmatpush1.bf16.msra.mxu0 %v2292
    %4620 = vmatprep.subr.bf16.mxu0 %v2309
    %4621 = vmatpush1.bf16.msra.mxu0 %v2308
    %4622 = vmatprep.subr.bf16.mxu0 %v2325
    %4623 = vmatpush1.bf16.msra.mxu0 %v2324
    %4624 = vmatprep.subr.bf16.mxu0 %v2341
    %4625 = vmatpush1.bf16.msra.mxu0 %v2340
    %4626 = vmatprep.subr.bf16.mxu0 %v2357
    %4627 = vmatpush1.bf16.msra.mxu0 %v2356
    %4628 = vmatprep.subr.bf16.mxu0 %v2373
    %4629 = vmatpush1.bf16.msra.mxu0 %v2372
    %4630 = vmatprep.subr.bf16.mxu0 %v2389
    %4631 = vmatpush1.bf16.msra.mxu0 %v2388
    %4632 = vmatprep.subr.bf16.mxu0 %v2405
    %4633 = vmatpush1.bf16.msra.mxu0 %v2404
    %4634 = vmatprep.subr.bf16.mxu0 %v2421
    %4635 = vmatpush1.bf16.msra.mxu0 %v2420
    %4636 = vmatprep.subr.bf16.mxu0 %v2437
    %4637 = vmatpush1.bf16.msra.mxu0 %v2436
    %4638 = vmatprep.subr.bf16.mxu0 %v2453
    %4639 = vmatpush1.bf16.msra.mxu0 %v2452
    %4640 = vmatprep.subr.bf16.mxu0 %v2469
    %4641 = vmatpush1.bf16.msra.mxu0 %v2468
    %4642 = vmatprep.subr.bf16.mxu0 %v2485
    %4643 = vmatpush1.bf16.msra.mxu0 %v2484
    %4644 = vmatprep.mubr.bf16.mxu0 %v4359
    %4645 = vmatmul.mubr.bf16.gmra.mrb[0].mxu0 %v4358
    %v4646 = vpop.f32.mrb[0].mxu0
    %v4647 = vadd.f32 0.0, %v4646
    %v4648 = vpop.f32.mrb[0].mxu0
    %v4649 = vadd.f32 0.0, %v4648
    %v4650 = vpop.f32.mrb[0].mxu0
    %v4651 = vpop.f32.mrb[0].mxu0
    %4652 = vdwg.mxu0
    %4653 = vmatprep.subr.bf16.mxu0 %v2501
    %4654 = vmatpush1.bf16.msra.mxu0 %v2500
    %4655 = vmatprep.subr.bf16.mxu0 %v2517
    %4656 = vmatpush1.bf16.msra.mxu0 %v2516
    %4657 = vmatprep.subr.bf16.mxu0 %v2533
    %4658 = vmatpush1.bf16.msra.mxu0 %v2532
    %4659 = vmatprep.subr.bf16.mxu0 %v2549
    %4660 = vmatpush1.bf16.msra.mxu0 %v2548
    %4661 = vmatprep.subr.bf16.mxu0 %v2565
    %4662 = vmatpush1.bf16.msra.mxu0 %v2564
    %4663 = vmatprep.subr.bf16.mxu0 %v2581
    %4664 = vmatpush1.bf16.msra.mxu0 %v2580
    %4665 = vmatprep.subr.bf16.mxu0 %v2597
    %4666 = vmatpush1.bf16.msra.mxu0 %v2596
    %4667 = vmatprep.subr.bf16.mxu0 %v2613
    %4668 = vmatpush1.bf16.msra.mxu0 %v2612
    %4669 = vmatprep.subr.bf16.mxu0 %v2629
    %4670 = vmatpush1.bf16.msra.mxu0 %v2628
    %4671 = vmatprep.subr.bf16.mxu0 %v2645
    %4672 = vmatpush1.bf16.msra.mxu0 %v2644
    %4673 = vmatprep.subr.bf16.mxu0 %v2661
    %4674 = vmatpush1.bf16.msra.mxu0 %v2660
    %4675 = vmatprep.subr.bf16.mxu0 %v2677
    %4676 = vmatpush1.bf16.msra.mxu0 %v2676
    %4677 = vmatprep.subr.bf16.mxu0 %v2693
    %4678 = vmatpush1.bf16.msra.mxu0 %v2692
    %4679 = vmatprep.subr.bf16.mxu0 %v2709
    %4680 = vmatpush1.bf16.msra.mxu0 %v2708
    %4681 = vmatprep.subr.bf16.mxu0 %v2725
    %4682 = vmatpush1.bf16.msra.mxu0 %v2724
    %4683 = vmatprep.subr.bf16.mxu0 %v2741
    %4684 = vmatpush1.bf16.msra.mxu0 %v2740
    %4685 = vmatprep.mubr.bf16.mxu0 %v4361
    %4686 = vmatmul.mubr.bf16.gmra.mrb[0].mxu0 %v4360
    %v4687 = vpop.f32.mrb[0].mxu0
    %v4688 = vadd.f32 %v4647, %v4687
    %v4689 = vpop.f32.mrb[0].mxu0
    %v4690 = vadd.f32 %v4649, %v4689
    %v4691 = vpop.f32.mrb[0].mxu0
    %v4692 = vpop.f32.mrb[0].mxu0
    %4693 = vdwg.mxu0
    %4694 = vmatprep.subr.bf16.mxu0 %v2247
    %4695 = vmatpush1.bf16.msra.mxu0 %v2246
    %4696 = vmatprep.subr.bf16.mxu0 %v2263
    %4697 = vmatpush1.bf16.msra.mxu0 %v2262
    %4698 = vmatprep.subr.bf16.mxu0 %v2279
    %4699 = vmatpush1.bf16.msra.mxu0 %v2278
    %4700 = vmatprep.subr.bf16.mxu0 %v2295
    %4701 = vmatpush1.bf16.msra.mxu0 %v2294
    %4702 = vmatprep.subr.bf16.mxu0 %v2311
    %4703 = vmatpush1.bf16.msra.mxu0 %v2310
    %4704 = vmatprep.subr.bf16.mxu0 %v2327
    %4705 = vmatpush1.bf16.msra.mxu0 %v2326
    %4706 = vmatprep.subr.bf16.mxu0 %v2343
    %4707 = vmatpush1.bf16.msra.mxu0 %v2342
    %4708 = vmatprep.subr.bf16.mxu0 %v2359
    %4709 = vmatpush1.bf16.msra.mxu0 %v2358
    %4710 = vmatprep.subr.bf16.mxu0 %v2375
    %4711 = vmatpush1.bf16.msra.mxu0 %v2374
    %4712 = vmatprep.subr.bf16.mxu0 %v2391
    %4713 = vmatpush1.bf16.msra.mxu0 %v2390
    %4714 = vmatprep.subr.bf16.mxu0 %v2407
    %4715 = vmatpush1.bf16.msra.mxu0 %v2406
    %4716 = vmatprep.subr.bf16.mxu0 %v2423
    %4717 = vmatpush1.bf16.msra.mxu0 %v2422
    %4718 = vmatprep.subr.bf16.mxu0 %v2439
    %4719 = vmatpush1.bf16.msra.mxu0 %v2438
    %4720 = vmatprep.subr.bf16.mxu0 %v2455
    %4721 = vmatpush1.bf16.msra.mxu0 %v2454
    %4722 = vmatprep.subr.bf16.mxu0 %v2471
    %4723 = vmatpush1.bf16.msra.mxu0 %v2470
    %4724 = vmatprep.subr.bf16.mxu0 %v2487
    %4725 = vmatpush1.bf16.msra.mxu0 %v2486
    %4726 = vmatprep.mubr.bf16.mxu0 %v4359
    %4727 = vmatmul.mubr.bf16.gmra.mrb[0].mxu0 %v4358
    %v4728 = vpop.f32.mrb[0].mxu0
    %v4729 = vadd.f32 0.0, %v4728
    %v4730 = vpop.f32.mrb[0].mxu0
    %v4731 = vadd.f32 0.0, %v4730
    %v4732 = vpop.f32.mrb[0].mxu0
    %v4733 = vpop.f32.mrb[0].mxu0
    %4734 = vdwg.mxu0
    %4735 = vmatprep.subr.bf16.mxu0 %v2503
    %4736 = vmatpush1.bf16.msra.mxu0 %v2502
    %4737 = vmatprep.subr.bf16.mxu0 %v2519
    %4738 = vmatpush1.bf16.msra.mxu0 %v2518
    %4739 = vmatprep.subr.bf16.mxu0 %v2535
    %4740 = vmatpush1.bf16.msra.mxu0 %v2534
    %4741 = vmatprep.subr.bf16.mxu0 %v2551
    %4742 = vmatpush1.bf16.msra.mxu0 %v2550
    %4743 = vmatprep.subr.bf16.mxu0 %v2567
    %4744 = vmatpush1.bf16.msra.mxu0 %v2566
    %4745 = vmatprep.subr.bf16.mxu0 %v2583
    %4746 = vmatpush1.bf16.msra.mxu0 %v2582
    %4747 = vmatprep.subr.bf16.mxu0 %v2599
    %4748 = vmatpush1.bf16.msra.mxu0 %v2598
    %4749 = vmatprep.subr.bf16.mxu0 %v2615
    %4750 = vmatpush1.bf16.msra.mxu0 %v2614
    %4751 = vmatprep.subr.bf16.mxu0 %v2631
    %4752 = vmatpush1.bf16.msra.mxu0 %v2630
    %4753 = vmatprep.subr.bf16.mxu0 %v2647
    %4754 = vmatpush1.bf16.msra.mxu0 %v2646
    %4755 = vmatprep.subr.bf16.mxu0 %v2663
    %4756 = vmatpush1.bf16.msra.mxu0 %v2662
    %4757 = vmatprep.subr.bf16.mxu0 %v2679
    %4758 = vmatpush1.bf16.msra.mxu0 %v2678
    %4759 = vmatprep.subr.bf16.mxu0 %v2695
    %4760 = vmatpush1.bf16.msra.mxu0 %v2694
    %4761 = vmatprep.subr.bf16.mxu0 %v2711
    %4762 = vmatpush1.bf16.msra.mxu0 %v2710
    %4763 = vmatprep.subr.bf16.mxu0 %v2727
    %4764 = vmatpush1.bf16.msra.mxu0 %v2726
    %4765 = vmatprep.subr.bf16.mxu0 %v2743
    %4766 = vmatpush1.bf16.msra.mxu0 %v2742
    %4767 = vmatprep.mubr.bf16.mxu0 %v4361
    %4768 = vmatmul.mubr.bf16.gmra.mrb[0].mxu0 %v4360
    %v4769 = vpop.f32.mrb[0].mxu0
    %v4770 = vadd.f32 %v4729, %v4769
    %v4771 = vpop.f32.mrb[0].mxu0
    %v4772 = vadd.f32 %v4731, %v4771
    %v4773 = vpop.f32.mrb[0].mxu0
    %v4774 = vpop.f32.mrb[0].mxu0
    %4775 = vdwg.mxu0
    %4776 = vmatprep.subr.bf16.mxu0 %v2249
    %4777 = vmatpush1.bf16.msra.mxu0 %v2248
    %4778 = vmatprep.subr.bf16.mxu0 %v2265
    %4779 = vmatpush1.bf16.msra.mxu0 %v2264
    %4780 = vmatprep.subr.bf16.mxu0 %v2281
    %4781 = vmatpush1.bf16.msra.mxu0 %v2280
    %4782 = vmatprep.subr.bf16.mxu0 %v2297
    %4783 = vmatpush1.bf16.msra.mxu0 %v2296
    %4784 = vmatprep.subr.bf16.mxu0 %v2313
    %4785 = vmatpush1.bf16.msra.mxu0 %v2312
    %4786 = vmatprep.subr.bf16.mxu0 %v2329
    %4787 = vmatpush1.bf16.msra.mxu0 %v2328
    %4788 = vmatprep.subr.bf16.mxu0 %v2345
    %4789 = vmatpush1.bf16.msra.mxu0 %v2344
    %4790 = vmatprep.subr.bf16.mxu0 %v2361
    %4791 = vmatpush1.bf16.msra.mxu0 %v2360
    %4792 = vmatprep.subr.bf16.mxu0 %v2377
    %4793 = vmatpush1.bf16.msra.mxu0 %v2376
    %4794 = vmatprep.subr.bf16.mxu0 %v2393
    %4795 = vmatpush1.bf16.msra.mxu0 %v2392
    %4796 = vmatprep.subr.bf16.mxu0 %v2409
    %4797 = vmatpush1.bf16.msra.mxu0 %v2408
    %4798 = vmatprep.subr.bf16.mxu0 %v2425
    %4799 = vmatpush1.bf16.msra.mxu0 %v2424
    %4800 = vmatprep.subr.bf16.mxu0 %v2441
    %4801 = vmatpush1.bf16.msra.mxu0 %v2440
    %4802 = vmatprep.subr.bf16.mxu0 %v2457
    %4803 = vmatpush1.bf16.msra.mxu0 %v2456
    %4804 = vmatprep.subr.bf16.mxu0 %v2473
    %4805 = vmatpush1.bf16.msra.mxu0 %v2472
    %4806 = vmatprep.subr.bf16.mxu0 %v2489
    %4807 = vmatpush1.bf16.msra.mxu0 %v2488
    %4808 = vmatprep.mubr.bf16.mxu0 %v4359
    %4809 = vmatmul.mubr.bf16.gmra.mrb[0].mxu0 %v4358
    %v4810 = vpop.f32.mrb[0].mxu0
    %v4811 = vadd.f32 0.0, %v4810
    %v4812 = vpop.f32.mrb[0].mxu0
    %v4813 = vadd.f32 0.0, %v4812
    %v4814 = vpop.f32.mrb[0].mxu0
    %v4815 = vpop.f32.mrb[0].mxu0
    %4816 = vdwg.mxu0
    %4817 = vmatprep.subr.bf16.mxu0 %v2505
    %4818 = vmatpush1.bf16.msra.mxu0 %v2504
    %4819 = vmatprep.subr.bf16.mxu0 %v2521
    %4820 = vmatpush1.bf16.msra.mxu0 %v2520
    %4821 = vmatprep.subr.bf16.mxu0 %v2537
    %4822 = vmatpush1.bf16.msra.mxu0 %v2536
    %4823 = vmatprep.subr.bf16.mxu0 %v2553
    %4824 = vmatpush1.bf16.msra.mxu0 %v2552
    %4825 = vmatprep.subr.bf16.mxu0 %v2569
    %4826 = vmatpush1.bf16.msra.mxu0 %v2568
    %4827 = vmatprep.subr.bf16.mxu0 %v2585
    %4828 = vmatpush1.bf16.msra.mxu0 %v2584
    %4829 = vmatprep.subr.bf16.mxu0 %v2601
    %4830 = vmatpush1.bf16.msra.mxu0 %v2600
    %4831 = vmatprep.subr.bf16.mxu0 %v2617
    %4832 = vmatpush1.bf16.msra.mxu0 %v2616
    %4833 = vmatprep.subr.bf16.mxu0 %v2633
    %4834 = vmatpush1.bf16.msra.mxu0 %v2632
    %4835 = vmatprep.subr.bf16.mxu0 %v2649
    %4836 = vmatpush1.bf16.msra.mxu0 %v2648
    %4837 = vmatprep.subr.bf16.mxu0 %v2665
    %4838 = vmatpush1.bf16.msra.mxu0 %v2664
    %4839 = vmatprep.subr.bf16.mxu0 %v2681
    %4840 = vmatpush1.bf16.msra.mxu0 %v2680
    %4841 = vmatprep.subr.bf16.mxu0 %v2697
    %4842 = vmatpush1.bf16.msra.mxu0 %v2696
    %4843 = vmatprep.subr.bf16.mxu0 %v2713
    %4844 = vmatpush1.bf16.msra.mxu0 %v2712
    %4845 = vmatprep.subr.bf16.mxu0 %v2729
    %4846 = vmatpush1.bf16.msra.mxu0 %v2728
    %4847 = vmatprep.subr.bf16.mxu0 %v2745
    %4848 = vmatpush1.bf16.msra.mxu0 %v2744
    %4849 = vmatprep.mubr.bf16.mxu0 %v4361
    %4850 = vmatmul.mubr.bf16.gmra.mrb[0].mxu0 %v4360
    %v4851 = vpop.f32.mrb[0].mxu0
    %v4852 = vadd.f32 %v4811, %v4851
    %v4853 = vpop.f32.mrb[0].mxu0
    %v4854 = vadd.f32 %v4813, %v4853
    %v4855 = vpop.f32.mrb[0].mxu0
    %v4856 = vpop.f32.mrb[0].mxu0
    %4857 = vdwg.mxu0
    %4858 = vmatprep.subr.bf16.mxu0 %v2251
    %4859 = vmatpush1.bf16.msra.mxu0 %v2250
    %4860 = vmatprep.subr.bf16.mxu0 %v2267
    %4861 = vmatpush1.bf16.msra.mxu0 %v2266
    %4862 = vmatprep.subr.bf16.mxu0 %v2283
    %4863 = vmatpush1.bf16.msra.mxu0 %v2282
    %4864 = vmatprep.subr.bf16.mxu0 %v2299
    %4865 = vmatpush1.bf16.msra.mxu0 %v2298
    %4866 = vmatprep.subr.bf16.mxu0 %v2315
    %4867 = vmatpush1.bf16.msra.mxu0 %v2314
    %4868 = vmatprep.subr.bf16.mxu0 %v2331
    %4869 = vmatpush1.bf16.msra.mxu0 %v2330
    %4870 = vmatprep.subr.bf16.mxu0 %v2347
    %4871 = vmatpush1.bf16.msra.mxu0 %v2346
    %4872 = vmatprep.subr.bf16.mxu0 %v2363
    %4873 = vmatpush1.bf16.msra.mxu0 %v2362
    %4874 = vmatprep.subr.bf16.mxu0 %v2379
    %4875 = vmatpush1.bf16.msra.mxu0 %v2378
    %4876 = vmatprep.subr.bf16.mxu0 %v2395
    %4877 = vmatpush1.bf16.msra.mxu0 %v2394
    %4878 = vmatprep.subr.bf16.mxu0 %v2411
    %4879 = vmatpush1.bf16.msra.mxu0 %v2410
    %4880 = vmatprep.subr.bf16.mxu0 %v2427
    %4881 = vmatpush1.bf16.msra.mxu0 %v2426
    %4882 = vmatprep.subr.bf16.mxu0 %v2443
    %4883 = vmatpush1.bf16.msra.mxu0 %v2442
    %4884 = vmatprep.subr.bf16.mxu0 %v2459
    %4885 = vmatpush1.bf16.msra.mxu0 %v2458
    %4886 = vmatprep.subr.bf16.mxu0 %v2475
    %4887 = vmatpush1.bf16.msra.mxu0 %v2474
    %4888 = vmatprep.subr.bf16.mxu0 %v2491
    %4889 = vmatpush1.bf16.msra.mxu0 %v2490
    %4890 = vmatprep.mubr.bf16.mxu0 %v4359
    %4891 = vmatmul.mubr.bf16.gmra.mrb[0].mxu0 %v4358
    %v4892 = vpop.f32.mrb[0].mxu0
    %v4893 = vadd.f32 0.0, %v4892
    %v4894 = vpop.f32.mrb[0].mxu0
    %v4895 = vadd.f32 0.0, %v4894
    %v4896 = vpop.f32.mrb[0].mxu0
    %v4897 = vpop.f32.mrb[0].mxu0
    %4898 = vdwg.mxu0
    %4899 = vmatprep.subr.bf16.mxu0 %v2507
    %4900 = vmatpush1.bf16.msra.mxu0 %v2506
    %4901 = vmatprep.subr.bf16.mxu0 %v2523
    %4902 = vmatpush1.bf16.msra.mxu0 %v2522
    %4903 = vmatprep.subr.bf16.mxu0 %v2539
    %4904 = vmatpush1.bf16.msra.mxu0 %v2538
    %4905 = vmatprep.subr.bf16.mxu0 %v2555
    %4906 = vmatpush1.bf16.msra.mxu0 %v2554
    %4907 = vmatprep.subr.bf16.mxu0 %v2571
    %4908 = vmatpush1.bf16.msra.mxu0 %v2570
    %4909 = vmatprep.subr.bf16.mxu0 %v2587
    %4910 = vmatpush1.bf16.msra.mxu0 %v2586
    %4911 = vmatprep.subr.bf16.mxu0 %v2603
    %4912 = vmatpush1.bf16.msra.mxu0 %v2602
    %4913 = vmatprep.subr.bf16.mxu0 %v2619
    %4914 = vmatpush1.bf16.msra.mxu0 %v2618
    %4915 = vmatprep.subr.bf16.mxu0 %v2635
    %4916 = vmatpush1.bf16.msra.mxu0 %v2634
    %4917 = vmatprep.subr.bf16.mxu0 %v2651
    %4918 = vmatpush1.bf16.msra.mxu0 %v2650
    %4919 = vmatprep.subr.bf16.mxu0 %v2667
    %4920 = vmatpush1.bf16.msra.mxu0 %v2666
    %4921 = vmatprep.subr.bf16.mxu0 %v2683
    %4922 = vmatpush1.bf16.msra.mxu0 %v2682
    %4923 = vmatprep.subr.bf16.mxu0 %v2699
    %4924 = vmatpush1.bf16.msra.mxu0 %v2698
    %4925 = vmatprep.subr.bf16.mxu0 %v2715
    %4926 = vmatpush1.bf16.msra.mxu0 %v2714
    %4927 = vmatprep.subr.bf16.mxu0 %v2731
    %4928 = vmatpush1.bf16.msra.mxu0 %v2730
    %4929 = vmatprep.subr.bf16.mxu0 %v2747
    %4930 = vmatpush1.bf16.msra.mxu0 %v2746
    %4931 = vmatprep.mubr.bf16.mxu0 %v4361
    %4932 = vmatmul.mubr.bf16.gmra.mrb[0].mxu0 %v4360
    %v4933 = vpop.f32.mrb[0].mxu0
    %v4934 = vadd.f32 %v4893, %v4933
    %v4935 = vpop.f32.mrb[0].mxu0
    %v4936 = vadd.f32 %v4895, %v4935
    %v4937 = vpop.f32.mrb[0].mxu0
    %v4938 = vpop.f32.mrb[0].mxu0
    %4939 = vdwg.mxu0
    %4940 = vmatprep.subr.bf16.mxu0 %v2253
    %4941 = vmatpush1.bf16.msra.mxu0 %v2252
    %4942 = vmatprep.subr.bf16.mxu0 %v2269
    %4943 = vmatpush1.bf16.msra.mxu0 %v2268
    %4944 = vmatprep.subr.bf16.mxu0 %v2285
    %4945 = vmatpush1.bf16.msra.mxu0 %v2284
    %4946 = vmatprep.subr.bf16.mxu0 %v2301
    %4947 = vmatpush1.bf16.msra.mxu0 %v2300
    %4948 = vmatprep.subr.bf16.mxu0 %v2317
    %4949 = vmatpush1.bf16.msra.mxu0 %v2316
    %4950 = vmatprep.subr.bf16.mxu0 %v2333
    %4951 = vmatpush1.bf16.msra.mxu0 %v2332
    %4952 = vmatprep.subr.bf16.mxu0 %v2349
    %4953 = vmatpush1.bf16.msra.mxu0 %v2348
    %4954 = vmatprep.subr.bf16.mxu0 %v2365
    %4955 = vmatpush1.bf16.msra.mxu0 %v2364
    %4956 = vmatprep.subr.bf16.mxu0 %v2381
    %4957 = vmatpush1.bf16.msra.mxu0 %v2380
    %4958 = vmatprep.subr.bf16.mxu0 %v2397
    %4959 = vmatpush1.bf16.msra.mxu0 %v2396
    %4960 = vmatprep.subr.bf16.mxu0 %v2413
    %4961 = vmatpush1.bf16.msra.mxu0 %v2412
    %4962 = vmatprep.subr.bf16.mxu0 %v2429
    %4963 = vmatpush1.bf16.msra.mxu0 %v2428
    %4964 = vmatprep.subr.bf16.mxu0 %v2445
    %4965 = vmatpush1.bf16.msra.mxu0 %v2444
    %4966 = vmatprep.subr.bf16.mxu0 %v2461
    %4967 = vmatpush1.bf16.msra.mxu0 %v2460
    %4968 = vmatprep.subr.bf16.mxu0 %v2477
    %4969 = vmatpush1.bf16.msra.mxu0 %v2476
    %4970 = vmatprep.subr.bf16.mxu0 %v2493
    %4971 = vmatpush1.bf16.msra.mxu0 %v2492
    %4972 = vmatprep.mubr.bf16.mxu0 %v4359
    %4973 = vmatmul.mubr.bf16.gmra.mrb[0].mxu0 %v4358
    %v4974 = vpop.f32.mrb[0].mxu0
    %v4975 = vadd.f32 0.0, %v4974
    %v4976 = vpop.f32.mrb[0].mxu0
    %v4977 = vadd.f32 0.0, %v4976
    %v4978 = vpop.f32.mrb[0].mxu0
    %v4979 = vpop.f32.mrb[0].mxu0
    %4980 = vdwg.mxu0
    %4981 = vmatprep.subr.bf16.mxu0 %v2509
    %4982 = vmatpush1.bf16.msra.mxu0 %v2508
    %4983 = vmatprep.subr.bf16.mxu0 %v2525
    %4984 = vmatpush1.bf16.msra.mxu0 %v2524
    %4985 = vmatprep.subr.bf16.mxu0 %v2541
    %4986 = vmatpush1.bf16.msra.mxu0 %v2540
    %4987 = vmatprep.subr.bf16.mxu0 %v2557
    %4988 = vmatpush1.bf16.msra.mxu0 %v2556
    %4989 = vmatprep.subr.bf16.mxu0 %v2573
    %4990 = vmatpush1.bf16.msra.mxu0 %v2572
    %4991 = vmatprep.subr.bf16.mxu0 %v2589
    %4992 = vmatpush1.bf16.msra.mxu0 %v2588
    %4993 = vmatprep.subr.bf16.mxu0 %v2605
    %4994 = vmatpush1.bf16.msra.mxu0 %v2604
    %4995 = vmatprep.subr.bf16.mxu0 %v2621
    %4996 = vmatpush1.bf16.msra.mxu0 %v2620
    %4997 = vmatprep.subr.bf16.mxu0 %v2637
    %4998 = vmatpush1.bf16.msra.mxu0 %v2636
    %4999 = vmatprep.subr.bf16.mxu0 %v2653
    %5000 = vmatpush1.bf16.msra.mxu0 %v2652
    %5001 = vmatprep.subr.bf16.mxu0 %v2669
    %5002 = vmatpush1.bf16.msra.mxu0 %v2668
    %5003 = vmatprep.subr.bf16.mxu0 %v2685
    %5004 = vmatpush1.bf16.msra.mxu0 %v2684
    %5005 = vmatprep.subr.bf16.mxu0 %v2701
    %5006 = vmatpush1.bf16.msra.mxu0 %v2700
    %5007 = vmatprep.subr.bf16.mxu0 %v2717
    %5008 = vmatpush1.bf16.msra.mxu0 %v2716
    %5009 = vmatprep.subr.bf16.mxu0 %v2733
    %5010 = vmatpush1.bf16.msra.mxu0 %v2732
    %5011 = vmatprep.subr.bf16.mxu0 %v2749
    %5012 = vmatpush1.bf16.msra.mxu0 %v2748
    %5013 = vmatprep.mubr.bf16.mxu0 %v4361
    %5014 = vmatmul.mubr.bf16.gmra.mrb[0].mxu0 %v4360
    %v5015 = vpop.f32.mrb[0].mxu0
    %v5016 = vadd.f32 %v4975, %v5015
    %v5017 = vpop.f32.mrb[0].mxu0
    %v5018 = vadd.f32 %v4977, %v5017
    %v5019 = vpop.f32.mrb[0].mxu0
    %v5020 = vpop.f32.mrb[0].mxu0
    %5021 = vdwg.mxu0
    %v5038 = vrot.slane %v4442, 4
    %v5039 = vrot.slane %v4444, 4
    %v5040 = vrot.slane %v4524, 4
    %v5041 = vrot.slane %v4526, 4
    %v5042 = vrot.slane %v4606, 4
    %v5043 = vrot.slane %v4608, 4
    %v5044 = vrot.slane %v4688, 4
    %v5045 = vrot.slane %v4690, 4
    %v5046 = vrot.slane %v4770, 4
    %v5047 = vrot.slane %v4772, 4
    %v5048 = vrot.slane %v4852, 4
    %v5049 = vrot.slane %v4854, 4
    %v5050 = vrot.slane %v4934, 4
    %v5051 = vrot.slane %v4936, 4
    %v5052 = vrot.slane %v5016, 4
    %v5053 = vrot.slane %v5018, 4
    %v5070 = vadd.f32 %v787, %v5038
    %v5071 = vadd.f32 %v789, %v5039
    %v5072 = vadd.f32 %v830, %v5040
    %v5073 = vadd.f32 %v832, %v5041
    %v5074 = vadd.f32 %v873, %v5042
    %v5075 = vadd.f32 %v875, %v5043
    %v5076 = vadd.f32 %v916, %v5044
    %v5077 = vadd.f32 %v918, %v5045
    %v5078 = vadd.f32 %v959, %v5046
    %v5079 = vadd.f32 %v961, %v5047
    %v5080 = vadd.f32 %v1002, %v5048
    %v5081 = vadd.f32 %v1004, %v5049
    %v5082 = vadd.f32 %v1045, %v5050
    %v5083 = vadd.f32 %v1047, %v5051
    %v5084 = vadd.f32 %v1088, %v5052
    %v5085 = vadd.f32 %v1090, %v5053
    %v5086 = vxor.u32 %v5070, 2147483648
    %v5087 = vxor.u32 %v5071, 2147483648
    %v5088 = vxor.u32 %v5072, 2147483648
    %v5089 = vxor.u32 %v5073, 2147483648
    %v5090 = vmul.f32 %v5086, 1.442695
    %v5091 = vpow.pop %v5090
    %v5092 = vmul.f32 %v5087, 1.442695
    %v5093 = vpow.pop %v5092
    %v5094 = vmul.f32 %v5088, 1.442695
    %v5095 = vpow.pop %v5094
    %v5096 = vmul.f32 %v5089, 1.442695
    %v5097 = vpow.pop %v5096
    %v5098 = vadd.f32 %v5091, 1.0
    %v5099 = vadd.f32 %v5093, 1.0
    %v5100 = vadd.f32 %v5095, 1.0
    %v5101 = vadd.f32 %v5097, 1.0
    %v5102 = vrcp.pop %v5098
    %v5103 = vmul.f32 1.0, %v5102
    %v5104 = vrcp.pop %v5099
    %v5105 = vmul.f32 1.0, %v5104
    %v5106 = vrcp.pop %v5100
    %v5107 = vmul.f32 1.0, %v5106
    %v5108 = vrcp.pop %v5101
    %v5109 = vmul.f32 1.0, %v5108
    %v5110 = vxor.u32 %v5074, 2147483648
    %v5111 = vxor.u32 %v5075, 2147483648
    %v5112 = vxor.u32 %v5076, 2147483648
    %v5113 = vxor.u32 %v5077, 2147483648
    %v5114 = vmul.f32 %v5110, 1.442695
    %v5115 = vpow.pop %v5114
    %v5116 = vmul.f32 %v5111, 1.442695
    %v5117 = vpow.pop %v5116
    %v5118 = vmul.f32 %v5112, 1.442695
    %v5119 = vpow.pop %v5118
    %v5120 = vmul.f32 %v5113, 1.442695
    %v5121 = vpow.pop %v5120
    %v5122 = vadd.f32 %v5115, 1.0
    %v5123 = vadd.f32 %v5117, 1.0
    %v5124 = vadd.f32 %v5119, 1.0
    %v5125 = vadd.f32 %v5121, 1.0
    %v5126 = vrcp.pop %v5122
    %v5127 = vmul.f32 1.0, %v5126
    %v5128 = vrcp.pop %v5123
    %v5129 = vmul.f32 1.0, %v5128
    %v5130 = vrcp.pop %v5124
    %v5131 = vmul.f32 1.0, %v5130
    %v5132 = vrcp.pop %v5125
    %v5133 = vmul.f32 1.0, %v5132
    %v5134 = vtanh.pop %v5078
    %v5135 = vtanh.pop %v5079
    %v5136 = vtanh.pop %v5080
    %v5137 = vtanh.pop %v5081
    %v5138 = vxor.u32 %v5082, 2147483648
    %v5139 = vxor.u32 %v5083, 2147483648
    %v5140 = vxor.u32 %v5084, 2147483648
    %v5141 = vxor.u32 %v5085, 2147483648
    %v5142 = vmul.f32 %v5138, 1.442695
    %v5143 = vpow.pop %v5142
    %v5144 = vmul.f32 %v5139, 1.442695
    %v5145 = vpow.pop %v5144
    %v5146 = vmul.f32 %v5140, 1.442695
    %v5147 = vpow.pop %v5146
    %v5148 = vmul.f32 %v5141, 1.442695
    %v5149 = vpow.pop %v5148
    %v5150 = vadd.f32 %v5143, 1.0
    %v5151 = vadd.f32 %v5145, 1.0
    %v5152 = vadd.f32 %v5147, 1.0
    %v5153 = vadd.f32 %v5149, 1.0
    %v5154 = vrcp.pop %v5150
    %v5155 = vmul.f32 1.0, %v5154
    %v5156 = vrcp.pop %v5151
    %v5157 = vmul.f32 1.0, %v5156
    %v5158 = vrcp.pop %v5152
    %v5159 = vmul.f32 1.0, %v5158
    %v5160 = vrcp.pop %v5153
    %v5161 = vmul.f32 1.0, %v5160
    %v5166 = vrot.slane %v4338, 6
    %v5167 = vrot.slane %v4339, 6
    %v5168 = vrot.slane %v4340, 6
    %v5169 = vrot.slane %v4341, 6
    %v5174 = vmul.f32 %v5127, %v5166
    %v5175 = vmul.f32 %v5129, %v5167
    %v5176 = vmul.f32 %v5131, %v5168
    %v5177 = vmul.f32 %v5133, %v5169
    %v5178 = vmul.f32 %v5103, %v5134
    %v5179 = vmul.f32 %v5105, %v5135
    %v5180 = vmul.f32 %v5107, %v5136
    %v5181 = vmul.f32 %v5109, %v5137
    %v5182 = vadd.f32 %v5174, %v5178
    %v5183 = vadd.f32 %v5175, %v5179
    %v5184 = vadd.f32 %v5176, %v5180
    %v5185 = vadd.f32 %v5177, %v5181
    %v5186 = vtanh.pop %v5182
    %v5187 = vtanh.pop %v5183
    %v5188 = vtanh.pop %v5184
    %v5189 = vtanh.pop %v5185
    %v5190 = vmul.f32 %v5155, %v5186
    %v5191 = vmul.f32 %v5157, %v5187
    %v5192 = vmul.f32 %v5159, %v5188
    %v5193 = vmul.f32 %v5161, %v5189
    %v5194 = vpack.c.bf16 %v5190, %v5190
    %v5195 = vpack.c.bf16 %v5191, %v5191
    %v5196 = vpack.c.bf16 %v5192, %v5192
    %v5197 = vpack.c.bf16 %v5193, %v5193
    %v5202 = vrot.slane %v5194, 2
    %v5203 = vrot.slane %v5195, 2
    %v5204 = vrot.slane %v5196, 2
    %v5205 = vrot.slane %v5197, 2
    %5210 = vmatprep.subr.bf16.mxu0 %v2239
    %5211 = vmatpush1.bf16.msra.mxu0 %v2238
    %5212 = vmatprep.subr.bf16.mxu0 %v2255
    %5213 = vmatpush1.bf16.msra.mxu0 %v2254
    %5214 = vmatprep.subr.bf16.mxu0 %v2271
    %5215 = vmatpush1.bf16.msra.mxu0 %v2270
    %5216 = vmatprep.subr.bf16.mxu0 %v2287
    %5217 = vmatpush1.bf16.msra.mxu0 %v2286
    %5218 = vmatprep.subr.bf16.mxu0 %v2303
    %5219 = vmatpush1.bf16.msra.mxu0 %v2302
    %5220 = vmatprep.subr.bf16.mxu0 %v2319
    %5221 = vmatpush1.bf16.msra.mxu0 %v2318
    %5222 = vmatprep.subr.bf16.mxu0 %v2335
    %5223 = vmatpush1.bf16.msra.mxu0 %v2334
    %5224 = vmatprep.subr.bf16.mxu0 %v2351
    %5225 = vmatpush1.bf16.msra.mxu0 %v2350
    %5226 = vmatprep.subr.bf16.mxu0 %v2367
    %5227 = vmatpush1.bf16.msra.mxu0 %v2366
    %5228 = vmatprep.subr.bf16.mxu0 %v2383
    %5229 = vmatpush1.bf16.msra.mxu0 %v2382
    %5230 = vmatprep.subr.bf16.mxu0 %v2399
    %5231 = vmatpush1.bf16.msra.mxu0 %v2398
    %5232 = vmatprep.subr.bf16.mxu0 %v2415
    %5233 = vmatpush1.bf16.msra.mxu0 %v2414
    %5234 = vmatprep.subr.bf16.mxu0 %v2431
    %5235 = vmatpush1.bf16.msra.mxu0 %v2430
    %5236 = vmatprep.subr.bf16.mxu0 %v2447
    %5237 = vmatpush1.bf16.msra.mxu0 %v2446
    %5238 = vmatprep.subr.bf16.mxu0 %v2463
    %5239 = vmatpush1.bf16.msra.mxu0 %v2462
    %5240 = vmatprep.subr.bf16.mxu0 %v2479
    %5241 = vmatpush1.bf16.msra.mxu0 %v2478
    %5242 = vmatprep.mubr.bf16.mxu0 %v5203
    %5243 = vmatmul.mubr.bf16.gmra.mrb[0].mxu0 %v5202
    %v5244 = vpop.f32.mrb[0].mxu0
    %v5245 = vadd.f32 0.0, %v5244
    %v5246 = vpop.f32.mrb[0].mxu0
    %v5247 = vadd.f32 0.0, %v5246
    %v5248 = vpop.f32.mrb[0].mxu0
    %v5249 = vpop.f32.mrb[0].mxu0
    %5250 = vdwg.mxu0
    %5251 = vmatprep.subr.bf16.mxu0 %v2495
    %5252 = vmatpush1.bf16.msra.mxu0 %v2494
    %5253 = vmatprep.subr.bf16.mxu0 %v2511
    %5254 = vmatpush1.bf16.msra.mxu0 %v2510
    %5255 = vmatprep.subr.bf16.mxu0 %v2527
    %5256 = vmatpush1.bf16.msra.mxu0 %v2526
    %5257 = vmatprep.subr.bf16.mxu0 %v2543
    %5258 = vmatpush1.bf16.msra.mxu0 %v2542
    %5259 = vmatprep.subr.bf16.mxu0 %v2559
    %5260 = vmatpush1.bf16.msra.mxu0 %v2558
    %5261 = vmatprep.subr.bf16.mxu0 %v2575
    %5262 = vmatpush1.bf16.msra.mxu0 %v2574
    %5263 = vmatprep.subr.bf16.mxu0 %v2591
    %5264 = vmatpush1.bf16.msra.mxu0 %v2590
    %5265 = vmatprep.subr.bf16.mxu0 %v2607
    %5266 = vmatpush1.bf16.msra.mxu0 %v2606
    %5267 = vmatprep.subr.bf16.mxu0 %v2623
    %5268 = vmatpush1.bf16.msra.mxu0 %v2622
    %5269 = vmatprep.subr.bf16.mxu0 %v2639
    %5270 = vmatpush1.bf16.msra.mxu0 %v2638
    %5271 = vmatprep.subr.bf16.mxu0 %v2655
    %5272 = vmatpush1.bf16.msra.mxu0 %v2654
    %5273 = vmatprep.subr.bf16.mxu0 %v2671
    %5274 = vmatpush1.bf16.msra.mxu0 %v2670
    %5275 = vmatprep.subr.bf16.mxu0 %v2687
    %5276 = vmatpush1.bf16.msra.mxu0 %v2686
    %5277 = vmatprep.subr.bf16.mxu0 %v2703
    %5278 = vmatpush1.bf16.msra.mxu0 %v2702
    %5279 = vmatprep.subr.bf16.mxu0 %v2719
    %5280 = vmatpush1.bf16.msra.mxu0 %v2718
    %5281 = vmatprep.subr.bf16.mxu0 %v2735
    %5282 = vmatpush1.bf16.msra.mxu0 %v2734
    %5283 = vmatprep.mubr.bf16.mxu0 %v5205
    %5284 = vmatmul.mubr.bf16.gmra.mrb[0].mxu0 %v5204
    %v5285 = vpop.f32.mrb[0].mxu0
    %v5286 = vadd.f32 %v5245, %v5285
    %v5287 = vpop.f32.mrb[0].mxu0
    %v5288 = vadd.f32 %v5247, %v5287
    %v5289 = vpop.f32.mrb[0].mxu0
    %v5290 = vpop.f32.mrb[0].mxu0
    %5291 = vdwg.mxu0
    %5292 = vmatprep.subr.bf16.mxu0 %v2241
    %5293 = vmatpush1.bf16.msra.mxu0 %v2240
    %5294 = vmatprep.subr.bf16.mxu0 %v2257
    %5295 = vmatpush1.bf16.msra.mxu0 %v2256
    %5296 = vmatprep.subr.bf16.mxu0 %v2273
    %5297 = vmatpush1.bf16.msra.mxu0 %v2272
    %5298 = vmatprep.subr.bf16.mxu0 %v2289
    %5299 = vmatpush1.bf16.msra.mxu0 %v2288
    %5300 = vmatprep.subr.bf16.mxu0 %v2305
    %5301 = vmatpush1.bf16.msra.mxu0 %v2304
    %5302 = vmatprep.subr.bf16.mxu0 %v2321
    %5303 = vmatpush1.bf16.msra.mxu0 %v2320
    %5304 = vmatprep.subr.bf16.mxu0 %v2337
    %5305 = vmatpush1.bf16.msra.mxu0 %v2336
    %5306 = vmatprep.subr.bf16.mxu0 %v2353
    %5307 = vmatpush1.bf16.msra.mxu0 %v2352
    %5308 = vmatprep.subr.bf16.mxu0 %v2369
    %5309 = vmatpush1.bf16.msra.mxu0 %v2368
    %5310 = vmatprep.subr.bf16.mxu0 %v2385
    %5311 = vmatpush1.bf16.msra.mxu0 %v2384
    %5312 = vmatprep.subr.bf16.mxu0 %v2401
    %5313 = vmatpush1.bf16.msra.mxu0 %v2400
    %5314 = vmatprep.subr.bf16.mxu0 %v2417
    %5315 = vmatpush1.bf16.msra.mxu0 %v2416
    %5316 = vmatprep.subr.bf16.mxu0 %v2433
    %5317 = vmatpush1.bf16.msra.mxu0 %v2432
    %5318 = vmatprep.subr.bf16.mxu0 %v2449
    %5319 = vmatpush1.bf16.msra.mxu0 %v2448
    %5320 = vmatprep.subr.bf16.mxu0 %v2465
    %5321 = vmatpush1.bf16.msra.mxu0 %v2464
    %5322 = vmatprep.subr.bf16.mxu0 %v2481
    %5323 = vmatpush1.bf16.msra.mxu0 %v2480
    %5324 = vmatprep.mubr.bf16.mxu0 %v5203
    %5325 = vmatmul.mubr.bf16.gmra.mrb[0].mxu0 %v5202
    %v5326 = vpop.f32.mrb[0].mxu0
    %v5327 = vadd.f32 0.0, %v5326
    %v5328 = vpop.f32.mrb[0].mxu0
    %v5329 = vadd.f32 0.0, %v5328
    %v5330 = vpop.f32.mrb[0].mxu0
    %v5331 = vpop.f32.mrb[0].mxu0
    %5332 = vdwg.mxu0
    %5333 = vmatprep.subr.bf16.mxu0 %v2497
    %5334 = vmatpush1.bf16.msra.mxu0 %v2496
    %5335 = vmatprep.subr.bf16.mxu0 %v2513
    %5336 = vmatpush1.bf16.msra.mxu0 %v2512
    %5337 = vmatprep.subr.bf16.mxu0 %v2529
    %5338 = vmatpush1.bf16.msra.mxu0 %v2528
    %5339 = vmatprep.subr.bf16.mxu0 %v2545
    %5340 = vmatpush1.bf16.msra.mxu0 %v2544
    %5341 = vmatprep.subr.bf16.mxu0 %v2561
    %5342 = vmatpush1.bf16.msra.mxu0 %v2560
    %5343 = vmatprep.subr.bf16.mxu0 %v2577
    %5344 = vmatpush1.bf16.msra.mxu0 %v2576
    %5345 = vmatprep.subr.bf16.mxu0 %v2593
    %5346 = vmatpush1.bf16.msra.mxu0 %v2592
    %5347 = vmatprep.subr.bf16.mxu0 %v2609
    %5348 = vmatpush1.bf16.msra.mxu0 %v2608
    %5349 = vmatprep.subr.bf16.mxu0 %v2625
    %5350 = vmatpush1.bf16.msra.mxu0 %v2624
    %5351 = vmatprep.subr.bf16.mxu0 %v2641
    %5352 = vmatpush1.bf16.msra.mxu0 %v2640
    %5353 = vmatprep.subr.bf16.mxu0 %v2657
    %5354 = vmatpush1.bf16.msra.mxu0 %v2656
    %5355 = vmatprep.subr.bf16.mxu0 %v2673
    %5356 = vmatpush1.bf16.msra.mxu0 %v2672
    %5357 = vmatprep.subr.bf16.mxu0 %v2689
    %5358 = vmatpush1.bf16.msra.mxu0 %v2688
    %5359 = vmatprep.subr.bf16.mxu0 %v2705
    %5360 = vmatpush1.bf16.msra.mxu0 %v2704
    %5361 = vmatprep.subr.bf16.mxu0 %v2721
    %5362 = vmatpush1.bf16.msra.mxu0 %v2720
    %5363 = vmatprep.subr.bf16.mxu0 %v2737
    %5364 = vmatpush1.bf16.msra.mxu0 %v2736
    %5365 = vmatprep.mubr.bf16.mxu0 %v5205
    %5366 = vmatmul.mubr.bf16.gmra.mrb[0].mxu0 %v5204
    %v5367 = vpop.f32.mrb[0].mxu0
    %v5368 = vadd.f32 %v5327, %v5367
    %v5369 = vpop.f32.mrb[0].mxu0
    %v5370 = vadd.f32 %v5329, %v5369
    %v5371 = vpop.f32.mrb[0].mxu0
    %v5372 = vpop.f32.mrb[0].mxu0
    %5373 = vdwg.mxu0
    %5374 = vmatprep.subr.bf16.mxu0 %v2243
    %5375 = vmatpush1.bf16.msra.mxu0 %v2242
    %5376 = vmatprep.subr.bf16.mxu0 %v2259
    %5377 = vmatpush1.bf16.msra.mxu0 %v2258
    %5378 = vmatprep.subr.bf16.mxu0 %v2275
    %5379 = vmatpush1.bf16.msra.mxu0 %v2274
    %5380 = vmatprep.subr.bf16.mxu0 %v2291
    %5381 = vmatpush1.bf16.msra.mxu0 %v2290
    %5382 = vmatprep.subr.bf16.mxu0 %v2307
    %5383 = vmatpush1.bf16.msra.mxu0 %v2306
    %5384 = vmatprep.subr.bf16.mxu0 %v2323
    %5385 = vmatpush1.bf16.msra.mxu0 %v2322
    %5386 = vmatprep.subr.bf16.mxu0 %v2339
    %5387 = vmatpush1.bf16.msra.mxu0 %v2338
    %5388 = vmatprep.subr.bf16.mxu0 %v2355
    %5389 = vmatpush1.bf16.msra.mxu0 %v2354
    %5390 = vmatprep.subr.bf16.mxu0 %v2371
    %5391 = vmatpush1.bf16.msra.mxu0 %v2370
    %5392 = vmatprep.subr.bf16.mxu0 %v2387
    %5393 = vmatpush1.bf16.msra.mxu0 %v2386
    %5394 = vmatprep.subr.bf16.mxu0 %v2403
    %5395 = vmatpush1.bf16.msra.mxu0 %v2402
    %5396 = vmatprep.subr.bf16.mxu0 %v2419
    %5397 = vmatpush1.bf16.msra.mxu0 %v2418
    %5398 = vmatprep.subr.bf16.mxu0 %v2435
    %5399 = vmatpush1.bf16.msra.mxu0 %v2434
    %5400 = vmatprep.subr.bf16.mxu0 %v2451
    %5401 = vmatpush1.bf16.msra.mxu0 %v2450
    %5402 = vmatprep.subr.bf16.mxu0 %v2467
    %5403 = vmatpush1.bf16.msra.mxu0 %v2466
    %5404 = vmatprep.subr.bf16.mxu0 %v2483
    %5405 = vmatpush1.bf16.msra.mxu0 %v2482
    %5406 = vmatprep.mubr.bf16.mxu0 %v5203
    %5407 = vmatmul.mubr.bf16.gmra.mrb[0].mxu0 %v5202
    %v5408 = vpop.f32.mrb[0].mxu0
    %v5409 = vadd.f32 0.0, %v5408
    %v5410 = vpop.f32.mrb[0].mxu0
    %v5411 = vadd.f32 0.0, %v5410
    %v5412 = vpop.f32.mrb[0].mxu0
    %v5413 = vpop.f32.mrb[0].mxu0
    %5414 = vdwg.mxu0
    %5415 = vmatprep.subr.bf16.mxu0 %v2499
    %5416 = vmatpush1.bf16.msra.mxu0 %v2498
    %5417 = vmatprep.subr.bf16.mxu0 %v2515
    %5418 = vmatpush1.bf16.msra.mxu0 %v2514
    %5419 = vmatprep.subr.bf16.mxu0 %v2531
    %5420 = vmatpush1.bf16.msra.mxu0 %v2530
    %5421 = vmatprep.subr.bf16.mxu0 %v2547
    %5422 = vmatpush1.bf16.msra.mxu0 %v2546
    %5423 = vmatprep.subr.bf16.mxu0 %v2563
    %5424 = vmatpush1.bf16.msra.mxu0 %v2562
    %5425 = vmatprep.subr.bf16.mxu0 %v2579
    %5426 = vmatpush1.bf16.msra.mxu0 %v2578
    %5427 = vmatprep.subr.bf16.mxu0 %v2595
    %5428 = vmatpush1.bf16.msra.mxu0 %v2594
    %5429 = vmatprep.subr.bf16.mxu0 %v2611
    %5430 = vmatpush1.bf16.msra.mxu0 %v2610
    %5431 = vmatprep.subr.bf16.mxu0 %v2627
    %5432 = vmatpush1.bf16.msra.mxu0 %v2626
    %5433 = vmatprep.subr.bf16.mxu0 %v2643
    %5434 = vmatpush1.bf16.msra.mxu0 %v2642
    %5435 = vmatprep.subr.bf16.mxu0 %v2659
    %5436 = vmatpush1.bf16.msra.mxu0 %v2658
    %5437 = vmatprep.subr.bf16.mxu0 %v2675
    %5438 = vmatpush1.bf16.msra.mxu0 %v2674
    %5439 = vmatprep.subr.bf16.mxu0 %v2691
    %5440 = vmatpush1.bf16.msra.mxu0 %v2690
    %5441 = vmatprep.subr.bf16.mxu0 %v2707
    %5442 = vmatpush1.bf16.msra.mxu0 %v2706
    %5443 = vmatprep.subr.bf16.mxu0 %v2723
    %5444 = vmatpush1.bf16.msra.mxu0 %v2722
    %5445 = vmatprep.subr.bf16.mxu0 %v2739
    %5446 = vmatpush1.bf16.msra.mxu0 %v2738
    %5447 = vmatprep.mubr.bf16.mxu0 %v5205
    %5448 = vmatmul.mubr.bf16.gmra.mrb[0].mxu0 %v5204
    %v5449 = vpop.f32.mrb[0].mxu0
    %v5450 = vadd.f32 %v5409, %v5449
    %v5451 = vpop.f32.mrb[0].mxu0
    %v5452 = vadd.f32 %v5411, %v5451
    %v5453 = vpop.f32.mrb[0].mxu0
    %v5454 = vpop.f32.mrb[0].mxu0
    %5455 = vdwg.mxu0
    %5456 = vmatprep.subr.bf16.mxu0 %v2245
    %5457 = vmatpush1.bf16.msra.mxu0 %v2244
    %5458 = vmatprep.subr.bf16.mxu0 %v2261
    %5459 = vmatpush1.bf16.msra.mxu0 %v2260
    %5460 = vmatprep.subr.bf16.mxu0 %v2277
    %5461 = vmatpush1.bf16.msra.mxu0 %v2276
    %5462 = vmatprep.subr.bf16.mxu0 %v2293
    %5463 = vmatpush1.bf16.msra.mxu0 %v2292
    %5464 = vmatprep.subr.bf16.mxu0 %v2309
    %5465 = vmatpush1.bf16.msra.mxu0 %v2308
    %5466 = vmatprep.subr.bf16.mxu0 %v2325
    %5467 = vmatpush1.bf16.msra.mxu0 %v2324
    %5468 = vmatprep.subr.bf16.mxu0 %v2341
    %5469 = vmatpush1.bf16.msra.mxu0 %v2340
    %5470 = vmatprep.subr.bf16.mxu0 %v2357
    %5471 = vmatpush1.bf16.msra.mxu0 %v2356
    %5472 = vmatprep.subr.bf16.mxu0 %v2373
    %5473 = vmatpush1.bf16.msra.mxu0 %v2372
    %5474 = vmatprep.subr.bf16.mxu0 %v2389
    %5475 = vmatpush1.bf16.msra.mxu0 %v2388
    %5476 = vmatprep.subr.bf16.mxu0 %v2405
    %5477 = vmatpush1.bf16.msra.mxu0 %v2404
    %5478 = vmatprep.subr.bf16.mxu0 %v2421
    %5479 = vmatpush1.bf16.msra.mxu0 %v2420
    %5480 = vmatprep.subr.bf16.mxu0 %v2437
    %5481 = vmatpush1.bf16.msra.mxu0 %v2436
    %5482 = vmatprep.subr.bf16.mxu0 %v2453
    %5483 = vmatpush1.bf16.msra.mxu0 %v2452
    %5484 = vmatprep.subr.bf16.mxu0 %v2469
    %5485 = vmatpush1.bf16.msra.mxu0 %v2468
    %5486 = vmatprep.subr.bf16.mxu0 %v2485
    %5487 = vmatpush1.bf16.msra.mxu0 %v2484
    %5488 = vmatprep.mubr.bf16.mxu0 %v5203
    %5489 = vmatmul.mubr.bf16.gmra.mrb[0].mxu0 %v5202
    %v5490 = vpop.f32.mrb[0].mxu0
    %v5491 = vadd.f32 0.0, %v5490
    %v5492 = vpop.f32.mrb[0].mxu0
    %v5493 = vadd.f32 0.0, %v5492
    %v5494 = vpop.f32.mrb[0].mxu0
    %v5495 = vpop.f32.mrb[0].mxu0
    %5496 = vdwg.mxu0
    %5497 = vmatprep.subr.bf16.mxu0 %v2501
    %5498 = vmatpush1.bf16.msra.mxu0 %v2500
    %5499 = vmatprep.subr.bf16.mxu0 %v2517
    %5500 = vmatpush1.bf16.msra.mxu0 %v2516
    %5501 = vmatprep.subr.bf16.mxu0 %v2533
    %5502 = vmatpush1.bf16.msra.mxu0 %v2532
    %5503 = vmatprep.subr.bf16.mxu0 %v2549
    %5504 = vmatpush1.bf16.msra.mxu0 %v2548
    %5505 = vmatprep.subr.bf16.mxu0 %v2565
    %5506 = vmatpush1.bf16.msra.mxu0 %v2564
    %5507 = vmatprep.subr.bf16.mxu0 %v2581
    %5508 = vmatpush1.bf16.msra.mxu0 %v2580
    %5509 = vmatprep.subr.bf16.mxu0 %v2597
    %5510 = vmatpush1.bf16.msra.mxu0 %v2596
    %5511 = vmatprep.subr.bf16.mxu0 %v2613
    %5512 = vmatpush1.bf16.msra.mxu0 %v2612
    %5513 = vmatprep.subr.bf16.mxu0 %v2629
    %5514 = vmatpush1.bf16.msra.mxu0 %v2628
    %5515 = vmatprep.subr.bf16.mxu0 %v2645
    %5516 = vmatpush1.bf16.msra.mxu0 %v2644
    %5517 = vmatprep.subr.bf16.mxu0 %v2661
    %5518 = vmatpush1.bf16.msra.mxu0 %v2660
    %5519 = vmatprep.subr.bf16.mxu0 %v2677
    %5520 = vmatpush1.bf16.msra.mxu0 %v2676
    %5521 = vmatprep.subr.bf16.mxu0 %v2693
    %5522 = vmatpush1.bf16.msra.mxu0 %v2692
    %5523 = vmatprep.subr.bf16.mxu0 %v2709
    %5524 = vmatpush1.bf16.msra.mxu0 %v2708
    %5525 = vmatprep.subr.bf16.mxu0 %v2725
    %5526 = vmatpush1.bf16.msra.mxu0 %v2724
    %5527 = vmatprep.subr.bf16.mxu0 %v2741
    %5528 = vmatpush1.bf16.msra.mxu0 %v2740
    %5529 = vmatprep.mubr.bf16.mxu0 %v5205
    %5530 = vmatmul.mubr.bf16.gmra.mrb[0].mxu0 %v5204
    %v5531 = vpop.f32.mrb[0].mxu0
    %v5532 = vadd.f32 %v5491, %v5531
    %v5533 = vpop.f32.mrb[0].mxu0
    %v5534 = vadd.f32 %v5493, %v5533
    %v5535 = vpop.f32.mrb[0].mxu0
    %v5536 = vpop.f32.mrb[0].mxu0
    %5537 = vdwg.mxu0
    %5538 = vmatprep.subr.bf16.mxu0 %v2247
    %5539 = vmatpush1.bf16.msra.mxu0 %v2246
    %5540 = vmatprep.subr.bf16.mxu0 %v2263
    %5541 = vmatpush1.bf16.msra.mxu0 %v2262
    %5542 = vmatprep.subr.bf16.mxu0 %v2279
    %5543 = vmatpush1.bf16.msra.mxu0 %v2278
    %5544 = vmatprep.subr.bf16.mxu0 %v2295
    %5545 = vmatpush1.bf16.msra.mxu0 %v2294
    %5546 = vmatprep.subr.bf16.mxu0 %v2311
    %5547 = vmatpush1.bf16.msra.mxu0 %v2310
    %5548 = vmatprep.subr.bf16.mxu0 %v2327
    %5549 = vmatpush1.bf16.msra.mxu0 %v2326
    %5550 = vmatprep.subr.bf16.mxu0 %v2343
    %5551 = vmatpush1.bf16.msra.mxu0 %v2342
    %5552 = vmatprep.subr.bf16.mxu0 %v2359
    %5553 = vmatpush1.bf16.msra.mxu0 %v2358
    %5554 = vmatprep.subr.bf16.mxu0 %v2375
    %5555 = vmatpush1.bf16.msra.mxu0 %v2374
    %5556 = vmatprep.subr.bf16.mxu0 %v2391
    %5557 = vmatpush1.bf16.msra.mxu0 %v2390
    %5558 = vmatprep.subr.bf16.mxu0 %v2407
    %5559 = vmatpush1.bf16.msra.mxu0 %v2406
    %5560 = vmatprep.subr.bf16.mxu0 %v2423
    %5561 = vmatpush1.bf16.msra.mxu0 %v2422
    %5562 = vmatprep.subr.bf16.mxu0 %v2439
    %5563 = vmatpush1.bf16.msra.mxu0 %v2438
    %5564 = vmatprep.subr.bf16.mxu0 %v2455
    %5565 = vmatpush1.bf16.msra.mxu0 %v2454
    %5566 = vmatprep.subr.bf16.mxu0 %v2471
    %5567 = vmatpush1.bf16.msra.mxu0 %v2470
    %5568 = vmatprep.subr.bf16.mxu0 %v2487
    %5569 = vmatpush1.bf16.msra.mxu0 %v2486
    %5570 = vmatprep.mubr.bf16.mxu0 %v5203
    %5571 = vmatmul.mubr.bf16.gmra.mrb[0].mxu0 %v5202
    %v5572 = vpop.f32.mrb[0].mxu0
    %v5573 = vadd.f32 0.0, %v5572
    %v5574 = vpop.f32.mrb[0].mxu0
    %v5575 = vadd.f32 0.0, %v5574
    %v5576 = vpop.f32.mrb[0].mxu0
    %v5577 = vpop.f32.mrb[0].mxu0
    %5578 = vdwg.mxu0
    %5579 = vmatprep.subr.bf16.mxu0 %v2503
    %5580 = vmatpush1.bf16.msra.mxu0 %v2502
    %5581 = vmatprep.subr.bf16.mxu0 %v2519
    %5582 = vmatpush1.bf16.msra.mxu0 %v2518
    %5583 = vmatprep.subr.bf16.mxu0 %v2535
    %5584 = vmatpush1.bf16.msra.mxu0 %v2534
    %5585 = vmatprep.subr.bf16.mxu0 %v2551
    %5586 = vmatpush1.bf16.msra.mxu0 %v2550
    %5587 = vmatprep.subr.bf16.mxu0 %v2567
    %5588 = vmatpush1.bf16.msra.mxu0 %v2566
    %5589 = vmatprep.subr.bf16.mxu0 %v2583
    %5590 = vmatpush1.bf16.msra.mxu0 %v2582
    %5591 = vmatprep.subr.bf16.mxu0 %v2599
    %5592 = vmatpush1.bf16.msra.mxu0 %v2598
    %5593 = vmatprep.subr.bf16.mxu0 %v2615
    %5594 = vmatpush1.bf16.msra.mxu0 %v2614
    %5595 = vmatprep.subr.bf16.mxu0 %v2631
    %5596 = vmatpush1.bf16.msra.mxu0 %v2630
    %5597 = vmatprep.subr.bf16.mxu0 %v2647
    %5598 = vmatpush1.bf16.msra.mxu0 %v2646
    %5599 = vmatprep.subr.bf16.mxu0 %v2663
    %5600 = vmatpush1.bf16.msra.mxu0 %v2662
    %5601 = vmatprep.subr.bf16.mxu0 %v2679
    %5602 = vmatpush1.bf16.msra.mxu0 %v2678
    %5603 = vmatprep.subr.bf16.mxu0 %v2695
    %5604 = vmatpush1.bf16.msra.mxu0 %v2694
    %5605 = vmatprep.subr.bf16.mxu0 %v2711
    %5606 = vmatpush1.bf16.msra.mxu0 %v2710
    %5607 = vmatprep.subr.bf16.mxu0 %v2727
    %5608 = vmatpush1.bf16.msra.mxu0 %v2726
    %5609 = vmatprep.subr.bf16.mxu0 %v2743
    %5610 = vmatpush1.bf16.msra.mxu0 %v2742
    %5611 = vmatprep.mubr.bf16.mxu0 %v5205
    %5612 = vmatmul.mubr.bf16.gmra.mrb[0].mxu0 %v5204
    %v5613 = vpop.f32.mrb[0].mxu0
    %v5614 = vadd.f32 %v5573, %v5613
    %v5615 = vpop.f32.mrb[0].mxu0
    %v5616 = vadd.f32 %v5575, %v5615
    %v5617 = vpop.f32.mrb[0].mxu0
    %v5618 = vpop.f32.mrb[0].mxu0
    %5619 = vdwg.mxu0
    %5620 = vmatprep.subr.bf16.mxu0 %v2249
    %5621 = vmatpush1.bf16.msra.mxu0 %v2248
    %5622 = vmatprep.subr.bf16.mxu0 %v2265
    %5623 = vmatpush1.bf16.msra.mxu0 %v2264
    %5624 = vmatprep.subr.bf16.mxu0 %v2281
    %5625 = vmatpush1.bf16.msra.mxu0 %v2280
    %5626 = vmatprep.subr.bf16.mxu0 %v2297
    %5627 = vmatpush1.bf16.msra.mxu0 %v2296
    %5628 = vmatprep.subr.bf16.mxu0 %v2313
    %5629 = vmatpush1.bf16.msra.mxu0 %v2312
    %5630 = vmatprep.subr.bf16.mxu0 %v2329
    %5631 = vmatpush1.bf16.msra.mxu0 %v2328
    %5632 = vmatprep.subr.bf16.mxu0 %v2345
    %5633 = vmatpush1.bf16.msra.mxu0 %v2344
    %5634 = vmatprep.subr.bf16.mxu0 %v2361
    %5635 = vmatpush1.bf16.msra.mxu0 %v2360
    %5636 = vmatprep.subr.bf16.mxu0 %v2377
    %5637 = vmatpush1.bf16.msra.mxu0 %v2376
    %5638 = vmatprep.subr.bf16.mxu0 %v2393
    %5639 = vmatpush1.bf16.msra.mxu0 %v2392
    %5640 = vmatprep.subr.bf16.mxu0 %v2409
    %5641 = vmatpush1.bf16.msra.mxu0 %v2408
    %5642 = vmatprep.subr.bf16.mxu0 %v2425
    %5643 = vmatpush1.bf16.msra.mxu0 %v2424
    %5644 = vmatprep.subr.bf16.mxu0 %v2441
    %5645 = vmatpush1.bf16.msra.mxu0 %v2440
    %5646 = vmatprep.subr.bf16.mxu0 %v2457
    %5647 = vmatpush1.bf16.msra.mxu0 %v2456
    %5648 = vmatprep.subr.bf16.mxu0 %v2473
    %5649 = vmatpush1.bf16.msra.mxu0 %v2472
    %5650 = vmatprep.subr.bf16.mxu0 %v2489
    %5651 = vmatpush1.bf16.msra.mxu0 %v2488
    %5652 = vmatprep.mubr.bf16.mxu0 %v5203
    %5653 = vmatmul.mubr.bf16.gmra.mrb[0].mxu0 %v5202
    %v5654 = vpop.f32.mrb[0].mxu0
    %v5655 = vadd.f32 0.0, %v5654
    %v5656 = vpop.f32.mrb[0].mxu0
    %v5657 = vadd.f32 0.0, %v5656
    %v5658 = vpop.f32.mrb[0].mxu0
    %v5659 = vpop.f32.mrb[0].mxu0
    %5660 = vdwg.mxu0
    %5661 = vmatprep.subr.bf16.mxu0 %v2505
    %5662 = vmatpush1.bf16.msra.mxu0 %v2504
    %5663 = vmatprep.subr.bf16.mxu0 %v2521
    %5664 = vmatpush1.bf16.msra.mxu0 %v2520
    %5665 = vmatprep.subr.bf16.mxu0 %v2537
    %5666 = vmatpush1.bf16.msra.mxu0 %v2536
    %5667 = vmatprep.subr.bf16.mxu0 %v2553
    %5668 = vmatpush1.bf16.msra.mxu0 %v2552
    %5669 = vmatprep.subr.bf16.mxu0 %v2569
    %5670 = vmatpush1.bf16.msra.mxu0 %v2568
    %5671 = vmatprep.subr.bf16.mxu0 %v2585
    %5672 = vmatpush1.bf16.msra.mxu0 %v2584
    %5673 = vmatprep.subr.bf16.mxu0 %v2601
    %5674 = vmatpush1.bf16.msra.mxu0 %v2600
    %5675 = vmatprep.subr.bf16.mxu0 %v2617
    %5676 = vmatpush1.bf16.msra.mxu0 %v2616
    %5677 = vmatprep.subr.bf16.mxu0 %v2633
    %5678 = vmatpush1.bf16.msra.mxu0 %v2632
    %5679 = vmatprep.subr.bf16.mxu0 %v2649
    %5680 = vmatpush1.bf16.msra.mxu0 %v2648
    %5681 = vmatprep.subr.bf16.mxu0 %v2665
    %5682 = vmatpush1.bf16.msra.mxu0 %v2664
    %5683 = vmatprep.subr.bf16.mxu0 %v2681
    %5684 = vmatpush1.bf16.msra.mxu0 %v2680
    %5685 = vmatprep.subr.bf16.mxu0 %v2697
    %5686 = vmatpush1.bf16.msra.mxu0 %v2696
    %5687 = vmatprep.subr.bf16.mxu0 %v2713
    %5688 = vmatpush1.bf16.msra.mxu0 %v2712
    %5689 = vmatprep.subr.bf16.mxu0 %v2729
    %5690 = vmatpush1.bf16.msra.mxu0 %v2728
    %5691 = vmatprep.subr.bf16.mxu0 %v2745
    %5692 = vmatpush1.bf16.msra.mxu0 %v2744
    %5693 = vmatprep.mubr.bf16.mxu0 %v5205
    %5694 = vmatmul.mubr.bf16.gmra.mrb[0].mxu0 %v5204
    %v5695 = vpop.f32.mrb[0].mxu0
    %v5696 = vadd.f32 %v5655, %v5695
    %v5697 = vpop.f32.mrb[0].mxu0
    %v5698 = vadd.f32 %v5657, %v5697
    %v5699 = vpop.f32.mrb[0].mxu0
    %v5700 = vpop.f32.mrb[0].mxu0
    %5701 = vdwg.mxu0
    %5702 = vmatprep.subr.bf16.mxu0 %v2251
    %5703 = vmatpush1.bf16.msra.mxu0 %v2250
    %5704 = vmatprep.subr.bf16.mxu0 %v2267
    %5705 = vmatpush1.bf16.msra.mxu0 %v2266
    %5706 = vmatprep.subr.bf16.mxu0 %v2283
    %5707 = vmatpush1.bf16.msra.mxu0 %v2282
    %5708 = vmatprep.subr.bf16.mxu0 %v2299
    %5709 = vmatpush1.bf16.msra.mxu0 %v2298
    %5710 = vmatprep.subr.bf16.mxu0 %v2315
    %5711 = vmatpush1.bf16.msra.mxu0 %v2314
    %5712 = vmatprep.subr.bf16.mxu0 %v2331
    %5713 = vmatpush1.bf16.msra.mxu0 %v2330
    %5714 = vmatprep.subr.bf16.mxu0 %v2347
    %5715 = vmatpush1.bf16.msra.mxu0 %v2346
    %5716 = vmatprep.subr.bf16.mxu0 %v2363
    %5717 = vmatpush1.bf16.msra.mxu0 %v2362
    %5718 = vmatprep.subr.bf16.mxu0 %v2379
    %5719 = vmatpush1.bf16.msra.mxu0 %v2378
    %5720 = vmatprep.subr.bf16.mxu0 %v2395
    %5721 = vmatpush1.bf16.msra.mxu0 %v2394
    %5722 = vmatprep.subr.bf16.mxu0 %v2411
    %5723 = vmatpush1.bf16.msra.mxu0 %v2410
    %5724 = vmatprep.subr.bf16.mxu0 %v2427
    %5725 = vmatpush1.bf16.msra.mxu0 %v2426
    %5726 = vmatprep.subr.bf16.mxu0 %v2443
    %5727 = vmatpush1.bf16.msra.mxu0 %v2442
    %5728 = vmatprep.subr.bf16.mxu0 %v2459
    %5729 = vmatpush1.bf16.msra.mxu0 %v2458
    %5730 = vmatprep.subr.bf16.mxu0 %v2475
    %5731 = vmatpush1.bf16.msra.mxu0 %v2474
    %5732 = vmatprep.subr.bf16.mxu0 %v2491
    %5733 = vmatpush1.bf16.msra.mxu0 %v2490
    %5734 = vmatprep.mubr.bf16.mxu0 %v5203
    %5735 = vmatmul.mubr.bf16.gmra.mrb[0].mxu0 %v5202
    %v5736 = vpop.f32.mrb[0].mxu0
    %v5737 = vadd.f32 0.0, %v5736
    %v5738 = vpop.f32.mrb[0].mxu0
    %v5739 = vadd.f32 0.0, %v5738
    %v5740 = vpop.f32.mrb[0].mxu0
    %v5741 = vpop.f32.mrb[0].mxu0
    %5742 = vdwg.mxu0
    %5743 = vmatprep.subr.bf16.mxu0 %v2507
    %5744 = vmatpush1.bf16.msra.mxu0 %v2506
    %5745 = vmatprep.subr.bf16.mxu0 %v2523
    %5746 = vmatpush1.bf16.msra.mxu0 %v2522
    %5747 = vmatprep.subr.bf16.mxu0 %v2539
    %5748 = vmatpush1.bf16.msra.mxu0 %v2538
    %5749 = vmatprep.subr.bf16.mxu0 %v2555
    %5750 = vmatpush1.bf16.msra.mxu0 %v2554
    %5751 = vmatprep.subr.bf16.mxu0 %v2571
    %5752 = vmatpush1.bf16.msra.mxu0 %v2570
    %5753 = vmatprep.subr.bf16.mxu0 %v2587
    %5754 = vmatpush1.bf16.msra.mxu0 %v2586
    %5755 = vmatprep.subr.bf16.mxu0 %v2603
    %5756 = vmatpush1.bf16.msra.mxu0 %v2602
    %5757 = vmatprep.subr.bf16.mxu0 %v2619
    %5758 = vmatpush1.bf16.msra.mxu0 %v2618
    %5759 = vmatprep.subr.bf16.mxu0 %v2635
    %5760 = vmatpush1.bf16.msra.mxu0 %v2634
    %5761 = vmatprep.subr.bf16.mxu0 %v2651
    %5762 = vmatpush1.bf16.msra.mxu0 %v2650
    %5763 = vmatprep.subr.bf16.mxu0 %v2667
    %5764 = vmatpush1.bf16.msra.mxu0 %v2666
    %5765 = vmatprep.subr.bf16.mxu0 %v2683
    %5766 = vmatpush1.bf16.msra.mxu0 %v2682
    %5767 = vmatprep.subr.bf16.mxu0 %v2699
    %5768 = vmatpush1.bf16.msra.mxu0 %v2698
    %5769 = vmatprep.subr.bf16.mxu0 %v2715
    %5770 = vmatpush1.bf16.msra.mxu0 %v2714
    %5771 = vmatprep.subr.bf16.mxu0 %v2731
    %5772 = vmatpush1.bf16.msra.mxu0 %v2730
    %5773 = vmatprep.subr.bf16.mxu0 %v2747
    %5774 = vmatpush1.bf16.msra.mxu0 %v2746
    %5775 = vmatprep.mubr.bf16.mxu0 %v5205
    %5776 = vmatmul.mubr.bf16.gmra.mrb[0].mxu0 %v5204
    %v5777 = vpop.f32.mrb[0].mxu0
    %v5778 = vadd.f32 %v5737, %v5777
    %v5779 = vpop.f32.mrb[0].mxu0
    %v5780 = vadd.f32 %v5739, %v5779
    %v5781 = vpop.f32.mrb[0].mxu0
    %v5782 = vpop.f32.mrb[0].mxu0
    %5783 = vdwg.mxu0
    %5784 = vmatprep.subr.bf16.mxu0 %v2253
    %5785 = vmatpush1.bf16.msra.mxu0 %v2252
    %5786 = vmatprep.subr.bf16.mxu0 %v2269
    %5787 = vmatpush1.bf16.msra.mxu0 %v2268
    %5788 = vmatprep.subr.bf16.mxu0 %v2285
    %5789 = vmatpush1.bf16.msra.mxu0 %v2284
    %5790 = vmatprep.subr.bf16.mxu0 %v2301
    %5791 = vmatpush1.bf16.msra.mxu0 %v2300
    %5792 = vmatprep.subr.bf16.mxu0 %v2317
    %5793 = vmatpush1.bf16.msra.mxu0 %v2316
    %5794 = vmatprep.subr.bf16.mxu0 %v2333
    %5795 = vmatpush1.bf16.msra.mxu0 %v2332
    %5796 = vmatprep.subr.bf16.mxu0 %v2349
    %5797 = vmatpush1.bf16.msra.mxu0 %v2348
    %5798 = vmatprep.subr.bf16.mxu0 %v2365
    %5799 = vmatpush1.bf16.msra.mxu0 %v2364
    %5800 = vmatprep.subr.bf16.mxu0 %v2381
    %5801 = vmatpush1.bf16.msra.mxu0 %v2380
    %5802 = vmatprep.subr.bf16.mxu0 %v2397
    %5803 = vmatpush1.bf16.msra.mxu0 %v2396
    %5804 = vmatprep.subr.bf16.mxu0 %v2413
    %5805 = vmatpush1.bf16.msra.mxu0 %v2412
    %5806 = vmatprep.subr.bf16.mxu0 %v2429
    %5807 = vmatpush1.bf16.msra.mxu0 %v2428
    %5808 = vmatprep.subr.bf16.mxu0 %v2445
    %5809 = vmatpush1.bf16.msra.mxu0 %v2444
    %5810 = vmatprep.subr.bf16.mxu0 %v2461
    %5811 = vmatpush1.bf16.msra.mxu0 %v2460
    %5812 = vmatprep.subr.bf16.mxu0 %v2477
    %5813 = vmatpush1.bf16.msra.mxu0 %v2476
    %5814 = vmatprep.subr.bf16.mxu0 %v2493
    %5815 = vmatpush1.bf16.msra.mxu0 %v2492
    %5816 = vmatprep.mubr.bf16.mxu0 %v5203
    %5817 = vmatmul.mubr.bf16.gmra.mrb[0].mxu0 %v5202
    %v5818 = vpop.f32.mrb[0].mxu0
    %v5819 = vadd.f32 0.0, %v5818
    %v5820 = vpop.f32.mrb[0].mxu0
    %v5821 = vadd.f32 0.0, %v5820
    %v5822 = vpop.f32.mrb[0].mxu0
    %v5823 = vpop.f32.mrb[0].mxu0
    %5824 = vdwg.mxu0
    %5825 = vmatprep.subr.bf16.mxu0 %v2509
    %5826 = vmatpush1.bf16.msra.mxu0 %v2508
    %5827 = vmatprep.subr.bf16.mxu0 %v2525
    %5828 = vmatpush1.bf16.msra.mxu0 %v2524
    %5829 = vmatprep.subr.bf16.mxu0 %v2541
    %5830 = vmatpush1.bf16.msra.mxu0 %v2540
    %5831 = vmatprep.subr.bf16.mxu0 %v2557
    %5832 = vmatpush1.bf16.msra.mxu0 %v2556
    %5833 = vmatprep.subr.bf16.mxu0 %v2573
    %5834 = vmatpush1.bf16.msra.mxu0 %v2572
    %5835 = vmatprep.subr.bf16.mxu0 %v2589
    %5836 = vmatpush1.bf16.msra.mxu0 %v2588
    %5837 = vmatprep.subr.bf16.mxu0 %v2605
    %5838 = vmatpush1.bf16.msra.mxu0 %v2604
    %5839 = vmatprep.subr.bf16.mxu0 %v2621
    %5840 = vmatpush1.bf16.msra.mxu0 %v2620
    %5841 = vmatprep.subr.bf16.mxu0 %v2637
    %5842 = vmatpush1.bf16.msra.mxu0 %v2636
    %5843 = vmatprep.subr.bf16.mxu0 %v2653
    %5844 = vmatpush1.bf16.msra.mxu0 %v2652
    %5845 = vmatprep.subr.bf16.mxu0 %v2669
    %5846 = vmatpush1.bf16.msra.mxu0 %v2668
    %5847 = vmatprep.subr.bf16.mxu0 %v2685
    %5848 = vmatpush1.bf16.msra.mxu0 %v2684
    %5849 = vmatprep.subr.bf16.mxu0 %v2701
    %5850 = vmatpush1.bf16.msra.mxu0 %v2700
    %5851 = vmatprep.subr.bf16.mxu0 %v2717
    %5852 = vmatpush1.bf16.msra.mxu0 %v2716
    %5853 = vmatprep.subr.bf16.mxu0 %v2733
    %5854 = vmatpush1.bf16.msra.mxu0 %v2732
    %5855 = vmatprep.subr.bf16.mxu0 %v2749
    %5856 = vmatpush1.bf16.msra.mxu0 %v2748
    %5857 = vmatprep.mubr.bf16.mxu0 %v5205
    %5858 = vmatmul.mubr.bf16.gmra.mrb[0].mxu0 %v5204
    %v5859 = vpop.f32.mrb[0].mxu0
    %v5860 = vadd.f32 %v5819, %v5859
    %v5861 = vpop.f32.mrb[0].mxu0
    %v5862 = vadd.f32 %v5821, %v5861
    %v5863 = vpop.f32.mrb[0].mxu0
    %v5864 = vpop.f32.mrb[0].mxu0
    %5865 = vdwg.mxu0
    %v5882 = vrot.slane %v5286, 2
    %v5883 = vrot.slane %v5288, 2
    %v5884 = vrot.slane %v5368, 2
    %v5885 = vrot.slane %v5370, 2
    %v5886 = vrot.slane %v5450, 2
    %v5887 = vrot.slane %v5452, 2
    %v5888 = vrot.slane %v5532, 2
    %v5889 = vrot.slane %v5534, 2
    %v5890 = vrot.slane %v5614, 2
    %v5891 = vrot.slane %v5616, 2
    %v5892 = vrot.slane %v5696, 2
    %v5893 = vrot.slane %v5698, 2
    %v5894 = vrot.slane %v5778, 2
    %v5895 = vrot.slane %v5780, 2
    %v5896 = vrot.slane %v5860, 2
    %v5897 = vrot.slane %v5862, 2
    %v5914 = vadd.f32 %v787, %v5882
    %v5915 = vadd.f32 %v789, %v5883
    %v5916 = vadd.f32 %v830, %v5884
    %v5917 = vadd.f32 %v832, %v5885
    %v5918 = vadd.f32 %v873, %v5886
    %v5919 = vadd.f32 %v875, %v5887
    %v5920 = vadd.f32 %v916, %v5888
    %v5921 = vadd.f32 %v918, %v5889
    %v5922 = vadd.f32 %v959, %v5890
    %v5923 = vadd.f32 %v961, %v5891
    %v5924 = vadd.f32 %v1002, %v5892
    %v5925 = vadd.f32 %v1004, %v5893
    %v5926 = vadd.f32 %v1045, %v5894
    %v5927 = vadd.f32 %v1047, %v5895
    %v5928 = vadd.f32 %v1088, %v5896
    %v5929 = vadd.f32 %v1090, %v5897
    %v5930 = vxor.u32 %v5914, 2147483648
    %v5931 = vxor.u32 %v5915, 2147483648
    %v5932 = vxor.u32 %v5916, 2147483648
    %v5933 = vxor.u32 %v5917, 2147483648
    %v5934 = vmul.f32 %v5930, 1.442695
    %v5935 = vpow.pop %v5934
    %v5936 = vmul.f32 %v5931, 1.442695
    %v5937 = vpow.pop %v5936
    %v5938 = vmul.f32 %v5932, 1.442695
    %v5939 = vpow.pop %v5938
    %v5940 = vmul.f32 %v5933, 1.442695
    %v5941 = vpow.pop %v5940
    %v5942 = vadd.f32 %v5935, 1.0
    %v5943 = vadd.f32 %v5937, 1.0
    %v5944 = vadd.f32 %v5939, 1.0
    %v5945 = vadd.f32 %v5941, 1.0
    %v5946 = vrcp.pop %v5942
    %v5947 = vmul.f32 1.0, %v5946
    %v5948 = vrcp.pop %v5943
    %v5949 = vmul.f32 1.0, %v5948
    %v5950 = vrcp.pop %v5944
    %v5951 = vmul.f32 1.0, %v5950
    %v5952 = vrcp.pop %v5945
    %v5953 = vmul.f32 1.0, %v5952
    %v5954 = vxor.u32 %v5918, 2147483648
    %v5955 = vxor.u32 %v5919, 2147483648
    %v5956 = vxor.u32 %v5920, 2147483648
    %v5957 = vxor.u32 %v5921, 2147483648
    %v5958 = vmul.f32 %v5954, 1.442695
    %v5959 = vpow.pop %v5958
    %v5960 = vmul.f32 %v5955, 1.442695
    %v5961 = vpow.pop %v5960
    %v5962 = vmul.f32 %v5956, 1.442695
    %v5963 = vpow.pop %v5962
    %v5964 = vmul.f32 %v5957, 1.442695
    %v5965 = vpow.pop %v5964
    %v5966 = vadd.f32 %v5959, 1.0
    %v5967 = vadd.f32 %v5961, 1.0
    %v5968 = vadd.f32 %v5963, 1.0
    %v5969 = vadd.f32 %v5965, 1.0
    %v5970 = vrcp.pop %v5966
    %v5971 = vmul.f32 1.0, %v5970
    %v5972 = vrcp.pop %v5967
    %v5973 = vmul.f32 1.0, %v5972
    %v5974 = vrcp.pop %v5968
    %v5975 = vmul.f32 1.0, %v5974
    %v5976 = vrcp.pop %v5969
    %v5977 = vmul.f32 1.0, %v5976
    %v5978 = vtanh.pop %v5922
    %v5979 = vtanh.pop %v5923
    %v5980 = vtanh.pop %v5924
    %v5981 = vtanh.pop %v5925
    %v5982 = vxor.u32 %v5926, 2147483648
    %v5983 = vxor.u32 %v5927, 2147483648
    %v5984 = vxor.u32 %v5928, 2147483648
    %v5985 = vxor.u32 %v5929, 2147483648
    %v5986 = vmul.f32 %v5982, 1.442695
    %v5987 = vpow.pop %v5986
    %v5988 = vmul.f32 %v5983, 1.442695
    %v5989 = vpow.pop %v5988
    %v5990 = vmul.f32 %v5984, 1.442695
    %v5991 = vpow.pop %v5990
    %v5992 = vmul.f32 %v5985, 1.442695
    %v5993 = vpow.pop %v5992
    %v5994 = vadd.f32 %v5987, 1.0
    %v5995 = vadd.f32 %v5989, 1.0
    %v5996 = vadd.f32 %v5991, 1.0
    %v5997 = vadd.f32 %v5993, 1.0
    %v5998 = vrcp.pop %v5994
    %v5999 = vmul.f32 1.0, %v5998
    %v6000 = vrcp.pop %v5995
    %v6001 = vmul.f32 1.0, %v6000
    %v6002 = vrcp.pop %v5996
    %v6003 = vmul.f32 1.0, %v6002
    %v6004 = vrcp.pop %v5997
    %v6005 = vmul.f32 1.0, %v6004
    %v6010 = vrot.slane %v5182, 6
    %v6011 = vrot.slane %v5183, 6
    %v6012 = vrot.slane %v5184, 6
    %v6013 = vrot.slane %v5185, 6
    %v6018 = vmul.f32 %v5971, %v6010
    %v6019 = vmul.f32 %v5973, %v6011
    %v6020 = vmul.f32 %v5975, %v6012
    %v6021 = vmul.f32 %v5977, %v6013
    %v6022 = vmul.f32 %v5947, %v5978
    %v6023 = vmul.f32 %v5949, %v5979
    %v6024 = vmul.f32 %v5951, %v5980
    %v6025 = vmul.f32 %v5953, %v5981
    %v6026 = vadd.f32 %v6018, %v6022
    %v6027 = vadd.f32 %v6019, %v6023
    %v6028 = vadd.f32 %v6020, %v6024
    %v6029 = vadd.f32 %v6021, %v6025
    %v6030 = vtanh.pop %v6026
    %v6031 = vtanh.pop %v6027
    %v6032 = vtanh.pop %v6028
    %v6033 = vtanh.pop %v6029
    %v6034 = vmul.f32 %v5999, %v6030
    %v6035 = vmul.f32 %v6001, %v6031
    %v6036 = vmul.f32 %v6003, %v6032
    %v6037 = vmul.f32 %v6005, %v6033
    %v6038 = vpack.c.bf16 %v6034, %v6034
    %v6039 = vpack.c.bf16 %v6035, %v6035
    %v6040 = vpack.c.bf16 %v6036, %v6036
    %v6041 = vpack.c.bf16 %v6037, %v6037
    %v6046 = vrot.slane %v6038, 3
    %v6047 = vrot.slane %v6039, 3
    %v6048 = vrot.slane %v6040, 3
    %v6049 = vrot.slane %v6041, 3
    %6054 = vmatprep.subr.bf16.mxu0 %v2239
    %6055 = vmatpush1.bf16.msra.mxu0 %v2238
    %6056 = vmatprep.subr.bf16.mxu0 %v2255
    %6057 = vmatpush1.bf16.msra.mxu0 %v2254
    %6058 = vmatprep.subr.bf16.mxu0 %v2271
    %6059 = vmatpush1.bf16.msra.mxu0 %v2270
    %6060 = vmatprep.subr.bf16.mxu0 %v2287
    %6061 = vmatpush1.bf16.msra.mxu0 %v2286
    %6062 = vmatprep.subr.bf16.mxu0 %v2303
    %6063 = vmatpush1.bf16.msra.mxu0 %v2302
    %6064 = vmatprep.subr.bf16.mxu0 %v2319
    %6065 = vmatpush1.bf16.msra.mxu0 %v2318
    %6066 = vmatprep.subr.bf16.mxu0 %v2335
    %6067 = vmatpush1.bf16.msra.mxu0 %v2334
    %6068 = vmatprep.subr.bf16.mxu0 %v2351
    %6069 = vmatpush1.bf16.msra.mxu0 %v2350
    %6070 = vmatprep.subr.bf16.mxu0 %v2367
    %6071 = vmatpush1.bf16.msra.mxu0 %v2366
    %6072 = vmatprep.subr.bf16.mxu0 %v2383
    %6073 = vmatpush1.bf16.msra.mxu0 %v2382
    %6074 = vmatprep.subr.bf16.mxu0 %v2399
    %6075 = vmatpush1.bf16.msra.mxu0 %v2398
    %6076 = vmatprep.subr.bf16.mxu0 %v2415
    %6077 = vmatpush1.bf16.msra.mxu0 %v2414
    %6078 = vmatprep.subr.bf16.mxu0 %v2431
    %6079 = vmatpush1.bf16.msra.mxu0 %v2430
    %6080 = vmatprep.subr.bf16.mxu0 %v2447
    %6081 = vmatpush1.bf16.msra.mxu0 %v2446
    %6082 = vmatprep.subr.bf16.mxu0 %v2463
    %6083 = vmatpush1.bf16.msra.mxu0 %v2462
    %6084 = vmatprep.subr.bf16.mxu0 %v2479
    %6085 = vmatpush1.bf16.msra.mxu0 %v2478
    %6086 = vmatprep.mubr.bf16.mxu0 %v6047
    %6087 = vmatmul.mubr.bf16.gmra.mrb[0].mxu0 %v6046
    %v6088 = vpop.f32.mrb[0].mxu0
    %v6089 = vadd.f32 0.0, %v6088
    %v6090 = vpop.f32.mrb[0].mxu0
    %v6091 = vadd.f32 0.0, %v6090
    %v6092 = vpop.f32.mrb[0].mxu0
    %v6093 = vpop.f32.mrb[0].mxu0
    %6094 = vdwg.mxu0
    %6095 = vmatprep.subr.bf16.mxu0 %v2495
    %6096 = vmatpush1.bf16.msra.mxu0 %v2494
    %6097 = vmatprep.subr.bf16.mxu0 %v2511
    %6098 = vmatpush1.bf16.msra.mxu0 %v2510
    %6099 = vmatprep.subr.bf16.mxu0 %v2527
    %6100 = vmatpush1.bf16.msra.mxu0 %v2526
    %6101 = vmatprep.subr.bf16.mxu0 %v2543
    %6102 = vmatpush1.bf16.msra.mxu0 %v2542
    %6103 = vmatprep.subr.bf16.mxu0 %v2559
    %6104 = vmatpush1.bf16.msra.mxu0 %v2558
    %6105 = vmatprep.subr.bf16.mxu0 %v2575
    %6106 = vmatpush1.bf16.msra.mxu0 %v2574
    %6107 = vmatprep.subr.bf16.mxu0 %v2591
    %6108 = vmatpush1.bf16.msra.mxu0 %v2590
    %6109 = vmatprep.subr.bf16.mxu0 %v2607
    %6110 = vmatpush1.bf16.msra.mxu0 %v2606
    %6111 = vmatprep.subr.bf16.mxu0 %v2623
    %6112 = vmatpush1.bf16.msra.mxu0 %v2622
    %6113 = vmatprep.subr.bf16.mxu0 %v2639
    %6114 = vmatpush1.bf16.msra.mxu0 %v2638
    %6115 = vmatprep.subr.bf16.mxu0 %v2655
    %6116 = vmatpush1.bf16.msra.mxu0 %v2654
    %6117 = vmatprep.subr.bf16.mxu0 %v2671
    %6118 = vmatpush1.bf16.msra.mxu0 %v2670
    %6119 = vmatprep.subr.bf16.mxu0 %v2687
    %6120 = vmatpush1.bf16.msra.mxu0 %v2686
    %6121 = vmatprep.subr.bf16.mxu0 %v2703
    %6122 = vmatpush1.bf16.msra.mxu0 %v2702
    %6123 = vmatprep.subr.bf16.mxu0 %v2719
    %6124 = vmatpush1.bf16.msra.mxu0 %v2718
    %6125 = vmatprep.subr.bf16.mxu0 %v2735
    %6126 = vmatpush1.bf16.msra.mxu0 %v2734
    %6127 = vmatprep.mubr.bf16.mxu0 %v6049
    %6128 = vmatmul.mubr.bf16.gmra.mrb[0].mxu0 %v6048
    %v6129 = vpop.f32.mrb[0].mxu0
    %v6130 = vadd.f32 %v6089, %v6129
    %v6131 = vpop.f32.mrb[0].mxu0
    %v6132 = vadd.f32 %v6091, %v6131
    %v6133 = vpop.f32.mrb[0].mxu0
    %v6134 = vpop.f32.mrb[0].mxu0
    %6135 = vdwg.mxu0
    %6136 = vmatprep.subr.bf16.mxu0 %v2241
    %6137 = vmatpush1.bf16.msra.mxu0 %v2240
    %6138 = vmatprep.subr.bf16.mxu0 %v2257
    %6139 = vmatpush1.bf16.msra.mxu0 %v2256
    %6140 = vmatprep.subr.bf16.mxu0 %v2273
    %6141 = vmatpush1.bf16.msra.mxu0 %v2272
    %6142 = vmatprep.subr.bf16.mxu0 %v2289
    %6143 = vmatpush1.bf16.msra.mxu0 %v2288
    %6144 = vmatprep.subr.bf16.mxu0 %v2305
    %6145 = vmatpush1.bf16.msra.mxu0 %v2304
    %6146 = vmatprep.subr.bf16.mxu0 %v2321
    %6147 = vmatpush1.bf16.msra.mxu0 %v2320
    %6148 = vmatprep.subr.bf16.mxu0 %v2337
    %6149 = vmatpush1.bf16.msra.mxu0 %v2336
    %6150 = vmatprep.subr.bf16.mxu0 %v2353
    %6151 = vmatpush1.bf16.msra.mxu0 %v2352
    %6152 = vmatprep.subr.bf16.mxu0 %v2369
    %6153 = vmatpush1.bf16.msra.mxu0 %v2368
    %6154 = vmatprep.subr.bf16.mxu0 %v2385
    %6155 = vmatpush1.bf16.msra.mxu0 %v2384
    %6156 = vmatprep.subr.bf16.mxu0 %v2401
    %6157 = vmatpush1.bf16.msra.mxu0 %v2400
    %6158 = vmatprep.subr.bf16.mxu0 %v2417
    %6159 = vmatpush1.bf16.msra.mxu0 %v2416
    %6160 = vmatprep.subr.bf16.mxu0 %v2433
    %6161 = vmatpush1.bf16.msra.mxu0 %v2432
    %6162 = vmatprep.subr.bf16.mxu0 %v2449
    %6163 = vmatpush1.bf16.msra.mxu0 %v2448
    %6164 = vmatprep.subr.bf16.mxu0 %v2465
    %6165 = vmatpush1.bf16.msra.mxu0 %v2464
    %6166 = vmatprep.subr.bf16.mxu0 %v2481
    %6167 = vmatpush1.bf16.msra.mxu0 %v2480
    %6168 = vmatprep.mubr.bf16.mxu0 %v6047
    %6169 = vmatmul.mubr.bf16.gmra.mrb[0].mxu0 %v6046
    %v6170 = vpop.f32.mrb[0].mxu0
    %v6171 = vadd.f32 0.0, %v6170
    %v6172 = vpop.f32.mrb[0].mxu0
    %v6173 = vadd.f32 0.0, %v6172
    %v6174 = vpop.f32.mrb[0].mxu0
    %v6175 = vpop.f32.mrb[0].mxu0
    %6176 = vdwg.mxu0
    %6177 = vmatprep.subr.bf16.mxu0 %v2497
    %6178 = vmatpush1.bf16.msra.mxu0 %v2496
    %6179 = vmatprep.subr.bf16.mxu0 %v2513
    %6180 = vmatpush1.bf16.msra.mxu0 %v2512
    %6181 = vmatprep.subr.bf16.mxu0 %v2529
    %6182 = vmatpush1.bf16.msra.mxu0 %v2528
    %6183 = vmatprep.subr.bf16.mxu0 %v2545
    %6184 = vmatpush1.bf16.msra.mxu0 %v2544
    %6185 = vmatprep.subr.bf16.mxu0 %v2561
    %6186 = vmatpush1.bf16.msra.mxu0 %v2560
    %6187 = vmatprep.subr.bf16.mxu0 %v2577
    %6188 = vmatpush1.bf16.msra.mxu0 %v2576
    %6189 = vmatprep.subr.bf16.mxu0 %v2593
    %6190 = vmatpush1.bf16.msra.mxu0 %v2592
    %6191 = vmatprep.subr.bf16.mxu0 %v2609
    %6192 = vmatpush1.bf16.msra.mxu0 %v2608
    %6193 = vmatprep.subr.bf16.mxu0 %v2625
    %6194 = vmatpush1.bf16.msra.mxu0 %v2624
    %6195 = vmatprep.subr.bf16.mxu0 %v2641
    %6196 = vmatpush1.bf16.msra.mxu0 %v2640
    %6197 = vmatprep.subr.bf16.mxu0 %v2657
    %6198 = vmatpush1.bf16.msra.mxu0 %v2656
    %6199 = vmatprep.subr.bf16.mxu0 %v2673
    %6200 = vmatpush1.bf16.msra.mxu0 %v2672
    %6201 = vmatprep.subr.bf16.mxu0 %v2689
    %6202 = vmatpush1.bf16.msra.mxu0 %v2688
    %6203 = vmatprep.subr.bf16.mxu0 %v2705
    %6204 = vmatpush1.bf16.msra.mxu0 %v2704
    %6205 = vmatprep.subr.bf16.mxu0 %v2721
    %6206 = vmatpush1.bf16.msra.mxu0 %v2720
    %6207 = vmatprep.subr.bf16.mxu0 %v2737
    %6208 = vmatpush1.bf16.msra.mxu0 %v2736
    %6209 = vmatprep.mubr.bf16.mxu0 %v6049
    %6210 = vmatmul.mubr.bf16.gmra.mrb[0].mxu0 %v6048
    %v6211 = vpop.f32.mrb[0].mxu0
    %v6212 = vadd.f32 %v6171, %v6211
    %v6213 = vpop.f32.mrb[0].mxu0
    %v6214 = vadd.f32 %v6173, %v6213
    %v6215 = vpop.f32.mrb[0].mxu0
    %v6216 = vpop.f32.mrb[0].mxu0
    %6217 = vdwg.mxu0
    %6218 = vmatprep.subr.bf16.mxu0 %v2243
    %6219 = vmatpush1.bf16.msra.mxu0 %v2242
    %6220 = vmatprep.subr.bf16.mxu0 %v2259
    %6221 = vmatpush1.bf16.msra.mxu0 %v2258
    %6222 = vmatprep.subr.bf16.mxu0 %v2275
    %6223 = vmatpush1.bf16.msra.mxu0 %v2274
    %6224 = vmatprep.subr.bf16.mxu0 %v2291
    %6225 = vmatpush1.bf16.msra.mxu0 %v2290
    %6226 = vmatprep.subr.bf16.mxu0 %v2307
    %6227 = vmatpush1.bf16.msra.mxu0 %v2306
    %6228 = vmatprep.subr.bf16.mxu0 %v2323
    %6229 = vmatpush1.bf16.msra.mxu0 %v2322
    %6230 = vmatprep.subr.bf16.mxu0 %v2339
    %6231 = vmatpush1.bf16.msra.mxu0 %v2338
    %6232 = vmatprep.subr.bf16.mxu0 %v2355
    %6233 = vmatpush1.bf16.msra.mxu0 %v2354
    %6234 = vmatprep.subr.bf16.mxu0 %v2371
    %6235 = vmatpush1.bf16.msra.mxu0 %v2370
    %6236 = vmatprep.subr.bf16.mxu0 %v2387
    %6237 = vmatpush1.bf16.msra.mxu0 %v2386
    %6238 = vmatprep.subr.bf16.mxu0 %v2403
    %6239 = vmatpush1.bf16.msra.mxu0 %v2402
    %6240 = vmatprep.subr.bf16.mxu0 %v2419
    %6241 = vmatpush1.bf16.msra.mxu0 %v2418
    %6242 = vmatprep.subr.bf16.mxu0 %v2435
    %6243 = vmatpush1.bf16.msra.mxu0 %v2434
    %6244 = vmatprep.subr.bf16.mxu0 %v2451
    %6245 = vmatpush1.bf16.msra.mxu0 %v2450
    %6246 = vmatprep.subr.bf16.mxu0 %v2467
    %6247 = vmatpush1.bf16.msra.mxu0 %v2466
    %6248 = vmatprep.subr.bf16.mxu0 %v2483
    %6249 = vmatpush1.bf16.msra.mxu0 %v2482
    %6250 = vmatprep.mubr.bf16.mxu0 %v6047
    %6251 = vmatmul.mubr.bf16.gmra.mrb[0].mxu0 %v6046
    %v6252 = vpop.f32.mrb[0].mxu0
    %v6253 = vadd.f32 0.0, %v6252
    %v6254 = vpop.f32.mrb[0].mxu0
    %v6255 = vadd.f32 0.0, %v6254
    %v6256 = vpop.f32.mrb[0].mxu0
    %v6257 = vpop.f32.mrb[0].mxu0
    %6258 = vdwg.mxu0
    %6259 = vmatprep.subr.bf16.mxu0 %v2499
    %6260 = vmatpush1.bf16.msra.mxu0 %v2498
    %6261 = vmatprep.subr.bf16.mxu0 %v2515
    %6262 = vmatpush1.bf16.msra.mxu0 %v2514
    %6263 = vmatprep.subr.bf16.mxu0 %v2531
    %6264 = vmatpush1.bf16.msra.mxu0 %v2530
    %6265 = vmatprep.subr.bf16.mxu0 %v2547
    %6266 = vmatpush1.bf16.msra.mxu0 %v2546
    %6267 = vmatprep.subr.bf16.mxu0 %v2563
    %6268 = vmatpush1.bf16.msra.mxu0 %v2562
    %6269 = vmatprep.subr.bf16.mxu0 %v2579
    %6270 = vmatpush1.bf16.msra.mxu0 %v2578
    %6271 = vmatprep.subr.bf16.mxu0 %v2595
    %6272 = vmatpush1.bf16.msra.mxu0 %v2594
    %6273 = vmatprep.subr.bf16.mxu0 %v2611
    %6274 = vmatpush1.bf16.msra.mxu0 %v2610
    %6275 = vmatprep.subr.bf16.mxu0 %v2627
    %6276 = vmatpush1.bf16.msra.mxu0 %v2626
    %6277 = vmatprep.subr.bf16.mxu0 %v2643
    %6278 = vmatpush1.bf16.msra.mxu0 %v2642
    %6279 = vmatprep.subr.bf16.mxu0 %v2659
    %6280 = vmatpush1.bf16.msra.mxu0 %v2658
    %6281 = vmatprep.subr.bf16.mxu0 %v2675
    %6282 = vmatpush1.bf16.msra.mxu0 %v2674
    %6283 = vmatprep.subr.bf16.mxu0 %v2691
    %6284 = vmatpush1.bf16.msra.mxu0 %v2690
    %6285 = vmatprep.subr.bf16.mxu0 %v2707
    %6286 = vmatpush1.bf16.msra.mxu0 %v2706
    %6287 = vmatprep.subr.bf16.mxu0 %v2723
    %6288 = vmatpush1.bf16.msra.mxu0 %v2722
    %6289 = vmatprep.subr.bf16.mxu0 %v2739
    %6290 = vmatpush1.bf16.msra.mxu0 %v2738
    %6291 = vmatprep.mubr.bf16.mxu0 %v6049
    %6292 = vmatmul.mubr.bf16.gmra.mrb[0].mxu0 %v6048
    %v6293 = vpop.f32.mrb[0].mxu0
    %v6294 = vadd.f32 %v6253, %v6293
    %v6295 = vpop.f32.mrb[0].mxu0
    %v6296 = vadd.f32 %v6255, %v6295
    %v6297 = vpop.f32.mrb[0].mxu0
    %v6298 = vpop.f32.mrb[0].mxu0
    %6299 = vdwg.mxu0
    %6300 = vmatprep.subr.bf16.mxu0 %v2245
    %6301 = vmatpush1.bf16.msra.mxu0 %v2244
    %6302 = vmatprep.subr.bf16.mxu0 %v2261
    %6303 = vmatpush1.bf16.msra.mxu0 %v2260
    %6304 = vmatprep.subr.bf16.mxu0 %v2277
    %6305 = vmatpush1.bf16.msra.mxu0 %v2276
    %6306 = vmatprep.subr.bf16.mxu0 %v2293
    %6307 = vmatpush1.bf16.msra.mxu0 %v2292
    %6308 = vmatprep.subr.bf16.mxu0 %v2309
    %6309 = vmatpush1.bf16.msra.mxu0 %v2308
    %6310 = vmatprep.subr.bf16.mxu0 %v2325
    %6311 = vmatpush1.bf16.msra.mxu0 %v2324
    %6312 = vmatprep.subr.bf16.mxu0 %v2341
    %6313 = vmatpush1.bf16.msra.mxu0 %v2340
    %6314 = vmatprep.subr.bf16.mxu0 %v2357
    %6315 = vmatpush1.bf16.msra.mxu0 %v2356
    %6316 = vmatprep.subr.bf16.mxu0 %v2373
    %6317 = vmatpush1.bf16.msra.mxu0 %v2372
    %6318 = vmatprep.subr.bf16.mxu0 %v2389
    %6319 = vmatpush1.bf16.msra.mxu0 %v2388
    %6320 = vmatprep.subr.bf16.mxu0 %v2405
    %6321 = vmatpush1.bf16.msra.mxu0 %v2404
    %6322 = vmatprep.subr.bf16.mxu0 %v2421
    %6323 = vmatpush1.bf16.msra.mxu0 %v2420
    %6324 = vmatprep.subr.bf16.mxu0 %v2437
    %6325 = vmatpush1.bf16.msra.mxu0 %v2436
    %6326 = vmatprep.subr.bf16.mxu0 %v2453
    %6327 = vmatpush1.bf16.msra.mxu0 %v2452
    %6328 = vmatprep.subr.bf16.mxu0 %v2469
    %6329 = vmatpush1.bf16.msra.mxu0 %v2468
    %6330 = vmatprep.subr.bf16.mxu0 %v2485
    %6331 = vmatpush1.bf16.msra.mxu0 %v2484
    %6332 = vmatprep.mubr.bf16.mxu0 %v6047
    %6333 = vmatmul.mubr.bf16.gmra.mrb[0].mxu0 %v6046
    %v6334 = vpop.f32.mrb[0].mxu0
    %v6335 = vadd.f32 0.0, %v6334
    %v6336 = vpop.f32.mrb[0].mxu0
    %v6337 = vadd.f32 0.0, %v6336
    %v6338 = vpop.f32.mrb[0].mxu0
    %v6339 = vpop.f32.mrb[0].mxu0
    %6340 = vdwg.mxu0
    %6341 = vmatprep.subr.bf16.mxu0 %v2501
    %6342 = vmatpush1.bf16.msra.mxu0 %v2500
    %6343 = vmatprep.subr.bf16.mxu0 %v2517
    %6344 = vmatpush1.bf16.msra.mxu0 %v2516
    %6345 = vmatprep.subr.bf16.mxu0 %v2533
    %6346 = vmatpush1.bf16.msra.mxu0 %v2532
    %6347 = vmatprep.subr.bf16.mxu0 %v2549
    %6348 = vmatpush1.bf16.msra.mxu0 %v2548
    %6349 = vmatprep.subr.bf16.mxu0 %v2565
    %6350 = vmatpush1.bf16.msra.mxu0 %v2564
    %6351 = vmatprep.subr.bf16.mxu0 %v2581
    %6352 = vmatpush1.bf16.msra.mxu0 %v2580
    %6353 = vmatprep.subr.bf16.mxu0 %v2597
    %6354 = vmatpush1.bf16.msra.mxu0 %v2596
    %6355 = vmatprep.subr.bf16.mxu0 %v2613
    %6356 = vmatpush1.bf16.msra.mxu0 %v2612
    %6357 = vmatprep.subr.bf16.mxu0 %v2629
    %6358 = vmatpush1.bf16.msra.mxu0 %v2628
    %6359 = vmatprep.subr.bf16.mxu0 %v2645
    %6360 = vmatpush1.bf16.msra.mxu0 %v2644
    %6361 = vmatprep.subr.bf16.mxu0 %v2661
    %6362 = vmatpush1.bf16.msra.mxu0 %v2660
    %6363 = vmatprep.subr.bf16.mxu0 %v2677
    %6364 = vmatpush1.bf16.msra.mxu0 %v2676
    %6365 = vmatprep.subr.bf16.mxu0 %v2693
    %6366 = vmatpush1.bf16.msra.mxu0 %v2692
    %6367 = vmatprep.subr.bf16.mxu0 %v2709
    %6368 = vmatpush1.bf16.msra.mxu0 %v2708
    %6369 = vmatprep.subr.bf16.mxu0 %v2725
    %6370 = vmatpush1.bf16.msra.mxu0 %v2724
    %6371 = vmatprep.subr.bf16.mxu0 %v2741
    %6372 = vmatpush1.bf16.msra.mxu0 %v2740
    %6373 = vmatprep.mubr.bf16.mxu0 %v6049
    %6374 = vmatmul.mubr.bf16.gmra.mrb[0].mxu0 %v6048
    %v6375 = vpop.f32.mrb[0].mxu0
    %v6376 = vadd.f32 %v6335, %v6375
    %v6377 = vpop.f32.mrb[0].mxu0
    %v6378 = vadd.f32 %v6337, %v6377
    %v6379 = vpop.f32.mrb[0].mxu0
    %v6380 = vpop.f32.mrb[0].mxu0
    %6381 = vdwg.mxu0
    %6382 = vmatprep.subr.bf16.mxu0 %v2247
    %6383 = vmatpush1.bf16.msra.mxu0 %v2246
    %6384 = vmatprep.subr.bf16.mxu0 %v2263
    %6385 = vmatpush1.bf16.msra.mxu0 %v2262
    %6386 = vmatprep.subr.bf16.mxu0 %v2279
    %6387 = vmatpush1.bf16.msra.mxu0 %v2278
    %6388 = vmatprep.subr.bf16.mxu0 %v2295
    %6389 = vmatpush1.bf16.msra.mxu0 %v2294
    %6390 = vmatprep.subr.bf16.mxu0 %v2311
    %6391 = vmatpush1.bf16.msra.mxu0 %v2310
    %6392 = vmatprep.subr.bf16.mxu0 %v2327
    %6393 = vmatpush1.bf16.msra.mxu0 %v2326
    %6394 = vmatprep.subr.bf16.mxu0 %v2343
    %6395 = vmatpush1.bf16.msra.mxu0 %v2342
    %6396 = vmatprep.subr.bf16.mxu0 %v2359
    %6397 = vmatpush1.bf16.msra.mxu0 %v2358
    %6398 = vmatprep.subr.bf16.mxu0 %v2375
    %6399 = vmatpush1.bf16.msra.mxu0 %v2374
    %6400 = vmatprep.subr.bf16.mxu0 %v2391
    %6401 = vmatpush1.bf16.msra.mxu0 %v2390
    %6402 = vmatprep.subr.bf16.mxu0 %v2407
    %6403 = vmatpush1.bf16.msra.mxu0 %v2406
    %6404 = vmatprep.subr.bf16.mxu0 %v2423
    %6405 = vmatpush1.bf16.msra.mxu0 %v2422
    %6406 = vmatprep.subr.bf16.mxu0 %v2439
    %6407 = vmatpush1.bf16.msra.mxu0 %v2438
    %6408 = vmatprep.subr.bf16.mxu0 %v2455
    %6409 = vmatpush1.bf16.msra.mxu0 %v2454
    %6410 = vmatprep.subr.bf16.mxu0 %v2471
    %6411 = vmatpush1.bf16.msra.mxu0 %v2470
    %6412 = vmatprep.subr.bf16.mxu0 %v2487
    %6413 = vmatpush1.bf16.msra.mxu0 %v2486
    %6414 = vmatprep.mubr.bf16.mxu0 %v6047
    %6415 = vmatmul.mubr.bf16.gmra.mrb[0].mxu0 %v6046
    %v6416 = vpop.f32.mrb[0].mxu0
    %v6417 = vadd.f32 0.0, %v6416
    %v6418 = vpop.f32.mrb[0].mxu0
    %v6419 = vadd.f32 0.0, %v6418
    %v6420 = vpop.f32.mrb[0].mxu0
    %v6421 = vpop.f32.mrb[0].mxu0
    %6422 = vdwg.mxu0
    %6423 = vmatprep.subr.bf16.mxu0 %v2503
    %6424 = vmatpush1.bf16.msra.mxu0 %v2502
    %6425 = vmatprep.subr.bf16.mxu0 %v2519
    %6426 = vmatpush1.bf16.msra.mxu0 %v2518
    %6427 = vmatprep.subr.bf16.mxu0 %v2535
    %6428 = vmatpush1.bf16.msra.mxu0 %v2534
    %6429 = vmatprep.subr.bf16.mxu0 %v2551
    %6430 = vmatpush1.bf16.msra.mxu0 %v2550
    %6431 = vmatprep.subr.bf16.mxu0 %v2567
    %6432 = vmatpush1.bf16.msra.mxu0 %v2566
    %6433 = vmatprep.subr.bf16.mxu0 %v2583
    %6434 = vmatpush1.bf16.msra.mxu0 %v2582
    %6435 = vmatprep.subr.bf16.mxu0 %v2599
    %6436 = vmatpush1.bf16.msra.mxu0 %v2598
    %6437 = vmatprep.subr.bf16.mxu0 %v2615
    %6438 = vmatpush1.bf16.msra.mxu0 %v2614
    %6439 = vmatprep.subr.bf16.mxu0 %v2631
    %6440 = vmatpush1.bf16.msra.mxu0 %v2630
    %6441 = vmatprep.subr.bf16.mxu0 %v2647
    %6442 = vmatpush1.bf16.msra.mxu0 %v2646
    %6443 = vmatprep.subr.bf16.mxu0 %v2663
    %6444 = vmatpush1.bf16.msra.mxu0 %v2662
    %6445 = vmatprep.subr.bf16.mxu0 %v2679
    %6446 = vmatpush1.bf16.msra.mxu0 %v2678
    %6447 = vmatprep.subr.bf16.mxu0 %v2695
    %6448 = vmatpush1.bf16.msra.mxu0 %v2694
    %6449 = vmatprep.subr.bf16.mxu0 %v2711
    %6450 = vmatpush1.bf16.msra.mxu0 %v2710
    %6451 = vmatprep.subr.bf16.mxu0 %v2727
    %6452 = vmatpush1.bf16.msra.mxu0 %v2726
    %6453 = vmatprep.subr.bf16.mxu0 %v2743
    %6454 = vmatpush1.bf16.msra.mxu0 %v2742
    %6455 = vmatprep.mubr.bf16.mxu0 %v6049
    %6456 = vmatmul.mubr.bf16.gmra.mrb[0].mxu0 %v6048
    %v6457 = vpop.f32.mrb[0].mxu0
    %v6458 = vadd.f32 %v6417, %v6457
    %v6459 = vpop.f32.mrb[0].mxu0
    %v6460 = vadd.f32 %v6419, %v6459
    %v6461 = vpop.f32.mrb[0].mxu0
    %v6462 = vpop.f32.mrb[0].mxu0
    %6463 = vdwg.mxu0
    %6464 = vmatprep.subr.bf16.mxu0 %v2249
    %6465 = vmatpush1.bf16.msra.mxu0 %v2248
    %6466 = vmatprep.subr.bf16.mxu0 %v2265
    %6467 = vmatpush1.bf16.msra.mxu0 %v2264
    %6468 = vmatprep.subr.bf16.mxu0 %v2281
    %6469 = vmatpush1.bf16.msra.mxu0 %v2280
    %6470 = vmatprep.subr.bf16.mxu0 %v2297
    %6471 = vmatpush1.bf16.msra.mxu0 %v2296
    %6472 = vmatprep.subr.bf16.mxu0 %v2313
    %6473 = vmatpush1.bf16.msra.mxu0 %v2312
    %6474 = vmatprep.subr.bf16.mxu0 %v2329
    %6475 = vmatpush1.bf16.msra.mxu0 %v2328
    %6476 = vmatprep.subr.bf16.mxu0 %v2345
    %6477 = vmatpush1.bf16.msra.mxu0 %v2344
    %6478 = vmatprep.subr.bf16.mxu0 %v2361
    %6479 = vmatpush1.bf16.msra.mxu0 %v2360
    %6480 = vmatprep.subr.bf16.mxu0 %v2377
    %6481 = vmatpush1.bf16.msra.mxu0 %v2376
    %6482 = vmatprep.subr.bf16.mxu0 %v2393
    %6483 = vmatpush1.bf16.msra.mxu0 %v2392
    %6484 = vmatprep.subr.bf16.mxu0 %v2409
    %6485 = vmatpush1.bf16.msra.mxu0 %v2408
    %6486 = vmatprep.subr.bf16.mxu0 %v2425
    %6487 = vmatpush1.bf16.msra.mxu0 %v2424
    %6488 = vmatprep.subr.bf16.mxu0 %v2441
    %6489 = vmatpush1.bf16.msra.mxu0 %v2440
    %6490 = vmatprep.subr.bf16.mxu0 %v2457
    %6491 = vmatpush1.bf16.msra.mxu0 %v2456
    %6492 = vmatprep.subr.bf16.mxu0 %v2473
    %6493 = vmatpush1.bf16.msra.mxu0 %v2472
    %6494 = vmatprep.subr.bf16.mxu0 %v2489
    %6495 = vmatpush1.bf16.msra.mxu0 %v2488
    %6496 = vmatprep.mubr.bf16.mxu0 %v6047
    %6497 = vmatmul.mubr.bf16.gmra.mrb[0].mxu0 %v6046
    %v6498 = vpop.f32.mrb[0].mxu0
    %v6499 = vadd.f32 0.0, %v6498
    %v6500 = vpop.f32.mrb[0].mxu0
    %v6501 = vadd.f32 0.0, %v6500
    %v6502 = vpop.f32.mrb[0].mxu0
    %v6503 = vpop.f32.mrb[0].mxu0
    %6504 = vdwg.mxu0
    %6505 = vmatprep.subr.bf16.mxu0 %v2505
    %6506 = vmatpush1.bf16.msra.mxu0 %v2504
    %6507 = vmatprep.subr.bf16.mxu0 %v2521
    %6508 = vmatpush1.bf16.msra.mxu0 %v2520
    %6509 = vmatprep.subr.bf16.mxu0 %v2537
    %6510 = vmatpush1.bf16.msra.mxu0 %v2536
    %6511 = vmatprep.subr.bf16.mxu0 %v2553
    %6512 = vmatpush1.bf16.msra.mxu0 %v2552
    %6513 = vmatprep.subr.bf16.mxu0 %v2569
    %6514 = vmatpush1.bf16.msra.mxu0 %v2568
    %6515 = vmatprep.subr.bf16.mxu0 %v2585
    %6516 = vmatpush1.bf16.msra.mxu0 %v2584
    %6517 = vmatprep.subr.bf16.mxu0 %v2601
    %6518 = vmatpush1.bf16.msra.mxu0 %v2600
    %6519 = vmatprep.subr.bf16.mxu0 %v2617
    %6520 = vmatpush1.bf16.msra.mxu0 %v2616
    %6521 = vmatprep.subr.bf16.mxu0 %v2633
    %6522 = vmatpush1.bf16.msra.mxu0 %v2632
    %6523 = vmatprep.subr.bf16.mxu0 %v2649
    %6524 = vmatpush1.bf16.msra.mxu0 %v2648
    %6525 = vmatprep.subr.bf16.mxu0 %v2665
    %6526 = vmatpush1.bf16.msra.mxu0 %v2664
    %6527 = vmatprep.subr.bf16.mxu0 %v2681
    %6528 = vmatpush1.bf16.msra.mxu0 %v2680
    %6529 = vmatprep.subr.bf16.mxu0 %v2697
    %6530 = vmatpush1.bf16.msra.mxu0 %v2696
    %6531 = vmatprep.subr.bf16.mxu0 %v2713
    %6532 = vmatpush1.bf16.msra.mxu0 %v2712
    %6533 = vmatprep.subr.bf16.mxu0 %v2729
    %6534 = vmatpush1.bf16.msra.mxu0 %v2728
    %6535 = vmatprep.subr.bf16.mxu0 %v2745
    %6536 = vmatpush1.bf16.msra.mxu0 %v2744
    %6537 = vmatprep.mubr.bf16.mxu0 %v6049
    %6538 = vmatmul.mubr.bf16.gmra.mrb[0].mxu0 %v6048
    %v6539 = vpop.f32.mrb[0].mxu0
    %v6540 = vadd.f32 %v6499, %v6539
    %v6541 = vpop.f32.mrb[0].mxu0
    %v6542 = vadd.f32 %v6501, %v6541
    %v6543 = vpop.f32.mrb[0].mxu0
    %v6544 = vpop.f32.mrb[0].mxu0
    %6545 = vdwg.mxu0
    %6546 = vmatprep.subr.bf16.mxu0 %v2251
    %6547 = vmatpush1.bf16.msra.mxu0 %v2250
    %6548 = vmatprep.subr.bf16.mxu0 %v2267
    %6549 = vmatpush1.bf16.msra.mxu0 %v2266
    %6550 = vmatprep.subr.bf16.mxu0 %v2283
    %6551 = vmatpush1.bf16.msra.mxu0 %v2282
    %6552 = vmatprep.subr.bf16.mxu0 %v2299
    %6553 = vmatpush1.bf16.msra.mxu0 %v2298
    %6554 = vmatprep.subr.bf16.mxu0 %v2315
    %6555 = vmatpush1.bf16.msra.mxu0 %v2314
    %6556 = vmatprep.subr.bf16.mxu0 %v2331
    %6557 = vmatpush1.bf16.msra.mxu0 %v2330
    %6558 = vmatprep.subr.bf16.mxu0 %v2347
    %6559 = vmatpush1.bf16.msra.mxu0 %v2346
    %6560 = vmatprep.subr.bf16.mxu0 %v2363
    %6561 = vmatpush1.bf16.msra.mxu0 %v2362
    %6562 = vmatprep.subr.bf16.mxu0 %v2379
    %6563 = vmatpush1.bf16.msra.mxu0 %v2378
    %6564 = vmatprep.subr.bf16.mxu0 %v2395
    %6565 = vmatpush1.bf16.msra.mxu0 %v2394
    %6566 = vmatprep.subr.bf16.mxu0 %v2411
    %6567 = vmatpush1.bf16.msra.mxu0 %v2410
    %6568 = vmatprep.subr.bf16.mxu0 %v2427
    %6569 = vmatpush1.bf16.msra.mxu0 %v2426
    %6570 = vmatprep.subr.bf16.mxu0 %v2443
    %6571 = vmatpush1.bf16.msra.mxu0 %v2442
    %6572 = vmatprep.subr.bf16.mxu0 %v2459
    %6573 = vmatpush1.bf16.msra.mxu0 %v2458
    %6574 = vmatprep.subr.bf16.mxu0 %v2475
    %6575 = vmatpush1.bf16.msra.mxu0 %v2474
    %6576 = vmatprep.subr.bf16.mxu0 %v2491
    %6577 = vmatpush1.bf16.msra.mxu0 %v2490
    %6578 = vmatprep.mubr.bf16.mxu0 %v6047
    %6579 = vmatmul.mubr.bf16.gmra.mrb[0].mxu0 %v6046
    %v6580 = vpop.f32.mrb[0].mxu0
    %v6581 = vadd.f32 0.0, %v6580
    %v6582 = vpop.f32.mrb[0].mxu0
    %v6583 = vadd.f32 0.0, %v6582
    %v6584 = vpop.f32.mrb[0].mxu0
    %v6585 = vpop.f32.mrb[0].mxu0
    %6586 = vdwg.mxu0
    %6587 = vmatprep.subr.bf16.mxu0 %v2507
    %6588 = vmatpush1.bf16.msra.mxu0 %v2506
    %6589 = vmatprep.subr.bf16.mxu0 %v2523
    %6590 = vmatpush1.bf16.msra.mxu0 %v2522
    %6591 = vmatprep.subr.bf16.mxu0 %v2539
    %6592 = vmatpush1.bf16.msra.mxu0 %v2538
    %6593 = vmatprep.subr.bf16.mxu0 %v2555
    %6594 = vmatpush1.bf16.msra.mxu0 %v2554
    %6595 = vmatprep.subr.bf16.mxu0 %v2571
    %6596 = vmatpush1.bf16.msra.mxu0 %v2570
    %6597 = vmatprep.subr.bf16.mxu0 %v2587
    %6598 = vmatpush1.bf16.msra.mxu0 %v2586
    %6599 = vmatprep.subr.bf16.mxu0 %v2603
    %6600 = vmatpush1.bf16.msra.mxu0 %v2602
    %6601 = vmatprep.subr.bf16.mxu0 %v2619
    %6602 = vmatpush1.bf16.msra.mxu0 %v2618
    %6603 = vmatprep.subr.bf16.mxu0 %v2635
    %6604 = vmatpush1.bf16.msra.mxu0 %v2634
    %6605 = vmatprep.subr.bf16.mxu0 %v2651
    %6606 = vmatpush1.bf16.msra.mxu0 %v2650
    %6607 = vmatprep.subr.bf16.mxu0 %v2667
    %6608 = vmatpush1.bf16.msra.mxu0 %v2666
    %6609 = vmatprep.subr.bf16.mxu0 %v2683
    %6610 = vmatpush1.bf16.msra.mxu0 %v2682
    %6611 = vmatprep.subr.bf16.mxu0 %v2699
    %6612 = vmatpush1.bf16.msra.mxu0 %v2698
    %6613 = vmatprep.subr.bf16.mxu0 %v2715
    %6614 = vmatpush1.bf16.msra.mxu0 %v2714
    %6615 = vmatprep.subr.bf16.mxu0 %v2731
    %6616 = vmatpush1.bf16.msra.mxu0 %v2730
    %6617 = vmatprep.subr.bf16.mxu0 %v2747
    %6618 = vmatpush1.bf16.msra.mxu0 %v2746
    %6619 = vmatprep.mubr.bf16.mxu0 %v6049
    %6620 = vmatmul.mubr.bf16.gmra.mrb[0].mxu0 %v6048
    %v6621 = vpop.f32.mrb[0].mxu0
    %v6622 = vadd.f32 %v6581, %v6621
    %v6623 = vpop.f32.mrb[0].mxu0
    %v6624 = vadd.f32 %v6583, %v6623
    %v6625 = vpop.f32.mrb[0].mxu0
    %v6626 = vpop.f32.mrb[0].mxu0
    %6627 = vdwg.mxu0
    %6628 = vmatprep.subr.bf16.mxu0 %v2253
    %6629 = vmatpush1.bf16.msra.mxu0 %v2252
    %6630 = vmatprep.subr.bf16.mxu0 %v2269
    %6631 = vmatpush1.bf16.msra.mxu0 %v2268
    %6632 = vmatprep.subr.bf16.mxu0 %v2285
    %6633 = vmatpush1.bf16.msra.mxu0 %v2284
    %6634 = vmatprep.subr.bf16.mxu0 %v2301
    %6635 = vmatpush1.bf16.msra.mxu0 %v2300
    %6636 = vmatprep.subr.bf16.mxu0 %v2317
    %6637 = vmatpush1.bf16.msra.mxu0 %v2316
    %6638 = vmatprep.subr.bf16.mxu0 %v2333
    %6639 = vmatpush1.bf16.msra.mxu0 %v2332
    %6640 = vmatprep.subr.bf16.mxu0 %v2349
    %6641 = vmatpush1.bf16.msra.mxu0 %v2348
    %6642 = vmatprep.subr.bf16.mxu0 %v2365
    %6643 = vmatpush1.bf16.msra.mxu0 %v2364
    %6644 = vmatprep.subr.bf16.mxu0 %v2381
    %6645 = vmatpush1.bf16.msra.mxu0 %v2380
    %6646 = vmatprep.subr.bf16.mxu0 %v2397
    %6647 = vmatpush1.bf16.msra.mxu0 %v2396
    %6648 = vmatprep.subr.bf16.mxu0 %v2413
    %6649 = vmatpush1.bf16.msra.mxu0 %v2412
    %6650 = vmatprep.subr.bf16.mxu0 %v2429
    %6651 = vmatpush1.bf16.msra.mxu0 %v2428
    %6652 = vmatprep.subr.bf16.mxu0 %v2445
    %6653 = vmatpush1.bf16.msra.mxu0 %v2444
    %6654 = vmatprep.subr.bf16.mxu0 %v2461
    %6655 = vmatpush1.bf16.msra.mxu0 %v2460
    %6656 = vmatprep.subr.bf16.mxu0 %v2477
    %6657 = vmatpush1.bf16.msra.mxu0 %v2476
    %6658 = vmatprep.subr.bf16.mxu0 %v2493
    %6659 = vmatpush1.bf16.msra.mxu0 %v2492
    %6660 = vmatprep.mubr.bf16.mxu0 %v6047
    %6661 = vmatmul.mubr.bf16.gmra.mrb[0].mxu0 %v6046
    %v6662 = vpop.f32.mrb[0].mxu0
    %v6663 = vadd.f32 0.0, %v6662
    %v6664 = vpop.f32.mrb[0].mxu0
    %v6665 = vadd.f32 0.0, %v6664
    %v6666 = vpop.f32.mrb[0].mxu0
    %v6667 = vpop.f32.mrb[0].mxu0
    %6668 = vdwg.mxu0
    %6669 = vmatprep.subr.bf16.mxu0 %v2509
    %6670 = vmatpush1.bf16.msra.mxu0 %v2508
    %6671 = vmatprep.subr.bf16.mxu0 %v2525
    %6672 = vmatpush1.bf16.msra.mxu0 %v2524
    %6673 = vmatprep.subr.bf16.mxu0 %v2541
    %6674 = vmatpush1.bf16.msra.mxu0 %v2540
    %6675 = vmatprep.subr.bf16.mxu0 %v2557
    %6676 = vmatpush1.bf16.msra.mxu0 %v2556
    %6677 = vmatprep.subr.bf16.mxu0 %v2573
    %6678 = vmatpush1.bf16.msra.mxu0 %v2572
    %6679 = vmatprep.subr.bf16.mxu0 %v2589
    %6680 = vmatpush1.bf16.msra.mxu0 %v2588
    %6681 = vmatprep.subr.bf16.mxu0 %v2605
    %6682 = vmatpush1.bf16.msra.mxu0 %v2604
    %6683 = vmatprep.subr.bf16.mxu0 %v2621
    %6684 = vmatpush1.bf16.msra.mxu0 %v2620
    %6685 = vmatprep.subr.bf16.mxu0 %v2637
    %6686 = vmatpush1.bf16.msra.mxu0 %v2636
    %6687 = vmatprep.subr.bf16.mxu0 %v2653
    %6688 = vmatpush1.bf16.msra.mxu0 %v2652
    %6689 = vmatprep.subr.bf16.mxu0 %v2669
    %6690 = vmatpush1.bf16.msra.mxu0 %v2668
    %6691 = vmatprep.subr.bf16.mxu0 %v2685
    %6692 = vmatpush1.bf16.msra.mxu0 %v2684
    %6693 = vmatprep.subr.bf16.mxu0 %v2701
    %6694 = vmatpush1.bf16.msra.mxu0 %v2700
    %6695 = vmatprep.subr.bf16.mxu0 %v2717
    %6696 = vmatpush1.bf16.msra.mxu0 %v2716
    %6697 = vmatprep.subr.bf16.mxu0 %v2733
    %6698 = vmatpush1.bf16.msra.mxu0 %v2732
    %6699 = vmatprep.subr.bf16.mxu0 %v2749
    %6700 = vmatpush1.bf16.msra.mxu0 %v2748
    %6701 = vmatprep.mubr.bf16.mxu0 %v6049
    %6702 = vmatmul.mubr.bf16.gmra.mrb[0].mxu0 %v6048
    %v6703 = vpop.f32.mrb[0].mxu0
    %v6704 = vadd.f32 %v6663, %v6703
    %v6705 = vpop.f32.mrb[0].mxu0
    %v6706 = vadd.f32 %v6665, %v6705
    %v6707 = vpop.f32.mrb[0].mxu0
    %v6708 = vpop.f32.mrb[0].mxu0
    %6709 = vdwg.mxu0
    %v6710 = vadd.f32 %v791, %v6130
    %v6711 = vadd.f32 %v793, %v6132
    %v6712 = vadd.f32 %v834, %v6212
    %v6713 = vadd.f32 %v836, %v6214
    %v6714 = vadd.f32 %v877, %v6294
    %v6715 = vadd.f32 %v879, %v6296
    %v6716 = vadd.f32 %v920, %v6376
    %v6717 = vadd.f32 %v922, %v6378
    %v6718 = vadd.f32 %v963, %v6458
    %v6719 = vadd.f32 %v965, %v6460
    %v6720 = vadd.f32 %v1006, %v6540
    %v6721 = vadd.f32 %v1008, %v6542
    %v6722 = vadd.f32 %v1049, %v6622
    %v6723 = vadd.f32 %v1051, %v6624
    %v6724 = vadd.f32 %v1092, %v6704
    %v6725 = vadd.f32 %v1094, %v6706
    %v6726 = vxor.u32 %v6710, 2147483648
    %v6727 = vxor.u32 %v6711, 2147483648
    %v6728 = vxor.u32 %v6712, 2147483648
    %v6729 = vxor.u32 %v6713, 2147483648
    %v6730 = vmul.f32 %v6726, 1.442695
    %v6731 = vpow.pop %v6730
    %v6732 = vmul.f32 %v6727, 1.442695
    %v6733 = vpow.pop %v6732
    %v6734 = vmul.f32 %v6728, 1.442695
    %v6735 = vpow.pop %v6734
    %v6736 = vmul.f32 %v6729, 1.442695
    %v6737 = vpow.pop %v6736
    %v6738 = vadd.f32 %v6731, 1.0
    %v6739 = vadd.f32 %v6733, 1.0
    %v6740 = vadd.f32 %v6735, 1.0
    %v6741 = vadd.f32 %v6737, 1.0
    %v6742 = vrcp.pop %v6738
    %v6743 = vmul.f32 1.0, %v6742
    %v6744 = vrcp.pop %v6739
    %v6745 = vmul.f32 1.0, %v6744
    %v6746 = vrcp.pop %v6740
    %v6747 = vmul.f32 1.0, %v6746
    %v6748 = vrcp.pop %v6741
    %v6749 = vmul.f32 1.0, %v6748
    %v6750 = vxor.u32 %v6714, 2147483648
    %v6751 = vxor.u32 %v6715, 2147483648
    %v6752 = vxor.u32 %v6716, 2147483648
    %v6753 = vxor.u32 %v6717, 2147483648
    %v6754 = vmul.f32 %v6750, 1.442695
    %v6755 = vpow.pop %v6754
    %v6756 = vmul.f32 %v6751, 1.442695
    %v6757 = vpow.pop %v6756
    %v6758 = vmul.f32 %v6752, 1.442695
    %v6759 = vpow.pop %v6758
    %v6760 = vmul.f32 %v6753, 1.442695
    %v6761 = vpow.pop %v6760
    %v6762 = vadd.f32 %v6755, 1.0
    %v6763 = vadd.f32 %v6757, 1.0
    %v6764 = vadd.f32 %v6759, 1.0
    %v6765 = vadd.f32 %v6761, 1.0
    %v6766 = vrcp.pop %v6762
    %v6767 = vmul.f32 1.0, %v6766
    %v6768 = vrcp.pop %v6763
    %v6769 = vmul.f32 1.0, %v6768
    %v6770 = vrcp.pop %v6764
    %v6771 = vmul.f32 1.0, %v6770
    %v6772 = vrcp.pop %v6765
    %v6773 = vmul.f32 1.0, %v6772
    %v6774 = vtanh.pop %v6718
    %v6775 = vtanh.pop %v6719
    %v6776 = vtanh.pop %v6720
    %v6777 = vtanh.pop %v6721
    %v6778 = vxor.u32 %v6722, 2147483648
    %v6779 = vxor.u32 %v6723, 2147483648
    %v6780 = vxor.u32 %v6724, 2147483648
    %v6781 = vxor.u32 %v6725, 2147483648
    %v6782 = vmul.f32 %v6778, 1.442695
    %v6783 = vpow.pop %v6782
    %v6784 = vmul.f32 %v6779, 1.442695
    %v6785 = vpow.pop %v6784
    %v6786 = vmul.f32 %v6780, 1.442695
    %v6787 = vpow.pop %v6786
    %v6788 = vmul.f32 %v6781, 1.442695
    %v6789 = vpow.pop %v6788
    %v6790 = vadd.f32 %v6783, 1.0
    %v6791 = vadd.f32 %v6785, 1.0
    %v6792 = vadd.f32 %v6787, 1.0
    %v6793 = vadd.f32 %v6789, 1.0
    %v6794 = vrcp.pop %v6790
    %v6795 = vmul.f32 1.0, %v6794
    %v6796 = vrcp.pop %v6791
    %v6797 = vmul.f32 1.0, %v6796
    %v6798 = vrcp.pop %v6792
    %v6799 = vmul.f32 1.0, %v6798
    %v6800 = vrcp.pop %v6793
    %v6801 = vmul.f32 1.0, %v6800
    %v6806 = vrot.slane %v6026, 6
    %v6807 = vrot.slane %v6027, 6
    %v6808 = vrot.slane %v6028, 6
    %v6809 = vrot.slane %v6029, 6
    %v6814 = vmul.f32 %v6767, %v6806
    %v6815 = vmul.f32 %v6769, %v6807
    %v6816 = vmul.f32 %v6771, %v6808
    %v6817 = vmul.f32 %v6773, %v6809
    %v6818 = vmul.f32 %v6743, %v6774
    %v6819 = vmul.f32 %v6745, %v6775
    %v6820 = vmul.f32 %v6747, %v6776
    %v6821 = vmul.f32 %v6749, %v6777
    %v6822 = vadd.f32 %v6814, %v6818
    %v6823 = vadd.f32 %v6815, %v6819
    %v6824 = vadd.f32 %v6816, %v6820
    %v6825 = vadd.f32 %v6817, %v6821
    %v6826 = vtanh.pop %v6822
    %v6827 = vtanh.pop %v6823
    %v6828 = vtanh.pop %v6824
    %v6829 = vtanh.pop %v6825
    %v6830 = vmul.f32 %v6795, %v6826
    %v6831 = vmul.f32 %v6797, %v6827
    %v6832 = vmul.f32 %v6799, %v6828
    %v6833 = vmul.f32 %v6801, %v6829
    %v6834 = vpack.c.bf16 %v6830, %v6830
    %v6835 = vpack.c.bf16 %v6831, %v6831
    %v6836 = vpack.c.bf16 %v6832, %v6832
    %v6837 = vpack.c.bf16 %v6833, %v6833
    %6838 = vmatprep.subr.bf16.mxu0 %v2239
    %6839 = vmatpush1.bf16.msra.mxu0 %v2238
    %6840 = vmatprep.subr.bf16.mxu0 %v2255
    %6841 = vmatpush1.bf16.msra.mxu0 %v2254
    %6842 = vmatprep.subr.bf16.mxu0 %v2271
    %6843 = vmatpush1.bf16.msra.mxu0 %v2270
    %6844 = vmatprep.subr.bf16.mxu0 %v2287
    %6845 = vmatpush1.bf16.msra.mxu0 %v2286
    %6846 = vmatprep.subr.bf16.mxu0 %v2303
    %6847 = vmatpush1.bf16.msra.mxu0 %v2302
    %6848 = vmatprep.subr.bf16.mxu0 %v2319
    %6849 = vmatpush1.bf16.msra.mxu0 %v2318
    %6850 = vmatprep.subr.bf16.mxu0 %v2335
    %6851 = vmatpush1.bf16.msra.mxu0 %v2334
    %6852 = vmatprep.subr.bf16.mxu0 %v2351
    %6853 = vmatpush1.bf16.msra.mxu0 %v2350
    %6854 = vmatprep.subr.bf16.mxu0 %v2367
    %6855 = vmatpush1.bf16.msra.mxu0 %v2366
    %6856 = vmatprep.subr.bf16.mxu0 %v2383
    %6857 = vmatpush1.bf16.msra.mxu0 %v2382
    %6858 = vmatprep.subr.bf16.mxu0 %v2399
    %6859 = vmatpush1.bf16.msra.mxu0 %v2398
    %6860 = vmatprep.subr.bf16.mxu0 %v2415
    %6861 = vmatpush1.bf16.msra.mxu0 %v2414
    %6862 = vmatprep.subr.bf16.mxu0 %v2431
    %6863 = vmatpush1.bf16.msra.mxu0 %v2430
    %6864 = vmatprep.subr.bf16.mxu0 %v2447
    %6865 = vmatpush1.bf16.msra.mxu0 %v2446
    %6866 = vmatprep.subr.bf16.mxu0 %v2463
    %6867 = vmatpush1.bf16.msra.mxu0 %v2462
    %6868 = vmatprep.subr.bf16.mxu0 %v2479
    %6869 = vmatpush1.bf16.msra.mxu0 %v2478
    %6870 = vmatprep.mubr.bf16.mxu0 %v6835
    %6871 = vmatmul.mubr.bf16.gmra.mrb[0].mxu0 %v6834
    %v6872 = vpop.f32.mrb[0].mxu0
    %v6873 = vadd.f32 0.0, %v6872
    %v6874 = vpop.f32.mrb[0].mxu0
    %v6875 = vadd.f32 0.0, %v6874
    %v6876 = vpop.f32.mrb[0].mxu0
    %v6877 = vpop.f32.mrb[0].mxu0
    %6878 = vdwg.mxu0
    %6879 = vmatprep.subr.bf16.mxu0 %v2495
    %6880 = vmatpush1.bf16.msra.mxu0 %v2494
    %6881 = vmatprep.subr.bf16.mxu0 %v2511
    %6882 = vmatpush1.bf16.msra.mxu0 %v2510
    %6883 = vmatprep.subr.bf16.mxu0 %v2527
    %6884 = vmatpush1.bf16.msra.mxu0 %v2526
    %6885 = vmatprep.subr.bf16.mxu0 %v2543
    %6886 = vmatpush1.bf16.msra.mxu0 %v2542
    %6887 = vmatprep.subr.bf16.mxu0 %v2559
    %6888 = vmatpush1.bf16.msra.mxu0 %v2558
    %6889 = vmatprep.subr.bf16.mxu0 %v2575
    %6890 = vmatpush1.bf16.msra.mxu0 %v2574
    %6891 = vmatprep.subr.bf16.mxu0 %v2591
    %6892 = vmatpush1.bf16.msra.mxu0 %v2590
    %6893 = vmatprep.subr.bf16.mxu0 %v2607
    %6894 = vmatpush1.bf16.msra.mxu0 %v2606
    %6895 = vmatprep.subr.bf16.mxu0 %v2623
    %6896 = vmatpush1.bf16.msra.mxu0 %v2622
    %6897 = vmatprep.subr.bf16.mxu0 %v2639
    %6898 = vmatpush1.bf16.msra.mxu0 %v2638
    %6899 = vmatprep.subr.bf16.mxu0 %v2655
    %6900 = vmatpush1.bf16.msra.mxu0 %v2654
    %6901 = vmatprep.subr.bf16.mxu0 %v2671
    %6902 = vmatpush1.bf16.msra.mxu0 %v2670
    %6903 = vmatprep.subr.bf16.mxu0 %v2687
    %6904 = vmatpush1.bf16.msra.mxu0 %v2686
    %6905 = vmatprep.subr.bf16.mxu0 %v2703
    %6906 = vmatpush1.bf16.msra.mxu0 %v2702
    %6907 = vmatprep.subr.bf16.mxu0 %v2719
    %6908 = vmatpush1.bf16.msra.mxu0 %v2718
    %6909 = vmatprep.subr.bf16.mxu0 %v2735
    %6910 = vmatpush1.bf16.msra.mxu0 %v2734
    %6911 = vmatprep.mubr.bf16.mxu0 %v6837
    %6912 = vmatmul.mubr.bf16.gmra.mrb[0].mxu0 %v6836
    %v6913 = vpop.f32.mrb[0].mxu0
    %v6914 = vadd.f32 %v6873, %v6913
    %v6915 = vpop.f32.mrb[0].mxu0
    %v6916 = vadd.f32 %v6875, %v6915
    %v6917 = vpop.f32.mrb[0].mxu0
    %v6918 = vpop.f32.mrb[0].mxu0
    %6919 = vdwg.mxu0
    %6920 = vmatprep.subr.bf16.mxu0 %v2241
    %6921 = vmatpush1.bf16.msra.mxu0 %v2240
    %6922 = vmatprep.subr.bf16.mxu0 %v2257
    %6923 = vmatpush1.bf16.msra.mxu0 %v2256
    %6924 = vmatprep.subr.bf16.mxu0 %v2273
    %6925 = vmatpush1.bf16.msra.mxu0 %v2272
    %6926 = vmatprep.subr.bf16.mxu0 %v2289
    %6927 = vmatpush1.bf16.msra.mxu0 %v2288
    %6928 = vmatprep.subr.bf16.mxu0 %v2305
    %6929 = vmatpush1.bf16.msra.mxu0 %v2304
    %6930 = vmatprep.subr.bf16.mxu0 %v2321
    %6931 = vmatpush1.bf16.msra.mxu0 %v2320
    %6932 = vmatprep.subr.bf16.mxu0 %v2337
    %6933 = vmatpush1.bf16.msra.mxu0 %v2336
    %6934 = vmatprep.subr.bf16.mxu0 %v2353
    %6935 = vmatpush1.bf16.msra.mxu0 %v2352
    %6936 = vmatprep.subr.bf16.mxu0 %v2369
    %6937 = vmatpush1.bf16.msra.mxu0 %v2368
    %6938 = vmatprep.subr.bf16.mxu0 %v2385
    %6939 = vmatpush1.bf16.msra.mxu0 %v2384
    %6940 = vmatprep.subr.bf16.mxu0 %v2401
    %6941 = vmatpush1.bf16.msra.mxu0 %v2400
    %6942 = vmatprep.subr.bf16.mxu0 %v2417
    %6943 = vmatpush1.bf16.msra.mxu0 %v2416
    %6944 = vmatprep.subr.bf16.mxu0 %v2433
    %6945 = vmatpush1.bf16.msra.mxu0 %v2432
    %6946 = vmatprep.subr.bf16.mxu0 %v2449
    %6947 = vmatpush1.bf16.msra.mxu0 %v2448
    %6948 = vmatprep.subr.bf16.mxu0 %v2465
    %6949 = vmatpush1.bf16.msra.mxu0 %v2464
    %6950 = vmatprep.subr.bf16.mxu0 %v2481
    %6951 = vmatpush1.bf16.msra.mxu0 %v2480
    %6952 = vmatprep.mubr.bf16.mxu0 %v6835
    %6953 = vmatmul.mubr.bf16.gmra.mrb[0].mxu0 %v6834
    %v6954 = vpop.f32.mrb[0].mxu0
    %v6955 = vadd.f32 0.0, %v6954
    %v6956 = vpop.f32.mrb[0].mxu0
    %v6957 = vadd.f32 0.0, %v6956
    %v6958 = vpop.f32.mrb[0].mxu0
    %v6959 = vpop.f32.mrb[0].mxu0
    %6960 = vdwg.mxu0
    %6961 = vmatprep.subr.bf16.mxu0 %v2497
    %6962 = vmatpush1.bf16.msra.mxu0 %v2496
    %6963 = vmatprep.subr.bf16.mxu0 %v2513
    %6964 = vmatpush1.bf16.msra.mxu0 %v2512
    %6965 = vmatprep.subr.bf16.mxu0 %v2529
    %6966 = vmatpush1.bf16.msra.mxu0 %v2528
    %6967 = vmatprep.subr.bf16.mxu0 %v2545
    %6968 = vmatpush1.bf16.msra.mxu0 %v2544
    %6969 = vmatprep.subr.bf16.mxu0 %v2561
    %6970 = vmatpush1.bf16.msra.mxu0 %v2560
    %6971 = vmatprep.subr.bf16.mxu0 %v2577
    %6972 = vmatpush1.bf16.msra.mxu0 %v2576
    %6973 = vmatprep.subr.bf16.mxu0 %v2593
    %6974 = vmatpush1.bf16.msra.mxu0 %v2592
    %6975 = vmatprep.subr.bf16.mxu0 %v2609
    %6976 = vmatpush1.bf16.msra.mxu0 %v2608
    %6977 = vmatprep.subr.bf16.mxu0 %v2625
    %6978 = vmatpush1.bf16.msra.mxu0 %v2624
    %6979 = vmatprep.subr.bf16.mxu0 %v2641
    %6980 = vmatpush1.bf16.msra.mxu0 %v2640
    %6981 = vmatprep.subr.bf16.mxu0 %v2657
    %6982 = vmatpush1.bf16.msra.mxu0 %v2656
    %6983 = vmatprep.subr.bf16.mxu0 %v2673
    %6984 = vmatpush1.bf16.msra.mxu0 %v2672
    %6985 = vmatprep.subr.bf16.mxu0 %v2689
    %6986 = vmatpush1.bf16.msra.mxu0 %v2688
    %6987 = vmatprep.subr.bf16.mxu0 %v2705
    %6988 = vmatpush1.bf16.msra.mxu0 %v2704
    %6989 = vmatprep.subr.bf16.mxu0 %v2721
    %6990 = vmatpush1.bf16.msra.mxu0 %v2720
    %6991 = vmatprep.subr.bf16.mxu0 %v2737
    %6992 = vmatpush1.bf16.msra.mxu0 %v2736
    %6993 = vmatprep.mubr.bf16.mxu0 %v6837
    %6994 = vmatmul.mubr.bf16.gmra.mrb[0].mxu0 %v6836
    %v6995 = vpop.f32.mrb[0].mxu0
    %v6996 = vadd.f32 %v6955, %v6995
    %v6997 = vpop.f32.mrb[0].mxu0
    %v6998 = vadd.f32 %v6957, %v6997
    %v6999 = vpop.f32.mrb[0].mxu0
    %v7000 = vpop.f32.mrb[0].mxu0
    %7001 = vdwg.mxu0
    %7002 = vmatprep.subr.bf16.mxu0 %v2243
    %7003 = vmatpush1.bf16.msra.mxu0 %v2242
    %7004 = vmatprep.subr.bf16.mxu0 %v2259
    %7005 = vmatpush1.bf16.msra.mxu0 %v2258
    %7006 = vmatprep.subr.bf16.mxu0 %v2275
    %7007 = vmatpush1.bf16.msra.mxu0 %v2274
    %7008 = vmatprep.subr.bf16.mxu0 %v2291
    %7009 = vmatpush1.bf16.msra.mxu0 %v2290
    %7010 = vmatprep.subr.bf16.mxu0 %v2307
    %7011 = vmatpush1.bf16.msra.mxu0 %v2306
    %7012 = vmatprep.subr.bf16.mxu0 %v2323
    %7013 = vmatpush1.bf16.msra.mxu0 %v2322
    %7014 = vmatprep.subr.bf16.mxu0 %v2339
    %7015 = vmatpush1.bf16.msra.mxu0 %v2338
    %7016 = vmatprep.subr.bf16.mxu0 %v2355
    %7017 = vmatpush1.bf16.msra.mxu0 %v2354
    %7018 = vmatprep.subr.bf16.mxu0 %v2371
    %7019 = vmatpush1.bf16.msra.mxu0 %v2370
    %7020 = vmatprep.subr.bf16.mxu0 %v2387
    %7021 = vmatpush1.bf16.msra.mxu0 %v2386
    %7022 = vmatprep.subr.bf16.mxu0 %v2403
    %7023 = vmatpush1.bf16.msra.mxu0 %v2402
    %7024 = vmatprep.subr.bf16.mxu0 %v2419
    %7025 = vmatpush1.bf16.msra.mxu0 %v2418
    %7026 = vmatprep.subr.bf16.mxu0 %v2435
    %7027 = vmatpush1.bf16.msra.mxu0 %v2434
    %7028 = vmatprep.subr.bf16.mxu0 %v2451
    %7029 = vmatpush1.bf16.msra.mxu0 %v2450
    %7030 = vmatprep.subr.bf16.mxu0 %v2467
    %7031 = vmatpush1.bf16.msra.mxu0 %v2466
    %7032 = vmatprep.subr.bf16.mxu0 %v2483
    %7033 = vmatpush1.bf16.msra.mxu0 %v2482
    %7034 = vmatprep.mubr.bf16.mxu0 %v6835
    %7035 = vmatmul.mubr.bf16.gmra.mrb[0].mxu0 %v6834
    %v7036 = vpop.f32.mrb[0].mxu0
    %v7037 = vadd.f32 0.0, %v7036
    %v7038 = vpop.f32.mrb[0].mxu0
    %v7039 = vadd.f32 0.0, %v7038
    %v7040 = vpop.f32.mrb[0].mxu0
    %v7041 = vpop.f32.mrb[0].mxu0
    %7042 = vdwg.mxu0
    %7043 = vmatprep.subr.bf16.mxu0 %v2499
    %7044 = vmatpush1.bf16.msra.mxu0 %v2498
    %7045 = vmatprep.subr.bf16.mxu0 %v2515
    %7046 = vmatpush1.bf16.msra.mxu0 %v2514
    %7047 = vmatprep.subr.bf16.mxu0 %v2531
    %7048 = vmatpush1.bf16.msra.mxu0 %v2530
    %7049 = vmatprep.subr.bf16.mxu0 %v2547
    %7050 = vmatpush1.bf16.msra.mxu0 %v2546
    %7051 = vmatprep.subr.bf16.mxu0 %v2563
    %7052 = vmatpush1.bf16.msra.mxu0 %v2562
    %7053 = vmatprep.subr.bf16.mxu0 %v2579
    %7054 = vmatpush1.bf16.msra.mxu0 %v2578
    %7055 = vmatprep.subr.bf16.mxu0 %v2595
    %7056 = vmatpush1.bf16.msra.mxu0 %v2594
    %7057 = vmatprep.subr.bf16.mxu0 %v2611
    %7058 = vmatpush1.bf16.msra.mxu0 %v2610
    %7059 = vmatprep.subr.bf16.mxu0 %v2627
    %7060 = vmatpush1.bf16.msra.mxu0 %v2626
    %7061 = vmatprep.subr.bf16.mxu0 %v2643
    %7062 = vmatpush1.bf16.msra.mxu0 %v2642
    %7063 = vmatprep.subr.bf16.mxu0 %v2659
    %7064 = vmatpush1.bf16.msra.mxu0 %v2658
    %7065 = vmatprep.subr.bf16.mxu0 %v2675
    %7066 = vmatpush1.bf16.msra.mxu0 %v2674
    %7067 = vmatprep.subr.bf16.mxu0 %v2691
    %7068 = vmatpush1.bf16.msra.mxu0 %v2690
    %7069 = vmatprep.subr.bf16.mxu0 %v2707
    %7070 = vmatpush1.bf16.msra.mxu0 %v2706
    %7071 = vmatprep.subr.bf16.mxu0 %v2723
    %7072 = vmatpush1.bf16.msra.mxu0 %v2722
    %7073 = vmatprep.subr.bf16.mxu0 %v2739
    %7074 = vmatpush1.bf16.msra.mxu0 %v2738
    %7075 = vmatprep.mubr.bf16.mxu0 %v6837
    %7076 = vmatmul.mubr.bf16.gmra.mrb[0].mxu0 %v6836
    %v7077 = vpop.f32.mrb[0].mxu0
    %v7078 = vadd.f32 %v7037, %v7077
    %v7079 = vpop.f32.mrb[0].mxu0
    %v7080 = vadd.f32 %v7039, %v7079
    %v7081 = vpop.f32.mrb[0].mxu0
    %v7082 = vpop.f32.mrb[0].mxu0
    %7083 = vdwg.mxu0
    %7084 = vmatprep.subr.bf16.mxu0 %v2245
    %7085 = vmatpush1.bf16.msra.mxu0 %v2244
    %7086 = vmatprep.subr.bf16.mxu0 %v2261
    %7087 = vmatpush1.bf16.msra.mxu0 %v2260
    %7088 = vmatprep.subr.bf16.mxu0 %v2277
    %7089 = vmatpush1.bf16.msra.mxu0 %v2276
    %7090 = vmatprep.subr.bf16.mxu0 %v2293
    %7091 = vmatpush1.bf16.msra.mxu0 %v2292
    %7092 = vmatprep.subr.bf16.mxu0 %v2309
    %7093 = vmatpush1.bf16.msra.mxu0 %v2308
    %7094 = vmatprep.subr.bf16.mxu0 %v2325
    %7095 = vmatpush1.bf16.msra.mxu0 %v2324
    %7096 = vmatprep.subr.bf16.mxu0 %v2341
    %7097 = vmatpush1.bf16.msra.mxu0 %v2340
    %7098 = vmatprep.subr.bf16.mxu0 %v2357
    %7099 = vmatpush1.bf16.msra.mxu0 %v2356
    %7100 = vmatprep.subr.bf16.mxu0 %v2373
    %7101 = vmatpush1.bf16.msra.mxu0 %v2372
    %7102 = vmatprep.subr.bf16.mxu0 %v2389
    %7103 = vmatpush1.bf16.msra.mxu0 %v2388
    %7104 = vmatprep.subr.bf16.mxu0 %v2405
    %7105 = vmatpush1.bf16.msra.mxu0 %v2404
    %7106 = vmatprep.subr.bf16.mxu0 %v2421
    %7107 = vmatpush1.bf16.msra.mxu0 %v2420
    %7108 = vmatprep.subr.bf16.mxu0 %v2437
    %7109 = vmatpush1.bf16.msra.mxu0 %v2436
    %7110 = vmatprep.subr.bf16.mxu0 %v2453
    %7111 = vmatpush1.bf16.msra.mxu0 %v2452
    %7112 = vmatprep.subr.bf16.mxu0 %v2469
    %7113 = vmatpush1.bf16.msra.mxu0 %v2468
    %7114 = vmatprep.subr.bf16.mxu0 %v2485
    %7115 = vmatpush1.bf16.msra.mxu0 %v2484
    %7116 = vmatprep.mubr.bf16.mxu0 %v6835
    %7117 = vmatmul.mubr.bf16.gmra.mrb[0].mxu0 %v6834
    %v7118 = vpop.f32.mrb[0].mxu0
    %v7119 = vadd.f32 0.0, %v7118
    %v7120 = vpop.f32.mrb[0].mxu0
    %v7121 = vadd.f32 0.0, %v7120
    %v7122 = vpop.f32.mrb[0].mxu0
    %v7123 = vpop.f32.mrb[0].mxu0
    %7124 = vdwg.mxu0
    %7125 = vmatprep.subr.bf16.mxu0 %v2501
    %7126 = vmatpush1.bf16.msra.mxu0 %v2500
    %7127 = vmatprep.subr.bf16.mxu0 %v2517
    %7128 = vmatpush1.bf16.msra.mxu0 %v2516
    %7129 = vmatprep.subr.bf16.mxu0 %v2533
    %7130 = vmatpush1.bf16.msra.mxu0 %v2532
    %7131 = vmatprep.subr.bf16.mxu0 %v2549
    %7132 = vmatpush1.bf16.msra.mxu0 %v2548
    %7133 = vmatprep.subr.bf16.mxu0 %v2565
    %7134 = vmatpush1.bf16.msra.mxu0 %v2564
    %7135 = vmatprep.subr.bf16.mxu0 %v2581
    %7136 = vmatpush1.bf16.msra.mxu0 %v2580
    %7137 = vmatprep.subr.bf16.mxu0 %v2597
    %7138 = vmatpush1.bf16.msra.mxu0 %v2596
    %7139 = vmatprep.subr.bf16.mxu0 %v2613
    %7140 = vmatpush1.bf16.msra.mxu0 %v2612
    %7141 = vmatprep.subr.bf16.mxu0 %v2629
    %7142 = vmatpush1.bf16.msra.mxu0 %v2628
    %7143 = vmatprep.subr.bf16.mxu0 %v2645
    %7144 = vmatpush1.bf16.msra.mxu0 %v2644
    %7145 = vmatprep.subr.bf16.mxu0 %v2661
    %7146 = vmatpush1.bf16.msra.mxu0 %v2660
    %7147 = vmatprep.subr.bf16.mxu0 %v2677
    %7148 = vmatpush1.bf16.msra.mxu0 %v2676
    %7149 = vmatprep.subr.bf16.mxu0 %v2693
    %7150 = vmatpush1.bf16.msra.mxu0 %v2692
    %7151 = vmatprep.subr.bf16.mxu0 %v2709
    %7152 = vmatpush1.bf16.msra.mxu0 %v2708
    %7153 = vmatprep.subr.bf16.mxu0 %v2725
    %7154 = vmatpush1.bf16.msra.mxu0 %v2724
    %7155 = vmatprep.subr.bf16.mxu0 %v2741
    %7156 = vmatpush1.bf16.msra.mxu0 %v2740
    %7157 = vmatprep.mubr.bf16.mxu0 %v6837
    %7158 = vmatmul.mubr.bf16.gmra.mrb[0].mxu0 %v6836
    %v7159 = vpop.f32.mrb[0].mxu0
    %v7160 = vadd.f32 %v7119, %v7159
    %v7161 = vpop.f32.mrb[0].mxu0
    %v7162 = vadd.f32 %v7121, %v7161
    %v7163 = vpop.f32.mrb[0].mxu0
    %v7164 = vpop.f32.mrb[0].mxu0
    %7165 = vdwg.mxu0
    %7166 = vmatprep.subr.bf16.mxu0 %v2247
    %7167 = vmatpush1.bf16.msra.mxu0 %v2246
    %7168 = vmatprep.subr.bf16.mxu0 %v2263
    %7169 = vmatpush1.bf16.msra.mxu0 %v2262
    %7170 = vmatprep.subr.bf16.mxu0 %v2279
    %7171 = vmatpush1.bf16.msra.mxu0 %v2278
    %7172 = vmatprep.subr.bf16.mxu0 %v2295
    %7173 = vmatpush1.bf16.msra.mxu0 %v2294
    %7174 = vmatprep.subr.bf16.mxu0 %v2311
    %7175 = vmatpush1.bf16.msra.mxu0 %v2310
    %7176 = vmatprep.subr.bf16.mxu0 %v2327
    %7177 = vmatpush1.bf16.msra.mxu0 %v2326
    %7178 = vmatprep.subr.bf16.mxu0 %v2343
    %7179 = vmatpush1.bf16.msra.mxu0 %v2342
    %7180 = vmatprep.subr.bf16.mxu0 %v2359
    %7181 = vmatpush1.bf16.msra.mxu0 %v2358
    %7182 = vmatprep.subr.bf16.mxu0 %v2375
    %7183 = vmatpush1.bf16.msra.mxu0 %v2374
    %7184 = vmatprep.subr.bf16.mxu0 %v2391
    %7185 = vmatpush1.bf16.msra.mxu0 %v2390
    %7186 = vmatprep.subr.bf16.mxu0 %v2407
    %7187 = vmatpush1.bf16.msra.mxu0 %v2406
    %7188 = vmatprep.subr.bf16.mxu0 %v2423
    %7189 = vmatpush1.bf16.msra.mxu0 %v2422
    %7190 = vmatprep.subr.bf16.mxu0 %v2439
    %7191 = vmatpush1.bf16.msra.mxu0 %v2438
    %7192 = vmatprep.subr.bf16.mxu0 %v2455
    %7193 = vmatpush1.bf16.msra.mxu0 %v2454
    %7194 = vmatprep.subr.bf16.mxu0 %v2471
    %7195 = vmatpush1.bf16.msra.mxu0 %v2470
    %7196 = vmatprep.subr.bf16.mxu0 %v2487
    %7197 = vmatpush1.bf16.msra.mxu0 %v2486
    %7198 = vmatprep.mubr.bf16.mxu0 %v6835
    %7199 = vmatmul.mubr.bf16.gmra.mrb[0].mxu0 %v6834
    %v7200 = vpop.f32.mrb[0].mxu0
    %v7201 = vadd.f32 0.0, %v7200
    %v7202 = vpop.f32.mrb[0].mxu0
    %v7203 = vadd.f32 0.0, %v7202
    %v7204 = vpop.f32.mrb[0].mxu0
    %v7205 = vpop.f32.mrb[0].mxu0
    %7206 = vdwg.mxu0
    %7207 = vmatprep.subr.bf16.mxu0 %v2503
    %7208 = vmatpush1.bf16.msra.mxu0 %v2502
    %7209 = vmatprep.subr.bf16.mxu0 %v2519
    %7210 = vmatpush1.bf16.msra.mxu0 %v2518
    %7211 = vmatprep.subr.bf16.mxu0 %v2535
    %7212 = vmatpush1.bf16.msra.mxu0 %v2534
    %7213 = vmatprep.subr.bf16.mxu0 %v2551
    %7214 = vmatpush1.bf16.msra.mxu0 %v2550
    %7215 = vmatprep.subr.bf16.mxu0 %v2567
    %7216 = vmatpush1.bf16.msra.mxu0 %v2566
    %7217 = vmatprep.subr.bf16.mxu0 %v2583
    %7218 = vmatpush1.bf16.msra.mxu0 %v2582
    %7219 = vmatprep.subr.bf16.mxu0 %v2599
    %7220 = vmatpush1.bf16.msra.mxu0 %v2598
    %7221 = vmatprep.subr.bf16.mxu0 %v2615
    %7222 = vmatpush1.bf16.msra.mxu0 %v2614
    %7223 = vmatprep.subr.bf16.mxu0 %v2631
    %7224 = vmatpush1.bf16.msra.mxu0 %v2630
    %7225 = vmatprep.subr.bf16.mxu0 %v2647
    %7226 = vmatpush1.bf16.msra.mxu0 %v2646
    %7227 = vmatprep.subr.bf16.mxu0 %v2663
    %7228 = vmatpush1.bf16.msra.mxu0 %v2662
    %7229 = vmatprep.subr.bf16.mxu0 %v2679
    %7230 = vmatpush1.bf16.msra.mxu0 %v2678
    %7231 = vmatprep.subr.bf16.mxu0 %v2695
    %7232 = vmatpush1.bf16.msra.mxu0 %v2694
    %7233 = vmatprep.subr.bf16.mxu0 %v2711
    %7234 = vmatpush1.bf16.msra.mxu0 %v2710
    %7235 = vmatprep.subr.bf16.mxu0 %v2727
    %7236 = vmatpush1.bf16.msra.mxu0 %v2726
    %7237 = vmatprep.subr.bf16.mxu0 %v2743
    %7238 = vmatpush1.bf16.msra.mxu0 %v2742
    %7239 = vmatprep.mubr.bf16.mxu0 %v6837
    %7240 = vmatmul.mubr.bf16.gmra.mrb[0].mxu0 %v6836
    %v7241 = vpop.f32.mrb[0].mxu0
    %v7242 = vadd.f32 %v7201, %v7241
    %v7243 = vpop.f32.mrb[0].mxu0
    %v7244 = vadd.f32 %v7203, %v7243
    %v7245 = vpop.f32.mrb[0].mxu0
    %v7246 = vpop.f32.mrb[0].mxu0
    %7247 = vdwg.mxu0
    %7248 = vmatprep.subr.bf16.mxu0 %v2249
    %7249 = vmatpush1.bf16.msra.mxu0 %v2248
    %7250 = vmatprep.subr.bf16.mxu0 %v2265
    %7251 = vmatpush1.bf16.msra.mxu0 %v2264
    %7252 = vmatprep.subr.bf16.mxu0 %v2281
    %7253 = vmatpush1.bf16.msra.mxu0 %v2280
    %7254 = vmatprep.subr.bf16.mxu0 %v2297
    %7255 = vmatpush1.bf16.msra.mxu0 %v2296
    %7256 = vmatprep.subr.bf16.mxu0 %v2313
    %7257 = vmatpush1.bf16.msra.mxu0 %v2312
    %7258 = vmatprep.subr.bf16.mxu0 %v2329
    %7259 = vmatpush1.bf16.msra.mxu0 %v2328
    %7260 = vmatprep.subr.bf16.mxu0 %v2345
    %7261 = vmatpush1.bf16.msra.mxu0 %v2344
    %7262 = vmatprep.subr.bf16.mxu0 %v2361
    %7263 = vmatpush1.bf16.msra.mxu0 %v2360
    %7264 = vmatprep.subr.bf16.mxu0 %v2377
    %7265 = vmatpush1.bf16.msra.mxu0 %v2376
    %7266 = vmatprep.subr.bf16.mxu0 %v2393
    %7267 = vmatpush1.bf16.msra.mxu0 %v2392
    %7268 = vmatprep.subr.bf16.mxu0 %v2409
    %7269 = vmatpush1.bf16.msra.mxu0 %v2408
    %7270 = vmatprep.subr.bf16.mxu0 %v2425
    %7271 = vmatpush1.bf16.msra.mxu0 %v2424
    %7272 = vmatprep.subr.bf16.mxu0 %v2441
    %7273 = vmatpush1.bf16.msra.mxu0 %v2440
    %7274 = vmatprep.subr.bf16.mxu0 %v2457
    %7275 = vmatpush1.bf16.msra.mxu0 %v2456
    %7276 = vmatprep.subr.bf16.mxu0 %v2473
    %7277 = vmatpush1.bf16.msra.mxu0 %v2472
    %7278 = vmatprep.subr.bf16.mxu0 %v2489
    %7279 = vmatpush1.bf16.msra.mxu0 %v2488
    %7280 = vmatprep.mubr.bf16.mxu0 %v6835
    %7281 = vmatmul.mubr.bf16.gmra.mrb[0].mxu0 %v6834
    %v7282 = vpop.f32.mrb[0].mxu0
    %v7283 = vadd.f32 0.0, %v7282
    %v7284 = vpop.f32.mrb[0].mxu0
    %v7285 = vadd.f32 0.0, %v7284
    %v7286 = vpop.f32.mrb[0].mxu0
    %v7287 = vpop.f32.mrb[0].mxu0
    %7288 = vdwg.mxu0
    %7289 = vmatprep.subr.bf16.mxu0 %v2505
    %7290 = vmatpush1.bf16.msra.mxu0 %v2504
    %7291 = vmatprep.subr.bf16.mxu0 %v2521
    %7292 = vmatpush1.bf16.msra.mxu0 %v2520
    %7293 = vmatprep.subr.bf16.mxu0 %v2537
    %7294 = vmatpush1.bf16.msra.mxu0 %v2536
    %7295 = vmatprep.subr.bf16.mxu0 %v2553
    %7296 = vmatpush1.bf16.msra.mxu0 %v2552
    %7297 = vmatprep.subr.bf16.mxu0 %v2569
    %7298 = vmatpush1.bf16.msra.mxu0 %v2568
    %7299 = vmatprep.subr.bf16.mxu0 %v2585
    %7300 = vmatpush1.bf16.msra.mxu0 %v2584
    %7301 = vmatprep.subr.bf16.mxu0 %v2601
    %7302 = vmatpush1.bf16.msra.mxu0 %v2600
    %7303 = vmatprep.subr.bf16.mxu0 %v2617
    %7304 = vmatpush1.bf16.msra.mxu0 %v2616
    %7305 = vmatprep.subr.bf16.mxu0 %v2633
    %7306 = vmatpush1.bf16.msra.mxu0 %v2632
    %7307 = vmatprep.subr.bf16.mxu0 %v2649
    %7308 = vmatpush1.bf16.msra.mxu0 %v2648
    %7309 = vmatprep.subr.bf16.mxu0 %v2665
    %7310 = vmatpush1.bf16.msra.mxu0 %v2664
    %7311 = vmatprep.subr.bf16.mxu0 %v2681
    %7312 = vmatpush1.bf16.msra.mxu0 %v2680
    %7313 = vmatprep.subr.bf16.mxu0 %v2697
    %7314 = vmatpush1.bf16.msra.mxu0 %v2696
    %7315 = vmatprep.subr.bf16.mxu0 %v2713
    %7316 = vmatpush1.bf16.msra.mxu0 %v2712
    %7317 = vmatprep.subr.bf16.mxu0 %v2729
    %7318 = vmatpush1.bf16.msra.mxu0 %v2728
    %7319 = vmatprep.subr.bf16.mxu0 %v2745
    %7320 = vmatpush1.bf16.msra.mxu0 %v2744
    %7321 = vmatprep.mubr.bf16.mxu0 %v6837
    %7322 = vmatmul.mubr.bf16.gmra.mrb[0].mxu0 %v6836
    %v7323 = vpop.f32.mrb[0].mxu0
    %v7324 = vadd.f32 %v7283, %v7323
    %v7325 = vpop.f32.mrb[0].mxu0
    %v7326 = vadd.f32 %v7285, %v7325
    %v7327 = vpop.f32.mrb[0].mxu0
    %v7328 = vpop.f32.mrb[0].mxu0
    %7329 = vdwg.mxu0
    %7330 = vmatprep.subr.bf16.mxu0 %v2251
    %7331 = vmatpush1.bf16.msra.mxu0 %v2250
    %7332 = vmatprep.subr.bf16.mxu0 %v2267
    %7333 = vmatpush1.bf16.msra.mxu0 %v2266
    %7334 = vmatprep.subr.bf16.mxu0 %v2283
    %7335 = vmatpush1.bf16.msra.mxu0 %v2282
    %7336 = vmatprep.subr.bf16.mxu0 %v2299
    %7337 = vmatpush1.bf16.msra.mxu0 %v2298
    %7338 = vmatprep.subr.bf16.mxu0 %v2315
    %7339 = vmatpush1.bf16.msra.mxu0 %v2314
    %7340 = vmatprep.subr.bf16.mxu0 %v2331
    %7341 = vmatpush1.bf16.msra.mxu0 %v2330
    %7342 = vmatprep.subr.bf16.mxu0 %v2347
    %7343 = vmatpush1.bf16.msra.mxu0 %v2346
    %7344 = vmatprep.subr.bf16.mxu0 %v2363
    %7345 = vmatpush1.bf16.msra.mxu0 %v2362
    %7346 = vmatprep.subr.bf16.mxu0 %v2379
    %7347 = vmatpush1.bf16.msra.mxu0 %v2378
    %7348 = vmatprep.subr.bf16.mxu0 %v2395
    %7349 = vmatpush1.bf16.msra.mxu0 %v2394
    %7350 = vmatprep.subr.bf16.mxu0 %v2411
    %7351 = vmatpush1.bf16.msra.mxu0 %v2410
    %7352 = vmatprep.subr.bf16.mxu0 %v2427
    %7353 = vmatpush1.bf16.msra.mxu0 %v2426
    %7354 = vmatprep.subr.bf16.mxu0 %v2443
    %7355 = vmatpush1.bf16.msra.mxu0 %v2442
    %7356 = vmatprep.subr.bf16.mxu0 %v2459
    %7357 = vmatpush1.bf16.msra.mxu0 %v2458
    %7358 = vmatprep.subr.bf16.mxu0 %v2475
    %7359 = vmatpush1.bf16.msra.mxu0 %v2474
    %7360 = vmatprep.subr.bf16.mxu0 %v2491
    %7361 = vmatpush1.bf16.msra.mxu0 %v2490
    %7362 = vmatprep.mubr.bf16.mxu0 %v6835
    %7363 = vmatmul.mubr.bf16.gmra.mrb[0].mxu0 %v6834
    %v7364 = vpop.f32.mrb[0].mxu0
    %v7365 = vadd.f32 0.0, %v7364
    %v7366 = vpop.f32.mrb[0].mxu0
    %v7367 = vadd.f32 0.0, %v7366
    %v7368 = vpop.f32.mrb[0].mxu0
    %v7369 = vpop.f32.mrb[0].mxu0
    %7370 = vdwg.mxu0
    %7371 = vmatprep.subr.bf16.mxu0 %v2507
    %7372 = vmatpush1.bf16.msra.mxu0 %v2506
    %7373 = vmatprep.subr.bf16.mxu0 %v2523
    %7374 = vmatpush1.bf16.msra.mxu0 %v2522
    %7375 = vmatprep.subr.bf16.mxu0 %v2539
    %7376 = vmatpush1.bf16.msra.mxu0 %v2538
    %7377 = vmatprep.subr.bf16.mxu0 %v2555
    %7378 = vmatpush1.bf16.msra.mxu0 %v2554
    %7379 = vmatprep.subr.bf16.mxu0 %v2571
    %7380 = vmatpush1.bf16.msra.mxu0 %v2570
    %7381 = vmatprep.subr.bf16.mxu0 %v2587
    %7382 = vmatpush1.bf16.msra.mxu0 %v2586
    %7383 = vmatprep.subr.bf16.mxu0 %v2603
    %7384 = vmatpush1.bf16.msra.mxu0 %v2602
    %7385 = vmatprep.subr.bf16.mxu0 %v2619
    %7386 = vmatpush1.bf16.msra.mxu0 %v2618
    %7387 = vmatprep.subr.bf16.mxu0 %v2635
    %7388 = vmatpush1.bf16.msra.mxu0 %v2634
    %7389 = vmatprep.subr.bf16.mxu0 %v2651
    %7390 = vmatpush1.bf16.msra.mxu0 %v2650
    %7391 = vmatprep.subr.bf16.mxu0 %v2667
    %7392 = vmatpush1.bf16.msra.mxu0 %v2666
    %7393 = vmatprep.subr.bf16.mxu0 %v2683
    %7394 = vmatpush1.bf16.msra.mxu0 %v2682
    %7395 = vmatprep.subr.bf16.mxu0 %v2699
    %7396 = vmatpush1.bf16.msra.mxu0 %v2698
    %7397 = vmatprep.subr.bf16.mxu0 %v2715
    %7398 = vmatpush1.bf16.msra.mxu0 %v2714
    %7399 = vmatprep.subr.bf16.mxu0 %v2731
    %7400 = vmatpush1.bf16.msra.mxu0 %v2730
    %7401 = vmatprep.subr.bf16.mxu0 %v2747
    %7402 = vmatpush1.bf16.msra.mxu0 %v2746
    %7403 = vmatprep.mubr.bf16.mxu0 %v6837
    %7404 = vmatmul.mubr.bf16.gmra.mrb[0].mxu0 %v6836
    %v7405 = vpop.f32.mrb[0].mxu0
    %v7406 = vadd.f32 %v7365, %v7405
    %v7407 = vpop.f32.mrb[0].mxu0
    %v7408 = vadd.f32 %v7367, %v7407
    %v7409 = vpop.f32.mrb[0].mxu0
    %v7410 = vpop.f32.mrb[0].mxu0
    %7411 = vdwg.mxu0
    %7412 = vmatprep.subr.bf16.mxu0 %v2253
    %7413 = vmatpush1.bf16.msra.mxu0 %v2252
    %7414 = vmatprep.subr.bf16.mxu0 %v2269
    %7415 = vmatpush1.bf16.msra.mxu0 %v2268
    %7416 = vmatprep.subr.bf16.mxu0 %v2285
    %7417 = vmatpush1.bf16.msra.mxu0 %v2284
    %7418 = vmatprep.subr.bf16.mxu0 %v2301
    %7419 = vmatpush1.bf16.msra.mxu0 %v2300
    %7420 = vmatprep.subr.bf16.mxu0 %v2317
    %7421 = vmatpush1.bf16.msra.mxu0 %v2316
    %7422 = vmatprep.subr.bf16.mxu0 %v2333
    %7423 = vmatpush1.bf16.msra.mxu0 %v2332
    %7424 = vmatprep.subr.bf16.mxu0 %v2349
    %7425 = vmatpush1.bf16.msra.mxu0 %v2348
    %7426 = vmatprep.subr.bf16.mxu0 %v2365
    %7427 = vmatpush1.bf16.msra.mxu0 %v2364
    %7428 = vmatprep.subr.bf16.mxu0 %v2381
    %7429 = vmatpush1.bf16.msra.mxu0 %v2380
    %7430 = vmatprep.subr.bf16.mxu0 %v2397
    %7431 = vmatpush1.bf16.msra.mxu0 %v2396
    %7432 = vmatprep.subr.bf16.mxu0 %v2413
    %7433 = vmatpush1.bf16.msra.mxu0 %v2412
    %7434 = vmatprep.subr.bf16.mxu0 %v2429
    %7435 = vmatpush1.bf16.msra.mxu0 %v2428
    %7436 = vmatprep.subr.bf16.mxu0 %v2445
    %7437 = vmatpush1.bf16.msra.mxu0 %v2444
    %7438 = vmatprep.subr.bf16.mxu0 %v2461
    %7439 = vmatpush1.bf16.msra.mxu0 %v2460
    %7440 = vmatprep.subr.bf16.mxu0 %v2477
    %7441 = vmatpush1.bf16.msra.mxu0 %v2476
    %7442 = vmatprep.subr.bf16.mxu0 %v2493
    %7443 = vmatpush1.bf16.msra.mxu0 %v2492
    %7444 = vmatprep.mubr.bf16.mxu0 %v6835
    %7445 = vmatmul.mubr.bf16.gmra.mrb[0].mxu0 %v6834
    %v7446 = vpop.f32.mrb[0].mxu0
    %v7447 = vadd.f32 0.0, %v7446
    %v7448 = vpop.f32.mrb[0].mxu0
    %v7449 = vadd.f32 0.0, %v7448
    %v7450 = vpop.f32.mrb[0].mxu0
    %v7451 = vpop.f32.mrb[0].mxu0
    %7452 = vdwg.mxu0
    %7453 = vmatprep.subr.bf16.mxu0 %v2509
    %7454 = vmatpush1.bf16.msra.mxu0 %v2508
    %7455 = vmatprep.subr.bf16.mxu0 %v2525
    %7456 = vmatpush1.bf16.msra.mxu0 %v2524
    %7457 = vmatprep.subr.bf16.mxu0 %v2541
    %7458 = vmatpush1.bf16.msra.mxu0 %v2540
    %7459 = vmatprep.subr.bf16.mxu0 %v2557
    %7460 = vmatpush1.bf16.msra.mxu0 %v2556
    %7461 = vmatprep.subr.bf16.mxu0 %v2573
    %7462 = vmatpush1.bf16.msra.mxu0 %v2572
    %7463 = vmatprep.subr.bf16.mxu0 %v2589
    %7464 = vmatpush1.bf16.msra.mxu0 %v2588
    %7465 = vmatprep.subr.bf16.mxu0 %v2605
    %7466 = vmatpush1.bf16.msra.mxu0 %v2604
    %7467 = vmatprep.subr.bf16.mxu0 %v2621
    %7468 = vmatpush1.bf16.msra.mxu0 %v2620
    %7469 = vmatprep.subr.bf16.mxu0 %v2637
    %7470 = vmatpush1.bf16.msra.mxu0 %v2636
    %7471 = vmatprep.subr.bf16.mxu0 %v2653
    %7472 = vmatpush1.bf16.msra.mxu0 %v2652
    %7473 = vmatprep.subr.bf16.mxu0 %v2669
    %7474 = vmatpush1.bf16.msra.mxu0 %v2668
    %7475 = vmatprep.subr.bf16.mxu0 %v2685
    %7476 = vmatpush1.bf16.msra.mxu0 %v2684
    %7477 = vmatprep.subr.bf16.mxu0 %v2701
    %7478 = vmatpush1.bf16.msra.mxu0 %v2700
    %7479 = vmatprep.subr.bf16.mxu0 %v2717
    %7480 = vmatpush1.bf16.msra.mxu0 %v2716
    %7481 = vmatprep.subr.bf16.mxu0 %v2733
    %7482 = vmatpush1.bf16.msra.mxu0 %v2732
    %7483 = vmatprep.subr.bf16.mxu0 %v2749
    %7484 = vmatpush1.bf16.msra.mxu0 %v2748
    %7485 = vmatprep.mubr.bf16.mxu0 %v6837
    %7486 = vmatmul.mubr.bf16.gmra.mrb[0].mxu0 %v6836
    %v7487 = vpop.f32.mrb[0].mxu0
    %v7488 = vadd.f32 %v7447, %v7487
    %v7489 = vpop.f32.mrb[0].mxu0
    %v7490 = vadd.f32 %v7449, %v7489
    %v7491 = vpop.f32.mrb[0].mxu0
    %v7492 = vpop.f32.mrb[0].mxu0
    %7493 = vdwg.mxu0
    %v7510 = vrot.slane %v6914, 6
    %v7511 = vrot.slane %v6916, 6
    %v7512 = vrot.slane %v6996, 6
    %v7513 = vrot.slane %v6998, 6
    %v7514 = vrot.slane %v7078, 6
    %v7515 = vrot.slane %v7080, 6
    %v7516 = vrot.slane %v7160, 6
    %v7517 = vrot.slane %v7162, 6
    %v7518 = vrot.slane %v7242, 6
    %v7519 = vrot.slane %v7244, 6
    %v7520 = vrot.slane %v7324, 6
    %v7521 = vrot.slane %v7326, 6
    %v7522 = vrot.slane %v7406, 6
    %v7523 = vrot.slane %v7408, 6
    %v7524 = vrot.slane %v7488, 6
    %v7525 = vrot.slane %v7490, 6
    %v7542 = vadd.f32 %v791, %v7510
    %v7543 = vadd.f32 %v793, %v7511
    %v7544 = vadd.f32 %v834, %v7512
    %v7545 = vadd.f32 %v836, %v7513
    %v7546 = vadd.f32 %v877, %v7514
    %v7547 = vadd.f32 %v879, %v7515
    %v7548 = vadd.f32 %v920, %v7516
    %v7549 = vadd.f32 %v922, %v7517
    %v7550 = vadd.f32 %v963, %v7518
    %v7551 = vadd.f32 %v965, %v7519
    %v7552 = vadd.f32 %v1006, %v7520
    %v7553 = vadd.f32 %v1008, %v7521
    %v7554 = vadd.f32 %v1049, %v7522
    %v7555 = vadd.f32 %v1051, %v7523
    %v7556 = vadd.f32 %v1092, %v7524
    %v7557 = vadd.f32 %v1094, %v7525
    %v7558 = vxor.u32 %v7542, 2147483648
    %v7559 = vxor.u32 %v7543, 2147483648
    %v7560 = vxor.u32 %v7544, 2147483648
    %v7561 = vxor.u32 %v7545, 2147483648
    %v7562 = vmul.f32 %v7558, 1.442695
    %v7563 = vpow.pop %v7562
    %v7564 = vmul.f32 %v7559, 1.442695
    %v7565 = vpow.pop %v7564
    %v7566 = vmul.f32 %v7560, 1.442695
    %v7567 = vpow.pop %v7566
    %v7568 = vmul.f32 %v7561, 1.442695
    %v7569 = vpow.pop %v7568
    %v7570 = vadd.f32 %v7563, 1.0
    %v7571 = vadd.f32 %v7565, 1.0
    %v7572 = vadd.f32 %v7567, 1.0
    %v7573 = vadd.f32 %v7569, 1.0
    %v7574 = vrcp.pop %v7570
    %v7575 = vmul.f32 1.0, %v7574
    %v7576 = vrcp.pop %v7571
    %v7577 = vmul.f32 1.0, %v7576
    %v7578 = vrcp.pop %v7572
    %v7579 = vmul.f32 1.0, %v7578
    %v7580 = vrcp.pop %v7573
    %v7581 = vmul.f32 1.0, %v7580
    %v7582 = vxor.u32 %v7546, 2147483648
    %v7583 = vxor.u32 %v7547, 2147483648
    %v7584 = vxor.u32 %v7548, 2147483648
    %v7585 = vxor.u32 %v7549, 2147483648
    %v7586 = vmul.f32 %v7582, 1.442695
    %v7587 = vpow.pop %v7586
    %v7588 = vmul.f32 %v7583, 1.442695
    %v7589 = vpow.pop %v7588
    %v7590 = vmul.f32 %v7584, 1.442695
    %v7591 = vpow.pop %v7590
    %v7592 = vmul.f32 %v7585, 1.442695
    %v7593 = vpow.pop %v7592
    %v7594 = vadd.f32 %v7587, 1.0
    %v7595 = vadd.f32 %v7589, 1.0
    %v7596 = vadd.f32 %v7591, 1.0
    %v7597 = vadd.f32 %v7593, 1.0
    %v7598 = vrcp.pop %v7594
    %v7599 = vmul.f32 1.0, %v7598
    %v7600 = vrcp.pop %v7595
    %v7601 = vmul.f32 1.0, %v7600
    %v7602 = vrcp.pop %v7596
    %v7603 = vmul.f32 1.0, %v7602
    %v7604 = vrcp.pop %v7597
    %v7605 = vmul.f32 1.0, %v7604
    %v7606 = vtanh.pop %v7550
    %v7607 = vtanh.pop %v7551
    %v7608 = vtanh.pop %v7552
    %v7609 = vtanh.pop %v7553
    %v7610 = vxor.u32 %v7554, 2147483648
    %v7611 = vxor.u32 %v7555, 2147483648
    %v7612 = vxor.u32 %v7556, 2147483648
    %v7613 = vxor.u32 %v7557, 2147483648
    %v7614 = vmul.f32 %v7610, 1.442695
    %v7615 = vpow.pop %v7614
    %v7616 = vmul.f32 %v7611, 1.442695
    %v7617 = vpow.pop %v7616
    %v7618 = vmul.f32 %v7612, 1.442695
    %v7619 = vpow.pop %v7618
    %v7620 = vmul.f32 %v7613, 1.442695
    %v7621 = vpow.pop %v7620
    %v7622 = vadd.f32 %v7615, 1.0
    %v7623 = vadd.f32 %v7617, 1.0
    %v7624 = vadd.f32 %v7619, 1.0
    %v7625 = vadd.f32 %v7621, 1.0
    %v7626 = vrcp.pop %v7622
    %v7627 = vmul.f32 1.0, %v7626
    %v7628 = vrcp.pop %v7623
    %v7629 = vmul.f32 1.0, %v7628
    %v7630 = vrcp.pop %v7624
    %v7631 = vmul.f32 1.0, %v7630
    %v7632 = vrcp.pop %v7625
    %v7633 = vmul.f32 1.0, %v7632
    %v7638 = vrot.slane %v6822, 6
    %v7639 = vrot.slane %v6823, 6
    %v7640 = vrot.slane %v6824, 6
    %v7641 = vrot.slane %v6825, 6
    %v7646 = vmul.f32 %v7599, %v7638
    %v7647 = vmul.f32 %v7601, %v7639
    %v7648 = vmul.f32 %v7603, %v7640
    %v7649 = vmul.f32 %v7605, %v7641
    %v7650 = vmul.f32 %v7575, %v7606
    %v7651 = vmul.f32 %v7577, %v7607
    %v7652 = vmul.f32 %v7579, %v7608
    %v7653 = vmul.f32 %v7581, %v7609
    %v7654 = vadd.f32 %v7646, %v7650
    %v7655 = vadd.f32 %v7647, %v7651
    %v7656 = vadd.f32 %v7648, %v7652
    %v7657 = vadd.f32 %v7649, %v7653
    %v7658 = vtanh.pop %v7654
    %v7659 = vtanh.pop %v7655
    %v7660 = vtanh.pop %v7656
    %v7661 = vtanh.pop %v7657
    %v7662 = vmul.f32 %v7627, %v7658
    %v7663 = vmul.f32 %v7629, %v7659
    %v7664 = vmul.f32 %v7631, %v7660
    %v7665 = vmul.f32 %v7633, %v7661
    %v7666 = vpack.c.bf16 %v7662, %v7662
    %v7667 = vpack.c.bf16 %v7663, %v7663
    %v7668 = vpack.c.bf16 %v7664, %v7664
    %v7669 = vpack.c.bf16 %v7665, %v7665
    %v7674 = vrot.slane %v7666, 1
    %v7675 = vrot.slane %v7667, 1
    %v7676 = vrot.slane %v7668, 1
    %v7677 = vrot.slane %v7669, 1
    %7682 = vmatprep.subr.bf16.mxu0 %v2239
    %7683 = vmatpush1.bf16.msra.mxu0 %v2238
    %7684 = vmatprep.subr.bf16.mxu0 %v2255
    %7685 = vmatpush1.bf16.msra.mxu0 %v2254
    %7686 = vmatprep.subr.bf16.mxu0 %v2271
    %7687 = vmatpush1.bf16.msra.mxu0 %v2270
    %7688 = vmatprep.subr.bf16.mxu0 %v2287
    %7689 = vmatpush1.bf16.msra.mxu0 %v2286
    %7690 = vmatprep.subr.bf16.mxu0 %v2303
    %7691 = vmatpush1.bf16.msra.mxu0 %v2302
    %7692 = vmatprep.subr.bf16.mxu0 %v2319
    %7693 = vmatpush1.bf16.msra.mxu0 %v2318
    %7694 = vmatprep.subr.bf16.mxu0 %v2335
    %7695 = vmatpush1.bf16.msra.mxu0 %v2334
    %7696 = vmatprep.subr.bf16.mxu0 %v2351
    %7697 = vmatpush1.bf16.msra.mxu0 %v2350
    %7698 = vmatprep.subr.bf16.mxu0 %v2367
    %7699 = vmatpush1.bf16.msra.mxu0 %v2366
    %7700 = vmatprep.subr.bf16.mxu0 %v2383
    %7701 = vmatpush1.bf16.msra.mxu0 %v2382
    %7702 = vmatprep.subr.bf16.mxu0 %v2399
    %7703 = vmatpush1.bf16.msra.mxu0 %v2398
    %7704 = vmatprep.subr.bf16.mxu0 %v2415
    %7705 = vmatpush1.bf16.msra.mxu0 %v2414
    %7706 = vmatprep.subr.bf16.mxu0 %v2431
    %7707 = vmatpush1.bf16.msra.mxu0 %v2430
    %7708 = vmatprep.subr.bf16.mxu0 %v2447
    %7709 = vmatpush1.bf16.msra.mxu0 %v2446
    %7710 = vmatprep.subr.bf16.mxu0 %v2463
    %7711 = vmatpush1.bf16.msra.mxu0 %v2462
    %7712 = vmatprep.subr.bf16.mxu0 %v2479
    %7713 = vmatpush1.bf16.msra.mxu0 %v2478
    %7714 = vmatprep.mubr.bf16.mxu0 %v7675
    %7715 = vmatmul.mubr.bf16.gmra.mrb[0].mxu0 %v7674
    %v7716 = vpop.f32.mrb[0].mxu0
    %v7717 = vadd.f32 0.0, %v7716
    %v7718 = vpop.f32.mrb[0].mxu0
    %v7719 = vadd.f32 0.0, %v7718
    %v7720 = vpop.f32.mrb[0].mxu0
    %v7721 = vpop.f32.mrb[0].mxu0
    %7722 = vdwg.mxu0
    %7723 = vmatprep.subr.bf16.mxu0 %v2495
    %7724 = vmatpush1.bf16.msra.mxu0 %v2494
    %7725 = vmatprep.subr.bf16.mxu0 %v2511
    %7726 = vmatpush1.bf16.msra.mxu0 %v2510
    %7727 = vmatprep.subr.bf16.mxu0 %v2527
    %7728 = vmatpush1.bf16.msra.mxu0 %v2526
    %7729 = vmatprep.subr.bf16.mxu0 %v2543
    %7730 = vmatpush1.bf16.msra.mxu0 %v2542
    %7731 = vmatprep.subr.bf16.mxu0 %v2559
    %7732 = vmatpush1.bf16.msra.mxu0 %v2558
    %7733 = vmatprep.subr.bf16.mxu0 %v2575
    %7734 = vmatpush1.bf16.msra.mxu0 %v2574
    %7735 = vmatprep.subr.bf16.mxu0 %v2591
    %7736 = vmatpush1.bf16.msra.mxu0 %v2590
    %7737 = vmatprep.subr.bf16.mxu0 %v2607
    %7738 = vmatpush1.bf16.msra.mxu0 %v2606
    %7739 = vmatprep.subr.bf16.mxu0 %v2623
    %7740 = vmatpush1.bf16.msra.mxu0 %v2622
    %7741 = vmatprep.subr.bf16.mxu0 %v2639
    %7742 = vmatpush1.bf16.msra.mxu0 %v2638
    %7743 = vmatprep.subr.bf16.mxu0 %v2655
    %7744 = vmatpush1.bf16.msra.mxu0 %v2654
    %7745 = vmatprep.subr.bf16.mxu0 %v2671
    %7746 = vmatpush1.bf16.msra.mxu0 %v2670
    %7747 = vmatprep.subr.bf16.mxu0 %v2687
    %7748 = vmatpush1.bf16.msra.mxu0 %v2686
    %7749 = vmatprep.subr.bf16.mxu0 %v2703
    %7750 = vmatpush1.bf16.msra.mxu0 %v2702
    %7751 = vmatprep.subr.bf16.mxu0 %v2719
    %7752 = vmatpush1.bf16.msra.mxu0 %v2718
    %7753 = vmatprep.subr.bf16.mxu0 %v2735
    %7754 = vmatpush1.bf16.msra.mxu0 %v2734
    %7755 = vmatprep.mubr.bf16.mxu0 %v7677
    %7756 = vmatmul.mubr.bf16.gmra.mrb[0].mxu0 %v7676
    %v7757 = vpop.f32.mrb[0].mxu0
    %v7758 = vadd.f32 %v7717, %v7757
    %v7759 = vpop.f32.mrb[0].mxu0
    %v7760 = vadd.f32 %v7719, %v7759
    %v7761 = vpop.f32.mrb[0].mxu0
    %v7762 = vpop.f32.mrb[0].mxu0
    %7763 = vdwg.mxu0
    %7764 = vmatprep.subr.bf16.mxu0 %v2241
    %7765 = vmatpush1.bf16.msra.mxu0 %v2240
    %7766 = vmatprep.subr.bf16.mxu0 %v2257
    %7767 = vmatpush1.bf16.msra.mxu0 %v2256
    %7768 = vmatprep.subr.bf16.mxu0 %v2273
    %7769 = vmatpush1.bf16.msra.mxu0 %v2272
    %7770 = vmatprep.subr.bf16.mxu0 %v2289
    %7771 = vmatpush1.bf16.msra.mxu0 %v2288
    %7772 = vmatprep.subr.bf16.mxu0 %v2305
    %7773 = vmatpush1.bf16.msra.mxu0 %v2304
    %7774 = vmatprep.subr.bf16.mxu0 %v2321
    %7775 = vmatpush1.bf16.msra.mxu0 %v2320
    %7776 = vmatprep.subr.bf16.mxu0 %v2337
    %7777 = vmatpush1.bf16.msra.mxu0 %v2336
    %7778 = vmatprep.subr.bf16.mxu0 %v2353
    %7779 = vmatpush1.bf16.msra.mxu0 %v2352
    %7780 = vmatprep.subr.bf16.mxu0 %v2369
    %7781 = vmatpush1.bf16.msra.mxu0 %v2368
    %7782 = vmatprep.subr.bf16.mxu0 %v2385
    %7783 = vmatpush1.bf16.msra.mxu0 %v2384
    %7784 = vmatprep.subr.bf16.mxu0 %v2401
    %7785 = vmatpush1.bf16.msra.mxu0 %v2400
    %7786 = vmatprep.subr.bf16.mxu0 %v2417
    %7787 = vmatpush1.bf16.msra.mxu0 %v2416
    %7788 = vmatprep.subr.bf16.mxu0 %v2433
    %7789 = vmatpush1.bf16.msra.mxu0 %v2432
    %7790 = vmatprep.subr.bf16.mxu0 %v2449
    %7791 = vmatpush1.bf16.msra.mxu0 %v2448
    %7792 = vmatprep.subr.bf16.mxu0 %v2465
    %7793 = vmatpush1.bf16.msra.mxu0 %v2464
    %7794 = vmatprep.subr.bf16.mxu0 %v2481
    %7795 = vmatpush1.bf16.msra.mxu0 %v2480
    %7796 = vmatprep.mubr.bf16.mxu0 %v7675
    %7797 = vmatmul.mubr.bf16.gmra.mrb[0].mxu0 %v7674
    %v7798 = vpop.f32.mrb[0].mxu0
    %v7799 = vadd.f32 0.0, %v7798
    %v7800 = vpop.f32.mrb[0].mxu0
    %v7801 = vadd.f32 0.0, %v7800
    %v7802 = vpop.f32.mrb[0].mxu0
    %v7803 = vpop.f32.mrb[0].mxu0
    %7804 = vdwg.mxu0
    %7805 = vmatprep.subr.bf16.mxu0 %v2497
    %7806 = vmatpush1.bf16.msra.mxu0 %v2496
    %7807 = vmatprep.subr.bf16.mxu0 %v2513
    %7808 = vmatpush1.bf16.msra.mxu0 %v2512
    %7809 = vmatprep.subr.bf16.mxu0 %v2529
    %7810 = vmatpush1.bf16.msra.mxu0 %v2528
    %7811 = vmatprep.subr.bf16.mxu0 %v2545
    %7812 = vmatpush1.bf16.msra.mxu0 %v2544
    %7813 = vmatprep.subr.bf16.mxu0 %v2561
    %7814 = vmatpush1.bf16.msra.mxu0 %v2560
    %7815 = vmatprep.subr.bf16.mxu0 %v2577
    %7816 = vmatpush1.bf16.msra.mxu0 %v2576
    %7817 = vmatprep.subr.bf16.mxu0 %v2593
    %7818 = vmatpush1.bf16.msra.mxu0 %v2592
    %7819 = vmatprep.subr.bf16.mxu0 %v2609
    %7820 = vmatpush1.bf16.msra.mxu0 %v2608
    %7821 = vmatprep.subr.bf16.mxu0 %v2625
    %7822 = vmatpush1.bf16.msra.mxu0 %v2624
    %7823 = vmatprep.subr.bf16.mxu0 %v2641
    %7824 = vmatpush1.bf16.msra.mxu0 %v2640
    %7825 = vmatprep.subr.bf16.mxu0 %v2657
    %7826 = vmatpush1.bf16.msra.mxu0 %v2656
    %7827 = vmatprep.subr.bf16.mxu0 %v2673
    %7828 = vmatpush1.bf16.msra.mxu0 %v2672
    %7829 = vmatprep.subr.bf16.mxu0 %v2689
    %7830 = vmatpush1.bf16.msra.mxu0 %v2688
    %7831 = vmatprep.subr.bf16.mxu0 %v2705
    %7832 = vmatpush1.bf16.msra.mxu0 %v2704
    %7833 = vmatprep.subr.bf16.mxu0 %v2721
    %7834 = vmatpush1.bf16.msra.mxu0 %v2720
    %7835 = vmatprep.subr.bf16.mxu0 %v2737
    %7836 = vmatpush1.bf16.msra.mxu0 %v2736
    %7837 = vmatprep.mubr.bf16.mxu0 %v7677
    %7838 = vmatmul.mubr.bf16.gmra.mrb[0].mxu0 %v7676
    %v7839 = vpop.f32.mrb[0].mxu0
    %v7840 = vadd.f32 %v7799, %v7839
    %v7841 = vpop.f32.mrb[0].mxu0
    %v7842 = vadd.f32 %v7801, %v7841
    %v7843 = vpop.f32.mrb[0].mxu0
    %v7844 = vpop.f32.mrb[0].mxu0
    %7845 = vdwg.mxu0
    %7846 = vmatprep.subr.bf16.mxu0 %v2243
    %7847 = vmatpush1.bf16.msra.mxu0 %v2242
    %7848 = vmatprep.subr.bf16.mxu0 %v2259
    %7849 = vmatpush1.bf16.msra.mxu0 %v2258
    %7850 = vmatprep.subr.bf16.mxu0 %v2275
    %7851 = vmatpush1.bf16.msra.mxu0 %v2274
    %7852 = vmatprep.subr.bf16.mxu0 %v2291
    %7853 = vmatpush1.bf16.msra.mxu0 %v2290
    %7854 = vmatprep.subr.bf16.mxu0 %v2307
    %7855 = vmatpush1.bf16.msra.mxu0 %v2306
    %7856 = vmatprep.subr.bf16.mxu0 %v2323
    %7857 = vmatpush1.bf16.msra.mxu0 %v2322
    %7858 = vmatprep.subr.bf16.mxu0 %v2339
    %7859 = vmatpush1.bf16.msra.mxu0 %v2338
    %7860 = vmatprep.subr.bf16.mxu0 %v2355
    %7861 = vmatpush1.bf16.msra.mxu0 %v2354
    %7862 = vmatprep.subr.bf16.mxu0 %v2371
    %7863 = vmatpush1.bf16.msra.mxu0 %v2370
    %7864 = vmatprep.subr.bf16.mxu0 %v2387
    %7865 = vmatpush1.bf16.msra.mxu0 %v2386
    %7866 = vmatprep.subr.bf16.mxu0 %v2403
    %7867 = vmatpush1.bf16.msra.mxu0 %v2402
    %7868 = vmatprep.subr.bf16.mxu0 %v2419
    %7869 = vmatpush1.bf16.msra.mxu0 %v2418
    %7870 = vmatprep.subr.bf16.mxu0 %v2435
    %7871 = vmatpush1.bf16.msra.mxu0 %v2434
    %7872 = vmatprep.subr.bf16.mxu0 %v2451
    %7873 = vmatpush1.bf16.msra.mxu0 %v2450
    %7874 = vmatprep.subr.bf16.mxu0 %v2467
    %7875 = vmatpush1.bf16.msra.mxu0 %v2466
    %7876 = vmatprep.subr.bf16.mxu0 %v2483
    %7877 = vmatpush1.bf16.msra.mxu0 %v2482
    %7878 = vmatprep.mubr.bf16.mxu0 %v7675
    %7879 = vmatmul.mubr.bf16.gmra.mrb[0].mxu0 %v7674
    %v7880 = vpop.f32.mrb[0].mxu0
    %v7881 = vadd.f32 0.0, %v7880
    %v7882 = vpop.f32.mrb[0].mxu0
    %v7883 = vadd.f32 0.0, %v7882
    %v7884 = vpop.f32.mrb[0].mxu0
    %v7885 = vpop.f32.mrb[0].mxu0
    %7886 = vdwg.mxu0
    %7887 = vmatprep.subr.bf16.mxu0 %v2499
    %7888 = vmatpush1.bf16.msra.mxu0 %v2498
    %7889 = vmatprep.subr.bf16.mxu0 %v2515
    %7890 = vmatpush1.bf16.msra.mxu0 %v2514
    %7891 = vmatprep.subr.bf16.mxu0 %v2531
    %7892 = vmatpush1.bf16.msra.mxu0 %v2530
    %7893 = vmatprep.subr.bf16.mxu0 %v2547
    %7894 = vmatpush1.bf16.msra.mxu0 %v2546
    %7895 = vmatprep.subr.bf16.mxu0 %v2563
    %7896 = vmatpush1.bf16.msra.mxu0 %v2562
    %7897 = vmatprep.subr.bf16.mxu0 %v2579
    %7898 = vmatpush1.bf16.msra.mxu0 %v2578
    %7899 = vmatprep.subr.bf16.mxu0 %v2595
    %7900 = vmatpush1.bf16.msra.mxu0 %v2594
    %7901 = vmatprep.subr.bf16.mxu0 %v2611
    %7902 = vmatpush1.bf16.msra.mxu0 %v2610
    %7903 = vmatprep.subr.bf16.mxu0 %v2627
    %7904 = vmatpush1.bf16.msra.mxu0 %v2626
    %7905 = vmatprep.subr.bf16.mxu0 %v2643
    %7906 = vmatpush1.bf16.msra.mxu0 %v2642
    %7907 = vmatprep.subr.bf16.mxu0 %v2659
    %7908 = vmatpush1.bf16.msra.mxu0 %v2658
    %7909 = vmatprep.subr.bf16.mxu0 %v2675
    %7910 = vmatpush1.bf16.msra.mxu0 %v2674
    %7911 = vmatprep.subr.bf16.mxu0 %v2691
    %7912 = vmatpush1.bf16.msra.mxu0 %v2690
    %7913 = vmatprep.subr.bf16.mxu0 %v2707
    %7914 = vmatpush1.bf16.msra.mxu0 %v2706
    %7915 = vmatprep.subr.bf16.mxu0 %v2723
    %7916 = vmatpush1.bf16.msra.mxu0 %v2722
    %7917 = vmatprep.subr.bf16.mxu0 %v2739
    %7918 = vmatpush1.bf16.msra.mxu0 %v2738
    %7919 = vmatprep.mubr.bf16.mxu0 %v7677
    %7920 = vmatmul.mubr.bf16.gmra.mrb[0].mxu0 %v7676
    %v7921 = vpop.f32.mrb[0].mxu0
    %v7922 = vadd.f32 %v7881, %v7921
    %v7923 = vpop.f32.mrb[0].mxu0
    %v7924 = vadd.f32 %v7883, %v7923
    %v7925 = vpop.f32.mrb[0].mxu0
    %v7926 = vpop.f32.mrb[0].mxu0
    %7927 = vdwg.mxu0
    %7928 = vmatprep.subr.bf16.mxu0 %v2245
    %7929 = vmatpush1.bf16.msra.mxu0 %v2244
    %7930 = vmatprep.subr.bf16.mxu0 %v2261
    %7931 = vmatpush1.bf16.msra.mxu0 %v2260
    %7932 = vmatprep.subr.bf16.mxu0 %v2277
    %7933 = vmatpush1.bf16.msra.mxu0 %v2276
    %7934 = vmatprep.subr.bf16.mxu0 %v2293
    %7935 = vmatpush1.bf16.msra.mxu0 %v2292
    %7936 = vmatprep.subr.bf16.mxu0 %v2309
    %7937 = vmatpush1.bf16.msra.mxu0 %v2308
    %7938 = vmatprep.subr.bf16.mxu0 %v2325
    %7939 = vmatpush1.bf16.msra.mxu0 %v2324
    %7940 = vmatprep.subr.bf16.mxu0 %v2341
    %7941 = vmatpush1.bf16.msra.mxu0 %v2340
    %7942 = vmatprep.subr.bf16.mxu0 %v2357
    %7943 = vmatpush1.bf16.msra.mxu0 %v2356
    %7944 = vmatprep.subr.bf16.mxu0 %v2373
    %7945 = vmatpush1.bf16.msra.mxu0 %v2372
    %7946 = vmatprep.subr.bf16.mxu0 %v2389
    %7947 = vmatpush1.bf16.msra.mxu0 %v2388
    %7948 = vmatprep.subr.bf16.mxu0 %v2405
    %7949 = vmatpush1.bf16.msra.mxu0 %v2404
    %7950 = vmatprep.subr.bf16.mxu0 %v2421
    %7951 = vmatpush1.bf16.msra.mxu0 %v2420
    %7952 = vmatprep.subr.bf16.mxu0 %v2437
    %7953 = vmatpush1.bf16.msra.mxu0 %v2436
    %7954 = vmatprep.subr.bf16.mxu0 %v2453
    %7955 = vmatpush1.bf16.msra.mxu0 %v2452
    %7956 = vmatprep.subr.bf16.mxu0 %v2469
    %7957 = vmatpush1.bf16.msra.mxu0 %v2468
    %7958 = vmatprep.subr.bf16.mxu0 %v2485
    %7959 = vmatpush1.bf16.msra.mxu0 %v2484
    %7960 = vmatprep.mubr.bf16.mxu0 %v7675
    %7961 = vmatmul.mubr.bf16.gmra.mrb[0].mxu0 %v7674
    %v7962 = vpop.f32.mrb[0].mxu0
    %v7963 = vadd.f32 0.0, %v7962
    %v7964 = vpop.f32.mrb[0].mxu0
    %v7965 = vadd.f32 0.0, %v7964
    %v7966 = vpop.f32.mrb[0].mxu0
    %v7967 = vpop.f32.mrb[0].mxu0
    %7968 = vdwg.mxu0
    %7969 = vmatprep.subr.bf16.mxu0 %v2501
    %7970 = vmatpush1.bf16.msra.mxu0 %v2500
    %7971 = vmatprep.subr.bf16.mxu0 %v2517
    %7972 = vmatpush1.bf16.msra.mxu0 %v2516
    %7973 = vmatprep.subr.bf16.mxu0 %v2533
    %7974 = vmatpush1.bf16.msra.mxu0 %v2532
    %7975 = vmatprep.subr.bf16.mxu0 %v2549
    %7976 = vmatpush1.bf16.msra.mxu0 %v2548
    %7977 = vmatprep.subr.bf16.mxu0 %v2565
    %7978 = vmatpush1.bf16.msra.mxu0 %v2564
    %7979 = vmatprep.subr.bf16.mxu0 %v2581
    %7980 = vmatpush1.bf16.msra.mxu0 %v2580
    %7981 = vmatprep.subr.bf16.mxu0 %v2597
    %7982 = vmatpush1.bf16.msra.mxu0 %v2596
    %7983 = vmatprep.subr.bf16.mxu0 %v2613
    %7984 = vmatpush1.bf16.msra.mxu0 %v2612
    %7985 = vmatprep.subr.bf16.mxu0 %v2629
    %7986 = vmatpush1.bf16.msra.mxu0 %v2628
    %7987 = vmatprep.subr.bf16.mxu0 %v2645
    %7988 = vmatpush1.bf16.msra.mxu0 %v2644
    %7989 = vmatprep.subr.bf16.mxu0 %v2661
    %7990 = vmatpush1.bf16.msra.mxu0 %v2660
    %7991 = vmatprep.subr.bf16.mxu0 %v2677
    %7992 = vmatpush1.bf16.msra.mxu0 %v2676
    %7993 = vmatprep.subr.bf16.mxu0 %v2693
    %7994 = vmatpush1.bf16.msra.mxu0 %v2692
    %7995 = vmatprep.subr.bf16.mxu0 %v2709
    %7996 = vmatpush1.bf16.msra.mxu0 %v2708
    %7997 = vmatprep.subr.bf16.mxu0 %v2725
    %7998 = vmatpush1.bf16.msra.mxu0 %v2724
    %7999 = vmatprep.subr.bf16.mxu0 %v2741
    %8000 = vmatpush1.bf16.msra.mxu0 %v2740
    %8001 = vmatprep.mubr.bf16.mxu0 %v7677
    %8002 = vmatmul.mubr.bf16.gmra.mrb[0].mxu0 %v7676
    %v8003 = vpop.f32.mrb[0].mxu0
    %v8004 = vadd.f32 %v7963, %v8003
    %v8005 = vpop.f32.mrb[0].mxu0
    %v8006 = vadd.f32 %v7965, %v8005
    %v8007 = vpop.f32.mrb[0].mxu0
    %v8008 = vpop.f32.mrb[0].mxu0
    %8009 = vdwg.mxu0
    %8010 = vmatprep.subr.bf16.mxu0 %v2247
    %8011 = vmatpush1.bf16.msra.mxu0 %v2246
    %8012 = vmatprep.subr.bf16.mxu0 %v2263
    %8013 = vmatpush1.bf16.msra.mxu0 %v2262
    %8014 = vmatprep.subr.bf16.mxu0 %v2279
    %8015 = vmatpush1.bf16.msra.mxu0 %v2278
    %8016 = vmatprep.subr.bf16.mxu0 %v2295
    %8017 = vmatpush1.bf16.msra.mxu0 %v2294
    %8018 = vmatprep.subr.bf16.mxu0 %v2311
    %8019 = vmatpush1.bf16.msra.mxu0 %v2310
    %8020 = vmatprep.subr.bf16.mxu0 %v2327
    %8021 = vmatpush1.bf16.msra.mxu0 %v2326
    %8022 = vmatprep.subr.bf16.mxu0 %v2343
    %8023 = vmatpush1.bf16.msra.mxu0 %v2342
    %8024 = vmatprep.subr.bf16.mxu0 %v2359
    %8025 = vmatpush1.bf16.msra.mxu0 %v2358
    %8026 = vmatprep.subr.bf16.mxu0 %v2375
    %8027 = vmatpush1.bf16.msra.mxu0 %v2374
    %8028 = vmatprep.subr.bf16.mxu0 %v2391
    %8029 = vmatpush1.bf16.msra.mxu0 %v2390
    %8030 = vmatprep.subr.bf16.mxu0 %v2407
    %8031 = vmatpush1.bf16.msra.mxu0 %v2406
    %8032 = vmatprep.subr.bf16.mxu0 %v2423
    %8033 = vmatpush1.bf16.msra.mxu0 %v2422
    %8034 = vmatprep.subr.bf16.mxu0 %v2439
    %8035 = vmatpush1.bf16.msra.mxu0 %v2438
    %8036 = vmatprep.subr.bf16.mxu0 %v2455
    %8037 = vmatpush1.bf16.msra.mxu0 %v2454
    %8038 = vmatprep.subr.bf16.mxu0 %v2471
    %8039 = vmatpush1.bf16.msra.mxu0 %v2470
    %8040 = vmatprep.subr.bf16.mxu0 %v2487
    %8041 = vmatpush1.bf16.msra.mxu0 %v2486
    %8042 = vmatprep.mubr.bf16.mxu0 %v7675
    %8043 = vmatmul.mubr.bf16.gmra.mrb[0].mxu0 %v7674
    %v8044 = vpop.f32.mrb[0].mxu0
    %v8045 = vadd.f32 0.0, %v8044
    %v8046 = vpop.f32.mrb[0].mxu0
    %v8047 = vadd.f32 0.0, %v8046
    %v8048 = vpop.f32.mrb[0].mxu0
    %v8049 = vpop.f32.mrb[0].mxu0
    %8050 = vdwg.mxu0
    %8051 = vmatprep.subr.bf16.mxu0 %v2503
    %8052 = vmatpush1.bf16.msra.mxu0 %v2502
    %8053 = vmatprep.subr.bf16.mxu0 %v2519
    %8054 = vmatpush1.bf16.msra.mxu0 %v2518
    %8055 = vmatprep.subr.bf16.mxu0 %v2535
    %8056 = vmatpush1.bf16.msra.mxu0 %v2534
    %8057 = vmatprep.subr.bf16.mxu0 %v2551
    %8058 = vmatpush1.bf16.msra.mxu0 %v2550
    %8059 = vmatprep.subr.bf16.mxu0 %v2567
    %8060 = vmatpush1.bf16.msra.mxu0 %v2566
    %8061 = vmatprep.subr.bf16.mxu0 %v2583
    %8062 = vmatpush1.bf16.msra.mxu0 %v2582
    %8063 = vmatprep.subr.bf16.mxu0 %v2599
    %8064 = vmatpush1.bf16.msra.mxu0 %v2598
    %8065 = vmatprep.subr.bf16.mxu0 %v2615
    %8066 = vmatpush1.bf16.msra.mxu0 %v2614
    %8067 = vmatprep.subr.bf16.mxu0 %v2631
    %8068 = vmatpush1.bf16.msra.mxu0 %v2630
    %8069 = vmatprep.subr.bf16.mxu0 %v2647
    %8070 = vmatpush1.bf16.msra.mxu0 %v2646
    %8071 = vmatprep.subr.bf16.mxu0 %v2663
    %8072 = vmatpush1.bf16.msra.mxu0 %v2662
    %8073 = vmatprep.subr.bf16.mxu0 %v2679
    %8074 = vmatpush1.bf16.msra.mxu0 %v2678
    %8075 = vmatprep.subr.bf16.mxu0 %v2695
    %8076 = vmatpush1.bf16.msra.mxu0 %v2694
    %8077 = vmatprep.subr.bf16.mxu0 %v2711
    %8078 = vmatpush1.bf16.msra.mxu0 %v2710
    %8079 = vmatprep.subr.bf16.mxu0 %v2727
    %8080 = vmatpush1.bf16.msra.mxu0 %v2726
    %8081 = vmatprep.subr.bf16.mxu0 %v2743
    %8082 = vmatpush1.bf16.msra.mxu0 %v2742
    %8083 = vmatprep.mubr.bf16.mxu0 %v7677
    %8084 = vmatmul.mubr.bf16.gmra.mrb[0].mxu0 %v7676
    %v8085 = vpop.f32.mrb[0].mxu0
    %v8086 = vadd.f32 %v8045, %v8085
    %v8087 = vpop.f32.mrb[0].mxu0
    %v8088 = vadd.f32 %v8047, %v8087
    %v8089 = vpop.f32.mrb[0].mxu0
    %v8090 = vpop.f32.mrb[0].mxu0
    %8091 = vdwg.mxu0
    %8092 = vmatprep.subr.bf16.mxu0 %v2249
    %8093 = vmatpush1.bf16.msra.mxu0 %v2248
    %8094 = vmatprep.subr.bf16.mxu0 %v2265
    %8095 = vmatpush1.bf16.msra.mxu0 %v2264
    %8096 = vmatprep.subr.bf16.mxu0 %v2281
    %8097 = vmatpush1.bf16.msra.mxu0 %v2280
    %8098 = vmatprep.subr.bf16.mxu0 %v2297
    %8099 = vmatpush1.bf16.msra.mxu0 %v2296
    %8100 = vmatprep.subr.bf16.mxu0 %v2313
    %8101 = vmatpush1.bf16.msra.mxu0 %v2312
    %8102 = vmatprep.subr.bf16.mxu0 %v2329
    %8103 = vmatpush1.bf16.msra.mxu0 %v2328
    %8104 = vmatprep.subr.bf16.mxu0 %v2345
    %8105 = vmatpush1.bf16.msra.mxu0 %v2344
    %8106 = vmatprep.subr.bf16.mxu0 %v2361
    %8107 = vmatpush1.bf16.msra.mxu0 %v2360
    %8108 = vmatprep.subr.bf16.mxu0 %v2377
    %8109 = vmatpush1.bf16.msra.mxu0 %v2376
    %8110 = vmatprep.subr.bf16.mxu0 %v2393
    %8111 = vmatpush1.bf16.msra.mxu0 %v2392
    %8112 = vmatprep.subr.bf16.mxu0 %v2409
    %8113 = vmatpush1.bf16.msra.mxu0 %v2408
    %8114 = vmatprep.subr.bf16.mxu0 %v2425
    %8115 = vmatpush1.bf16.msra.mxu0 %v2424
    %8116 = vmatprep.subr.bf16.mxu0 %v2441
    %8117 = vmatpush1.bf16.msra.mxu0 %v2440
    %8118 = vmatprep.subr.bf16.mxu0 %v2457
    %8119 = vmatpush1.bf16.msra.mxu0 %v2456
    %8120 = vmatprep.subr.bf16.mxu0 %v2473
    %8121 = vmatpush1.bf16.msra.mxu0 %v2472
    %8122 = vmatprep.subr.bf16.mxu0 %v2489
    %8123 = vmatpush1.bf16.msra.mxu0 %v2488
    %8124 = vmatprep.mubr.bf16.mxu0 %v7675
    %8125 = vmatmul.mubr.bf16.gmra.mrb[0].mxu0 %v7674
    %v8126 = vpop.f32.mrb[0].mxu0
    %v8127 = vadd.f32 0.0, %v8126
    %v8128 = vpop.f32.mrb[0].mxu0
    %v8129 = vadd.f32 0.0, %v8128
    %v8130 = vpop.f32.mrb[0].mxu0
    %v8131 = vpop.f32.mrb[0].mxu0
    %8132 = vdwg.mxu0
    %8133 = vmatprep.subr.bf16.mxu0 %v2505
    %8134 = vmatpush1.bf16.msra.mxu0 %v2504
    %8135 = vmatprep.subr.bf16.mxu0 %v2521
    %8136 = vmatpush1.bf16.msra.mxu0 %v2520
    %8137 = vmatprep.subr.bf16.mxu0 %v2537
    %8138 = vmatpush1.bf16.msra.mxu0 %v2536
    %8139 = vmatprep.subr.bf16.mxu0 %v2553
    %8140 = vmatpush1.bf16.msra.mxu0 %v2552
    %8141 = vmatprep.subr.bf16.mxu0 %v2569
    %8142 = vmatpush1.bf16.msra.mxu0 %v2568
    %8143 = vmatprep.subr.bf16.mxu0 %v2585
    %8144 = vmatpush1.bf16.msra.mxu0 %v2584
    %8145 = vmatprep.subr.bf16.mxu0 %v2601
    %8146 = vmatpush1.bf16.msra.mxu0 %v2600
    %8147 = vmatprep.subr.bf16.mxu0 %v2617
    %8148 = vmatpush1.bf16.msra.mxu0 %v2616
    %8149 = vmatprep.subr.bf16.mxu0 %v2633
    %8150 = vmatpush1.bf16.msra.mxu0 %v2632
    %8151 = vmatprep.subr.bf16.mxu0 %v2649
    %8152 = vmatpush1.bf16.msra.mxu0 %v2648
    %8153 = vmatprep.subr.bf16.mxu0 %v2665
    %8154 = vmatpush1.bf16.msra.mxu0 %v2664
    %8155 = vmatprep.subr.bf16.mxu0 %v2681
    %8156 = vmatpush1.bf16.msra.mxu0 %v2680
    %8157 = vmatprep.subr.bf16.mxu0 %v2697
    %8158 = vmatpush1.bf16.msra.mxu0 %v2696
    %8159 = vmatprep.subr.bf16.mxu0 %v2713
    %8160 = vmatpush1.bf16.msra.mxu0 %v2712
    %8161 = vmatprep.subr.bf16.mxu0 %v2729
    %8162 = vmatpush1.bf16.msra.mxu0 %v2728
    %8163 = vmatprep.subr.bf16.mxu0 %v2745
    %8164 = vmatpush1.bf16.msra.mxu0 %v2744
    %8165 = vmatprep.mubr.bf16.mxu0 %v7677
    %8166 = vmatmul.mubr.bf16.gmra.mrb[0].mxu0 %v7676
    %v8167 = vpop.f32.mrb[0].mxu0
    %v8168 = vadd.f32 %v8127, %v8167
    %v8169 = vpop.f32.mrb[0].mxu0
    %v8170 = vadd.f32 %v8129, %v8169
    %v8171 = vpop.f32.mrb[0].mxu0
    %v8172 = vpop.f32.mrb[0].mxu0
    %8173 = vdwg.mxu0
    %8174 = vmatprep.subr.bf16.mxu0 %v2251
    %8175 = vmatpush1.bf16.msra.mxu0 %v2250
    %8176 = vmatprep.subr.bf16.mxu0 %v2267
    %8177 = vmatpush1.bf16.msra.mxu0 %v2266
    %8178 = vmatprep.subr.bf16.mxu0 %v2283
    %8179 = vmatpush1.bf16.msra.mxu0 %v2282
    %8180 = vmatprep.subr.bf16.mxu0 %v2299
    %8181 = vmatpush1.bf16.msra.mxu0 %v2298
    %8182 = vmatprep.subr.bf16.mxu0 %v2315
    %8183 = vmatpush1.bf16.msra.mxu0 %v2314
    %8184 = vmatprep.subr.bf16.mxu0 %v2331
    %8185 = vmatpush1.bf16.msra.mxu0 %v2330
    %8186 = vmatprep.subr.bf16.mxu0 %v2347
    %8187 = vmatpush1.bf16.msra.mxu0 %v2346
    %8188 = vmatprep.subr.bf16.mxu0 %v2363
    %8189 = vmatpush1.bf16.msra.mxu0 %v2362
    %8190 = vmatprep.subr.bf16.mxu0 %v2379
    %8191 = vmatpush1.bf16.msra.mxu0 %v2378
    %8192 = vmatprep.subr.bf16.mxu0 %v2395
    %8193 = vmatpush1.bf16.msra.mxu0 %v2394
    %8194 = vmatprep.subr.bf16.mxu0 %v2411
    %8195 = vmatpush1.bf16.msra.mxu0 %v2410
    %8196 = vmatprep.subr.bf16.mxu0 %v2427
    %8197 = vmatpush1.bf16.msra.mxu0 %v2426
    %8198 = vmatprep.subr.bf16.mxu0 %v2443
    %8199 = vmatpush1.bf16.msra.mxu0 %v2442
    %8200 = vmatprep.subr.bf16.mxu0 %v2459
    %8201 = vmatpush1.bf16.msra.mxu0 %v2458
    %8202 = vmatprep.subr.bf16.mxu0 %v2475
    %8203 = vmatpush1.bf16.msra.mxu0 %v2474
    %8204 = vmatprep.subr.bf16.mxu0 %v2491
    %8205 = vmatpush1.bf16.msra.mxu0 %v2490
    %8206 = vmatprep.mubr.bf16.mxu0 %v7675
    %8207 = vmatmul.mubr.bf16.gmra.mrb[0].mxu0 %v7674
    %v8208 = vpop.f32.mrb[0].mxu0
    %v8209 = vadd.f32 0.0, %v8208
    %v8210 = vpop.f32.mrb[0].mxu0
    %v8211 = vadd.f32 0.0, %v8210
    %v8212 = vpop.f32.mrb[0].mxu0
    %v8213 = vpop.f32.mrb[0].mxu0
    %8214 = vdwg.mxu0
    %8215 = vmatprep.subr.bf16.mxu0 %v2507
    %8216 = vmatpush1.bf16.msra.mxu0 %v2506
    %8217 = vmatprep.subr.bf16.mxu0 %v2523
    %8218 = vmatpush1.bf16.msra.mxu0 %v2522
    %8219 = vmatprep.subr.bf16.mxu0 %v2539
    %8220 = vmatpush1.bf16.msra.mxu0 %v2538
    %8221 = vmatprep.subr.bf16.mxu0 %v2555
    %8222 = vmatpush1.bf16.msra.mxu0 %v2554
    %8223 = vmatprep.subr.bf16.mxu0 %v2571
    %8224 = vmatpush1.bf16.msra.mxu0 %v2570
    %8225 = vmatprep.subr.bf16.mxu0 %v2587
    %8226 = vmatpush1.bf16.msra.mxu0 %v2586
    %8227 = vmatprep.subr.bf16.mxu0 %v2603
    %8228 = vmatpush1.bf16.msra.mxu0 %v2602
    %8229 = vmatprep.subr.bf16.mxu0 %v2619
    %8230 = vmatpush1.bf16.msra.mxu0 %v2618
    %8231 = vmatprep.subr.bf16.mxu0 %v2635
    %8232 = vmatpush1.bf16.msra.mxu0 %v2634
    %8233 = vmatprep.subr.bf16.mxu0 %v2651
    %8234 = vmatpush1.bf16.msra.mxu0 %v2650
    %8235 = vmatprep.subr.bf16.mxu0 %v2667
    %8236 = vmatpush1.bf16.msra.mxu0 %v2666
    %8237 = vmatprep.subr.bf16.mxu0 %v2683
    %8238 = vmatpush1.bf16.msra.mxu0 %v2682
    %8239 = vmatprep.subr.bf16.mxu0 %v2699
    %8240 = vmatpush1.bf16.msra.mxu0 %v2698
    %8241 = vmatprep.subr.bf16.mxu0 %v2715
    %8242 = vmatpush1.bf16.msra.mxu0 %v2714
    %8243 = vmatprep.subr.bf16.mxu0 %v2731
    %8244 = vmatpush1.bf16.msra.mxu0 %v2730
    %8245 = vmatprep.subr.bf16.mxu0 %v2747
    %8246 = vmatpush1.bf16.msra.mxu0 %v2746
    %8247 = vmatprep.mubr.bf16.mxu0 %v7677
    %8248 = vmatmul.mubr.bf16.gmra.mrb[0].mxu0 %v7676
    %v8249 = vpop.f32.mrb[0].mxu0
    %v8250 = vadd.f32 %v8209, %v8249
    %v8251 = vpop.f32.mrb[0].mxu0
    %v8252 = vadd.f32 %v8211, %v8251
    %v8253 = vpop.f32.mrb[0].mxu0
    %v8254 = vpop.f32.mrb[0].mxu0
    %8255 = vdwg.mxu0
    %8256 = vmatprep.subr.bf16.mxu0 %v2253
    %8257 = vmatpush1.bf16.msra.mxu0 %v2252
    %8258 = vmatprep.subr.bf16.mxu0 %v2269
    %8259 = vmatpush1.bf16.msra.mxu0 %v2268
    %8260 = vmatprep.subr.bf16.mxu0 %v2285
    %8261 = vmatpush1.bf16.msra.mxu0 %v2284
    %8262 = vmatprep.subr.bf16.mxu0 %v2301
    %8263 = vmatpush1.bf16.msra.mxu0 %v2300
    %8264 = vmatprep.subr.bf16.mxu0 %v2317
    %8265 = vmatpush1.bf16.msra.mxu0 %v2316
    %8266 = vmatprep.subr.bf16.mxu0 %v2333
    %8267 = vmatpush1.bf16.msra.mxu0 %v2332
    %8268 = vmatprep.subr.bf16.mxu0 %v2349
    %8269 = vmatpush1.bf16.msra.mxu0 %v2348
    %8270 = vmatprep.subr.bf16.mxu0 %v2365
    %8271 = vmatpush1.bf16.msra.mxu0 %v2364
    %8272 = vmatprep.subr.bf16.mxu0 %v2381
    %8273 = vmatpush1.bf16.msra.mxu0 %v2380
    %8274 = vmatprep.subr.bf16.mxu0 %v2397
    %8275 = vmatpush1.bf16.msra.mxu0 %v2396
    %8276 = vmatprep.subr.bf16.mxu0 %v2413
    %8277 = vmatpush1.bf16.msra.mxu0 %v2412
    %8278 = vmatprep.subr.bf16.mxu0 %v2429
    %8279 = vmatpush1.bf16.msra.mxu0 %v2428
    %8280 = vmatprep.subr.bf16.mxu0 %v2445
    %8281 = vmatpush1.bf16.msra.mxu0 %v2444
    %8282 = vmatprep.subr.bf16.mxu0 %v2461
    %8283 = vmatpush1.bf16.msra.mxu0 %v2460
    %8284 = vmatprep.subr.bf16.mxu0 %v2477
    %8285 = vmatpush1.bf16.msra.mxu0 %v2476
    %8286 = vmatprep.subr.bf16.mxu0 %v2493
    %8287 = vmatpush1.bf16.msra.mxu0 %v2492
    %8288 = vmatprep.mubr.bf16.mxu0 %v7675
    %8289 = vmatmul.mubr.bf16.gmra.mrb[0].mxu0 %v7674
    %v8290 = vpop.f32.mrb[0].mxu0
    %v8291 = vadd.f32 0.0, %v8290
    %v8292 = vpop.f32.mrb[0].mxu0
    %v8293 = vadd.f32 0.0, %v8292
    %v8294 = vpop.f32.mrb[0].mxu0
    %v8295 = vpop.f32.mrb[0].mxu0
    %8296 = vdwg.mxu0
    %8297 = vmatprep.subr.bf16.mxu0 %v2509
    %8298 = vmatpush1.bf16.msra.mxu0 %v2508
    %8299 = vmatprep.subr.bf16.mxu0 %v2525
    %8300 = vmatpush1.bf16.msra.mxu0 %v2524
    %8301 = vmatprep.subr.bf16.mxu0 %v2541
    %8302 = vmatpush1.bf16.msra.mxu0 %v2540
    %8303 = vmatprep.subr.bf16.mxu0 %v2557
    %8304 = vmatpush1.bf16.msra.mxu0 %v2556
    %8305 = vmatprep.subr.bf16.mxu0 %v2573
    %8306 = vmatpush1.bf16.msra.mxu0 %v2572
    %8307 = vmatprep.subr.bf16.mxu0 %v2589
    %8308 = vmatpush1.bf16.msra.mxu0 %v2588
    %8309 = vmatprep.subr.bf16.mxu0 %v2605
    %8310 = vmatpush1.bf16.msra.mxu0 %v2604
    %8311 = vmatprep.subr.bf16.mxu0 %v2621
    %8312 = vmatpush1.bf16.msra.mxu0 %v2620
    %8313 = vmatprep.subr.bf16.mxu0 %v2637
    %8314 = vmatpush1.bf16.msra.mxu0 %v2636
    %8315 = vmatprep.subr.bf16.mxu0 %v2653
    %8316 = vmatpush1.bf16.msra.mxu0 %v2652
    %8317 = vmatprep.subr.bf16.mxu0 %v2669
    %8318 = vmatpush1.bf16.msra.mxu0 %v2668
    %8319 = vmatprep.subr.bf16.mxu0 %v2685
    %8320 = vmatpush1.bf16.msra.mxu0 %v2684
    %8321 = vmatprep.subr.bf16.mxu0 %v2701
    %8322 = vmatpush1.bf16.msra.mxu0 %v2700
    %8323 = vmatprep.subr.bf16.mxu0 %v2717
    %8324 = vmatpush1.bf16.msra.mxu0 %v2716
    %8325 = vmatprep.subr.bf16.mxu0 %v2733
    %8326 = vmatpush1.bf16.msra.mxu0 %v2732
    %8327 = vmatprep.subr.bf16.mxu0 %v2749
    %8328 = vmatpush1.bf16.msra.mxu0 %v2748
    %8329 = vmatprep.mubr.bf16.mxu0 %v7677
    %8330 = vmatmul.mubr.bf16.gmra.mrb[0].mxu0 %v7676
    %v8331 = vpop.f32.mrb[0].mxu0
    %v8332 = vadd.f32 %v8291, %v8331
    %v8333 = vpop.f32.mrb[0].mxu0
    %v8334 = vadd.f32 %v8293, %v8333
    %v8335 = vpop.f32.mrb[0].mxu0
    %v8336 = vpop.f32.mrb[0].mxu0
    %8337 = vdwg.mxu0
    %v8354 = vrot.slane %v7758, 4
    %v8355 = vrot.slane %v7760, 4
    %v8356 = vrot.slane %v7840, 4
    %v8357 = vrot.slane %v7842, 4
    %v8358 = vrot.slane %v7922, 4
    %v8359 = vrot.slane %v7924, 4
    %v8360 = vrot.slane %v8004, 4
    %v8361 = vrot.slane %v8006, 4
    %v8362 = vrot.slane %v8086, 4
    %v8363 = vrot.slane %v8088, 4
    %v8364 = vrot.slane %v8168, 4
    %v8365 = vrot.slane %v8170, 4
    %v8366 = vrot.slane %v8250, 4
    %v8367 = vrot.slane %v8252, 4
    %v8368 = vrot.slane %v8332, 4
    %v8369 = vrot.slane %v8334, 4
    %v8386 = vadd.f32 %v791, %v8354
    %v8387 = vadd.f32 %v793, %v8355
    %v8388 = vadd.f32 %v834, %v8356
    %v8389 = vadd.f32 %v836, %v8357
    %v8390 = vadd.f32 %v877, %v8358
    %v8391 = vadd.f32 %v879, %v8359
    %v8392 = vadd.f32 %v920, %v8360
    %v8393 = vadd.f32 %v922, %v8361
    %v8394 = vadd.f32 %v963, %v8362
    %v8395 = vadd.f32 %v965, %v8363
    %v8396 = vadd.f32 %v1006, %v8364
    %v8397 = vadd.f32 %v1008, %v8365
    %v8398 = vadd.f32 %v1049, %v8366
    %v8399 = vadd.f32 %v1051, %v8367
    %v8400 = vadd.f32 %v1092, %v8368
    %v8401 = vadd.f32 %v1094, %v8369
    %v8402 = vxor.u32 %v8386, 2147483648
    %v8403 = vxor.u32 %v8387, 2147483648
    %v8404 = vxor.u32 %v8388, 2147483648
    %v8405 = vxor.u32 %v8389, 2147483648
    %v8406 = vmul.f32 %v8402, 1.442695
    %v8407 = vpow.pop %v8406
    %v8408 = vmul.f32 %v8403, 1.442695
    %v8409 = vpow.pop %v8408
    %v8410 = vmul.f32 %v8404, 1.442695
    %v8411 = vpow.pop %v8410
    %v8412 = vmul.f32 %v8405, 1.442695
    %v8413 = vpow.pop %v8412
    %v8414 = vadd.f32 %v8407, 1.0
    %v8415 = vadd.f32 %v8409, 1.0
    %v8416 = vadd.f32 %v8411, 1.0
    %v8417 = vadd.f32 %v8413, 1.0
    %v8418 = vrcp.pop %v8414
    %v8419 = vmul.f32 1.0, %v8418
    %v8420 = vrcp.pop %v8415
    %v8421 = vmul.f32 1.0, %v8420
    %v8422 = vrcp.pop %v8416
    %v8423 = vmul.f32 1.0, %v8422
    %v8424 = vrcp.pop %v8417
    %v8425 = vmul.f32 1.0, %v8424
    %v8426 = vxor.u32 %v8390, 2147483648
    %v8427 = vxor.u32 %v8391, 2147483648
    %v8428 = vxor.u32 %v8392, 2147483648
    %v8429 = vxor.u32 %v8393, 2147483648
    %v8430 = vmul.f32 %v8426, 1.442695
    %v8431 = vpow.pop %v8430
    %v8432 = vmul.f32 %v8427, 1.442695
    %v8433 = vpow.pop %v8432
    %v8434 = vmul.f32 %v8428, 1.442695
    %v8435 = vpow.pop %v8434
    %v8436 = vmul.f32 %v8429, 1.442695
    %v8437 = vpow.pop %v8436
    %v8438 = vadd.f32 %v8431, 1.0
    %v8439 = vadd.f32 %v8433, 1.0
    %v8440 = vadd.f32 %v8435, 1.0
    %v8441 = vadd.f32 %v8437, 1.0
    %v8442 = vrcp.pop %v8438
    %v8443 = vmul.f32 1.0, %v8442
    %v8444 = vrcp.pop %v8439
    %v8445 = vmul.f32 1.0, %v8444
    %v8446 = vrcp.pop %v8440
    %v8447 = vmul.f32 1.0, %v8446
    %v8448 = vrcp.pop %v8441
    %v8449 = vmul.f32 1.0, %v8448
    %v8450 = vtanh.pop %v8394
    %v8451 = vtanh.pop %v8395
    %v8452 = vtanh.pop %v8396
    %v8453 = vtanh.pop %v8397
    %v8454 = vxor.u32 %v8398, 2147483648
    %v8455 = vxor.u32 %v8399, 2147483648
    %v8456 = vxor.u32 %v8400, 2147483648
    %v8457 = vxor.u32 %v8401, 2147483648
    %v8458 = vmul.f32 %v8454, 1.442695
    %v8459 = vpow.pop %v8458
    %v8460 = vmul.f32 %v8455, 1.442695
    %v8461 = vpow.pop %v8460
    %v8462 = vmul.f32 %v8456, 1.442695
    %v8463 = vpow.pop %v8462
    %v8464 = vmul.f32 %v8457, 1.442695
    %v8465 = vpow.pop %v8464
    %v8466 = vadd.f32 %v8459, 1.0
    %v8467 = vadd.f32 %v8461, 1.0
    %v8468 = vadd.f32 %v8463, 1.0
    %v8469 = vadd.f32 %v8465, 1.0
    %v8470 = vrcp.pop %v8466
    %v8471 = vmul.f32 1.0, %v8470
    %v8472 = vrcp.pop %v8467
    %v8473 = vmul.f32 1.0, %v8472
    %v8474 = vrcp.pop %v8468
    %v8475 = vmul.f32 1.0, %v8474
    %v8476 = vrcp.pop %v8469
    %v8477 = vmul.f32 1.0, %v8476
    %v8482 = vrot.slane %v7654, 6
    %v8483 = vrot.slane %v7655, 6
    %v8484 = vrot.slane %v7656, 6
    %v8485 = vrot.slane %v7657, 6
    %v8490 = vmul.f32 %v8443, %v8482
    %v8491 = vmul.f32 %v8445, %v8483
    %v8492 = vmul.f32 %v8447, %v8484
    %v8493 = vmul.f32 %v8449, %v8485
    %v8494 = vmul.f32 %v8419, %v8450
    %v8495 = vmul.f32 %v8421, %v8451
    %v8496 = vmul.f32 %v8423, %v8452
    %v8497 = vmul.f32 %v8425, %v8453
    %v8498 = vadd.f32 %v8490, %v8494
    %v8499 = vadd.f32 %v8491, %v8495
    %v8500 = vadd.f32 %v8492, %v8496
    %v8501 = vadd.f32 %v8493, %v8497
    %v8502 = vtanh.pop %v8498
    %v8503 = vtanh.pop %v8499
    %v8504 = vtanh.pop %v8500
    %v8505 = vtanh.pop %v8501
    %v8506 = vmul.f32 %v8471, %v8502
    %v8507 = vmul.f32 %v8473, %v8503
    %v8508 = vmul.f32 %v8475, %v8504
    %v8509 = vmul.f32 %v8477, %v8505
    %v8510 = vpack.c.bf16 %v8506, %v8506
    %v8511 = vpack.c.bf16 %v8507, %v8507
    %v8512 = vpack.c.bf16 %v8508, %v8508
    %v8513 = vpack.c.bf16 %v8509, %v8509
    %v8518 = vrot.slane %v8510, 2
    %v8519 = vrot.slane %v8511, 2
    %v8520 = vrot.slane %v8512, 2
    %v8521 = vrot.slane %v8513, 2
    %8526 = vmatprep.subr.bf16.mxu0 %v2239
    %8527 = vmatpush1.bf16.msra.mxu0 %v2238
    %8528 = vmatprep.subr.bf16.mxu0 %v2255
    %8529 = vmatpush1.bf16.msra.mxu0 %v2254
    %8530 = vmatprep.subr.bf16.mxu0 %v2271
    %8531 = vmatpush1.bf16.msra.mxu0 %v2270
    %8532 = vmatprep.subr.bf16.mxu0 %v2287
    %8533 = vmatpush1.bf16.msra.mxu0 %v2286
    %8534 = vmatprep.subr.bf16.mxu0 %v2303
    %8535 = vmatpush1.bf16.msra.mxu0 %v2302
    %8536 = vmatprep.subr.bf16.mxu0 %v2319
    %8537 = vmatpush1.bf16.msra.mxu0 %v2318
    %8538 = vmatprep.subr.bf16.mxu0 %v2335
    %8539 = vmatpush1.bf16.msra.mxu0 %v2334
    %8540 = vmatprep.subr.bf16.mxu0 %v2351
    %8541 = vmatpush1.bf16.msra.mxu0 %v2350
    %8542 = vmatprep.subr.bf16.mxu0 %v2367
    %8543 = vmatpush1.bf16.msra.mxu0 %v2366
    %8544 = vmatprep.subr.bf16.mxu0 %v2383
    %8545 = vmatpush1.bf16.msra.mxu0 %v2382
    %8546 = vmatprep.subr.bf16.mxu0 %v2399
    %8547 = vmatpush1.bf16.msra.mxu0 %v2398
    %8548 = vmatprep.subr.bf16.mxu0 %v2415
    %8549 = vmatpush1.bf16.msra.mxu0 %v2414
    %8550 = vmatprep.subr.bf16.mxu0 %v2431
    %8551 = vmatpush1.bf16.msra.mxu0 %v2430
    %8552 = vmatprep.subr.bf16.mxu0 %v2447
    %8553 = vmatpush1.bf16.msra.mxu0 %v2446
    %8554 = vmatprep.subr.bf16.mxu0 %v2463
    %8555 = vmatpush1.bf16.msra.mxu0 %v2462
    %8556 = vmatprep.subr.bf16.mxu0 %v2479
    %8557 = vmatpush1.bf16.msra.mxu0 %v2478
    %8558 = vmatprep.mubr.bf16.mxu0 %v8519
    %8559 = vmatmul.mubr.bf16.gmra.mrb[0].mxu0 %v8518
    %v8560 = vpop.f32.mrb[0].mxu0
    %v8561 = vadd.f32 0.0, %v8560
    %v8562 = vpop.f32.mrb[0].mxu0
    %v8563 = vadd.f32 0.0, %v8562
    %v8564 = vpop.f32.mrb[0].mxu0
    %v8565 = vpop.f32.mrb[0].mxu0
    %8566 = vdwg.mxu0
    %8567 = vmatprep.subr.bf16.mxu0 %v2495
    %8568 = vmatpush1.bf16.msra.mxu0 %v2494
    %8569 = vmatprep.subr.bf16.mxu0 %v2511
    %8570 = vmatpush1.bf16.msra.mxu0 %v2510
    %8571 = vmatprep.subr.bf16.mxu0 %v2527
    %8572 = vmatpush1.bf16.msra.mxu0 %v2526
    %8573 = vmatprep.subr.bf16.mxu0 %v2543
    %8574 = vmatpush1.bf16.msra.mxu0 %v2542
    %8575 = vmatprep.subr.bf16.mxu0 %v2559
    %8576 = vmatpush1.bf16.msra.mxu0 %v2558
    %8577 = vmatprep.subr.bf16.mxu0 %v2575
    %8578 = vmatpush1.bf16.msra.mxu0 %v2574
    %8579 = vmatprep.subr.bf16.mxu0 %v2591
    %8580 = vmatpush1.bf16.msra.mxu0 %v2590
    %8581 = vmatprep.subr.bf16.mxu0 %v2607
    %8582 = vmatpush1.bf16.msra.mxu0 %v2606
    %8583 = vmatprep.subr.bf16.mxu0 %v2623
    %8584 = vmatpush1.bf16.msra.mxu0 %v2622
    %8585 = vmatprep.subr.bf16.mxu0 %v2639
    %8586 = vmatpush1.bf16.msra.mxu0 %v2638
    %8587 = vmatprep.subr.bf16.mxu0 %v2655
    %8588 = vmatpush1.bf16.msra.mxu0 %v2654
    %8589 = vmatprep.subr.bf16.mxu0 %v2671
    %8590 = vmatpush1.bf16.msra.mxu0 %v2670
    %8591 = vmatprep.subr.bf16.mxu0 %v2687
    %8592 = vmatpush1.bf16.msra.mxu0 %v2686
    %8593 = vmatprep.subr.bf16.mxu0 %v2703
    %8594 = vmatpush1.bf16.msra.mxu0 %v2702
    %8595 = vmatprep.subr.bf16.mxu0 %v2719
    %8596 = vmatpush1.bf16.msra.mxu0 %v2718
    %8597 = vmatprep.subr.bf16.mxu0 %v2735
    %8598 = vmatpush1.bf16.msra.mxu0 %v2734
    %8599 = vmatprep.mubr.bf16.mxu0 %v8521
    %8600 = vmatmul.mubr.bf16.gmra.mrb[0].mxu0 %v8520
    %v8601 = vpop.f32.mrb[0].mxu0
    %v8602 = vadd.f32 %v8561, %v8601
    %v8603 = vpop.f32.mrb[0].mxu0
    %v8604 = vadd.f32 %v8563, %v8603
    %v8605 = vpop.f32.mrb[0].mxu0
    %v8606 = vpop.f32.mrb[0].mxu0
    %8607 = vdwg.mxu0
    %8608 = vmatprep.subr.bf16.mxu0 %v2241
    %8609 = vmatpush1.bf16.msra.mxu0 %v2240
    %8610 = vmatprep.subr.bf16.mxu0 %v2257
    %8611 = vmatpush1.bf16.msra.mxu0 %v2256
    %8612 = vmatprep.subr.bf16.mxu0 %v2273
    %8613 = vmatpush1.bf16.msra.mxu0 %v2272
    %8614 = vmatprep.subr.bf16.mxu0 %v2289
    %8615 = vmatpush1.bf16.msra.mxu0 %v2288
    %8616 = vmatprep.subr.bf16.mxu0 %v2305
    %8617 = vmatpush1.bf16.msra.mxu0 %v2304
    %8618 = vmatprep.subr.bf16.mxu0 %v2321
    %8619 = vmatpush1.bf16.msra.mxu0 %v2320
    %8620 = vmatprep.subr.bf16.mxu0 %v2337
    %8621 = vmatpush1.bf16.msra.mxu0 %v2336
    %8622 = vmatprep.subr.bf16.mxu0 %v2353
    %8623 = vmatpush1.bf16.msra.mxu0 %v2352
    %8624 = vmatprep.subr.bf16.mxu0 %v2369
    %8625 = vmatpush1.bf16.msra.mxu0 %v2368
    %8626 = vmatprep.subr.bf16.mxu0 %v2385
    %8627 = vmatpush1.bf16.msra.mxu0 %v2384
    %8628 = vmatprep.subr.bf16.mxu0 %v2401
    %8629 = vmatpush1.bf16.msra.mxu0 %v2400
    %8630 = vmatprep.subr.bf16.mxu0 %v2417
    %8631 = vmatpush1.bf16.msra.mxu0 %v2416
    %8632 = vmatprep.subr.bf16.mxu0 %v2433
    %8633 = vmatpush1.bf16.msra.mxu0 %v2432
    %8634 = vmatprep.subr.bf16.mxu0 %v2449
    %8635 = vmatpush1.bf16.msra.mxu0 %v2448
    %8636 = vmatprep.subr.bf16.mxu0 %v2465
    %8637 = vmatpush1.bf16.msra.mxu0 %v2464
    %8638 = vmatprep.subr.bf16.mxu0 %v2481
    %8639 = vmatpush1.bf16.msra.mxu0 %v2480
    %8640 = vmatprep.mubr.bf16.mxu0 %v8519
    %8641 = vmatmul.mubr.bf16.gmra.mrb[0].mxu0 %v8518
    %v8642 = vpop.f32.mrb[0].mxu0
    %v8643 = vadd.f32 0.0, %v8642
    %v8644 = vpop.f32.mrb[0].mxu0
    %v8645 = vadd.f32 0.0, %v8644
    %v8646 = vpop.f32.mrb[0].mxu0
    %v8647 = vpop.f32.mrb[0].mxu0
    %8648 = vdwg.mxu0
    %8649 = vmatprep.subr.bf16.mxu0 %v2497
    %8650 = vmatpush1.bf16.msra.mxu0 %v2496
    %8651 = vmatprep.subr.bf16.mxu0 %v2513
    %8652 = vmatpush1.bf16.msra.mxu0 %v2512
    %8653 = vmatprep.subr.bf16.mxu0 %v2529
    %8654 = vmatpush1.bf16.msra.mxu0 %v2528
    %8655 = vmatprep.subr.bf16.mxu0 %v2545
    %8656 = vmatpush1.bf16.msra.mxu0 %v2544
    %8657 = vmatprep.subr.bf16.mxu0 %v2561
    %8658 = vmatpush1.bf16.msra.mxu0 %v2560
    %8659 = vmatprep.subr.bf16.mxu0 %v2577
    %8660 = vmatpush1.bf16.msra.mxu0 %v2576
    %8661 = vmatprep.subr.bf16.mxu0 %v2593
    %8662 = vmatpush1.bf16.msra.mxu0 %v2592
    %8663 = vmatprep.subr.bf16.mxu0 %v2609
    %8664 = vmatpush1.bf16.msra.mxu0 %v2608
    %8665 = vmatprep.subr.bf16.mxu0 %v2625
    %8666 = vmatpush1.bf16.msra.mxu0 %v2624
    %8667 = vmatprep.subr.bf16.mxu0 %v2641
    %8668 = vmatpush1.bf16.msra.mxu0 %v2640
    %8669 = vmatprep.subr.bf16.mxu0 %v2657
    %8670 = vmatpush1.bf16.msra.mxu0 %v2656
    %8671 = vmatprep.subr.bf16.mxu0 %v2673
    %8672 = vmatpush1.bf16.msra.mxu0 %v2672
    %8673 = vmatprep.subr.bf16.mxu0 %v2689
    %8674 = vmatpush1.bf16.msra.mxu0 %v2688
    %8675 = vmatprep.subr.bf16.mxu0 %v2705
    %8676 = vmatpush1.bf16.msra.mxu0 %v2704
    %8677 = vmatprep.subr.bf16.mxu0 %v2721
    %8678 = vmatpush1.bf16.msra.mxu0 %v2720
    %8679 = vmatprep.subr.bf16.mxu0 %v2737
    %8680 = vmatpush1.bf16.msra.mxu0 %v2736
    %8681 = vmatprep.mubr.bf16.mxu0 %v8521
    %8682 = vmatmul.mubr.bf16.gmra.mrb[0].mxu0 %v8520
    %v8683 = vpop.f32.mrb[0].mxu0
    %v8684 = vadd.f32 %v8643, %v8683
    %v8685 = vpop.f32.mrb[0].mxu0
    %v8686 = vadd.f32 %v8645, %v8685
    %v8687 = vpop.f32.mrb[0].mxu0
    %v8688 = vpop.f32.mrb[0].mxu0
    %8689 = vdwg.mxu0
    %8690 = vmatprep.subr.bf16.mxu0 %v2243
    %8691 = vmatpush1.bf16.msra.mxu0 %v2242
    %8692 = vmatprep.subr.bf16.mxu0 %v2259
    %8693 = vmatpush1.bf16.msra.mxu0 %v2258
    %8694 = vmatprep.subr.bf16.mxu0 %v2275
    %8695 = vmatpush1.bf16.msra.mxu0 %v2274
    %8696 = vmatprep.subr.bf16.mxu0 %v2291
    %8697 = vmatpush1.bf16.msra.mxu0 %v2290
    %8698 = vmatprep.subr.bf16.mxu0 %v2307
    %8699 = vmatpush1.bf16.msra.mxu0 %v2306
    %8700 = vmatprep.subr.bf16.mxu0 %v2323
    %8701 = vmatpush1.bf16.msra.mxu0 %v2322
    %8702 = vmatprep.subr.bf16.mxu0 %v2339
    %8703 = vmatpush1.bf16.msra.mxu0 %v2338
    %8704 = vmatprep.subr.bf16.mxu0 %v2355
    %8705 = vmatpush1.bf16.msra.mxu0 %v2354
    %8706 = vmatprep.subr.bf16.mxu0 %v2371
    %8707 = vmatpush1.bf16.msra.mxu0 %v2370
    %8708 = vmatprep.subr.bf16.mxu0 %v2387
    %8709 = vmatpush1.bf16.msra.mxu0 %v2386
    %8710 = vmatprep.subr.bf16.mxu0 %v2403
    %8711 = vmatpush1.bf16.msra.mxu0 %v2402
    %8712 = vmatprep.subr.bf16.mxu0 %v2419
    %8713 = vmatpush1.bf16.msra.mxu0 %v2418
    %8714 = vmatprep.subr.bf16.mxu0 %v2435
    %8715 = vmatpush1.bf16.msra.mxu0 %v2434
    %8716 = vmatprep.subr.bf16.mxu0 %v2451
    %8717 = vmatpush1.bf16.msra.mxu0 %v2450
    %8718 = vmatprep.subr.bf16.mxu0 %v2467
    %8719 = vmatpush1.bf16.msra.mxu0 %v2466
    %8720 = vmatprep.subr.bf16.mxu0 %v2483
    %8721 = vmatpush1.bf16.msra.mxu0 %v2482
    %8722 = vmatprep.mubr.bf16.mxu0 %v8519
    %8723 = vmatmul.mubr.bf16.gmra.mrb[0].mxu0 %v8518
    %v8724 = vpop.f32.mrb[0].mxu0
    %v8725 = vadd.f32 0.0, %v8724
    %v8726 = vpop.f32.mrb[0].mxu0
    %v8727 = vadd.f32 0.0, %v8726
    %v8728 = vpop.f32.mrb[0].mxu0
    %v8729 = vpop.f32.mrb[0].mxu0
    %8730 = vdwg.mxu0
    %8731 = vmatprep.subr.bf16.mxu0 %v2499
    %8732 = vmatpush1.bf16.msra.mxu0 %v2498
    %8733 = vmatprep.subr.bf16.mxu0 %v2515
    %8734 = vmatpush1.bf16.msra.mxu0 %v2514
    %8735 = vmatprep.subr.bf16.mxu0 %v2531
    %8736 = vmatpush1.bf16.msra.mxu0 %v2530
    %8737 = vmatprep.subr.bf16.mxu0 %v2547
    %8738 = vmatpush1.bf16.msra.mxu0 %v2546
    %8739 = vmatprep.subr.bf16.mxu0 %v2563
    %8740 = vmatpush1.bf16.msra.mxu0 %v2562
    %8741 = vmatprep.subr.bf16.mxu0 %v2579
    %8742 = vmatpush1.bf16.msra.mxu0 %v2578
    %8743 = vmatprep.subr.bf16.mxu0 %v2595
    %8744 = vmatpush1.bf16.msra.mxu0 %v2594
    %8745 = vmatprep.subr.bf16.mxu0 %v2611
    %8746 = vmatpush1.bf16.msra.mxu0 %v2610
    %8747 = vmatprep.subr.bf16.mxu0 %v2627
    %8748 = vmatpush1.bf16.msra.mxu0 %v2626
    %8749 = vmatprep.subr.bf16.mxu0 %v2643
    %8750 = vmatpush1.bf16.msra.mxu0 %v2642
    %8751 = vmatprep.subr.bf16.mxu0 %v2659
    %8752 = vmatpush1.bf16.msra.mxu0 %v2658
    %8753 = vmatprep.subr.bf16.mxu0 %v2675
    %8754 = vmatpush1.bf16.msra.mxu0 %v2674
    %8755 = vmatprep.subr.bf16.mxu0 %v2691
    %8756 = vmatpush1.bf16.msra.mxu0 %v2690
    %8757 = vmatprep.subr.bf16.mxu0 %v2707
    %8758 = vmatpush1.bf16.msra.mxu0 %v2706
    %8759 = vmatprep.subr.bf16.mxu0 %v2723
    %8760 = vmatpush1.bf16.msra.mxu0 %v2722
    %8761 = vmatprep.subr.bf16.mxu0 %v2739
    %8762 = vmatpush1.bf16.msra.mxu0 %v2738
    %8763 = vmatprep.mubr.bf16.mxu0 %v8521
    %8764 = vmatmul.mubr.bf16.gmra.mrb[0].mxu0 %v8520
    %v8765 = vpop.f32.mrb[0].mxu0
    %v8766 = vadd.f32 %v8725, %v8765
    %v8767 = vpop.f32.mrb[0].mxu0
    %v8768 = vadd.f32 %v8727, %v8767
    %v8769 = vpop.f32.mrb[0].mxu0
    %v8770 = vpop.f32.mrb[0].mxu0
    %8771 = vdwg.mxu0
    %8772 = vmatprep.subr.bf16.mxu0 %v2245
    %8773 = vmatpush1.bf16.msra.mxu0 %v2244
    %8774 = vmatprep.subr.bf16.mxu0 %v2261
    %8775 = vmatpush1.bf16.msra.mxu0 %v2260
    %8776 = vmatprep.subr.bf16.mxu0 %v2277
    %8777 = vmatpush1.bf16.msra.mxu0 %v2276
    %8778 = vmatprep.subr.bf16.mxu0 %v2293
    %8779 = vmatpush1.bf16.msra.mxu0 %v2292
    %8780 = vmatprep.subr.bf16.mxu0 %v2309
    %8781 = vmatpush1.bf16.msra.mxu0 %v2308
    %8782 = vmatprep.subr.bf16.mxu0 %v2325
    %8783 = vmatpush1.bf16.msra.mxu0 %v2324
    %8784 = vmatprep.subr.bf16.mxu0 %v2341
    %8785 = vmatpush1.bf16.msra.mxu0 %v2340
    %8786 = vmatprep.subr.bf16.mxu0 %v2357
    %8787 = vmatpush1.bf16.msra.mxu0 %v2356
    %8788 = vmatprep.subr.bf16.mxu0 %v2373
    %8789 = vmatpush1.bf16.msra.mxu0 %v2372
    %8790 = vmatprep.subr.bf16.mxu0 %v2389
    %8791 = vmatpush1.bf16.msra.mxu0 %v2388
    %8792 = vmatprep.subr.bf16.mxu0 %v2405
    %8793 = vmatpush1.bf16.msra.mxu0 %v2404
    %8794 = vmatprep.subr.bf16.mxu0 %v2421
    %8795 = vmatpush1.bf16.msra.mxu0 %v2420
    %8796 = vmatprep.subr.bf16.mxu0 %v2437
    %8797 = vmatpush1.bf16.msra.mxu0 %v2436
    %8798 = vmatprep.subr.bf16.mxu0 %v2453
    %8799 = vmatpush1.bf16.msra.mxu0 %v2452
    %8800 = vmatprep.subr.bf16.mxu0 %v2469
    %8801 = vmatpush1.bf16.msra.mxu0 %v2468
    %8802 = vmatprep.subr.bf16.mxu0 %v2485
    %8803 = vmatpush1.bf16.msra.mxu0 %v2484
    %8804 = vmatprep.mubr.bf16.mxu0 %v8519
    %8805 = vmatmul.mubr.bf16.gmra.mrb[0].mxu0 %v8518
    %v8806 = vpop.f32.mrb[0].mxu0
    %v8807 = vadd.f32 0.0, %v8806
    %v8808 = vpop.f32.mrb[0].mxu0
    %v8809 = vadd.f32 0.0, %v8808
    %v8810 = vpop.f32.mrb[0].mxu0
    %v8811 = vpop.f32.mrb[0].mxu0
    %8812 = vdwg.mxu0
    %8813 = vmatprep.subr.bf16.mxu0 %v2501
    %8814 = vmatpush1.bf16.msra.mxu0 %v2500
    %8815 = vmatprep.subr.bf16.mxu0 %v2517
    %8816 = vmatpush1.bf16.msra.mxu0 %v2516
    %8817 = vmatprep.subr.bf16.mxu0 %v2533
    %8818 = vmatpush1.bf16.msra.mxu0 %v2532
    %8819 = vmatprep.subr.bf16.mxu0 %v2549
    %8820 = vmatpush1.bf16.msra.mxu0 %v2548
    %8821 = vmatprep.subr.bf16.mxu0 %v2565
    %8822 = vmatpush1.bf16.msra.mxu0 %v2564
    %8823 = vmatprep.subr.bf16.mxu0 %v2581
    %8824 = vmatpush1.bf16.msra.mxu0 %v2580
    %8825 = vmatprep.subr.bf16.mxu0 %v2597
    %8826 = vmatpush1.bf16.msra.mxu0 %v2596
    %8827 = vmatprep.subr.bf16.mxu0 %v2613
    %8828 = vmatpush1.bf16.msra.mxu0 %v2612
    %8829 = vmatprep.subr.bf16.mxu0 %v2629
    %8830 = vmatpush1.bf16.msra.mxu0 %v2628
    %8831 = vmatprep.subr.bf16.mxu0 %v2645
    %8832 = vmatpush1.bf16.msra.mxu0 %v2644
    %8833 = vmatprep.subr.bf16.mxu0 %v2661
    %8834 = vmatpush1.bf16.msra.mxu0 %v2660
    %8835 = vmatprep.subr.bf16.mxu0 %v2677
    %8836 = vmatpush1.bf16.msra.mxu0 %v2676
    %8837 = vmatprep.subr.bf16.mxu0 %v2693
    %8838 = vmatpush1.bf16.msra.mxu0 %v2692
    %8839 = vmatprep.subr.bf16.mxu0 %v2709
    %8840 = vmatpush1.bf16.msra.mxu0 %v2708
    %8841 = vmatprep.subr.bf16.mxu0 %v2725
    %8842 = vmatpush1.bf16.msra.mxu0 %v2724
    %8843 = vmatprep.subr.bf16.mxu0 %v2741
    %8844 = vmatpush1.bf16.msra.mxu0 %v2740
    %8845 = vmatprep.mubr.bf16.mxu0 %v8521
    %8846 = vmatmul.mubr.bf16.gmra.mrb[0].mxu0 %v8520
    %v8847 = vpop.f32.mrb[0].mxu0
    %v8848 = vadd.f32 %v8807, %v8847
    %v8849 = vpop.f32.mrb[0].mxu0
    %v8850 = vadd.f32 %v8809, %v8849
    %v8851 = vpop.f32.mrb[0].mxu0
    %v8852 = vpop.f32.mrb[0].mxu0
    %8853 = vdwg.mxu0
    %8854 = vmatprep.subr.bf16.mxu0 %v2247
    %8855 = vmatpush1.bf16.msra.mxu0 %v2246
    %8856 = vmatprep.subr.bf16.mxu0 %v2263
    %8857 = vmatpush1.bf16.msra.mxu0 %v2262
    %8858 = vmatprep.subr.bf16.mxu0 %v2279
    %8859 = vmatpush1.bf16.msra.mxu0 %v2278
    %8860 = vmatprep.subr.bf16.mxu0 %v2295
    %8861 = vmatpush1.bf16.msra.mxu0 %v2294
    %8862 = vmatprep.subr.bf16.mxu0 %v2311
    %8863 = vmatpush1.bf16.msra.mxu0 %v2310
    %8864 = vmatprep.subr.bf16.mxu0 %v2327
    %8865 = vmatpush1.bf16.msra.mxu0 %v2326
    %8866 = vmatprep.subr.bf16.mxu0 %v2343
    %8867 = vmatpush1.bf16.msra.mxu0 %v2342
    %8868 = vmatprep.subr.bf16.mxu0 %v2359
    %8869 = vmatpush1.bf16.msra.mxu0 %v2358
    %8870 = vmatprep.subr.bf16.mxu0 %v2375
    %8871 = vmatpush1.bf16.msra.mxu0 %v2374
    %8872 = vmatprep.subr.bf16.mxu0 %v2391
    %8873 = vmatpush1.bf16.msra.mxu0 %v2390
    %8874 = vmatprep.subr.bf16.mxu0 %v2407
    %8875 = vmatpush1.bf16.msra.mxu0 %v2406
    %8876 = vmatprep.subr.bf16.mxu0 %v2423
    %8877 = vmatpush1.bf16.msra.mxu0 %v2422
    %8878 = vmatprep.subr.bf16.mxu0 %v2439
    %8879 = vmatpush1.bf16.msra.mxu0 %v2438
    %8880 = vmatprep.subr.bf16.mxu0 %v2455
    %8881 = vmatpush1.bf16.msra.mxu0 %v2454
    %8882 = vmatprep.subr.bf16.mxu0 %v2471
    %8883 = vmatpush1.bf16.msra.mxu0 %v2470
    %8884 = vmatprep.subr.bf16.mxu0 %v2487
    %8885 = vmatpush1.bf16.msra.mxu0 %v2486
    %8886 = vmatprep.mubr.bf16.mxu0 %v8519
    %8887 = vmatmul.mubr.bf16.gmra.mrb[0].mxu0 %v8518
    %v8888 = vpop.f32.mrb[0].mxu0
    %v8889 = vadd.f32 0.0, %v8888
    %v8890 = vpop.f32.mrb[0].mxu0
    %v8891 = vadd.f32 0.0, %v8890
    %v8892 = vpop.f32.mrb[0].mxu0
    %v8893 = vpop.f32.mrb[0].mxu0
    %8894 = vdwg.mxu0
    %8895 = vmatprep.subr.bf16.mxu0 %v2503
    %8896 = vmatpush1.bf16.msra.mxu0 %v2502
    %8897 = vmatprep.subr.bf16.mxu0 %v2519
    %8898 = vmatpush1.bf16.msra.mxu0 %v2518
    %8899 = vmatprep.subr.bf16.mxu0 %v2535
    %8900 = vmatpush1.bf16.msra.mxu0 %v2534
    %8901 = vmatprep.subr.bf16.mxu0 %v2551
    %8902 = vmatpush1.bf16.msra.mxu0 %v2550
    %8903 = vmatprep.subr.bf16.mxu0 %v2567
    %8904 = vmatpush1.bf16.msra.mxu0 %v2566
    %8905 = vmatprep.subr.bf16.mxu0 %v2583
    %8906 = vmatpush1.bf16.msra.mxu0 %v2582
    %8907 = vmatprep.subr.bf16.mxu0 %v2599
    %8908 = vmatpush1.bf16.msra.mxu0 %v2598
    %8909 = vmatprep.subr.bf16.mxu0 %v2615
    %8910 = vmatpush1.bf16.msra.mxu0 %v2614
    %8911 = vmatprep.subr.bf16.mxu0 %v2631
    %8912 = vmatpush1.bf16.msra.mxu0 %v2630
    %8913 = vmatprep.subr.bf16.mxu0 %v2647
    %8914 = vmatpush1.bf16.msra.mxu0 %v2646
    %8915 = vmatprep.subr.bf16.mxu0 %v2663
    %8916 = vmatpush1.bf16.msra.mxu0 %v2662
    %8917 = vmatprep.subr.bf16.mxu0 %v2679
    %8918 = vmatpush1.bf16.msra.mxu0 %v2678
    %8919 = vmatprep.subr.bf16.mxu0 %v2695
    %8920 = vmatpush1.bf16.msra.mxu0 %v2694
    %8921 = vmatprep.subr.bf16.mxu0 %v2711
    %8922 = vmatpush1.bf16.msra.mxu0 %v2710
    %8923 = vmatprep.subr.bf16.mxu0 %v2727
    %8924 = vmatpush1.bf16.msra.mxu0 %v2726
    %8925 = vmatprep.subr.bf16.mxu0 %v2743
    %8926 = vmatpush1.bf16.msra.mxu0 %v2742
    %8927 = vmatprep.mubr.bf16.mxu0 %v8521
    %8928 = vmatmul.mubr.bf16.gmra.mrb[0].mxu0 %v8520
    %v8929 = vpop.f32.mrb[0].mxu0
    %v8930 = vadd.f32 %v8889, %v8929
    %v8931 = vpop.f32.mrb[0].mxu0
    %v8932 = vadd.f32 %v8891, %v8931
    %v8933 = vpop.f32.mrb[0].mxu0
    %v8934 = vpop.f32.mrb[0].mxu0
    %8935 = vdwg.mxu0
    %8936 = vmatprep.subr.bf16.mxu0 %v2249
    %8937 = vmatpush1.bf16.msra.mxu0 %v2248
    %8938 = vmatprep.subr.bf16.mxu0 %v2265
    %8939 = vmatpush1.bf16.msra.mxu0 %v2264
    %8940 = vmatprep.subr.bf16.mxu0 %v2281
    %8941 = vmatpush1.bf16.msra.mxu0 %v2280
    %8942 = vmatprep.subr.bf16.mxu0 %v2297
    %8943 = vmatpush1.bf16.msra.mxu0 %v2296
    %8944 = vmatprep.subr.bf16.mxu0 %v2313
    %8945 = vmatpush1.bf16.msra.mxu0 %v2312
    %8946 = vmatprep.subr.bf16.mxu0 %v2329
    %8947 = vmatpush1.bf16.msra.mxu0 %v2328
    %8948 = vmatprep.subr.bf16.mxu0 %v2345
    %8949 = vmatpush1.bf16.msra.mxu0 %v2344
    %8950 = vmatprep.subr.bf16.mxu0 %v2361
    %8951 = vmatpush1.bf16.msra.mxu0 %v2360
    %8952 = vmatprep.subr.bf16.mxu0 %v2377
    %8953 = vmatpush1.bf16.msra.mxu0 %v2376
    %8954 = vmatprep.subr.bf16.mxu0 %v2393
    %8955 = vmatpush1.bf16.msra.mxu0 %v2392
    %8956 = vmatprep.subr.bf16.mxu0 %v2409
    %8957 = vmatpush1.bf16.msra.mxu0 %v2408
    %8958 = vmatprep.subr.bf16.mxu0 %v2425
    %8959 = vmatpush1.bf16.msra.mxu0 %v2424
    %8960 = vmatprep.subr.bf16.mxu0 %v2441
    %8961 = vmatpush1.bf16.msra.mxu0 %v2440
    %8962 = vmatprep.subr.bf16.mxu0 %v2457
    %8963 = vmatpush1.bf16.msra.mxu0 %v2456
    %8964 = vmatprep.subr.bf16.mxu0 %v2473
    %8965 = vmatpush1.bf16.msra.mxu0 %v2472
    %8966 = vmatprep.subr.bf16.mxu0 %v2489
    %8967 = vmatpush1.bf16.msra.mxu0 %v2488
    %8968 = vmatprep.mubr.bf16.mxu0 %v8519
    %8969 = vmatmul.mubr.bf16.gmra.mrb[0].mxu0 %v8518
    %v8970 = vpop.f32.mrb[0].mxu0
    %v8971 = vadd.f32 0.0, %v8970
    %v8972 = vpop.f32.mrb[0].mxu0
    %v8973 = vadd.f32 0.0, %v8972
    %v8974 = vpop.f32.mrb[0].mxu0
    %v8975 = vpop.f32.mrb[0].mxu0
    %8976 = vdwg.mxu0
    %8977 = vmatprep.subr.bf16.mxu0 %v2505
    %8978 = vmatpush1.bf16.msra.mxu0 %v2504
    %8979 = vmatprep.subr.bf16.mxu0 %v2521
    %8980 = vmatpush1.bf16.msra.mxu0 %v2520
    %8981 = vmatprep.subr.bf16.mxu0 %v2537
    %8982 = vmatpush1.bf16.msra.mxu0 %v2536
    %8983 = vmatprep.subr.bf16.mxu0 %v2553
    %8984 = vmatpush1.bf16.msra.mxu0 %v2552
    %8985 = vmatprep.subr.bf16.mxu0 %v2569
    %8986 = vmatpush1.bf16.msra.mxu0 %v2568
    %8987 = vmatprep.subr.bf16.mxu0 %v2585
    %8988 = vmatpush1.bf16.msra.mxu0 %v2584
    %8989 = vmatprep.subr.bf16.mxu0 %v2601
    %8990 = vmatpush1.bf16.msra.mxu0 %v2600
    %8991 = vmatprep.subr.bf16.mxu0 %v2617
    %8992 = vmatpush1.bf16.msra.mxu0 %v2616
    %8993 = vmatprep.subr.bf16.mxu0 %v2633
    %8994 = vmatpush1.bf16.msra.mxu0 %v2632
    %8995 = vmatprep.subr.bf16.mxu0 %v2649
    %8996 = vmatpush1.bf16.msra.mxu0 %v2648
    %8997 = vmatprep.subr.bf16.mxu0 %v2665
    %8998 = vmatpush1.bf16.msra.mxu0 %v2664
    %8999 = vmatprep.subr.bf16.mxu0 %v2681
    %9000 = vmatpush1.bf16.msra.mxu0 %v2680
    %9001 = vmatprep.subr.bf16.mxu0 %v2697
    %9002 = vmatpush1.bf16.msra.mxu0 %v2696
    %9003 = vmatprep.subr.bf16.mxu0 %v2713
    %9004 = vmatpush1.bf16.msra.mxu0 %v2712
    %9005 = vmatprep.subr.bf16.mxu0 %v2729
    %9006 = vmatpush1.bf16.msra.mxu0 %v2728
    %9007 = vmatprep.subr.bf16.mxu0 %v2745
    %9008 = vmatpush1.bf16.msra.mxu0 %v2744
    %9009 = vmatprep.mubr.bf16.mxu0 %v8521
    %9010 = vmatmul.mubr.bf16.gmra.mrb[0].mxu0 %v8520
    %v9011 = vpop.f32.mrb[0].mxu0
    %v9012 = vadd.f32 %v8971, %v9011
    %v9013 = vpop.f32.mrb[0].mxu0
    %v9014 = vadd.f32 %v8973, %v9013
    %v9015 = vpop.f32.mrb[0].mxu0
    %v9016 = vpop.f32.mrb[0].mxu0
    %9017 = vdwg.mxu0
    %9018 = vmatprep.subr.bf16.mxu0 %v2251
    %9019 = vmatpush1.bf16.msra.mxu0 %v2250
    %9020 = vmatprep.subr.bf16.mxu0 %v2267
    %9021 = vmatpush1.bf16.msra.mxu0 %v2266
    %9022 = vmatprep.subr.bf16.mxu0 %v2283
    %9023 = vmatpush1.bf16.msra.mxu0 %v2282
    %9024 = vmatprep.subr.bf16.mxu0 %v2299
    %9025 = vmatpush1.bf16.msra.mxu0 %v2298
    %9026 = vmatprep.subr.bf16.mxu0 %v2315
    %9027 = vmatpush1.bf16.msra.mxu0 %v2314
    %9028 = vmatprep.subr.bf16.mxu0 %v2331
    %9029 = vmatpush1.bf16.msra.mxu0 %v2330
    %9030 = vmatprep.subr.bf16.mxu0 %v2347
    %9031 = vmatpush1.bf16.msra.mxu0 %v2346
    %9032 = vmatprep.subr.bf16.mxu0 %v2363
    %9033 = vmatpush1.bf16.msra.mxu0 %v2362
    %9034 = vmatprep.subr.bf16.mxu0 %v2379
    %9035 = vmatpush1.bf16.msra.mxu0 %v2378
    %9036 = vmatprep.subr.bf16.mxu0 %v2395
    %9037 = vmatpush1.bf16.msra.mxu0 %v2394
    %9038 = vmatprep.subr.bf16.mxu0 %v2411
    %9039 = vmatpush1.bf16.msra.mxu0 %v2410
    %9040 = vmatprep.subr.bf16.mxu0 %v2427
    %9041 = vmatpush1.bf16.msra.mxu0 %v2426
    %9042 = vmatprep.subr.bf16.mxu0 %v2443
    %9043 = vmatpush1.bf16.msra.mxu0 %v2442
    %9044 = vmatprep.subr.bf16.mxu0 %v2459
    %9045 = vmatpush1.bf16.msra.mxu0 %v2458
    %9046 = vmatprep.subr.bf16.mxu0 %v2475
    %9047 = vmatpush1.bf16.msra.mxu0 %v2474
    %9048 = vmatprep.subr.bf16.mxu0 %v2491
    %9049 = vmatpush1.bf16.msra.mxu0 %v2490
    %9050 = vmatprep.mubr.bf16.mxu0 %v8519
    %9051 = vmatmul.mubr.bf16.gmra.mrb[0].mxu0 %v8518
    %v9052 = vpop.f32.mrb[0].mxu0
    %v9053 = vadd.f32 0.0, %v9052
    %v9054 = vpop.f32.mrb[0].mxu0
    %v9055 = vadd.f32 0.0, %v9054
    %v9056 = vpop.f32.mrb[0].mxu0
    %v9057 = vpop.f32.mrb[0].mxu0
    %9058 = vdwg.mxu0
    %9059 = vmatprep.subr.bf16.mxu0 %v2507
    %9060 = vmatpush1.bf16.msra.mxu0 %v2506
    %9061 = vmatprep.subr.bf16.mxu0 %v2523
    %9062 = vmatpush1.bf16.msra.mxu0 %v2522
    %9063 = vmatprep.subr.bf16.mxu0 %v2539
    %9064 = vmatpush1.bf16.msra.mxu0 %v2538
    %9065 = vmatprep.subr.bf16.mxu0 %v2555
    %9066 = vmatpush1.bf16.msra.mxu0 %v2554
    %9067 = vmatprep.subr.bf16.mxu0 %v2571
    %9068 = vmatpush1.bf16.msra.mxu0 %v2570
    %9069 = vmatprep.subr.bf16.mxu0 %v2587
    %9070 = vmatpush1.bf16.msra.mxu0 %v2586
    %9071 = vmatprep.subr.bf16.mxu0 %v2603
    %9072 = vmatpush1.bf16.msra.mxu0 %v2602
    %9073 = vmatprep.subr.bf16.mxu0 %v2619
    %9074 = vmatpush1.bf16.msra.mxu0 %v2618
    %9075 = vmatprep.subr.bf16.mxu0 %v2635
    %9076 = vmatpush1.bf16.msra.mxu0 %v2634
    %9077 = vmatprep.subr.bf16.mxu0 %v2651
    %9078 = vmatpush1.bf16.msra.mxu0 %v2650
    %9079 = vmatprep.subr.bf16.mxu0 %v2667
    %9080 = vmatpush1.bf16.msra.mxu0 %v2666
    %9081 = vmatprep.subr.bf16.mxu0 %v2683
    %9082 = vmatpush1.bf16.msra.mxu0 %v2682
    %9083 = vmatprep.subr.bf16.mxu0 %v2699
    %9084 = vmatpush1.bf16.msra.mxu0 %v2698
    %9085 = vmatprep.subr.bf16.mxu0 %v2715
    %9086 = vmatpush1.bf16.msra.mxu0 %v2714
    %9087 = vmatprep.subr.bf16.mxu0 %v2731
    %9088 = vmatpush1.bf16.msra.mxu0 %v2730
    %9089 = vmatprep.subr.bf16.mxu0 %v2747
    %9090 = vmatpush1.bf16.msra.mxu0 %v2746
    %9091 = vmatprep.mubr.bf16.mxu0 %v8521
    %9092 = vmatmul.mubr.bf16.gmra.mrb[0].mxu0 %v8520
    %v9093 = vpop.f32.mrb[0].mxu0
    %v9094 = vadd.f32 %v9053, %v9093
    %v9095 = vpop.f32.mrb[0].mxu0
    %v9096 = vadd.f32 %v9055, %v9095
    %v9097 = vpop.f32.mrb[0].mxu0
    %v9098 = vpop.f32.mrb[0].mxu0
    %9099 = vdwg.mxu0
    %9100 = vmatprep.subr.bf16.mxu0 %v2253
    %9101 = vmatpush1.bf16.msra.mxu0 %v2252
    %9102 = vmatprep.subr.bf16.mxu0 %v2269
    %9103 = vmatpush1.bf16.msra.mxu0 %v2268
    %9104 = vmatprep.subr.bf16.mxu0 %v2285
    %9105 = vmatpush1.bf16.msra.mxu0 %v2284
    %9106 = vmatprep.subr.bf16.mxu0 %v2301
    %9107 = vmatpush1.bf16.msra.mxu0 %v2300
    %9108 = vmatprep.subr.bf16.mxu0 %v2317
    %9109 = vmatpush1.bf16.msra.mxu0 %v2316
    %9110 = vmatprep.subr.bf16.mxu0 %v2333
    %9111 = vmatpush1.bf16.msra.mxu0 %v2332
    %9112 = vmatprep.subr.bf16.mxu0 %v2349
    %9113 = vmatpush1.bf16.msra.mxu0 %v2348
    %9114 = vmatprep.subr.bf16.mxu0 %v2365
    %9115 = vmatpush1.bf16.msra.mxu0 %v2364
    %9116 = vmatprep.subr.bf16.mxu0 %v2381
    %9117 = vmatpush1.bf16.msra.mxu0 %v2380
    %9118 = vmatprep.subr.bf16.mxu0 %v2397
    %9119 = vmatpush1.bf16.msra.mxu0 %v2396
    %9120 = vmatprep.subr.bf16.mxu0 %v2413
    %9121 = vmatpush1.bf16.msra.mxu0 %v2412
    %9122 = vmatprep.subr.bf16.mxu0 %v2429
    %9123 = vmatpush1.bf16.msra.mxu0 %v2428
    %9124 = vmatprep.subr.bf16.mxu0 %v2445
    %9125 = vmatpush1.bf16.msra.mxu0 %v2444
    %9126 = vmatprep.subr.bf16.mxu0 %v2461
    %9127 = vmatpush1.bf16.msra.mxu0 %v2460
    %9128 = vmatprep.subr.bf16.mxu0 %v2477
    %9129 = vmatpush1.bf16.msra.mxu0 %v2476
    %9130 = vmatprep.subr.bf16.mxu0 %v2493
    %9131 = vmatpush1.bf16.msra.mxu0 %v2492
    %9132 = vmatprep.mubr.bf16.mxu0 %v8519
    %9133 = vmatmul.mubr.bf16.gmra.mrb[0].mxu0 %v8518
    %v9134 = vpop.f32.mrb[0].mxu0
    %v9135 = vadd.f32 0.0, %v9134
    %v9136 = vpop.f32.mrb[0].mxu0
    %v9137 = vadd.f32 0.0, %v9136
    %v9138 = vpop.f32.mrb[0].mxu0
    %v9139 = vpop.f32.mrb[0].mxu0
    %9140 = vdwg.mxu0
    %9141 = vmatprep.subr.bf16.mxu0 %v2509
    %9142 = vmatpush1.bf16.msra.mxu0 %v2508
    %9143 = vmatprep.subr.bf16.mxu0 %v2525
    %9144 = vmatpush1.bf16.msra.mxu0 %v2524
    %9145 = vmatprep.subr.bf16.mxu0 %v2541
    %9146 = vmatpush1.bf16.msra.mxu0 %v2540
    %9147 = vmatprep.subr.bf16.mxu0 %v2557
    %9148 = vmatpush1.bf16.msra.mxu0 %v2556
    %9149 = vmatprep.subr.bf16.mxu0 %v2573
    %9150 = vmatpush1.bf16.msra.mxu0 %v2572
    %9151 = vmatprep.subr.bf16.mxu0 %v2589
    %9152 = vmatpush1.bf16.msra.mxu0 %v2588
    %9153 = vmatprep.subr.bf16.mxu0 %v2605
    %9154 = vmatpush1.bf16.msra.mxu0 %v2604
    %9155 = vmatprep.subr.bf16.mxu0 %v2621
    %9156 = vmatpush1.bf16.msra.mxu0 %v2620
    %9157 = vmatprep.subr.bf16.mxu0 %v2637
    %9158 = vmatpush1.bf16.msra.mxu0 %v2636
    %9159 = vmatprep.subr.bf16.mxu0 %v2653
    %9160 = vmatpush1.bf16.msra.mxu0 %v2652
    %9161 = vmatprep.subr.bf16.mxu0 %v2669
    %9162 = vmatpush1.bf16.msra.mxu0 %v2668
    %9163 = vmatprep.subr.bf16.mxu0 %v2685
    %9164 = vmatpush1.bf16.msra.mxu0 %v2684
    %9165 = vmatprep.subr.bf16.mxu0 %v2701
    %9166 = vmatpush1.bf16.msra.mxu0 %v2700
    %9167 = vmatprep.subr.bf16.mxu0 %v2717
    %9168 = vmatpush1.bf16.msra.mxu0 %v2716
    %9169 = vmatprep.subr.bf16.mxu0 %v2733
    %9170 = vmatpush1.bf16.msra.mxu0 %v2732
    %9171 = vmatprep.subr.bf16.mxu0 %v2749
    %9172 = vmatpush1.bf16.msra.mxu0 %v2748
    %9173 = vmatprep.mubr.bf16.mxu0 %v8521
    %9174 = vmatmul.mubr.bf16.gmra.mrb[0].mxu0 %v8520
    %v9175 = vpop.f32.mrb[0].mxu0
    %v9176 = vadd.f32 %v9135, %v9175
    %v9177 = vpop.f32.mrb[0].mxu0
    %v9178 = vadd.f32 %v9137, %v9177
    %v9179 = vpop.f32.mrb[0].mxu0
    %v9180 = vpop.f32.mrb[0].mxu0
    %9181 = vdwg.mxu0
    %v9198 = vrot.slane %v8602, 2
    %v9199 = vrot.slane %v8604, 2
    %v9200 = vrot.slane %v8684, 2
    %v9201 = vrot.slane %v8686, 2
    %v9202 = vrot.slane %v8766, 2
    %v9203 = vrot.slane %v8768, 2
    %v9204 = vrot.slane %v8848, 2
    %v9205 = vrot.slane %v8850, 2
    %v9206 = vrot.slane %v8930, 2
    %v9207 = vrot.slane %v8932, 2
    %v9208 = vrot.slane %v9012, 2
    %v9209 = vrot.slane %v9014, 2
    %v9210 = vrot.slane %v9094, 2
    %v9211 = vrot.slane %v9096, 2
    %v9212 = vrot.slane %v9176, 2
    %v9213 = vrot.slane %v9178, 2
    %v9230 = vadd.f32 %v791, %v9198
    %v9231 = vadd.f32 %v793, %v9199
    %v9232 = vadd.f32 %v834, %v9200
    %v9233 = vadd.f32 %v836, %v9201
    %v9234 = vadd.f32 %v877, %v9202
    %v9235 = vadd.f32 %v879, %v9203
    %v9236 = vadd.f32 %v920, %v9204
    %v9237 = vadd.f32 %v922, %v9205
    %v9238 = vadd.f32 %v963, %v9206
    %v9239 = vadd.f32 %v965, %v9207
    %v9240 = vadd.f32 %v1006, %v9208
    %v9241 = vadd.f32 %v1008, %v9209
    %v9242 = vadd.f32 %v1049, %v9210
    %v9243 = vadd.f32 %v1051, %v9211
    %v9244 = vadd.f32 %v1092, %v9212
    %v9245 = vadd.f32 %v1094, %v9213
    %v9246 = vxor.u32 %v9230, 2147483648
    %v9247 = vxor.u32 %v9231, 2147483648
    %v9248 = vxor.u32 %v9232, 2147483648
    %v9249 = vxor.u32 %v9233, 2147483648
    %v9250 = vmul.f32 %v9246, 1.442695
    %v9251 = vpow.pop %v9250
    %v9252 = vmul.f32 %v9247, 1.442695
    %v9253 = vpow.pop %v9252
    %v9254 = vmul.f32 %v9248, 1.442695
    %v9255 = vpow.pop %v9254
    %v9256 = vmul.f32 %v9249, 1.442695
    %v9257 = vpow.pop %v9256
    %v9258 = vadd.f32 %v9251, 1.0
    %v9259 = vadd.f32 %v9253, 1.0
    %v9260 = vadd.f32 %v9255, 1.0
    %v9261 = vadd.f32 %v9257, 1.0
    %v9262 = vrcp.pop %v9258
    %v9263 = vmul.f32 1.0, %v9262
    %v9264 = vrcp.pop %v9259
    %v9265 = vmul.f32 1.0, %v9264
    %v9266 = vrcp.pop %v9260
    %v9267 = vmul.f32 1.0, %v9266
    %v9268 = vrcp.pop %v9261
    %v9269 = vmul.f32 1.0, %v9268
    %v9270 = vxor.u32 %v9234, 2147483648
    %v9271 = vxor.u32 %v9235, 2147483648
    %v9272 = vxor.u32 %v9236, 2147483648
    %v9273 = vxor.u32 %v9237, 2147483648
    %v9274 = vmul.f32 %v9270, 1.442695
    %v9275 = vpow.pop %v9274
    %v9276 = vmul.f32 %v9271, 1.442695
    %v9277 = vpow.pop %v9276
    %v9278 = vmul.f32 %v9272, 1.442695
    %v9279 = vpow.pop %v9278
    %v9280 = vmul.f32 %v9273, 1.442695
    %v9281 = vpow.pop %v9280
    %v9282 = vadd.f32 %v9275, 1.0
    %v9283 = vadd.f32 %v9277, 1.0
    %v9284 = vadd.f32 %v9279, 1.0
    %v9285 = vadd.f32 %v9281, 1.0
    %v9286 = vrcp.pop %v9282
    %v9287 = vmul.f32 1.0, %v9286
    %v9288 = vrcp.pop %v9283
    %v9289 = vmul.f32 1.0, %v9288
    %v9290 = vrcp.pop %v9284
    %v9291 = vmul.f32 1.0, %v9290
    %v9292 = vrcp.pop %v9285
    %v9293 = vmul.f32 1.0, %v9292
    %v9294 = vtanh.pop %v9238
    %v9295 = vtanh.pop %v9239
    %v9296 = vtanh.pop %v9240
    %v9297 = vtanh.pop %v9241
    %v9298 = vxor.u32 %v9242, 2147483648
    %v9299 = vxor.u32 %v9243, 2147483648
    %v9300 = vxor.u32 %v9244, 2147483648
    %v9301 = vxor.u32 %v9245, 2147483648
    %v9302 = vmul.f32 %v9298, 1.442695
    %v9303 = vpow.pop %v9302
    %v9304 = vmul.f32 %v9299, 1.442695
    %v9305 = vpow.pop %v9304
    %v9306 = vmul.f32 %v9300, 1.442695
    %v9307 = vpow.pop %v9306
    %v9308 = vmul.f32 %v9301, 1.442695
    %v9309 = vpow.pop %v9308
    %v9310 = vadd.f32 %v9303, 1.0
    %v9311 = vadd.f32 %v9305, 1.0
    %v9312 = vadd.f32 %v9307, 1.0
    %v9313 = vadd.f32 %v9309, 1.0
    %v9314 = vrcp.pop %v9310
    %v9315 = vmul.f32 1.0, %v9314
    %v9316 = vrcp.pop %v9311
    %v9317 = vmul.f32 1.0, %v9316
    %v9318 = vrcp.pop %v9312
    %v9319 = vmul.f32 1.0, %v9318
    %v9320 = vrcp.pop %v9313
    %v9321 = vmul.f32 1.0, %v9320
    %v9326 = vrot.slane %v8498, 6
    %v9327 = vrot.slane %v8499, 6
    %v9328 = vrot.slane %v8500, 6
    %v9329 = vrot.slane %v8501, 6
    %v9334 = vmul.f32 %v9287, %v9326
    %v9335 = vmul.f32 %v9289, %v9327
    %v9336 = vmul.f32 %v9291, %v9328
    %v9337 = vmul.f32 %v9293, %v9329
    %v9338 = vmul.f32 %v9263, %v9294
    %v9339 = vmul.f32 %v9265, %v9295
    %v9340 = vmul.f32 %v9267, %v9296
    %v9341 = vmul.f32 %v9269, %v9297
    %v9342 = vadd.f32 %v9334, %v9338
    %v9343 = vadd.f32 %v9335, %v9339
    %v9344 = vadd.f32 %v9336, %v9340
    %v9345 = vadd.f32 %v9337, %v9341
    %v9346 = vtanh.pop %v9342
    %v9347 = vtanh.pop %v9343
    %v9348 = vtanh.pop %v9344
    %v9349 = vtanh.pop %v9345
    %v9350 = vmul.f32 %v9315, %v9346
    %v9351 = vmul.f32 %v9317, %v9347
    %v9352 = vmul.f32 %v9319, %v9348
    %v9353 = vmul.f32 %v9321, %v9349
    %v9358 = vrot.slane %v9350, 6
    %v9359 = vrot.slane %v9351, 6
    %v9360 = vrot.slane %v9352, 6
    %v9361 = vrot.slane %v9353, 6
    %v9366 = vpack.c.bf16 %v1639, %v1639
    %v9367 = vpack.c.bf16 %v1907, %v1907
    %v9368 = vpack.c.bf16 %v2233, %v2233
    %v9369 = vpack.c.bf16 %v9358, %v9358
    %v9370 = vpack.c.bf16 %v9359, %v9359
    %v9371 = vpack.c.bf16 %v9360, %v9360
    %v9372 = vpack.c.bf16 %v9361, %v9361
    %v9373 = vld [vmem:[#allocation24] sm:$0xf]
    %v9374 = vld [vmem:[#allocation24 + $0x4] sm:$0xf]
    %v9375 = vld [vmem:[#allocation24 + $0x8] sm:$0xf]
    %v9376 = vld [vmem:[#allocation24 + $0xc] sm:$0xf]
    %v9377 = vld [vmem:[#allocation24 + $0x10] sm:$0xf]
    %v9378 = vld [vmem:[#allocation24 + $0x14] sm:$0xf]
    %v9379 = vld [vmem:[#allocation24 + $0x18] sm:$0xf]
    %v9380 = vld [vmem:[#allocation24 + $0x1c] sm:$0xf]
    %v9381 = vld [vmem:[#allocation24 + $0x20] sm:$0xf]
    %v9382 = vld [vmem:[#allocation24 + $0x24] sm:$0xf]
    %v9383 = vld [vmem:[#allocation24 + $0x28] sm:$0xf]
    %v9384 = vld [vmem:[#allocation24 + $0x2c] sm:$0xf]
    %v9385 = vld [vmem:[#allocation24 + $0x30] sm:$0xf]
    %v9386 = vld [vmem:[#allocation24 + $0x34] sm:$0xf]
    %v9387 = vld [vmem:[#allocation24 + $0x38] sm:$0xf]
    %v9388 = vld [vmem:[#allocation24 + $0x3c] sm:$0xf]
    %v9389 = vld [vmem:[#allocation24 + $0x40] sm:$0xf]
    %v9390 = vld [vmem:[#allocation24 + $0x44] sm:$0xf]
    %v9391 = vld [vmem:[#allocation24 + $0x48] sm:$0xf]
    %v9392 = vld [vmem:[#allocation24 + $0x4c] sm:$0xf]
    %v9393 = vld [vmem:[#allocation24 + $0x50] sm:$0xf]
    %v9394 = vld [vmem:[#allocation24 + $0x54] sm:$0xf]
    %v9395 = vld [vmem:[#allocation24 + $0x58] sm:$0xf]
    %v9396 = vld [vmem:[#allocation24 + $0x5c] sm:$0xf]
    %v9397 = vld [vmem:[#allocation24 + $0x60] sm:$0xf]
    %v9398 = vld [vmem:[#allocation24 + $0x64] sm:$0xf]
    %v9399 = vld [vmem:[#allocation24 + $0x68] sm:$0xf]
    %v9400 = vld [vmem:[#allocation24 + $0x6c] sm:$0xf]
    %v9401 = vld [vmem:[#allocation24 + $0x70] sm:$0xf]
    %v9402 = vld [vmem:[#allocation24 + $0x74] sm:$0xf]
    %v9403 = vld [vmem:[#allocation24 + $0x78] sm:$0xf]
    %v9404 = vld [vmem:[#allocation24 + $0x7c] sm:$0xf]
    %v9405 = vld [vmem:[#allocation24 + $0x80] sm:$0xf]
    %v9406 = vld [vmem:[#allocation24 + $0x84] sm:$0xf]
    %v9407 = vld [vmem:[#allocation24 + $0x88] sm:$0xf]
    %v9408 = vld [vmem:[#allocation24 + $0x8c] sm:$0xf]
    %v9409 = vld [vmem:[#allocation24 + $0x90] sm:$0xf]
    %v9410 = vld [vmem:[#allocation24 + $0x94] sm:$0xf]
    %v9411 = vld [vmem:[#allocation24 + $0x98] sm:$0xf]
    %v9412 = vld [vmem:[#allocation24 + $0x9c] sm:$0xf]
    %v9413 = vld [vmem:[#allocation24 + $0xa0] sm:$0xf]
    %v9414 = vld [vmem:[#allocation24 + $0xa4] sm:$0xf]
    %v9415 = vld [vmem:[#allocation24 + $0xa8] sm:$0xf]
    %v9416 = vld [vmem:[#allocation24 + $0xac] sm:$0xf]
    %v9417 = vld [vmem:[#allocation24 + $0xb0] sm:$0xf]
    %v9418 = vld [vmem:[#allocation24 + $0xb4] sm:$0xf]
    %v9419 = vld [vmem:[#allocation24 + $0xb8] sm:$0xf]
    %v9420 = vld [vmem:[#allocation24 + $0xbc] sm:$0xf]
    %v9421 = vld [vmem:[#allocation24 + $0xc0] sm:$0xf]
    %v9422 = vld [vmem:[#allocation24 + $0xc4] sm:$0xf]
    %v9423 = vld [vmem:[#allocation24 + $0xc8] sm:$0xf]
    %v9424 = vld [vmem:[#allocation24 + $0xcc] sm:$0xf]
    %v9425 = vld [vmem:[#allocation24 + $0xd0] sm:$0xf]
    %v9426 = vld [vmem:[#allocation24 + $0xd4] sm:$0xf]
    %v9427 = vld [vmem:[#allocation24 + $0xd8] sm:$0xf]
    %v9428 = vld [vmem:[#allocation24 + $0xdc] sm:$0xf]
    %v9429 = vld [vmem:[#allocation24 + $0xe0] sm:$0xf]
    %v9430 = vld [vmem:[#allocation24 + $0xe4] sm:$0xf]
    %v9431 = vld [vmem:[#allocation24 + $0xe8] sm:$0xf]
    %v9432 = vld [vmem:[#allocation24 + $0xec] sm:$0xf]
    %v9433 = vld [vmem:[#allocation24 + $0xf0] sm:$0xf]
    %v9434 = vld [vmem:[#allocation24 + $0xf4] sm:$0xf]
    %v9435 = vld [vmem:[#allocation24 + $0xf8] sm:$0xf]
    %v9436 = vld [vmem:[#allocation24 + $0xfc] sm:$0xf]
    %v9437 = vld [vmem:[#allocation24 + $0x100] sm:$0xf]
    %v9438 = vld [vmem:[#allocation24 + $0x104] sm:$0xf]
    %v9439 = vld [vmem:[#allocation24 + $0x108] sm:$0xf]
    %v9440 = vld [vmem:[#allocation24 + $0x10c] sm:$0xf]
    %v9441 = vld [vmem:[#allocation24 + $0x110] sm:$0xf]
    %v9442 = vld [vmem:[#allocation24 + $0x114] sm:$0xf]
    %v9443 = vld [vmem:[#allocation24 + $0x118] sm:$0xf]
    %v9444 = vld [vmem:[#allocation24 + $0x11c] sm:$0xf]
    %v9445 = vld [vmem:[#allocation24 + $0x120] sm:$0xf]
    %v9446 = vld [vmem:[#allocation24 + $0x124] sm:$0xf]
    %v9447 = vld [vmem:[#allocation24 + $0x128] sm:$0xf]
    %v9448 = vld [vmem:[#allocation24 + $0x12c] sm:$0xf]
    %v9449 = vld [vmem:[#allocation24 + $0x130] sm:$0xf]
    %v9450 = vld [vmem:[#allocation24 + $0x134] sm:$0xf]
    %v9451 = vld [vmem:[#allocation24 + $0x138] sm:$0xf]
    %v9452 = vld [vmem:[#allocation24 + $0x13c] sm:$0xf]
    %v9453 = vld [vmem:[#allocation24 + $0x140] sm:$0xf]
    %v9454 = vld [vmem:[#allocation24 + $0x144] sm:$0xf]
    %v9455 = vld [vmem:[#allocation24 + $0x148] sm:$0xf]
    %v9456 = vld [vmem:[#allocation24 + $0x14c] sm:$0xf]
    %v9457 = vld [vmem:[#allocation24 + $0x150] sm:$0xf]
    %v9458 = vld [vmem:[#allocation24 + $0x154] sm:$0xf]
    %v9459 = vld [vmem:[#allocation24 + $0x158] sm:$0xf]
    %v9460 = vld [vmem:[#allocation24 + $0x15c] sm:$0xf]
    %v9461 = vld [vmem:[#allocation24 + $0x160] sm:$0xf]
    %v9462 = vld [vmem:[#allocation24 + $0x164] sm:$0xf]
    %v9463 = vld [vmem:[#allocation24 + $0x168] sm:$0xf]
    %v9464 = vld [vmem:[#allocation24 + $0x16c] sm:$0xf]
    %v9465 = vld [vmem:[#allocation24 + $0x170] sm:$0xf]
    %v9466 = vld [vmem:[#allocation24 + $0x174] sm:$0xf]
    %v9467 = vld [vmem:[#allocation24 + $0x178] sm:$0xf]
    %v9468 = vld [vmem:[#allocation24 + $0x17c] sm:$0xf]
    %v9469 = vld [vmem:[#allocation24 + $0x180] sm:$0xf]
    %v9470 = vld [vmem:[#allocation24 + $0x184] sm:$0xf]
    %v9471 = vld [vmem:[#allocation24 + $0x188] sm:$0xf]
    %v9472 = vld [vmem:[#allocation24 + $0x18c] sm:$0xf]
    %v9473 = vld [vmem:[#allocation24 + $0x190] sm:$0xf]
    %v9474 = vld [vmem:[#allocation24 + $0x194] sm:$0xf]
    %v9475 = vld [vmem:[#allocation24 + $0x198] sm:$0xf]
    %v9476 = vld [vmem:[#allocation24 + $0x19c] sm:$0xf]
    %v9477 = vld [vmem:[#allocation24 + $0x1a0] sm:$0xf]
    %v9478 = vld [vmem:[#allocation24 + $0x1a4] sm:$0xf]
    %v9479 = vld [vmem:[#allocation24 + $0x1a8] sm:$0xf]
    %v9480 = vld [vmem:[#allocation24 + $0x1ac] sm:$0xf]
    %v9481 = vld [vmem:[#allocation24 + $0x1b0] sm:$0xf]
    %v9482 = vld [vmem:[#allocation24 + $0x1b4] sm:$0xf]
    %v9483 = vld [vmem:[#allocation24 + $0x1b8] sm:$0xf]
    %v9484 = vld [vmem:[#allocation24 + $0x1bc] sm:$0xf]
    %v9485 = vld [vmem:[#allocation25] sm:$0x1]
    %v9487 = vlaneseq
    %v9488 = vshrl.u32 %v9487, 7
    %v9489 = vsub.s32 0, %v9488
    %v9490 = vrot.slane %v9485, %v9489
    %v9604 = vunpack.c.l.b16 %v9373
    %v9605 = vunpack.c.l.b16 %v9374
    %v9606 = vunpack.c.l.b16 %v9375
    %v9607 = vunpack.c.l.b16 %v9376
    %v9608 = vunpack.c.l.b16 %v9377
    %v9609 = vunpack.c.l.b16 %v9378
    %v9610 = vunpack.c.l.b16 %v9379
    %v9611 = vunpack.c.l.b16 %v9380
    %v9612 = vunpack.c.l.b16 %v9381
    %v9613 = vunpack.c.l.b16 %v9382
    %v9614 = vunpack.c.l.b16 %v9383
    %v9615 = vunpack.c.l.b16 %v9384
    %v9616 = vunpack.c.l.b16 %v9385
    %v9617 = vunpack.c.l.b16 %v9386
    %v9618 = vunpack.c.l.b16 %v9387
    %v9619 = vunpack.c.l.b16 %v9388
    %v9620 = vunpack.c.l.b16 %v9389
    %v9621 = vunpack.c.l.b16 %v9390
    %v9622 = vunpack.c.l.b16 %v9391
    %v9623 = vunpack.c.l.b16 %v9392
    %v9624 = vunpack.c.l.b16 %v9393
    %v9625 = vunpack.c.l.b16 %v9394
    %v9626 = vunpack.c.l.b16 %v9395
    %v9627 = vunpack.c.l.b16 %v9396
    %v9628 = vunpack.c.l.b16 %v9397
    %v9629 = vunpack.c.l.b16 %v9398
    %v9630 = vunpack.c.l.b16 %v9399
    %v9631 = vunpack.c.l.b16 %v9400
    %v9632 = vunpack.c.l.b16 %v9401
    %v9633 = vunpack.c.l.b16 %v9402
    %v9634 = vunpack.c.l.b16 %v9403
    %v9635 = vunpack.c.l.b16 %v9404
    %v9636 = vunpack.c.l.b16 %v9405
    %v9637 = vunpack.c.l.b16 %v9406
    %v9638 = vunpack.c.l.b16 %v9407
    %v9639 = vunpack.c.l.b16 %v9408
    %v9640 = vunpack.c.l.b16 %v9409
    %v9641 = vunpack.c.l.b16 %v9410
    %v9642 = vunpack.c.l.b16 %v9411
    %v9643 = vunpack.c.l.b16 %v9412
    %v9644 = vunpack.c.l.b16 %v9413
    %v9645 = vunpack.c.l.b16 %v9414
    %v9646 = vunpack.c.l.b16 %v9415
    %v9647 = vunpack.c.l.b16 %v9416
    %v9648 = vunpack.c.l.b16 %v9417
    %v9649 = vunpack.c.l.b16 %v9418
    %v9650 = vunpack.c.l.b16 %v9419
    %v9651 = vunpack.c.l.b16 %v9420
    %v9652 = vunpack.c.l.b16 %v9421
    %v9653 = vunpack.c.l.b16 %v9422
    %v9654 = vunpack.c.l.b16 %v9423
    %v9655 = vunpack.c.l.b16 %v9424
    %v9656 = vunpack.c.l.b16 %v9425
    %v9657 = vunpack.c.l.b16 %v9426
    %v9658 = vunpack.c.l.b16 %v9427
    %v9659 = vunpack.c.l.b16 %v9428
    %v9660 = vunpack.c.l.b16 %v9429
    %v9661 = vunpack.c.l.b16 %v9430
    %v9662 = vunpack.c.l.b16 %v9431
    %v9663 = vunpack.c.l.b16 %v9432
    %v9664 = vunpack.c.l.b16 %v9433
    %v9665 = vunpack.c.l.b16 %v9434
    %v9666 = vunpack.c.l.b16 %v9435
    %v9667 = vunpack.c.l.b16 %v9436
    %v9668 = vunpack.c.l.b16 %v9437
    %v9669 = vunpack.c.l.b16 %v9438
    %v9670 = vunpack.c.l.b16 %v9439
    %v9671 = vunpack.c.l.b16 %v9440
    %v9672 = vunpack.c.l.b16 %v9441
    %v9673 = vunpack.c.l.b16 %v9442
    %v9674 = vunpack.c.l.b16 %v9443
    %v9675 = vunpack.c.l.b16 %v9444
    %v9676 = vunpack.c.l.b16 %v9445
    %v9677 = vunpack.c.l.b16 %v9446
    %v9678 = vunpack.c.l.b16 %v9447
    %v9679 = vunpack.c.l.b16 %v9448
    %v9680 = vunpack.c.l.b16 %v9449
    %v9681 = vunpack.c.l.b16 %v9450
    %v9682 = vunpack.c.l.b16 %v9451
    %v9683 = vunpack.c.l.b16 %v9452
    %v9684 = vunpack.c.l.b16 %v9453
    %v9685 = vunpack.c.l.b16 %v9454
    %v9686 = vunpack.c.l.b16 %v9455
    %v9687 = vunpack.c.l.b16 %v9456
    %v9688 = vunpack.c.l.b16 %v9457
    %v9689 = vunpack.c.l.b16 %v9458
    %v9690 = vunpack.c.l.b16 %v9459
    %v9691 = vunpack.c.l.b16 %v9460
    %v9692 = vunpack.c.l.b16 %v9461
    %v9693 = vunpack.c.l.b16 %v9462
    %v9694 = vunpack.c.l.b16 %v9463
    %v9695 = vunpack.c.l.b16 %v9464
    %v9696 = vunpack.c.l.b16 %v9465
    %v9697 = vunpack.c.l.b16 %v9466
    %v9698 = vunpack.c.l.b16 %v9467
    %v9699 = vunpack.c.l.b16 %v9468
    %v9700 = vunpack.c.l.b16 %v9469
    %v9701 = vunpack.c.l.b16 %v9470
    %v9702 = vunpack.c.l.b16 %v9471
    %v9703 = vunpack.c.l.b16 %v9472
    %v9704 = vunpack.c.l.b16 %v9473
    %v9705 = vunpack.c.l.b16 %v9474
    %v9706 = vunpack.c.l.b16 %v9475
    %v9707 = vunpack.c.l.b16 %v9476
    %v9708 = vunpack.c.l.b16 %v9477
    %v9709 = vunpack.c.l.b16 %v9478
    %v9710 = vunpack.c.l.b16 %v9479
    %v9711 = vunpack.c.l.b16 %v9480
    %v9712 = vunpack.c.l.b16 %v9481
    %v9713 = vunpack.c.l.b16 %v9482
    %v9714 = vunpack.c.l.b16 %v9483
    %v9715 = vunpack.c.l.b16 %v9484
    %v9716 = vpack.c.b16 %v9605, %v9604
    %v9717 = vpack.c.b16 %v9607, %v9606
    %v9718 = vpack.c.b16 %v9609, %v9608
    %v9719 = vpack.c.b16 %v9611, %v9610
    %v9720 = vpack.c.b16 %v9613, %v9612
    %v9721 = vpack.c.b16 %v9615, %v9614
    %v9722 = vpack.c.b16 %v9617, %v9616
    %v9723 = vpack.c.b16 %v9619, %v9618
    %v9724 = vpack.c.b16 %v9621, %v9620
    %v9725 = vpack.c.b16 %v9623, %v9622
    %v9726 = vpack.c.b16 %v9625, %v9624
    %v9727 = vpack.c.b16 %v9627, %v9626
    %v9728 = vpack.c.b16 %v9629, %v9628
    %v9729 = vpack.c.b16 %v9631, %v9630
    %v9730 = vpack.c.b16 %v9633, %v9632
    %v9731 = vpack.c.b16 %v9635, %v9634
    %v9732 = vpack.c.b16 %v9637, %v9636
    %v9733 = vpack.c.b16 %v9639, %v9638
    %v9734 = vpack.c.b16 %v9641, %v9640
    %v9735 = vpack.c.b16 %v9643, %v9642
    %v9736 = vpack.c.b16 %v9645, %v9644
    %v9737 = vpack.c.b16 %v9647, %v9646
    %v9738 = vpack.c.b16 %v9649, %v9648
    %v9739 = vpack.c.b16 %v9651, %v9650
    %v9740 = vpack.c.b16 %v9653, %v9652
    %v9741 = vpack.c.b16 %v9655, %v9654
    %v9742 = vpack.c.b16 %v9657, %v9656
    %v9743 = vpack.c.b16 %v9659, %v9658
    %v9744 = vpack.c.b16 %v9661, %v9660
    %v9745 = vpack.c.b16 %v9663, %v9662
    %v9746 = vpack.c.b16 %v9665, %v9664
    %v9747 = vpack.c.b16 %v9667, %v9666
    %v9748 = vpack.c.b16 %v9669, %v9668
    %v9749 = vpack.c.b16 %v9671, %v9670
    %v9750 = vpack.c.b16 %v9673, %v9672
    %v9751 = vpack.c.b16 %v9675, %v9674
    %v9752 = vpack.c.b16 %v9677, %v9676
    %v9753 = vpack.c.b16 %v9679, %v9678
    %v9754 = vpack.c.b16 %v9681, %v9680
    %v9755 = vpack.c.b16 %v9683, %v9682
    %v9756 = vpack.c.b16 %v9685, %v9684
    %v9757 = vpack.c.b16 %v9687, %v9686
    %v9758 = vpack.c.b16 %v9689, %v9688
    %v9759 = vpack.c.b16 %v9691, %v9690
    %v9760 = vpack.c.b16 %v9693, %v9692
    %v9761 = vpack.c.b16 %v9695, %v9694
    %v9762 = vpack.c.b16 %v9697, %v9696
    %v9763 = vpack.c.b16 %v9699, %v9698
    %v9764 = vpack.c.b16 %v9701, %v9700
    %v9765 = vpack.c.b16 %v9703, %v9702
    %v9766 = vpack.c.b16 %v9705, %v9704
    %v9767 = vpack.c.b16 %v9707, %v9706
    %v9768 = vpack.c.b16 %v9709, %v9708
    %v9769 = vpack.c.b16 %v9711, %v9710
    %v9770 = vpack.c.b16 %v9713, %v9712
    %v9771 = vpack.c.b16 %v9715, %v9714
    %9828 = vmatprep.subr.bf16.mxu0 0
    %9829 = vmatpush1.bf16.msra.mxu0 %v9716
    %9830 = vmatprep.subr.bf16.mxu0 0
    %9831 = vmatpush1.bf16.msra.mxu0 %v9717
    %9832 = vmatprep.subr.bf16.mxu0 0
    %9833 = vmatpush1.bf16.msra.mxu0 %v9718
    %9834 = vmatprep.subr.bf16.mxu0 0
    %9835 = vmatpush1.bf16.msra.mxu0 %v9719
    %9836 = vmatprep.subr.bf16.mxu0 0
    %9837 = vmatpush1.bf16.msra.mxu0 %v9720
    %9838 = vmatprep.subr.bf16.mxu0 0
    %9839 = vmatpush1.bf16.msra.mxu0 %v9721
    %9840 = vmatprep.subr.bf16.mxu0 0
    %9841 = vmatpush1.bf16.msra.mxu0 %v9722
    %9842 = vmatprep.subr.bf16.mxu0 0
    %9843 = vmatpush1.bf16.msra.mxu0 %v9723
    %9844 = vmatprep.subr.bf16.mxu0 0
    %9845 = vmatpush1.bf16.msra.mxu0 %v9724
    %9846 = vmatprep.subr.bf16.mxu0 0
    %9847 = vmatpush1.bf16.msra.mxu0 %v9725
    %9848 = vmatprep.subr.bf16.mxu0 0
    %9849 = vmatpush1.bf16.msra.mxu0 %v9726
    %9850 = vmatprep.subr.bf16.mxu0 0
    %9851 = vmatpush1.bf16.msra.mxu0 %v9727
    %9852 = vmatprep.subr.bf16.mxu0 0
    %9853 = vmatpush1.bf16.msra.mxu0 %v9728
    %9854 = vmatprep.subr.bf16.mxu0 0
    %9855 = vmatpush1.bf16.msra.mxu0 %v9729
    %9856 = vmatprep.subr.bf16.mxu0 0
    %9857 = vmatpush1.bf16.msra.mxu0 %v9730
    %9858 = vmatprep.subr.bf16.mxu0 0
    %9859 = vmatpush1.bf16.msra.mxu0 %v9731
    %9860 = vmatprep.mubr.bf16.mxu0 %v9367
    %9861 = vmatmul.mubr.bf16.gmra.mrb[0].mxu0 %v9366
    %v9862 = vpop.f32.mrb[0].mxu0
    %v9863 = vadd.f32 %v9490, %v9862
    %v9864 = vpop.f32.mrb[0].mxu0
    %v9865 = vpop.f32.mrb[0].mxu0
    %v9866 = vpop.f32.mrb[0].mxu0
    %9867 = vdwg.mxu0
    %9868 = vmatprep.subr.bf16.mxu0 0
    %9869 = vmatpush1.bf16.msra.mxu0 %v9732
    %9870 = vmatprep.subr.bf16.mxu0 0
    %9871 = vmatpush1.bf16.msra.mxu0 %v9733
    %9872 = vmatprep.subr.bf16.mxu0 0
    %9873 = vmatpush1.bf16.msra.mxu0 %v9734
    %9874 = vmatprep.subr.bf16.mxu0 0
    %9875 = vmatpush1.bf16.msra.mxu0 %v9735
    %9876 = vmatprep.subr.bf16.mxu0 0
    %9877 = vmatpush1.bf16.msra.mxu0 %v9736
    %9878 = vmatprep.subr.bf16.mxu0 0
    %9879 = vmatpush1.bf16.msra.mxu0 %v9737
    %9880 = vmatprep.subr.bf16.mxu0 0
    %9881 = vmatpush1.bf16.msra.mxu0 %v9738
    %9882 = vmatprep.subr.bf16.mxu0 0
    %9883 = vmatpush1.bf16.msra.mxu0 %v9739
    %9884 = vmatprep.subr.bf16.mxu0 0
    %9885 = vmatpush1.bf16.msra.mxu0 %v9740
    %9886 = vmatprep.subr.bf16.mxu0 0
    %9887 = vmatpush1.bf16.msra.mxu0 %v9741
    %9888 = vmatprep.subr.bf16.mxu0 0
    %9889 = vmatpush1.bf16.msra.mxu0 %v9742
    %9890 = vmatprep.subr.bf16.mxu0 0
    %9891 = vmatpush1.bf16.msra.mxu0 %v9743
    %9892 = vmatprep.subr.bf16.mxu0 0
    %9893 = vmatpush1.bf16.msra.mxu0 %v9744
    %9894 = vmatprep.subr.bf16.mxu0 0
    %9895 = vmatpush1.bf16.msra.mxu0 %v9745
    %9896 = vmatprep.subr.bf16.mxu0 0
    %9897 = vmatpush1.bf16.msra.mxu0 %v9746
    %9898 = vmatprep.subr.bf16.mxu0 0
    %9899 = vmatpush1.bf16.msra.mxu0 %v9747
    %9900 = vmatprep.mubr.bf16.mxu0 %v9369
    %9901 = vmatmul.mubr.bf16.gmra.mrb[0].mxu0 %v9368
    %v9902 = vpop.f32.mrb[0].mxu0
    %v9903 = vadd.f32 %v9863, %v9902
    %v9904 = vpop.f32.mrb[0].mxu0
    %v9905 = vpop.f32.mrb[0].mxu0
    %v9906 = vpop.f32.mrb[0].mxu0
    %9907 = vdwg.mxu0
    %9908 = vmatprep.subr.bf16.mxu0 0
    %9909 = vmatpush1.bf16.msra.mxu0 %v9748
    %9910 = vmatprep.subr.bf16.mxu0 0
    %9911 = vmatpush1.bf16.msra.mxu0 %v9749
    %9912 = vmatprep.subr.bf16.mxu0 0
    %9913 = vmatpush1.bf16.msra.mxu0 %v9750
    %9914 = vmatprep.subr.bf16.mxu0 0
    %9915 = vmatpush1.bf16.msra.mxu0 %v9751
    %9916 = vmatprep.subr.bf16.mxu0 0
    %9917 = vmatpush1.bf16.msra.mxu0 %v9752
    %9918 = vmatprep.subr.bf16.mxu0 0
    %9919 = vmatpush1.bf16.msra.mxu0 %v9753
    %9920 = vmatprep.subr.bf16.mxu0 0
    %9921 = vmatpush1.bf16.msra.mxu0 %v9754
    %9922 = vmatprep.subr.bf16.mxu0 0
    %9923 = vmatpush1.bf16.msra.mxu0 %v9755
    %9924 = vmatprep.subr.bf16.mxu0 0
    %9925 = vmatpush1.bf16.msra.mxu0 %v9756
    %9926 = vmatprep.subr.bf16.mxu0 0
    %9927 = vmatpush1.bf16.msra.mxu0 %v9757
    %9928 = vmatprep.subr.bf16.mxu0 0
    %9929 = vmatpush1.bf16.msra.mxu0 %v9758
    %9930 = vmatprep.subr.bf16.mxu0 0
    %9931 = vmatpush1.bf16.msra.mxu0 %v9759
    %9932 = vmatprep.subr.bf16.mxu0 0
    %9933 = vmatpush1.bf16.msra.mxu0 %v9760
    %9934 = vmatprep.subr.bf16.mxu0 0
    %9935 = vmatpush1.bf16.msra.mxu0 %v9761
    %9936 = vmatprep.subr.bf16.mxu0 0
    %9937 = vmatpush1.bf16.msra.mxu0 %v9762
    %9938 = vmatprep.subr.bf16.mxu0 0
    %9939 = vmatpush1.bf16.msra.mxu0 %v9763
    %9940 = vmatprep.mubr.bf16.mxu0 %v9371
    %9941 = vmatmul.mubr.bf16.gmra.mrb[0].mxu0 %v9370
    %v9942 = vpop.f32.mrb[0].mxu0
    %v9943 = vadd.f32 %v9903, %v9942
    %v9944 = vpop.f32.mrb[0].mxu0
    %v9945 = vpop.f32.mrb[0].mxu0
    %v9946 = vpop.f32.mrb[0].mxu0
    %9947 = vdwg.mxu0
    %9948 = vmatprep.subr.bf16.mxu0 0
    %9949 = vmatpush1.bf16.msra.mxu0 %v9764
    %9950 = vmatprep.subr.bf16.mxu0 0
    %9951 = vmatpush1.bf16.msra.mxu0 %v9765
    %9952 = vmatprep.subr.bf16.mxu0 0
    %9953 = vmatpush1.bf16.msra.mxu0 %v9766
    %9954 = vmatprep.subr.bf16.mxu0 0
    %9955 = vmatpush1.bf16.msra.mxu0 %v9767
    %9956 = vmatprep.subr.bf16.mxu0 0
    %9957 = vmatpush1.bf16.msra.mxu0 %v9768
    %9958 = vmatprep.subr.bf16.mxu0 0
    %9959 = vmatpush1.bf16.msra.mxu0 %v9769
    %9960 = vmatprep.subr.bf16.mxu0 0
    %9961 = vmatpush1.bf16.msra.mxu0 %v9770
    %9962 = vmatprep.subr.bf16.mxu0 0
    %9963 = vmatpush1.bf16.msra.mxu0 %v9771
    %9964 = vmatprep.subr.bf16.mxu0 0
    %9965 = vmatpush1.bf16.msra.mxu0 0
    %9966 = vmatprep.subr.bf16.mxu0 0
    %9967 = vmatpush1.bf16.msra.mxu0 0
    %9968 = vmatprep.subr.bf16.mxu0 0
    %9969 = vmatpush1.bf16.msra.mxu0 0
    %9970 = vmatprep.subr.bf16.mxu0 0
    %9971 = vmatpush1.bf16.msra.mxu0 0
    %9972 = vmatprep.subr.bf16.mxu0 0
    %9973 = vmatpush1.bf16.msra.mxu0 0
    %9974 = vmatprep.subr.bf16.mxu0 0
    %9975 = vmatpush1.bf16.msra.mxu0 0
    %9976 = vmatprep.subr.bf16.mxu0 0
    %9977 = vmatpush1.bf16.msra.mxu0 0
    %9978 = vmatprep.subr.bf16.mxu0 0
    %9979 = vmatpush1.bf16.msra.mxu0 0
    %9980 = vmatprep.mubr.bf16.mxu0 0
    %9981 = vmatmul.mubr.bf16.gmra.mrb[0].mxu0 %v9372
    %v9982 = vpop.f32.mrb[0].mxu0
    %v9983 = vadd.f32 %v9943, %v9982
    %v9984 = vpop.f32.mrb[0].mxu0
    %v9985 = vpop.f32.mrb[0].mxu0
    %v9986 = vpop.f32.mrb[0].mxu0
    %9987 = vdwg.mxu0
    %v9988 = vld [vmem:[%s15] sm:$0xff]
    %v9989 = vld [vmem:[%s15 + $0x8] sm:$0xff]
    %v9990 = vld [vmem:[%s15 + $0x10] sm:$0xff]
    %v9991 = vld [vmem:[%s15 + $0x18] sm:$0xff]
    %v9992 = vld [vmem:[%s15 + $0x20] sm:$0xff]
    %v9993 = vld [vmem:[%s15 + $0x28] sm:$0xff]
    %v9994 = vld [vmem:[%s15 + $0x30] sm:$0xff]
    %v9995 = vld [vmem:[%s15 + $0x38] sm:$0xff]
    %v9996 = vld [vmem:[%s15 + $0x40] sm:$0xff]
    %v9997 = vld [vmem:[%s15 + $0x48] sm:$0xff]
    %v9998 = vld [vmem:[%s15 + $0x50] sm:$0xff]
    %v9999 = vld [vmem:[%s15 + $0x58] sm:$0xff]
    %v10000 = vld [vmem:[%s15 + $0x60] sm:$0xff]
    %v10001 = vld [vmem:[%s15 + $0x68] sm:$0xff]
    %v10002 = vld [vmem:[%s15 + $0x70] sm:$0xff]
    %v10003 = vld [vmem:[%s15 + $0x78] sm:$0xff]
    %v10004 = vld [vmem:[#allocation27] sm:$0x1]
    %v10006 = vlaneseq
    %v10007 = vshrl.u32 %v10006, 7
    %v10008 = vsub.s32 0, %v10007
    %v10009 = vrot.slane %v10004, %v10008
    %10011 = vmatprep.subr.mxu0 0.0
    %10012 = vmatpush1.msra.mxu0 %v9988
    %10013 = vmatprep.subr.mxu0 0.0
    %10014 = vmatpush1.msra.mxu0 %v9989
    %10015 = vmatprep.subr.mxu0 0.0
    %10016 = vmatpush1.msra.mxu0 %v9990
    %10017 = vmatprep.subr.mxu0 0.0
    %10018 = vmatpush1.msra.mxu0 %v9991
    %10019 = vmatprep.subr.mxu0 0.0
    %10020 = vmatpush1.msra.mxu0 %v9992
    %10021 = vmatprep.subr.mxu0 0.0
    %10022 = vmatpush1.msra.mxu0 %v9993
    %10023 = vmatprep.subr.mxu0 0.0
    %10024 = vmatpush1.msra.mxu0 %v9994
    %10025 = vmatprep.subr.mxu0 0.0
    %10026 = vmatpush1.msra.mxu0 %v9995
    %10027 = vmatprep.subr.mxu0 0.0
    %10028 = vmatpush1.msra.mxu0 %v9996
    %10029 = vmatprep.subr.mxu0 0.0
    %10030 = vmatpush1.msra.mxu0 %v9997
    %10031 = vmatprep.subr.mxu0 0.0
    %10032 = vmatpush1.msra.mxu0 %v9998
    %10033 = vmatprep.subr.mxu0 0.0
    %10034 = vmatpush1.msra.mxu0 %v9999
    %10035 = vmatprep.subr.mxu0 0.0
    %10036 = vmatpush1.msra.mxu0 %v10000
    %10037 = vmatprep.subr.mxu0 0.0
    %10038 = vmatpush1.msra.mxu0 %v10001
    %10039 = vmatprep.subr.mxu0 0.0
    %10040 = vmatpush1.msra.mxu0 %v10002
    %10041 = vmatprep.subr.mxu0 0.0
    %10042 = vmatpush1.msra.mxu0 %v10003
    %10043 = vmatprep.subr.mxu0 0.0
    %10044 = vmatpush1.msra.mxu0 0.0
    %10045 = vmatprep.subr.mxu0 0.0
    %10046 = vmatpush1.msra.mxu0 0.0
    %10047 = vmatprep.subr.mxu0 0.0
    %10048 = vmatpush1.msra.mxu0 0.0
    %10049 = vmatprep.subr.mxu0 0.0
    %10050 = vmatpush1.msra.mxu0 0.0
    %10051 = vmatprep.subr.mxu0 0.0
    %10052 = vmatpush1.msra.mxu0 0.0
    %10053 = vmatprep.subr.mxu0 0.0
    %10054 = vmatpush1.msra.mxu0 0.0
    %10055 = vmatprep.subr.mxu0 0.0
    %10056 = vmatpush1.msra.mxu0 0.0
    %10057 = vmatprep.subr.mxu0 0.0
    %10058 = vmatpush1.msra.mxu0 0.0
    %10059 = vmatprep.subr.mxu0 0.0
    %10060 = vmatpush1.msra.mxu0 0.0
    %10061 = vmatprep.subr.mxu0 0.0
    %10062 = vmatpush1.msra.mxu0 0.0
    %10063 = vmatprep.subr.mxu0 0.0
    %10064 = vmatpush1.msra.mxu0 0.0
    %10065 = vmatprep.subr.mxu0 0.0
    %10066 = vmatpush1.msra.mxu0 0.0
    %10067 = vmatprep.subr.mxu0 0.0
    %10068 = vmatpush1.msra.mxu0 0.0
    %10069 = vmatprep.subr.mxu0 0.0
    %10070 = vmatpush1.msra.mxu0 0.0
    %10071 = vmatprep.subr.mxu0 0.0
    %10072 = vmatpush1.msra.mxu0 0.0
    %10073 = vmatprep.subr.mxu0 0.0
    %10074 = vmatpush1.msra.mxu0 0.0
    %10075 = vmatprep.mubr.f32.mxu0 0.0
    %10076 = vmatmul.mubr.f32.gmra.mrb[0].mxu0 %v9983
    %v10077 = vpop.f32.mrb[0].mxu0
    %v10078 = vadd.f32 %v10009, %v10077
    %v10079 = vpop.f32.mrb[0].mxu0
    %10080 = vdwg.mxu0
    %vm10081 = vcmask 9216
    %v10082 = vsel %vm10081, %v10078, -inf
    %10083 = vmax.xlane.f32.xlu0 %v10082
    %v10084 = vpop.xlane.xlu0 %10083
    %v10085 = vsub.f32 %v10078, %v10084
    %v10086 = vmul.f32 %v10085, 1.442695
    %v10087 = vpow.pop %v10086
    %v10088 = vsel %vm10081, %v10087, 0.0
    %10089 = vadd.xlane.f32.xlu0 %v10088
    %v10090 = vpop.xlane.xlu0 %10089
    %v10091 = vrcp.pop %v10090
    %v10092 = vmul.f32 %v10087, %v10091
    %10093 = vst.msk [vmem:[#allocation28] sm:$0x3] %vm10081, %v10092
    // Predicated region
    $region126: #{tpu_custom_call.1} parent=1 // pred_check
      _
    $region127: #{tpu_custom_call.1} parent=1 // pred_check_branch
      %10095 = sbr.rel (0) target = $region129
    $region128: #{tpu_custom_call.1} parent=1 // pred_region
      %s10097 = ssub.s32 32, 32
      %10098 = vsyncadd [#allocation6], %s10097
      %s10100 = sshll.u32 [#allocation28], 4
      %s10101 = int_to_ptr.vmem [resolvable:$true] %s10100
      %10103 = dma.vmem_to_hbm [thread:$0]  %s10101, 32, %s17, [#allocation6]
    $region129: #{tpu_custom_call.1} parent=1 // pred_fallthru
      _
    // Predicated region
    $region130: #{tpu_custom_call.1} parent=1 // pred_check
      _
    $region131: #{tpu_custom_call.1} parent=1 // pred_check_branch
      %10105 = sbr.rel (0) target = $region133
    $region132: #{tpu_custom_call.1} parent=1 // pred_region
      %10106 = dma.done [#allocation6], 32
    $region133: #{tpu_custom_call.1} parent=1 // pred_fallthru
      _
    %10107 = vsyncpa [#allocation5], 1
    %10108 = vsyncpa [#allocation8], 1
    %10109 = vsyncpa [#allocation11], 1
    %10110 = vsyncpa [#allocation14], 1
    %10111 = vsyncpa [#allocation17], 1
    %10112 = vsyncpa [#allocation20], 1
    %10113 = vsyncpa [#allocation23], 1
    %10114 = vsyncpa [#allocation26], 1
    %10115 = vsyncpa [#allocation6], 1
  %10116 = vsyncmov [#allocation3]
  %s10117 = vpop.sfrf %10116
  %p10118 = scmp.eq.s32.totalorder %s10117, 0
  %p10119 = pneg %p10118
  %10121 = shalt.err (%p10119)

</llo_original>
